<compile_context>
chip_gen: v5e
topology: v5e:2x2
jax: 0.10.0
libtpu: 0.0.40
codegen_flags: <defaults>
</compile_context>

<pallas_src>
import jax
import jax.numpy as jnp
from jax.experimental import pallas as pl
from jax.experimental.pallas import tpu as pltpu

LN_EPS = 1e-5  # PyTorch nn.LayerNorm default


def _round_up(x, m):
    return ((x + m - 1) // m) * m


def _tpu_generation():
    """Best-effort (physical VMEM bytes per TensorCore, # TensorCores per chip)."""
    vmem_bytes = 128 << 20   # v5e / v6e
    num_tc = 1
    try:
        kind = (jax.devices()[0].device_kind or "").lower()
    except Exception:
        kind = ""
    if "v7" in kind:
        vmem_bytes = 64 << 20  # v7x: 64 MiB per TensorCore
        num_tc = 2
    try:  # only allow the reported capacity to LOWER the estimate, never raise it
        cap = int(getattr(pltpu.get_tpu_info(), "vmem_capacity_bytes", 0) or 0)
        if cap > 0:
            vmem_bytes = min(vmem_bytes, cap)
    except Exception:
        pass
    return vmem_bytes, num_tc


# ---------------------------------------------------------------------------
# One-time parameter preparation (hoisted out of the per-call hot path).
# ---------------------------------------------------------------------------
def prepare_params(params):
    """Convert f32 [in, out] params into kernel-ready operands (call once)."""
    w1 = params["w1"].astype(jnp.bfloat16)
    w2 = params["w2"].astype(jnp.bfloat16)
    w3 = params["w3"].astype(jnp.bfloat16)
    wo = params["wo"].astype(jnp.bfloat16)

    D_in, H1 = w1.shape
    H2 = w2.shape[1]
    H3 = w3.shape[1]
    D_out = wo.shape[1]

    # Lane-dense output: pad the output projection to a multiple of 128 lanes.
    D_out_pad = max(128, _round_up(D_out, 128))
    bo = params["bo"].reshape(1, D_out).astype(jnp.float32)
    if D_out_pad != D_out:
        wo = jnp.pad(wo, ((0, 0), (0, D_out_pad - D_out)))
        bo = jnp.pad(bo, ((0, 0), (0, D_out_pad - D_out)))

    # Fuse every small [1, H] operand into one f32 vector; each segment is
    # padded to a 128-lane boundary so in-kernel slices stay lane-aligned.
    segments = [
        ("b1", params["b1"], H1), ("g1", params["g1"], H1), ("be1", params["be1"], H1),
        ("b2", params["b2"], H2), ("g2", params["g2"], H2), ("be2", params["be2"], H2),
        ("b3", params["b3"], H3), ("g3", params["g3"], H3), ("be3", params["be3"], H3),
        ("bo", bo, D_out_pad),
    ]
    offsets = {}
    pieces = []
    off = 0
    for name, arr, width in segments:
        padded = _round_up(width, 128)
        arr = jnp.asarray(arr, jnp.float32).reshape(1, width)
        if padded != width:
            arr = jnp.pad(arr, ((0, 0), (0, padded - width)))
        pieces.append(arr)
        offsets[name] = (off, width)
        off += padded
    vec = jnp.concatenate(pieces, axis=1)

    return dict(
        w1=w1, w2=w2, w3=w3, wo=wo, vec=vec, offsets=offsets,
        dims=dict(D_in=D_in, H1=H1, H2=H2, H3=H3, D_out=D_out, D_out_pad=D_out_pad),
    )


# ---------------------------------------------------------------------------
# Kernel
# ---------------------------------------------------------------------------
def _make_kernel(offsets):
    def _layernorm(h, gamma, beta):
        # var = E[h^2] - E[h]^2: the two cross-lane reductions are independent,
        # so both XLU units can overlap; rsqrt goes to the EUP slot.
        mean = jnp.mean(h, axis=-1, keepdims=True)
        mean_sq = jnp.mean(h * h, axis=-1, keepdims=True)
        var = jnp.maximum(mean_sq - mean * mean, 0.0)
        inv = jax.lax.rsqrt(var + LN_EPS)
        return (h - mean) * inv * gamma + beta

    def kernel(x_ref, w1_ref, w2_ref, w3_ref, wo_ref, vec_ref, o_ref):
        def seg(name):
            off, width = offsets[name]
            return vec_ref[:, off:off + width]          # [1, width], f32

        x = x_ref[...]                                   # bf16 row tile
        residual = x.astype(jnp.float32)                 # single upcast for residual

        # fc1 -> ReLU -> LN1  (bf16 MXU operands, f32 accumulation)
        h = jnp.dot(x, w1_ref[...], preferred_element_type=jnp.float32) + seg("b1")
        h = jnp.maximum(h, 0.0)
        h = _layernorm(h, seg("g1"), seg("be1"))

        # fc2 -> ReLU -> LN2
        h = jnp.dot(h.astype(jnp.bfloat16), w2_ref[...],
                    preferred_element_type=jnp.float32) + seg("b2")
        h = jnp.maximum(h, 0.0)
        h = _layernorm(h, seg("g2"), seg("be2"))

        # fc3 -> ReLU -> LN3
        h = jnp.dot(h.astype(jnp.bfloat16), w3_ref[...],
                    preferred_element_type=jnp.float32) + seg("b3")
        h = jnp.maximum(h, 0.0)
        h = _layernorm(h, seg("g3"), seg("be3"))

        # residual add (f32) + output projection
        h = h + residual
        out = jnp.dot(h.astype(jnp.bfloat16), wo_ref[...],
                      preferred_element_type=jnp.float32) + seg("bo")
        o_ref[...] = out.astype(o_ref.dtype)

    return kernel


# ---------------------------------------------------------------------------
# Wrapper
# ---------------------------------------------------------------------------
def feature_fusion_mlp(x, prepared, *, block_m=None, out_dtype=jnp.float32):
    """x: [B, D_in] float32. prepared: output of prepare_params()."""
    B, D_in = x.shape
    dims = prepared["dims"]
    assert D_in == dims["D_in"]
    H1, H2, H3 = dims["H1"], dims["H2"], dims["H3"]
    D_out, D_out_pad = dims["D_out"], dims["D_out_pad"]
    assert D_in == H3, "residual add requires input_dim == hidden_dims[2]"

    w1, w2, w3, wo, vec = (prepared[k] for k in ("w1", "w2", "w3", "wo", "vec"))

    vmem_phys, num_tc = _tpu_generation()
    vmem_cap = int(0.75 * vmem_phys)   # 48 MiB on v7x, 96 MiB on v5e/v6e

    out_itemsize = jnp.dtype(out_dtype).itemsize
    max_h = max(H1, H2, H3, D_in, D_out_pad)
    weight_bytes = (w1.size + w2.size + w3.size + wo.size) * 2 + vec.size * 4

    def footprint(bm):
        return (weight_bytes                              # bf16 weights + fused vec (single-buffered)
                + 2 * bm * D_in * 2                       # bf16 x tile, double-buffered
                + 2 * bm * D_out_pad * out_itemsize       # out tile, double-buffered
                + 4 * bm * max_h * 4)                     # live f32 intermediates / compiler scratch

    if block_m is None:
        if num_tc >= 2 and B > 256:
            # v7x: aim for exactly num_tc "parallel" grid steps.
            block_m = _round_up(pl.cdiv(B, num_tc), 128)
        else:
            # v5e/v6e (single TC) or small batch: one maximal step.
            block_m = _round_up(max(B, 16), 16)
        block_m = min(block_m, 1024)
        # Shrink the tile until its per-step footprint fits the VMEM cap.
        while block_m > 128 and footprint(block_m) > vmem_cap:
            block_m = _round_up(block_m // 2, 128)
    # Multiple of 16 so bf16 LHS rows pack cleanly (2 rows / sublane).
    block_m = max(16, _round_up(block_m, 16))

    B_pad = _round_up(B, block_m)
    x_in = x.astype(jnp.bfloat16)
    if B_pad != B:
        x_in = jnp.pad(x_in, ((0, B_pad - B), (0, 0)))

    grid = (B_pad // block_m,)

    def const_spec(shape):
        # Grid-invariant operand: constant index map, resident once in VMEM.
        return pl.BlockSpec(shape, lambda i: (0, 0), pipeline_mode=pl.Buffered(1))

    in_specs = [
        pl.BlockSpec((block_m, D_in), lambda i: (i, 0)),
        const_spec(w1.shape), const_spec(w2.shape), const_spec(w3.shape),
        const_spec(wo.shape), const_spec(vec.shape),
    ]

    vmem_limit = int(min(max(int(1.5 * footprint(block_m)), 16 << 20), vmem_cap))

    out = pl.pallas_call(
        _make_kernel(prepared["offsets"]),
        out_shape=jax.ShapeDtypeStruct((B_pad, D_out_pad), out_dtype),
        grid_spec=pltpu.PrefetchScalarGridSpec(
            num_scalar_prefetch=0,
            grid=grid,
            in_specs=in_specs,
            out_specs=pl.BlockSpec((block_m, D_out_pad), lambda i: (i, 0)),
        ),
        compiler_params=pltpu.CompilerParams(
            dimension_semantics=("parallel",),
            vmem_limit_bytes=vmem_limit,
        ),
    )(x_in, w1, w2, w3, wo, vec)

    return out[:B, :D_out]


# ---------------------------------------------------------------------------
# Synthetic init + pure-JAX reference
# ---------------------------------------------------------------------------
def init_params(key, input_dim, hidden_dims, output_dim):
    """Deterministic synthetic init (uniform, PyTorch-Linear-like fan-in bound)."""
    keys = jax.random.split(key, 8)

    def linear(kw, kb, fan_in, fan_out):
        bound = 1.0 / jnp.sqrt(fan_in)
        w = jax.random.uniform(kw, (fan_in, fan_out), jnp.float32, -bound, bound)
        b = jax.random.uniform(kb, (1, fan_out), jnp.float32, -bound, bound)
        return w, b

    h1, h2, h3 = hidden_dims
    w1, b1 = linear(keys[0], keys[1], input_dim, h1)
    w2, b2 = linear(keys[2], keys[3], h1, h2)
    w3, b3 = linear(keys[4], keys[5], h2, h3)
    wo, bo = linear(keys[6], keys[7], h3, output_dim)

    return dict(
        w1=w1, b1=b1, w2=w2, b2=b2, w3=w3, b3=b3, wo=wo, bo=bo,
        g1=jnp.ones((1, h1), jnp.float32), be1=jnp.zeros((1, h1), jnp.float32),
        g2=jnp.ones((1, h2), jnp.float32), be2=jnp.zeros((1, h2), jnp.float32),
        g3=jnp.ones((1, h3), jnp.float32), be3=jnp.zeros((1, h3), jnp.float32),
    )


def reference_forward(x, p):
    """Pure-JAX reference mirroring the kernel's bf16-matmul / f32-accumulate math."""
    def mm(a, w):
        return jnp.dot(a.astype(jnp.bfloat16), w.astype(jnp.bfloat16),
                       preferred_element_type=jnp.float32)

    def ln(h, g, b):
        m = jnp.mean(h, axis=-1, keepdims=True)
        ms = jnp.mean(h * h, axis=-1, keepdims=True)
        inv = jax.lax.rsqrt(jnp.maximum(ms - m * m, 0.0) + LN_EPS)
        return (h - m) * inv * g + b

    xb = x.astype(jnp.bfloat16).astype(jnp.float32)
    residual = xb
    h = jnp.maximum(mm(xb, p["w1"]) + p["b1"], 0.0)
    h = ln(h, p["g1"], p["be1"])
    h = jnp.maximum(mm(h, p["w2"]) + p["b2"], 0.0)
    h = ln(h, p["g2"], p["be2"])
    h = jnp.maximum(mm(h, p["w3"]) + p["b3"], 0.0)
    h = ln(h, p["g3"], p["be3"])
    h = h + residual
    return mm(h, p["wo"]) + p["bo"]


if __name__ == "__main__":
    # Small shapes consistent with the module (input_dim == hidden_dims[2] so the
    # residual add is valid). batch=512 runs as one 512-row step on v5e/v6e and
    # two 256-row parallel steps on v7x; all feature dims are multiples of 128.
    batch = 512
    input_dim = 128
    hidden_dims = [256, 256, 128]
    output_dim = 128

    key = jax.random.PRNGKey(0)
    kx, kp = jax.random.split(key)
    x = jax.random.normal(kx, (batch, input_dim), jnp.float32)
    params = init_params(kp, input_dim, hidden_dims, output_dim)
    prepared = prepare_params(params)   # one-time: bf16 cast, pad, fuse small vectors

    out = feature_fusion_mlp(x, prepared)
    out = jax.block_until_ready(out)

    ref = reference_forward(x, params)
    assert out.shape == (batch, output_dim)
    assert jnp.allclose(out, ref, atol=2e-2, rtol=2e-2), "mismatch vs JAX reference"

    print("KERNEL_OK")
</pallas_src>

<mosaic_0001>
module attributes {stable_mosaic.version = 11 : i64} {
  func.func @kernel(%arg0: i32, %arg1: memref<512x128xbf16, #tpu.memory_space<vmem>>, %arg2: memref<128x256xbf16, #tpu.memory_space<vmem>>, %arg3: memref<256x256xbf16, #tpu.memory_space<vmem>>, %arg4: memref<256x128xbf16, #tpu.memory_space<vmem>>, %arg5: memref<128x128xbf16, #tpu.memory_space<vmem>>, %arg6: memref<1x2048xf32, #tpu.memory_space<vmem>>, %arg7: memref<512x128xf32, #tpu.memory_space<vmem>>) attributes {dimension_semantics = [#tpu.dimension_semantics<parallel>], iteration_bounds = array<i64: 1>, scalar_prefetch = 0 : i64, scratch_operands = 0 : i64, tpu.core_type = #tpu.core_type<tc>, window_params = [{transform_indices = @transform_0, window_bounds = array<i64: 512, 128>}, {pipeline_mode = #tpu.pipeline_mode<synchronous>, transform_indices = @transform_1, window_bounds = array<i64: 128, 256>}, {pipeline_mode = #tpu.pipeline_mode<synchronous>, transform_indices = @transform_2, window_bounds = array<i64: 256, 256>}, {pipeline_mode = #tpu.pipeline_mode<synchronous>, transform_indices = @transform_3, window_bounds = array<i64: 256, 128>}, {pipeline_mode = #tpu.pipeline_mode<synchronous>, transform_indices = @transform_4, window_bounds = array<i64: 128, 128>}, {pipeline_mode = #tpu.pipeline_mode<synchronous>, transform_indices = @transform_5, window_bounds = array<i64: 1, 2048>}, {transform_indices = @transform_6, window_bounds = array<i64: 512, 128>}]} {
    %c0 = arith.constant 0 : index
    %c0_0 = arith.constant 0 : index
    %0 = vector.load %arg1[%c0, %c0_0] : memref<512x128xbf16, #tpu.memory_space<vmem>>, vector<512x128xbf16>
    %1 = arith.extf %0 : vector<512x128xbf16> to vector<512x128xf32>
    %c0_1 = arith.constant 0 : index
    %c0_2 = arith.constant 0 : index
    %2 = vector.load %arg2[%c0_1, %c0_2] : memref<128x256xbf16, #tpu.memory_space<vmem>>, vector<128x256xbf16>
    %cst = arith.constant dense<0.000000e+00> : vector<512x256xf32>
    %3 = tpu.matmul %0, %2, %cst {dimension_numbers = #tpu.dot_dimension_numbers<[1], [0], [0], [1], [0, 0, 1, 1], [], []>} : vector<512x128xbf16>, vector<128x256xbf16>, vector<512x256xf32> -> vector<512x256xf32>
    %c0_3 = arith.constant 0 : index
    %c0_4 = arith.constant 0 : index
    %4 = vector.load %arg6[%c0_3, %c0_4] : memref<1x2048xf32, #tpu.memory_space<vmem>>, vector<1x256xf32>
    %5 = vector.broadcast %4 : vector<1x256xf32> to vector<512x256xf32>
    %6 = arith.addf %3, %5 : vector<512x256xf32>
    %cst_5 = arith.constant 0.000000e+00 : f32
    %7 = vector.broadcast %cst_5 : f32 to vector<512x256xf32>
    %8 = arith.maximumf %6, %7 : vector<512x256xf32>
    %c0_6 = arith.constant 0 : index
    %c256 = arith.constant 256 : index
    %9 = vector.load %arg6[%c0_6, %c256] : memref<1x2048xf32, #tpu.memory_space<vmem>>, vector<1x256xf32>
    %c0_7 = arith.constant 0 : index
    %c512 = arith.constant 512 : index
    %10 = vector.load %arg6[%c0_7, %c512] : memref<1x2048xf32, #tpu.memory_space<vmem>>, vector<1x256xf32>
    %cst_8 = arith.constant dense<0.000000e+00> : vector<512xf32>
    %11 = vector.multi_reduction <add>, %8, %cst_8 [1] : vector<512x256xf32> to vector<512xf32>
    %12 = vector.shape_cast %11 : vector<512xf32> to vector<512x1xf32>
    %cst_9 = arith.constant 2.560000e+02 : f32
    %13 = vector.broadcast %cst_9 : f32 to vector<512x1xf32>
    %14 = arith.divf %12, %13 : vector<512x1xf32>
    %15 = arith.mulf %8, %8 : vector<512x256xf32>
    %cst_10 = arith.constant dense<0.000000e+00> : vector<512xf32>
    %16 = vector.multi_reduction <add>, %15, %cst_10 [1] : vector<512x256xf32> to vector<512xf32>
    %17 = vector.shape_cast %16 : vector<512xf32> to vector<512x1xf32>
    %cst_11 = arith.constant 2.560000e+02 : f32
    %18 = vector.broadcast %cst_11 : f32 to vector<512x1xf32>
    %19 = arith.divf %17, %18 : vector<512x1xf32>
    %20 = arith.mulf %14, %14 : vector<512x1xf32>
    %21 = arith.subf %19, %20 : vector<512x1xf32>
    %cst_12 = arith.constant 0.000000e+00 : f32
    %22 = vector.broadcast %cst_12 : f32 to vector<512x1xf32>
    %23 = arith.maximumf %21, %22 : vector<512x1xf32>
    %cst_13 = arith.constant 9.99999974E-6 : f32
    %24 = vector.broadcast %cst_13 : f32 to vector<512x1xf32>
    %25 = arith.addf %23, %24 : vector<512x1xf32>
    %26 = math.rsqrt %25 : vector<512x1xf32>
    %27 = vector.broadcast %14 : vector<512x1xf32> to vector<512x256xf32>
    %28 = arith.subf %8, %27 : vector<512x256xf32>
    %29 = vector.broadcast %26 : vector<512x1xf32> to vector<512x256xf32>
    %30 = arith.mulf %28, %29 : vector<512x256xf32>
    %31 = vector.broadcast %9 : vector<1x256xf32> to vector<512x256xf32>
    %32 = arith.mulf %30, %31 : vector<512x256xf32>
    %33 = vector.broadcast %10 : vector<1x256xf32> to vector<512x256xf32>
    %34 = arith.addf %32, %33 : vector<512x256xf32>
    %35 = arith.truncf %34 : vector<512x256xf32> to vector<512x256xbf16>
    %c0_14 = arith.constant 0 : index
    %c0_15 = arith.constant 0 : index
    %36 = vector.load %arg3[%c0_14, %c0_15] : memref<256x256xbf16, #tpu.memory_space<vmem>>, vector<256x256xbf16>
    %cst_16 = arith.constant dense<0.000000e+00> : vector<512x256xf32>
    %37 = tpu.matmul %35, %36, %cst_16 {dimension_numbers = #tpu.dot_dimension_numbers<[1], [0], [0], [1], [0, 0, 1, 1], [], []>} : vector<512x256xbf16>, vector<256x256xbf16>, vector<512x256xf32> -> vector<512x256xf32>
    %c0_17 = arith.constant 0 : index
    %c768 = arith.constant 768 : index
    %38 = vector.load %arg6[%c0_17, %c768] : memref<1x2048xf32, #tpu.memory_space<vmem>>, vector<1x256xf32>
    %39 = vector.broadcast %38 : vector<1x256xf32> to vector<512x256xf32>
    %40 = arith.addf %37, %39 : vector<512x256xf32>
    %cst_18 = arith.constant 0.000000e+00 : f32
    %41 = vector.broadcast %cst_18 : f32 to vector<512x256xf32>
    %42 = arith.maximumf %40, %41 : vector<512x256xf32>
    %c0_19 = arith.constant 0 : index
    %c1024 = arith.constant 1024 : index
    %43 = vector.load %arg6[%c0_19, %c1024] : memref<1x2048xf32, #tpu.memory_space<vmem>>, vector<1x256xf32>
    %c0_20 = arith.constant 0 : index
    %c1280 = arith.constant 1280 : index
    %44 = vector.load %arg6[%c0_20, %c1280] : memref<1x2048xf32, #tpu.memory_space<vmem>>, vector<1x256xf32>
    %cst_21 = arith.constant dense<0.000000e+00> : vector<512xf32>
    %45 = vector.multi_reduction <add>, %42, %cst_21 [1] : vector<512x256xf32> to vector<512xf32>
    %46 = vector.shape_cast %45 : vector<512xf32> to vector<512x1xf32>
    %cst_22 = arith.constant 2.560000e+02 : f32
    %47 = vector.broadcast %cst_22 : f32 to vector<512x1xf32>
    %48 = arith.divf %46, %47 : vector<512x1xf32>
    %49 = arith.mulf %42, %42 : vector<512x256xf32>
    %cst_23 = arith.constant dense<0.000000e+00> : vector<512xf32>
    %50 = vector.multi_reduction <add>, %49, %cst_23 [1] : vector<512x256xf32> to vector<512xf32>
    %51 = vector.shape_cast %50 : vector<512xf32> to vector<512x1xf32>
    %cst_24 = arith.constant 2.560000e+02 : f32
    %52 = vector.broadcast %cst_24 : f32 to vector<512x1xf32>
    %53 = arith.divf %51, %52 : vector<512x1xf32>
    %54 = arith.mulf %48, %48 : vector<512x1xf32>
    %55 = arith.subf %53, %54 : vector<512x1xf32>
    %cst_25 = arith.constant 0.000000e+00 : f32
    %56 = vector.broadcast %cst_25 : f32 to vector<512x1xf32>
    %57 = arith.maximumf %55, %56 : vector<512x1xf32>
    %cst_26 = arith.constant 9.99999974E-6 : f32
    %58 = vector.broadcast %cst_26 : f32 to vector<512x1xf32>
    %59 = arith.addf %57, %58 : vector<512x1xf32>
    %60 = math.rsqrt %59 : vector<512x1xf32>
    %61 = vector.broadcast %48 : vector<512x1xf32> to vector<512x256xf32>
    %62 = arith.subf %42, %61 : vector<512x256xf32>
    %63 = vector.broadcast %60 : vector<512x1xf32> to vector<512x256xf32>
    %64 = arith.mulf %62, %63 : vector<512x256xf32>
    %65 = vector.broadcast %43 : vector<1x256xf32> to vector<512x256xf32>
    %66 = arith.mulf %64, %65 : vector<512x256xf32>
    %67 = vector.broadcast %44 : vector<1x256xf32> to vector<512x256xf32>
    %68 = arith.addf %66, %67 : vector<512x256xf32>
    %69 = arith.truncf %68 : vector<512x256xf32> to vector<512x256xbf16>
    %c0_27 = arith.constant 0 : index
    %c0_28 = arith.constant 0 : index
    %70 = vector.load %arg4[%c0_27, %c0_28] : memref<256x128xbf16, #tpu.memory_space<vmem>>, vector<256x128xbf16>
    %cst_29 = arith.constant dense<0.000000e+00> : vector<512x128xf32>
    %71 = tpu.matmul %69, %70, %cst_29 {dimension_numbers = #tpu.dot_dimension_numbers<[1], [0], [0], [1], [0, 0, 1, 1], [], []>} : vector<512x256xbf16>, vector<256x128xbf16>, vector<512x128xf32> -> vector<512x128xf32>
    %c0_30 = arith.constant 0 : index
    %c1536 = arith.constant 1536 : index
    %72 = vector.load %arg6[%c0_30, %c1536] : memref<1x2048xf32, #tpu.memory_space<vmem>>, vector<1x128xf32>
    %73 = vector.broadcast %72 : vector<1x128xf32> to vector<512x128xf32>
    %74 = arith.addf %71, %73 : vector<512x128xf32>
    %cst_31 = arith.constant 0.000000e+00 : f32
    %75 = vector.broadcast %cst_31 : f32 to vector<512x128xf32>
    %76 = arith.maximumf %74, %75 : vector<512x128xf32>
    %c0_32 = arith.constant 0 : index
    %c1664 = arith.constant 1664 : index
    %77 = vector.load %arg6[%c0_32, %c1664] : memref<1x2048xf32, #tpu.memory_space<vmem>>, vector<1x128xf32>
    %c0_33 = arith.constant 0 : index
    %c1792 = arith.constant 1792 : index
    %78 = vector.load %arg6[%c0_33, %c1792] : memref<1x2048xf32, #tpu.memory_space<vmem>>, vector<1x128xf32>
    %cst_34 = arith.constant dense<0.000000e+00> : vector<512xf32>
    %79 = vector.multi_reduction <add>, %76, %cst_34 [1] : vector<512x128xf32> to vector<512xf32>
    %80 = vector.shape_cast %79 : vector<512xf32> to vector<512x1xf32>
    %cst_35 = arith.constant 1.280000e+02 : f32
    %81 = vector.broadcast %cst_35 : f32 to vector<512x1xf32>
    %82 = arith.divf %80, %81 : vector<512x1xf32>
    %83 = arith.mulf %76, %76 : vector<512x128xf32>
    %cst_36 = arith.constant dense<0.000000e+00> : vector<512xf32>
    %84 = vector.multi_reduction <add>, %83, %cst_36 [1] : vector<512x128xf32> to vector<512xf32>
    %85 = vector.shape_cast %84 : vector<512xf32> to vector<512x1xf32>
    %cst_37 = arith.constant 1.280000e+02 : f32
    %86 = vector.broadcast %cst_37 : f32 to vector<512x1xf32>
    %87 = arith.divf %85, %86 : vector<512x1xf32>
    %88 = arith.mulf %82, %82 : vector<512x1xf32>
    %89 = arith.subf %87, %88 : vector<512x1xf32>
    %cst_38 = arith.constant 0.000000e+00 : f32
    %90 = vector.broadcast %cst_38 : f32 to vector<512x1xf32>
    %91 = arith.maximumf %89, %90 : vector<512x1xf32>
    %cst_39 = arith.constant 9.99999974E-6 : f32
    %92 = vector.broadcast %cst_39 : f32 to vector<512x1xf32>
    %93 = arith.addf %91, %92 : vector<512x1xf32>
    %94 = math.rsqrt %93 : vector<512x1xf32>
    %95 = vector.broadcast %82 : vector<512x1xf32> to vector<512x128xf32>
    %96 = arith.subf %76, %95 : vector<512x128xf32>
    %97 = vector.broadcast %94 : vector<512x1xf32> to vector<512x128xf32>
    %98 = arith.mulf %96, %97 : vector<512x128xf32>
    %99 = vector.broadcast %77 : vector<1x128xf32> to vector<512x128xf32>
    %100 = arith.mulf %98, %99 : vector<512x128xf32>
    %101 = vector.broadcast %78 : vector<1x128xf32> to vector<512x128xf32>
    %102 = arith.addf %100, %101 : vector<512x128xf32>
    %103 = arith.addf %102, %1 : vector<512x128xf32>
    %104 = arith.truncf %103 : vector<512x128xf32> to vector<512x128xbf16>
    %c0_40 = arith.constant 0 : index
    %c0_41 = arith.constant 0 : index
    %105 = vector.load %arg5[%c0_40, %c0_41] : memref<128x128xbf16, #tpu.memory_space<vmem>>, vector<128x128xbf16>
    %cst_42 = arith.constant dense<0.000000e+00> : vector<512x128xf32>
    %106 = tpu.matmul %104, %105, %cst_42 {dimension_numbers = #tpu.dot_dimension_numbers<[1], [0], [0], [1], [0, 0, 1, 1], [], []>} : vector<512x128xbf16>, vector<128x128xbf16>, vector<512x128xf32> -> vector<512x128xf32>
    %c0_43 = arith.constant 0 : index
    %c1920 = arith.constant 1920 : index
    %107 = vector.load %arg6[%c0_43, %c1920] : memref<1x2048xf32, #tpu.memory_space<vmem>>, vector<1x128xf32>
    %108 = vector.broadcast %107 : vector<1x128xf32> to vector<512x128xf32>
    %109 = arith.addf %106, %108 : vector<512x128xf32>
    %c0_44 = arith.constant 0 : index
    %c0_45 = arith.constant 0 : index
    %110 = vector.load %arg7[%c0_44, %c0_45] : memref<512x128xf32, #tpu.memory_space<vmem>>, vector<512x128xf32>
    tpu.vector_store %arg7[%c0_44, %c0_45], %109 {strides = array<i32>} : memref<512x128xf32, #tpu.memory_space<vmem>>, vector<512x128xf32>,
    return
  }
  func.func @transform_0(%arg0: i32) -> (i32, i32) {
    %c0_i32 = arith.constant 0 : i32
    %c0_i32_0 = arith.constant 0 : i32
    return %arg0, %c0_i32 : i32, i32
  }
  func.func @transform_1(%arg0: i32) -> (i32, i32) {
    %c0_i32 = arith.constant 0 : i32
    %c0_i32_0 = arith.constant 0 : i32
    %c0_i32_1 = arith.constant 0 : i32
    return %c0_i32, %c0_i32_0 : i32, i32
  }
  func.func @transform_2(%arg0: i32) -> (i32, i32) {
    %c0_i32 = arith.constant 0 : i32
    %c0_i32_0 = arith.constant 0 : i32
    %c0_i32_1 = arith.constant 0 : i32
    return %c0_i32, %c0_i32_0 : i32, i32
  }
  func.func @transform_3(%arg0: i32) -> (i32, i32) {
    %c0_i32 = arith.constant 0 : i32
    %c0_i32_0 = arith.constant 0 : i32
    %c0_i32_1 = arith.constant 0 : i32
    return %c0_i32, %c0_i32_0 : i32, i32
  }
  func.func @transform_4(%arg0: i32) -> (i32, i32) {
    %c0_i32 = arith.constant 0 : i32
    %c0_i32_0 = arith.constant 0 : i32
    %c0_i32_1 = arith.constant 0 : i32
    return %c0_i32, %c0_i32_0 : i32, i32
  }
  func.func @transform_5(%arg0: i32) -> (i32, i32) {
    %c0_i32 = arith.constant 0 : i32
    %c0_i32_0 = arith.constant 0 : i32
    %c0_i32_1 = arith.constant 0 : i32
    return %c0_i32, %c0_i32_0 : i32, i32
  }
  func.func @transform_6(%arg0: i32) -> (i32, i32) {
    %c0_i32 = arith.constant 0 : i32
    %c0_i32_0 = arith.constant 0 : i32
    return %arg0, %c0_i32 : i32, i32
  }
}

</mosaic_0001>

<llo_original>
// kernel: tpu_custom_call.1
$region0: #{tpu_custom_call.1}
  #allocation0 [shape = 'u32[]', space=smem, size = 0x4, offset = 0x4, fixed_abs, tag = 'smem constant byte address 0x4 - core index']
  #allocation1 [shape = 'u32[72,128]{1,0:T(1,128)}', space=vmem, size = 0x9000, scoped, tag = 'internal scratch']
  %s0 = inlined_call_operand.hbm [shape: bf16[512,128], index: 0, kind: input, shape index: {}]
  %s1 = inlined_call_operand.hbm [shape: bf16[128,256], index: 1, kind: input, shape index: {}]
  %s2 = inlined_call_operand.hbm [shape: bf16[256,256], index: 2, kind: input, shape index: {}]
  %s3 = inlined_call_operand.hbm [shape: bf16[256,128], index: 3, kind: input, shape index: {}]
  %s4 = inlined_call_operand.hbm [shape: bf16[128,128], index: 4, kind: input, shape index: {}]
  %s5 = inlined_call_operand.hbm [shape: f32[1,2048], index: 5, kind: input, shape index: {}]
  %s6 = inlined_call_operand.hbm [shape: f32[512,128], index: 6, kind: output, shape index: {}]
  %s7 = sld [smem:[#allocation0]]
  $region58: #{tpu_custom_call.1} parent=0
    _
  %s9 = ssub.s32 1, %s7
  %s10 = scalar_select 0, %s9, %s7
  $region1: #{tpu_custom_call.1} parent=0
    #allocation2 [shape = 'u8[131072]{0}', space=vmem, size = 0x20000, scoped, tag = 'input window, operand 0, single buffered']
    #allocation3 [shape = 's32[1]{0}', space=sflag, size = 0x4, scoped, tag = 'scoped memory for tpu_custom_call.1']
    #allocation4 [shape = 's32[1]{0}', space=sflag, size = 0x4, scoped, tag = 'scoped memory for tpu_custom_call.1']
    #allocation5 [shape = 'u8[65536]{0}', space=vmem, size = 0x10000, scoped, tag = 'input window, operand 1, single buffered']
    #allocation6 [shape = 's32[1]{0}', space=sflag, size = 0x4, scoped, tag = 'scoped memory for tpu_custom_call.1']
    #allocation7 [shape = 'u8[131072]{0}', space=vmem, size = 0x20000, scoped, tag = 'input window, operand 2, single buffered']
    #allocation8 [shape = 'u8[65536]{0}', space=vmem, size = 0x10000, scoped, tag = 'input window, operand 3, single buffered']
    #allocation9 [shape = 's32[1]{0}', space=sflag, size = 0x4, scoped, tag = 'scoped memory for tpu_custom_call.1']
    #allocation10 [shape = 'u8[32768]{0}', space=vmem, size = 0x8000, scoped, tag = 'input window, operand 4, single buffered']
    #allocation11 [shape = 'u8[8192]{0}', space=vmem, size = 0x2000, scoped, tag = 'input window, operand 5, single buffered']
    #allocation12 [shape = 's32[1]{0}', space=sflag, size = 0x4, scoped, tag = 'scoped memory for tpu_custom_call.1']
    #allocation13 [shape = 'u8[262144]{0}', space=vmem, size = 0x40000, scoped, tag = 'output window, operand 0, single buffered']
    %11 = vsyncpa [#allocation3], 0
    %12 = vsyncpa [#allocation6], 0
    %13 = vsyncpa [#allocation9], 0
    %14 = vsyncpa [#allocation12], 0
    %15 = vsyncpa [#allocation4], 0
    // Predicated region
    $region2: #{tpu_custom_call.1} parent=1 // pred_check
      _
    $region3: #{tpu_custom_call.1} parent=1 // pred_check_branch
      %17 = sbr.rel (0) target = $region5
    $region4: #{tpu_custom_call.1} parent=1 // pred_region
      %19 = vsyncadd [#allocation3], 0
      %s20 = sshll.u32 %s0, 4
      %s21 = int_to_ptr.hbm [resolvable:$true] %s20
      %s22 = sshll.u32 [#allocation2], 4
      %s23 = int_to_ptr.vmem [resolvable:$true] %s22
      %28 = dma.hbm_to_vmem [thread:$0]  %s21, 4096, %s23, [#allocation3], 64, 64, 4
    $region5: #{tpu_custom_call.1} parent=1 // pred_fallthru
      _
    // Predicated region
    $region6: #{tpu_custom_call.1} parent=1 // pred_check
      _
    $region7: #{tpu_custom_call.1} parent=1 // pred_check_branch
      %30 = sbr.rel (0) target = $region9
    $region8: #{tpu_custom_call.1} parent=1 // pred_region
      %32 = vsyncadd [#allocation6], 0
      %s33 = sshll.u32 %s1, 4
      %s34 = int_to_ptr.hbm [resolvable:$true] %s33
      %s35 = sshll.u32 [#allocation5], 4
      %s36 = int_to_ptr.vmem [resolvable:$true] %s35
      %41 = dma.hbm_to_vmem [thread:$0]  %s34, 2048, %s36, [#allocation6], 128, 128, 8
    $region9: #{tpu_custom_call.1} parent=1 // pred_fallthru
      _
    // Predicated region
    $region10: #{tpu_custom_call.1} parent=1 // pred_check
      _
    $region11: #{tpu_custom_call.1} parent=1 // pred_check_branch
      %43 = sbr.rel (0) target = $region13
    $region12: #{tpu_custom_call.1} parent=1 // pred_region
      %45 = vsyncadd [#allocation6], 0
      %s46 = sshll.u32 %s2, 4
      %s47 = int_to_ptr.hbm [resolvable:$true] %s46
      %s48 = sshll.u32 [#allocation7], 4
      %s49 = int_to_ptr.vmem [resolvable:$true] %s48
      %54 = dma.hbm_to_vmem [thread:$0]  %s47, 4096, %s49, [#allocation6], 128, 128, 8
    $region13: #{tpu_custom_call.1} parent=1 // pred_fallthru
      _
    // Predicated region
    $region14: #{tpu_custom_call.1} parent=1 // pred_check
      _
    $region15: #{tpu_custom_call.1} parent=1 // pred_check_branch
      %56 = sbr.rel (0) target = $region17
    $region16: #{tpu_custom_call.1} parent=1 // pred_region
      %58 = vsyncadd [#allocation9], 0
      %s59 = sshll.u32 %s3, 4
      %s60 = int_to_ptr.hbm [resolvable:$true] %s59
      %s61 = sshll.u32 [#allocation8], 4
      %s62 = int_to_ptr.vmem [resolvable:$true] %s61
      %67 = dma.hbm_to_vmem [thread:$0]  %s60, 2048, %s62, [#allocation9], 64, 64, 4
    $region17: #{tpu_custom_call.1} parent=1 // pred_fallthru
      _
    // Predicated region
    $region18: #{tpu_custom_call.1} parent=1 // pred_check
      _
    $region19: #{tpu_custom_call.1} parent=1 // pred_check_branch
      %69 = sbr.rel (0) target = $region21
    $region20: #{tpu_custom_call.1} parent=1 // pred_region
      %71 = vsyncadd [#allocation9], 0
      %s72 = sshll.u32 %s4, 4
      %s73 = int_to_ptr.hbm [resolvable:$true] %s72
      %s74 = sshll.u32 [#allocation10], 4
      %s75 = int_to_ptr.vmem [resolvable:$true] %s74
      %80 = dma.hbm_to_vmem [thread:$0]  %s73, 1024, %s75, [#allocation9], 64, 64, 4
    $region21: #{tpu_custom_call.1} parent=1 // pred_fallthru
      _
    // Predicated region
    $region22: #{tpu_custom_call.1} parent=1 // pred_check
      _
    $region23: #{tpu_custom_call.1} parent=1 // pred_check_branch
      %82 = sbr.rel (0) target = $region25
    $region24: #{tpu_custom_call.1} parent=1 // pred_region
      %84 = vsyncadd [#allocation12], 0
      %s86 = sshll.u32 %s5, 4
      %s87 = int_to_ptr.hbm [resolvable:$true] %s86
      %s88 = sshll.u32 [#allocation11], 4
      %s89 = int_to_ptr.vmem [resolvable:$true] %s88
      %91 = dma.hbm_to_vmem [thread:$0]  %s87, 256, %s89, [#allocation12]
    $region25: #{tpu_custom_call.1} parent=1 // pred_fallthru
      _
    // Predicated region
    $region26: #{tpu_custom_call.1} parent=1 // pred_check
      _
    $region27: #{tpu_custom_call.1} parent=1 // pred_check_branch
      %93 = sbr.rel (0) target = $region29
    $region28: #{tpu_custom_call.1} parent=1 // pred_region
      %95 = dma.done [#allocation3], 4096
    $region29: #{tpu_custom_call.1} parent=1 // pred_fallthru
      _
    // Predicated region
    $region30: #{tpu_custom_call.1} parent=1 // pred_check
      _
    $region31: #{tpu_custom_call.1} parent=1 // pred_check_branch
      %97 = sbr.rel (0) target = $region33
    $region32: #{tpu_custom_call.1} parent=1 // pred_region
      %99 = dma.done [#allocation6], 2048
    $region33: #{tpu_custom_call.1} parent=1 // pred_fallthru
      _
    // Predicated region
    $region34: #{tpu_custom_call.1} parent=1 // pred_check
      _
    $region35: #{tpu_custom_call.1} parent=1 // pred_check_branch
      %101 = sbr.rel (0) target = $region37
    $region36: #{tpu_custom_call.1} parent=1 // pred_region
      %103 = dma.done [#allocation6], 4096
    $region37: #{tpu_custom_call.1} parent=1 // pred_fallthru
      _
    // Predicated region
    $region38: #{tpu_custom_call.1} parent=1 // pred_check
      _
    $region39: #{tpu_custom_call.1} parent=1 // pred_check_branch
      %105 = sbr.rel (0) target = $region41
    $region40: #{tpu_custom_call.1} parent=1 // pred_region
      %107 = dma.done [#allocation9], 2048
    $region41: #{tpu_custom_call.1} parent=1 // pred_fallthru
      _
    // Predicated region
    $region42: #{tpu_custom_call.1} parent=1 // pred_check
      _
    $region43: #{tpu_custom_call.1} parent=1 // pred_check_branch
      %109 = sbr.rel (0) target = $region45
    $region44: #{tpu_custom_call.1} parent=1 // pred_region
      %111 = dma.done [#allocation9], 1024
    $region45: #{tpu_custom_call.1} parent=1 // pred_fallthru
      _
    // Predicated region
    $region46: #{tpu_custom_call.1} parent=1 // pred_check
      _
    $region47: #{tpu_custom_call.1} parent=1 // pred_check_branch
      %113 = sbr.rel (0) target = $region49
    $region48: #{tpu_custom_call.1} parent=1 // pred_region
      %115 = dma.done [#allocation12], 256
    $region49: #{tpu_custom_call.1} parent=1 // pred_fallthru
      _
    %v116 = vld [vmem:[#allocation2] sm:$0xf]
    %v117 = vld [vmem:[#allocation2 + $0x4] sm:$0xf]
    %v118 = vld [vmem:[#allocation2 + $0x8] sm:$0xf]
    %v119 = vld [vmem:[#allocation2 + $0xc] sm:$0xf]
    %v120 = vld [vmem:[#allocation2 + $0x10] sm:$0xf]
    %v121 = vld [vmem:[#allocation2 + $0x14] sm:$0xf]
    %v122 = vld [vmem:[#allocation2 + $0x18] sm:$0xf]
    %v123 = vld [vmem:[#allocation2 + $0x1c] sm:$0xf]
    %v124 = vld [vmem:[#allocation2 + $0x20] sm:$0xf]
    %v125 = vld [vmem:[#allocation2 + $0x24] sm:$0xf]
    %v126 = vld [vmem:[#allocation2 + $0x28] sm:$0xf]
    %v127 = vld [vmem:[#allocation2 + $0x2c] sm:$0xf]
    %v128 = vld [vmem:[#allocation2 + $0x30] sm:$0xf]
    %v129 = vld [vmem:[#allocation2 + $0x34] sm:$0xf]
    %v130 = vld [vmem:[#allocation2 + $0x38] sm:$0xf]
    %v131 = vld [vmem:[#allocation2 + $0x3c] sm:$0xf]
    %v132 = vld [vmem:[#allocation2 + $0x40] sm:$0xf]
    %v133 = vld [vmem:[#allocation2 + $0x44] sm:$0xf]
    %v134 = vld [vmem:[#allocation2 + $0x48] sm:$0xf]
    %v135 = vld [vmem:[#allocation2 + $0x4c] sm:$0xf]
    %v136 = vld [vmem:[#allocation2 + $0x50] sm:$0xf]
    %v137 = vld [vmem:[#allocation2 + $0x54] sm:$0xf]
    %v138 = vld [vmem:[#allocation2 + $0x58] sm:$0xf]
    %v139 = vld [vmem:[#allocation2 + $0x5c] sm:$0xf]
    %v140 = vld [vmem:[#allocation2 + $0x60] sm:$0xf]
    %v141 = vld [vmem:[#allocation2 + $0x64] sm:$0xf]
    %v142 = vld [vmem:[#allocation2 + $0x68] sm:$0xf]
    %v143 = vld [vmem:[#allocation2 + $0x6c] sm:$0xf]
    %v144 = vld [vmem:[#allocation2 + $0x70] sm:$0xf]
    %v145 = vld [vmem:[#allocation2 + $0x74] sm:$0xf]
    %v146 = vld [vmem:[#allocation2 + $0x78] sm:$0xf]
    %v147 = vld [vmem:[#allocation2 + $0x7c] sm:$0xf]
    %v148 = vld [vmem:[#allocation2 + $0x80] sm:$0xf]
    %v149 = vld [vmem:[#allocation2 + $0x84] sm:$0xf]
    %v150 = vld [vmem:[#allocation2 + $0x88] sm:$0xf]
    %v151 = vld [vmem:[#allocation2 + $0x8c] sm:$0xf]
    %v152 = vld [vmem:[#allocation2 + $0x90] sm:$0xf]
    %v153 = vld [vmem:[#allocation2 + $0x94] sm:$0xf]
    %v154 = vld [vmem:[#allocation2 + $0x98] sm:$0xf]
    %v155 = vld [vmem:[#allocation2 + $0x9c] sm:$0xf]
    %v156 = vld [vmem:[#allocation2 + $0xa0] sm:$0xf]
    %v157 = vld [vmem:[#allocation2 + $0xa4] sm:$0xf]
    %v158 = vld [vmem:[#allocation2 + $0xa8] sm:$0xf]
    %v159 = vld [vmem:[#allocation2 + $0xac] sm:$0xf]
    %v160 = vld [vmem:[#allocation2 + $0xb0] sm:$0xf]
    %v161 = vld [vmem:[#allocation2 + $0xb4] sm:$0xf]
    %v162 = vld [vmem:[#allocation2 + $0xb8] sm:$0xf]
    %v163 = vld [vmem:[#allocation2 + $0xbc] sm:$0xf]
    %v164 = vld [vmem:[#allocation2 + $0xc0] sm:$0xf]
    %v165 = vld [vmem:[#allocation2 + $0xc4] sm:$0xf]
    %v166 = vld [vmem:[#allocation2 + $0xc8] sm:$0xf]
    %v167 = vld [vmem:[#allocation2 + $0xcc] sm:$0xf]
    %v168 = vld [vmem:[#allocation2 + $0xd0] sm:$0xf]
    %v169 = vld [vmem:[#allocation2 + $0xd4] sm:$0xf]
    %v170 = vld [vmem:[#allocation2 + $0xd8] sm:$0xf]
    %v171 = vld [vmem:[#allocation2 + $0xdc] sm:$0xf]
    %v172 = vld [vmem:[#allocation2 + $0xe0] sm:$0xf]
    %v173 = vld [vmem:[#allocation2 + $0xe4] sm:$0xf]
    %v174 = vld [vmem:[#allocation2 + $0xe8] sm:$0xf]
    %v175 = vld [vmem:[#allocation2 + $0xec] sm:$0xf]
    %v176 = vld [vmem:[#allocation2 + $0xf0] sm:$0xf]
    %v177 = vld [vmem:[#allocation2 + $0xf4] sm:$0xf]
    %v178 = vld [vmem:[#allocation2 + $0xf8] sm:$0xf]
    %v179 = vld [vmem:[#allocation2 + $0xfc] sm:$0xf]
    %v180 = vunpack.c.l.bf16 %v116
    %v181 = vunpack.c.l.bf16 %v117
    %v182 = vunpack.c.l.bf16 %v118
    %v183 = vunpack.c.l.bf16 %v119
    %v184 = vunpack.c.l.bf16 %v120
    %v185 = vunpack.c.l.bf16 %v121
    %v186 = vunpack.c.l.bf16 %v122
    %v187 = vunpack.c.l.bf16 %v123
    %v188 = vunpack.c.l.bf16 %v124
    %v189 = vunpack.c.l.bf16 %v125
    %v190 = vunpack.c.l.bf16 %v126
    %v191 = vunpack.c.l.bf16 %v127
    %v192 = vunpack.c.l.bf16 %v128
    %v193 = vunpack.c.l.bf16 %v129
    %v194 = vunpack.c.l.bf16 %v130
    %v195 = vunpack.c.l.bf16 %v131
    %v196 = vunpack.c.l.bf16 %v132
    %v197 = vunpack.c.l.bf16 %v133
    %v198 = vunpack.c.l.bf16 %v134
    %v199 = vunpack.c.l.bf16 %v135
    %v200 = vunpack.c.l.bf16 %v136
    %v201 = vunpack.c.l.bf16 %v137
    %v202 = vunpack.c.l.bf16 %v138
    %v203 = vunpack.c.l.bf16 %v139
    %v204 = vunpack.c.l.bf16 %v140
    %v205 = vunpack.c.l.bf16 %v141
    %v206 = vunpack.c.l.bf16 %v142
    %v207 = vunpack.c.l.bf16 %v143
    %v208 = vunpack.c.l.bf16 %v144
    %v209 = vunpack.c.l.bf16 %v145
    %v210 = vunpack.c.l.bf16 %v146
    %v211 = vunpack.c.l.bf16 %v147
    %v212 = vunpack.c.l.bf16 %v148
    %v213 = vunpack.c.l.bf16 %v149
    %v214 = vunpack.c.l.bf16 %v150
    %v215 = vunpack.c.l.bf16 %v151
    %v216 = vunpack.c.l.bf16 %v152
    %v217 = vunpack.c.l.bf16 %v153
    %v218 = vunpack.c.l.bf16 %v154
    %v219 = vunpack.c.l.bf16 %v155
    %v220 = vunpack.c.l.bf16 %v156
    %v221 = vunpack.c.l.bf16 %v157
    %v222 = vunpack.c.l.bf16 %v158
    %v223 = vunpack.c.l.bf16 %v159
    %v224 = vunpack.c.l.bf16 %v160
    %v225 = vunpack.c.l.bf16 %v161
    %v226 = vunpack.c.l.bf16 %v162
    %v227 = vunpack.c.l.bf16 %v163
    %v228 = vunpack.c.l.bf16 %v164
    %v229 = vunpack.c.l.bf16 %v165
    %v230 = vunpack.c.l.bf16 %v166
    %v231 = vunpack.c.l.bf16 %v167
    %v232 = vunpack.c.l.bf16 %v168
    %v233 = vunpack.c.l.bf16 %v169
    %v234 = vunpack.c.l.bf16 %v170
    %v235 = vunpack.c.l.bf16 %v171
    %v236 = vunpack.c.l.bf16 %v172
    %v237 = vunpack.c.l.bf16 %v173
    %v238 = vunpack.c.l.bf16 %v174
    %v239 = vunpack.c.l.bf16 %v175
    %v240 = vunpack.c.l.bf16 %v176
    %v241 = vunpack.c.l.bf16 %v177
    %v242 = vunpack.c.l.bf16 %v178
    %v243 = vunpack.c.l.bf16 %v179
    %v244 = vld [vmem:[#allocation5] sm:$0xff]
    %v245 = vld [vmem:[#allocation5 + $0x8] sm:$0xff]
    %v246 = vld [vmem:[#allocation5 + $0x10] sm:$0xff]
    %v247 = vld [vmem:[#allocation5 + $0x18] sm:$0xff]
    %v248 = vld [vmem:[#allocation5 + $0x20] sm:$0xff]
    %v249 = vld [vmem:[#allocation5 + $0x28] sm:$0xff]
    %v250 = vld [vmem:[#allocation5 + $0x30] sm:$0xff]
    %v251 = vld [vmem:[#allocation5 + $0x38] sm:$0xff]
    %v252 = vld [vmem:[#allocation5 + $0x40] sm:$0xff]
    %v253 = vld [vmem:[#allocation5 + $0x48] sm:$0xff]
    %v254 = vld [vmem:[#allocation5 + $0x50] sm:$0xff]
    %v255 = vld [vmem:[#allocation5 + $0x58] sm:$0xff]
    %v256 = vld [vmem:[#allocation5 + $0x60] sm:$0xff]
    %v257 = vld [vmem:[#allocation5 + $0x68] sm:$0xff]
    %v258 = vld [vmem:[#allocation5 + $0x70] sm:$0xff]
    %v259 = vld [vmem:[#allocation5 + $0x78] sm:$0xff]
    %v260 = vld [vmem:[#allocation11] sm:$0x3]
    %v262 = vperm.slane %v260, 0
    %v263 = vperm.slane %v260, 1
    %v330 = vunpack.c.l.b16 %v116
    %v331 = vunpack.c.l.b16 %v117
    %v332 = vunpack.c.l.b16 %v118
    %v333 = vunpack.c.l.b16 %v119
    %v334 = vunpack.c.l.b16 %v120
    %v335 = vunpack.c.l.b16 %v121
    %v336 = vunpack.c.l.b16 %v122
    %v337 = vunpack.c.l.b16 %v123
    %v338 = vunpack.c.l.b16 %v124
    %v339 = vunpack.c.l.b16 %v125
    %v340 = vunpack.c.l.b16 %v126
    %v341 = vunpack.c.l.b16 %v127
    %v342 = vunpack.c.l.b16 %v128
    %v343 = vunpack.c.l.b16 %v129
    %v344 = vunpack.c.l.b16 %v130
    %v345 = vunpack.c.l.b16 %v131
    %v346 = vunpack.c.l.b16 %v132
    %v347 = vunpack.c.l.b16 %v133
    %v348 = vunpack.c.l.b16 %v134
    %v349 = vunpack.c.l.b16 %v135
    %v350 = vunpack.c.l.b16 %v136
    %v351 = vunpack.c.l.b16 %v137
    %v352 = vunpack.c.l.b16 %v138
    %v353 = vunpack.c.l.b16 %v139
    %v354 = vunpack.c.l.b16 %v140
    %v355 = vunpack.c.l.b16 %v141
    %v356 = vunpack.c.l.b16 %v142
    %v357 = vunpack.c.l.b16 %v143
    %v358 = vunpack.c.l.b16 %v144
    %v359 = vunpack.c.l.b16 %v145
    %v360 = vunpack.c.l.b16 %v146
    %v361 = vunpack.c.l.b16 %v147
    %v362 = vunpack.c.l.b16 %v148
    %v363 = vunpack.c.l.b16 %v149
    %v364 = vunpack.c.l.b16 %v150
    %v365 = vunpack.c.l.b16 %v151
    %v366 = vunpack.c.l.b16 %v152
    %v367 = vunpack.c.l.b16 %v153
    %v368 = vunpack.c.l.b16 %v154
    %v369 = vunpack.c.l.b16 %v155
    %v370 = vunpack.c.l.b16 %v156
    %v371 = vunpack.c.l.b16 %v157
    %v372 = vunpack.c.l.b16 %v158
    %v373 = vunpack.c.l.b16 %v159
    %v374 = vunpack.c.l.b16 %v160
    %v375 = vunpack.c.l.b16 %v161
    %v376 = vunpack.c.l.b16 %v162
    %v377 = vunpack.c.l.b16 %v163
    %v378 = vunpack.c.l.b16 %v164
    %v379 = vunpack.c.l.b16 %v165
    %v380 = vunpack.c.l.b16 %v166
    %v381 = vunpack.c.l.b16 %v167
    %v382 = vunpack.c.l.b16 %v168
    %v383 = vunpack.c.l.b16 %v169
    %v384 = vunpack.c.l.b16 %v170
    %v385 = vunpack.c.l.b16 %v171
    %v386 = vunpack.c.l.b16 %v172
    %v387 = vunpack.c.l.b16 %v173
    %v388 = vunpack.c.l.b16 %v174
    %v389 = vunpack.c.l.b16 %v175
    %v390 = vunpack.c.l.b16 %v176
    %v391 = vunpack.c.l.b16 %v177
    %v392 = vunpack.c.l.b16 %v178
    %v393 = vunpack.c.l.b16 %v179
    %v394 = vpack.c.b16 %v331, %v330
    %v395 = vpack.c.b16 %v333, %v332
    %v396 = vpack.c.b16 %v335, %v334
    %v397 = vpack.c.b16 %v337, %v336
    %v398 = vpack.c.b16 %v339, %v338
    %v399 = vpack.c.b16 %v341, %v340
    %v400 = vpack.c.b16 %v343, %v342
    %v401 = vpack.c.b16 %v345, %v344
    %v402 = vpack.c.b16 %v347, %v346
    %v403 = vpack.c.b16 %v349, %v348
    %v404 = vpack.c.b16 %v351, %v350
    %v405 = vpack.c.b16 %v353, %v352
    %v406 = vpack.c.b16 %v355, %v354
    %v407 = vpack.c.b16 %v357, %v356
    %v408 = vpack.c.b16 %v359, %v358
    %v409 = vpack.c.b16 %v361, %v360
    %v410 = vpack.c.b16 %v363, %v362
    %v411 = vpack.c.b16 %v365, %v364
    %v412 = vpack.c.b16 %v367, %v366
    %v413 = vpack.c.b16 %v369, %v368
    %v414 = vpack.c.b16 %v371, %v370
    %v415 = vpack.c.b16 %v373, %v372
    %v416 = vpack.c.b16 %v375, %v374
    %v417 = vpack.c.b16 %v377, %v376
    %v418 = vpack.c.b16 %v379, %v378
    %v419 = vpack.c.b16 %v381, %v380
    %v420 = vpack.c.b16 %v383, %v382
    %v421 = vpack.c.b16 %v385, %v384
    %v422 = vpack.c.b16 %v387, %v386
    %v423 = vpack.c.b16 %v389, %v388
    %v424 = vpack.c.b16 %v391, %v390
    %v425 = vpack.c.b16 %v393, %v392
    %v474 = vunpack.c.l.b16 %v244
    %v475 = vunpack.c.h.b16 %v244
    %v476 = vunpack.c.l.b16 %v245
    %v477 = vunpack.c.h.b16 %v245
    %v478 = vunpack.c.l.b16 %v246
    %v479 = vunpack.c.h.b16 %v246
    %v480 = vunpack.c.l.b16 %v247
    %v481 = vunpack.c.h.b16 %v247
    %v482 = vunpack.c.l.b16 %v248
    %v483 = vunpack.c.h.b16 %v248
    %v484 = vunpack.c.l.b16 %v249
    %v485 = vunpack.c.h.b16 %v249
    %v486 = vunpack.c.l.b16 %v250
    %v487 = vunpack.c.h.b16 %v250
    %v488 = vunpack.c.l.b16 %v251
    %v489 = vunpack.c.h.b16 %v251
    %v490 = vunpack.c.l.b16 %v252
    %v491 = vunpack.c.h.b16 %v252
    %v492 = vunpack.c.l.b16 %v253
    %v493 = vunpack.c.h.b16 %v253
    %v494 = vunpack.c.l.b16 %v254
    %v495 = vunpack.c.h.b16 %v254
    %v496 = vunpack.c.l.b16 %v255
    %v497 = vunpack.c.h.b16 %v255
    %v498 = vunpack.c.l.b16 %v256
    %v499 = vunpack.c.h.b16 %v256
    %v500 = vunpack.c.l.b16 %v257
    %v501 = vunpack.c.h.b16 %v257
    %v502 = vunpack.c.l.b16 %v258
    %v503 = vunpack.c.h.b16 %v258
    %v504 = vunpack.c.l.b16 %v259
    %v505 = vunpack.c.h.b16 %v259
    %v506 = vpack.c.b16 %v476, %v474
    %v507 = vpack.c.b16 %v477, %v475
    %v508 = vpack.c.b16 %v480, %v478
    %v509 = vpack.c.b16 %v481, %v479
    %v510 = vpack.c.b16 %v484, %v482
    %v511 = vpack.c.b16 %v485, %v483
    %v512 = vpack.c.b16 %v488, %v486
    %v513 = vpack.c.b16 %v489, %v487
    %v514 = vpack.c.b16 %v492, %v490
    %v515 = vpack.c.b16 %v493, %v491
    %v516 = vpack.c.b16 %v496, %v494
    %v517 = vpack.c.b16 %v497, %v495
    %v518 = vpack.c.b16 %v500, %v498
    %v519 = vpack.c.b16 %v501, %v499
    %v520 = vpack.c.b16 %v504, %v502
    %v521 = vpack.c.b16 %v505, %v503
    %538 = vmatpush.bf16.msra.mxu0 %v520
    %539 = vmatpush.bf16.msra.mxu0 %v518
    %540 = vmatpush.bf16.msra.mxu0 %v516
    %541 = vmatpush.bf16.msra.mxu0 %v514
    %542 = vmatpush.bf16.msra.mxu0 %v512
    %543 = vmatpush.bf16.msra.mxu0 %v510
    %544 = vmatpush.bf16.msra.mxu0 %v508
    %545 = vmatpush.bf16.msra.mxu0 %v506
    %546 = vmatmul.bf16.gmra.mxu0 %v394
    %v547 = vpop.f32.mrf.mxu0
    %v548 = vadd.f32 %v262, %v547
    %v549 = vpop.f32.mrf.mxu0
    %v550 = vadd.f32 %v262, %v549
    %551 = vmatmul.bf16.gmra.mxu0 %v395
    %v552 = vpop.f32.mrf.mxu0
    %v553 = vadd.f32 %v262, %v552
    %v554 = vpop.f32.mrf.mxu0
    %v555 = vadd.f32 %v262, %v554
    %556 = vmatmul.bf16.gmra.mxu0 %v396
    %v557 = vpop.f32.mrf.mxu0
    %v558 = vadd.f32 %v262, %v557
    %v559 = vpop.f32.mrf.mxu0
    %v560 = vadd.f32 %v262, %v559
    %561 = vmatmul.bf16.gmra.mxu0 %v397
    %v562 = vpop.f32.mrf.mxu0
    %v563 = vadd.f32 %v262, %v562
    %v564 = vpop.f32.mrf.mxu0
    %v565 = vadd.f32 %v262, %v564
    %566 = vmatmul.bf16.gmra.mxu0 %v398
    %v567 = vpop.f32.mrf.mxu0
    %v568 = vadd.f32 %v262, %v567
    %v569 = vpop.f32.mrf.mxu0
    %v570 = vadd.f32 %v262, %v569
    %571 = vmatmul.bf16.gmra.mxu0 %v399
    %v572 = vpop.f32.mrf.mxu0
    %v573 = vadd.f32 %v262, %v572
    %v574 = vpop.f32.mrf.mxu0
    %v575 = vadd.f32 %v262, %v574
    %576 = vmatmul.bf16.gmra.mxu0 %v400
    %v577 = vpop.f32.mrf.mxu0
    %v578 = vadd.f32 %v262, %v577
    %v579 = vpop.f32.mrf.mxu0
    %v580 = vadd.f32 %v262, %v579
    %581 = vmatmul.bf16.gmra.mxu0 %v401
    %v582 = vpop.f32.mrf.mxu0
    %v583 = vadd.f32 %v262, %v582
    %v584 = vpop.f32.mrf.mxu0
    %v585 = vadd.f32 %v262, %v584
    %586 = vmatmul.bf16.gmra.mxu0 %v402
    %v587 = vpop.f32.mrf.mxu0
    %v588 = vadd.f32 %v262, %v587
    %v589 = vpop.f32.mrf.mxu0
    %v590 = vadd.f32 %v262, %v589
    %591 = vmatmul.bf16.gmra.mxu0 %v403
    %v592 = vpop.f32.mrf.mxu0
    %v593 = vadd.f32 %v262, %v592
    %v594 = vpop.f32.mrf.mxu0
    %v595 = vadd.f32 %v262, %v594
    %596 = vmatmul.bf16.gmra.mxu0 %v404
    %v597 = vpop.f32.mrf.mxu0
    %v598 = vadd.f32 %v262, %v597
    %v599 = vpop.f32.mrf.mxu0
    %v600 = vadd.f32 %v262, %v599
    %601 = vmatmul.bf16.gmra.mxu0 %v405
    %v602 = vpop.f32.mrf.mxu0
    %v603 = vadd.f32 %v262, %v602
    %v604 = vpop.f32.mrf.mxu0
    %v605 = vadd.f32 %v262, %v604
    %606 = vmatmul.bf16.gmra.mxu0 %v406
    %v607 = vpop.f32.mrf.mxu0
    %v608 = vadd.f32 %v262, %v607
    %v609 = vpop.f32.mrf.mxu0
    %v610 = vadd.f32 %v262, %v609
    %611 = vmatmul.bf16.gmra.mxu0 %v407
    %v612 = vpop.f32.mrf.mxu0
    %v613 = vadd.f32 %v262, %v612
    %v614 = vpop.f32.mrf.mxu0
    %v615 = vadd.f32 %v262, %v614
    %616 = vmatmul.bf16.gmra.mxu0 %v408
    %v617 = vpop.f32.mrf.mxu0
    %v618 = vadd.f32 %v262, %v617
    %v619 = vpop.f32.mrf.mxu0
    %v620 = vadd.f32 %v262, %v619
    %621 = vmatmul.bf16.gmra.mxu0 %v409
    %v622 = vpop.f32.mrf.mxu0
    %v623 = vadd.f32 %v262, %v622
    %v624 = vpop.f32.mrf.mxu0
    %v625 = vadd.f32 %v262, %v624
    %626 = vmatmul.bf16.gmra.mxu0 %v410
    %v627 = vpop.f32.mrf.mxu0
    %v628 = vadd.f32 %v262, %v627
    %v629 = vpop.f32.mrf.mxu0
    %v630 = vadd.f32 %v262, %v629
    %631 = vmatmul.bf16.gmra.mxu0 %v411
    %v632 = vpop.f32.mrf.mxu0
    %v633 = vadd.f32 %v262, %v632
    %v634 = vpop.f32.mrf.mxu0
    %v635 = vadd.f32 %v262, %v634
    %636 = vmatmul.bf16.gmra.mxu0 %v412
    %v637 = vpop.f32.mrf.mxu0
    %v638 = vadd.f32 %v262, %v637
    %v639 = vpop.f32.mrf.mxu0
    %v640 = vadd.f32 %v262, %v639
    %641 = vmatmul.bf16.gmra.mxu0 %v413
    %v642 = vpop.f32.mrf.mxu0
    %v643 = vadd.f32 %v262, %v642
    %v644 = vpop.f32.mrf.mxu0
    %v645 = vadd.f32 %v262, %v644
    %646 = vmatmul.bf16.gmra.mxu0 %v414
    %v647 = vpop.f32.mrf.mxu0
    %v648 = vadd.f32 %v262, %v647
    %v649 = vpop.f32.mrf.mxu0
    %v650 = vadd.f32 %v262, %v649
    %651 = vmatmul.bf16.gmra.mxu0 %v415
    %v652 = vpop.f32.mrf.mxu0
    %v653 = vadd.f32 %v262, %v652
    %v654 = vpop.f32.mrf.mxu0
    %v655 = vadd.f32 %v262, %v654
    %656 = vmatmul.bf16.gmra.mxu0 %v416
    %v657 = vpop.f32.mrf.mxu0
    %v658 = vadd.f32 %v262, %v657
    %v659 = vpop.f32.mrf.mxu0
    %v660 = vadd.f32 %v262, %v659
    %661 = vmatmul.bf16.gmra.mxu0 %v417
    %v662 = vpop.f32.mrf.mxu0
    %v663 = vadd.f32 %v262, %v662
    %v664 = vpop.f32.mrf.mxu0
    %v665 = vadd.f32 %v262, %v664
    %666 = vmatmul.bf16.gmra.mxu0 %v418
    %v667 = vpop.f32.mrf.mxu0
    %v668 = vadd.f32 %v262, %v667
    %v669 = vpop.f32.mrf.mxu0
    %v670 = vadd.f32 %v262, %v669
    %671 = vmatmul.bf16.gmra.mxu0 %v419
    %v672 = vpop.f32.mrf.mxu0
    %v673 = vadd.f32 %v262, %v672
    %v674 = vpop.f32.mrf.mxu0
    %v675 = vadd.f32 %v262, %v674
    %676 = vmatmul.bf16.gmra.mxu0 %v420
    %v677 = vpop.f32.mrf.mxu0
    %v678 = vadd.f32 %v262, %v677
    %v679 = vpop.f32.mrf.mxu0
    %v680 = vadd.f32 %v262, %v679
    %681 = vmatmul.bf16.gmra.mxu0 %v421
    %v682 = vpop.f32.mrf.mxu0
    %v683 = vadd.f32 %v262, %v682
    %v684 = vpop.f32.mrf.mxu0
    %v685 = vadd.f32 %v262, %v684
    %686 = vmatmul.bf16.gmra.mxu0 %v422
    %v687 = vpop.f32.mrf.mxu0
    %v688 = vadd.f32 %v262, %v687
    %v689 = vpop.f32.mrf.mxu0
    %v690 = vadd.f32 %v262, %v689
    %691 = vmatmul.bf16.gmra.mxu0 %v423
    %v692 = vpop.f32.mrf.mxu0
    %v693 = vadd.f32 %v262, %v692
    %v694 = vpop.f32.mrf.mxu0
    %v695 = vadd.f32 %v262, %v694
    %696 = vmatmul.bf16.gmra.mxu0 %v424
    %v697 = vpop.f32.mrf.mxu0
    %v698 = vadd.f32 %v262, %v697
    %v699 = vpop.f32.mrf.mxu0
    %v700 = vadd.f32 %v262, %v699
    %701 = vmatmul.bf16.gmra.mxu0 %v425
    %v702 = vpop.f32.mrf.mxu0
    %v703 = vadd.f32 %v262, %v702
    %v704 = vpop.f32.mrf.mxu0
    %v705 = vadd.f32 %v262, %v704
    %706 = vdwg.mxu0
    %707 = vmatpush.bf16.msra.mxu0 %v521
    %708 = vmatpush.bf16.msra.mxu0 %v519
    %709 = vmatpush.bf16.msra.mxu0 %v517
    %710 = vmatpush.bf16.msra.mxu0 %v515
    %711 = vmatpush.bf16.msra.mxu0 %v513
    %712 = vmatpush.bf16.msra.mxu0 %v511
    %713 = vmatpush.bf16.msra.mxu0 %v509
    %714 = vmatpush.bf16.msra.mxu0 %v507
    %715 = vmatmul.bf16.gmra.mxu0 %v394
    %v716 = vpop.f32.mrf.mxu0
    %v717 = vadd.f32 %v263, %v716
    %v718 = vpop.f32.mrf.mxu0
    %v719 = vadd.f32 %v263, %v718
    %720 = vmatmul.bf16.gmra.mxu0 %v395
    %v721 = vpop.f32.mrf.mxu0
    %v722 = vadd.f32 %v263, %v721
    %v723 = vpop.f32.mrf.mxu0
    %v724 = vadd.f32 %v263, %v723
    %725 = vmatmul.bf16.gmra.mxu0 %v396
    %v726 = vpop.f32.mrf.mxu0
    %v727 = vadd.f32 %v263, %v726
    %v728 = vpop.f32.mrf.mxu0
    %v729 = vadd.f32 %v263, %v728
    %730 = vmatmul.bf16.gmra.mxu0 %v397
    %v731 = vpop.f32.mrf.mxu0
    %v732 = vadd.f32 %v263, %v731
    %v733 = vpop.f32.mrf.mxu0
    %v734 = vadd.f32 %v263, %v733
    %735 = vmatmul.bf16.gmra.mxu0 %v398
    %v736 = vpop.f32.mrf.mxu0
    %v737 = vadd.f32 %v263, %v736
    %v738 = vpop.f32.mrf.mxu0
    %v739 = vadd.f32 %v263, %v738
    %740 = vmatmul.bf16.gmra.mxu0 %v399
    %v741 = vpop.f32.mrf.mxu0
    %v742 = vadd.f32 %v263, %v741
    %v743 = vpop.f32.mrf.mxu0
    %v744 = vadd.f32 %v263, %v743
    %745 = vmatmul.bf16.gmra.mxu0 %v400
    %v746 = vpop.f32.mrf.mxu0
    %v747 = vadd.f32 %v263, %v746
    %v748 = vpop.f32.mrf.mxu0
    %v749 = vadd.f32 %v263, %v748
    %750 = vmatmul.bf16.gmra.mxu0 %v401
    %v751 = vpop.f32.mrf.mxu0
    %v752 = vadd.f32 %v263, %v751
    %v753 = vpop.f32.mrf.mxu0
    %v754 = vadd.f32 %v263, %v753
    %755 = vmatmul.bf16.gmra.mxu0 %v402
    %v756 = vpop.f32.mrf.mxu0
    %v757 = vadd.f32 %v263, %v756
    %v758 = vpop.f32.mrf.mxu0
    %v759 = vadd.f32 %v263, %v758
    %760 = vmatmul.bf16.gmra.mxu0 %v403
    %v761 = vpop.f32.mrf.mxu0
    %v762 = vadd.f32 %v263, %v761
    %v763 = vpop.f32.mrf.mxu0
    %v764 = vadd.f32 %v263, %v763
    %765 = vmatmul.bf16.gmra.mxu0 %v404
    %v766 = vpop.f32.mrf.mxu0
    %v767 = vadd.f32 %v263, %v766
    %v768 = vpop.f32.mrf.mxu0
    %v769 = vadd.f32 %v263, %v768
    %770 = vmatmul.bf16.gmra.mxu0 %v405
    %v771 = vpop.f32.mrf.mxu0
    %v772 = vadd.f32 %v263, %v771
    %v773 = vpop.f32.mrf.mxu0
    %v774 = vadd.f32 %v263, %v773
    %775 = vmatmul.bf16.gmra.mxu0 %v406
    %v776 = vpop.f32.mrf.mxu0
    %v777 = vadd.f32 %v263, %v776
    %v778 = vpop.f32.mrf.mxu0
    %v779 = vadd.f32 %v263, %v778
    %780 = vmatmul.bf16.gmra.mxu0 %v407
    %v781 = vpop.f32.mrf.mxu0
    %v782 = vadd.f32 %v263, %v781
    %v783 = vpop.f32.mrf.mxu0
    %v784 = vadd.f32 %v263, %v783
    %785 = vmatmul.bf16.gmra.mxu0 %v408
    %v786 = vpop.f32.mrf.mxu0
    %v787 = vadd.f32 %v263, %v786
    %v788 = vpop.f32.mrf.mxu0
    %v789 = vadd.f32 %v263, %v788
    %790 = vmatmul.bf16.gmra.mxu0 %v409
    %v791 = vpop.f32.mrf.mxu0
    %v792 = vadd.f32 %v263, %v791
    %v793 = vpop.f32.mrf.mxu0
    %v794 = vadd.f32 %v263, %v793
    %795 = vmatmul.bf16.gmra.mxu0 %v410
    %v796 = vpop.f32.mrf.mxu0
    %v797 = vadd.f32 %v263, %v796
    %v798 = vpop.f32.mrf.mxu0
    %v799 = vadd.f32 %v263, %v798
    %800 = vmatmul.bf16.gmra.mxu0 %v411
    %v801 = vpop.f32.mrf.mxu0
    %v802 = vadd.f32 %v263, %v801
    %v803 = vpop.f32.mrf.mxu0
    %v804 = vadd.f32 %v263, %v803
    %805 = vmatmul.bf16.gmra.mxu0 %v412
    %v806 = vpop.f32.mrf.mxu0
    %v807 = vadd.f32 %v263, %v806
    %v808 = vpop.f32.mrf.mxu0
    %v809 = vadd.f32 %v263, %v808
    %810 = vmatmul.bf16.gmra.mxu0 %v413
    %v811 = vpop.f32.mrf.mxu0
    %v812 = vadd.f32 %v263, %v811
    %v813 = vpop.f32.mrf.mxu0
    %v814 = vadd.f32 %v263, %v813
    %815 = vmatmul.bf16.gmra.mxu0 %v414
    %v816 = vpop.f32.mrf.mxu0
    %v817 = vadd.f32 %v263, %v816
    %v818 = vpop.f32.mrf.mxu0
    %v819 = vadd.f32 %v263, %v818
    %820 = vmatmul.bf16.gmra.mxu0 %v415
    %v821 = vpop.f32.mrf.mxu0
    %v822 = vadd.f32 %v263, %v821
    %v823 = vpop.f32.mrf.mxu0
    %v824 = vadd.f32 %v263, %v823
    %825 = vmatmul.bf16.gmra.mxu0 %v416
    %v826 = vpop.f32.mrf.mxu0
    %v827 = vadd.f32 %v263, %v826
    %v828 = vpop.f32.mrf.mxu0
    %v829 = vadd.f32 %v263, %v828
    %830 = vmatmul.bf16.gmra.mxu0 %v417
    %v831 = vpop.f32.mrf.mxu0
    %v832 = vadd.f32 %v263, %v831
    %v833 = vpop.f32.mrf.mxu0
    %v834 = vadd.f32 %v263, %v833
    %835 = vmatmul.bf16.gmra.mxu0 %v418
    %v836 = vpop.f32.mrf.mxu0
    %v837 = vadd.f32 %v263, %v836
    %v838 = vpop.f32.mrf.mxu0
    %v839 = vadd.f32 %v263, %v838
    %840 = vmatmul.bf16.gmra.mxu0 %v419
    %v841 = vpop.f32.mrf.mxu0
    %v842 = vadd.f32 %v263, %v841
    %v843 = vpop.f32.mrf.mxu0
    %v844 = vadd.f32 %v263, %v843
    %845 = vmatmul.bf16.gmra.mxu0 %v420
    %v846 = vpop.f32.mrf.mxu0
    %v847 = vadd.f32 %v263, %v846
    %v848 = vpop.f32.mrf.mxu0
    %v849 = vadd.f32 %v263, %v848
    %850 = vmatmul.bf16.gmra.mxu0 %v421
    %v851 = vpop.f32.mrf.mxu0
    %v852 = vadd.f32 %v263, %v851
    %v853 = vpop.f32.mrf.mxu0
    %v854 = vadd.f32 %v263, %v853
    %855 = vmatmul.bf16.gmra.mxu0 %v422
    %v856 = vpop.f32.mrf.mxu0
    %v857 = vadd.f32 %v263, %v856
    %v858 = vpop.f32.mrf.mxu0
    %v859 = vadd.f32 %v263, %v858
    %860 = vmatmul.bf16.gmra.mxu0 %v423
    %v861 = vpop.f32.mrf.mxu0
    %v862 = vadd.f32 %v263, %v861
    %v863 = vpop.f32.mrf.mxu0
    %v864 = vadd.f32 %v263, %v863
    %865 = vmatmul.bf16.gmra.mxu0 %v424
    %v866 = vpop.f32.mrf.mxu0
    %v867 = vadd.f32 %v263, %v866
    %v868 = vpop.f32.mrf.mxu0
    %v869 = vadd.f32 %v263, %v868
    %870 = vmatmul.bf16.gmra.mxu0 %v425
    %v871 = vpop.f32.mrf.mxu0
    %v872 = vadd.f32 %v263, %v871
    %v873 = vpop.f32.mrf.mxu0
    %v874 = vadd.f32 %v263, %v873
    %875 = vdwg.mxu0
    %v876 = vmax.f32 %v548, 0.0
    %v877 = vmax.f32 %v717, 0.0
    %v878 = vmax.f32 %v550, 0.0
    %v879 = vmax.f32 %v719, 0.0
    %v880 = vmax.f32 %v553, 0.0
    %v881 = vmax.f32 %v722, 0.0
    %v882 = vmax.f32 %v555, 0.0
    %v883 = vmax.f32 %v724, 0.0
    %v884 = vmax.f32 %v558, 0.0
    %v885 = vmax.f32 %v727, 0.0
    %v886 = vmax.f32 %v560, 0.0
    %v887 = vmax.f32 %v729, 0.0
    %v888 = vmax.f32 %v563, 0.0
    %v889 = vmax.f32 %v732, 0.0
    %v890 = vmax.f32 %v565, 0.0
    %v891 = vmax.f32 %v734, 0.0
    %v892 = vmax.f32 %v568, 0.0
    %v893 = vmax.f32 %v737, 0.0
    %v894 = vmax.f32 %v570, 0.0
    %v895 = vmax.f32 %v739, 0.0
    %v896 = vmax.f32 %v573, 0.0
    %v897 = vmax.f32 %v742, 0.0
    %v898 = vmax.f32 %v575, 0.0
    %v899 = vmax.f32 %v744, 0.0
    %v900 = vmax.f32 %v578, 0.0
    %v901 = vmax.f32 %v747, 0.0
    %v902 = vmax.f32 %v580, 0.0
    %v903 = vmax.f32 %v749, 0.0
    %v904 = vmax.f32 %v583, 0.0
    %v905 = vmax.f32 %v752, 0.0
    %v906 = vmax.f32 %v585, 0.0
    %v907 = vmax.f32 %v754, 0.0
    %v908 = vmax.f32 %v588, 0.0
    %v909 = vmax.f32 %v757, 0.0
    %v910 = vmax.f32 %v590, 0.0
    %v911 = vmax.f32 %v759, 0.0
    %v912 = vmax.f32 %v593, 0.0
    %v913 = vmax.f32 %v762, 0.0
    %v914 = vmax.f32 %v595, 0.0
    %v915 = vmax.f32 %v764, 0.0
    %v916 = vmax.f32 %v598, 0.0
    %v917 = vmax.f32 %v767, 0.0
    %v918 = vmax.f32 %v600, 0.0
    %v919 = vmax.f32 %v769, 0.0
    %v920 = vmax.f32 %v603, 0.0
    %v921 = vmax.f32 %v772, 0.0
    %v922 = vmax.f32 %v605, 0.0
    %v923 = vmax.f32 %v774, 0.0
    %v924 = vmax.f32 %v608, 0.0
    %v925 = vmax.f32 %v777, 0.0
    %v926 = vmax.f32 %v610, 0.0
    %v927 = vmax.f32 %v779, 0.0
    %v928 = vmax.f32 %v613, 0.0
    %v929 = vmax.f32 %v782, 0.0
    %v930 = vmax.f32 %v615, 0.0
    %v931 = vmax.f32 %v784, 0.0
    %v932 = vmax.f32 %v618, 0.0
    %v933 = vmax.f32 %v787, 0.0
    %v934 = vmax.f32 %v620, 0.0
    %v935 = vmax.f32 %v789, 0.0
    %v936 = vmax.f32 %v623, 0.0
    %v937 = vmax.f32 %v792, 0.0
    %v938 = vmax.f32 %v625, 0.0
    %v939 = vmax.f32 %v794, 0.0
    %v940 = vmax.f32 %v628, 0.0
    %v941 = vmax.f32 %v797, 0.0
    %v942 = vmax.f32 %v630, 0.0
    %v943 = vmax.f32 %v799, 0.0
    %v944 = vmax.f32 %v633, 0.0
    %v945 = vmax.f32 %v802, 0.0
    %v946 = vmax.f32 %v635, 0.0
    %v947 = vmax.f32 %v804, 0.0
    %v948 = vmax.f32 %v638, 0.0
    %v949 = vmax.f32 %v807, 0.0
    %v950 = vmax.f32 %v640, 0.0
    %v951 = vmax.f32 %v809, 0.0
    %v952 = vmax.f32 %v643, 0.0
    %v953 = vmax.f32 %v812, 0.0
    %v954 = vmax.f32 %v645, 0.0
    %v955 = vmax.f32 %v814, 0.0
    %v956 = vmax.f32 %v648, 0.0
    %v957 = vmax.f32 %v817, 0.0
    %v958 = vmax.f32 %v650, 0.0
    %v959 = vmax.f32 %v819, 0.0
    %v960 = vmax.f32 %v653, 0.0
    %v961 = vmax.f32 %v822, 0.0
    %v962 = vmax.f32 %v655, 0.0
    %v963 = vmax.f32 %v824, 0.0
    %v964 = vmax.f32 %v658, 0.0
    %v965 = vmax.f32 %v827, 0.0
    %v966 = vmax.f32 %v660, 0.0
    %v967 = vmax.f32 %v829, 0.0
    %v968 = vmax.f32 %v663, 0.0
    %v969 = vmax.f32 %v832, 0.0
    %v970 = vmax.f32 %v665, 0.0
    %v971 = vmax.f32 %v834, 0.0
    %v972 = vmax.f32 %v668, 0.0
    %v973 = vmax.f32 %v837, 0.0
    %v974 = vmax.f32 %v670, 0.0
    %v975 = vmax.f32 %v839, 0.0
    %v976 = vmax.f32 %v673, 0.0
    %v977 = vmax.f32 %v842, 0.0
    %v978 = vmax.f32 %v675, 0.0
    %v979 = vmax.f32 %v844, 0.0
    %v980 = vmax.f32 %v678, 0.0
    %v981 = vmax.f32 %v847, 0.0
    %v982 = vmax.f32 %v680, 0.0
    %v983 = vmax.f32 %v849, 0.0
    %v984 = vmax.f32 %v683, 0.0
    %v985 = vmax.f32 %v852, 0.0
    %v986 = vmax.f32 %v685, 0.0
    %v987 = vmax.f32 %v854, 0.0
    %v988 = vmax.f32 %v688, 0.0
    %v989 = vmax.f32 %v857, 0.0
    %v990 = vmax.f32 %v690, 0.0
    %v991 = vmax.f32 %v859, 0.0
    %v992 = vmax.f32 %v693, 0.0
    %v993 = vmax.f32 %v862, 0.0
    %v994 = vmax.f32 %v695, 0.0
    %v995 = vmax.f32 %v864, 0.0
    %v996 = vmax.f32 %v698, 0.0
    %v997 = vmax.f32 %v867, 0.0
    %v998 = vmax.f32 %v700, 0.0
    %v999 = vmax.f32 %v869, 0.0
    %v1000 = vmax.f32 %v703, 0.0
    %v1001 = vmax.f32 %v872, 0.0
    %v1002 = vmax.f32 %v705, 0.0
    %v1003 = vmax.f32 %v874, 0.0
    %v1004 = vld [vmem:[#allocation11 + $0x2] sm:$0x3]
    %v1005 = vld [vmem:[#allocation11 + $0x4] sm:$0x3]
    %v1006 = vadd.f32 %v876, %v877
    %1007 = vadd.xlane.f32.xlu0 %v1006
    %v1008 = vpop.xlane.xlu0 %1007
    %v1009 = vadd.f32 %v878, %v879
    %1010 = vadd.xlane.f32.xlu0 %v1009
    %v1011 = vpop.xlane.xlu0 %1010
    %v1012 = vadd.f32 %v880, %v881
    %1013 = vadd.xlane.f32.xlu0 %v1012
    %v1014 = vpop.xlane.xlu0 %1013
    %v1015 = vadd.f32 %v882, %v883
    %1016 = vadd.xlane.f32.xlu0 %v1015
    %v1017 = vpop.xlane.xlu0 %1016
    %v1018 = vadd.f32 %v884, %v885
    %1019 = vadd.xlane.f32.xlu0 %v1018
    %v1020 = vpop.xlane.xlu0 %1019
    %v1021 = vadd.f32 %v886, %v887
    %1022 = vadd.xlane.f32.xlu0 %v1021
    %v1023 = vpop.xlane.xlu0 %1022
    %v1024 = vadd.f32 %v888, %v889
    %1025 = vadd.xlane.f32.xlu0 %v1024
    %v1026 = vpop.xlane.xlu0 %1025
    %v1027 = vadd.f32 %v890, %v891
    %1028 = vadd.xlane.f32.xlu0 %v1027
    %v1029 = vpop.xlane.xlu0 %1028
    %v1030 = vadd.f32 %v892, %v893
    %1031 = vadd.xlane.f32.xlu0 %v1030
    %v1032 = vpop.xlane.xlu0 %1031
    %v1033 = vadd.f32 %v894, %v895
    %1034 = vadd.xlane.f32.xlu0 %v1033
    %v1035 = vpop.xlane.xlu0 %1034
    %v1036 = vadd.f32 %v896, %v897
    %1037 = vadd.xlane.f32.xlu0 %v1036
    %v1038 = vpop.xlane.xlu0 %1037
    %v1039 = vadd.f32 %v898, %v899
    %1040 = vadd.xlane.f32.xlu0 %v1039
    %v1041 = vpop.xlane.xlu0 %1040
    %v1042 = vadd.f32 %v900, %v901
    %1043 = vadd.xlane.f32.xlu0 %v1042
    %v1044 = vpop.xlane.xlu0 %1043
    %v1045 = vadd.f32 %v902, %v903
    %1046 = vadd.xlane.f32.xlu0 %v1045
    %v1047 = vpop.xlane.xlu0 %1046
    %v1048 = vadd.f32 %v904, %v905
    %1049 = vadd.xlane.f32.xlu0 %v1048
    %v1050 = vpop.xlane.xlu0 %1049
    %v1051 = vadd.f32 %v906, %v907
    %1052 = vadd.xlane.f32.xlu0 %v1051
    %v1053 = vpop.xlane.xlu0 %1052
    %v1054 = vadd.f32 %v908, %v909
    %1055 = vadd.xlane.f32.xlu0 %v1054
    %v1056 = vpop.xlane.xlu0 %1055
    %v1057 = vadd.f32 %v910, %v911
    %1058 = vadd.xlane.f32.xlu0 %v1057
    %v1059 = vpop.xlane.xlu0 %1058
    %v1060 = vadd.f32 %v912, %v913
    %1061 = vadd.xlane.f32.xlu0 %v1060
    %v1062 = vpop.xlane.xlu0 %1061
    %v1063 = vadd.f32 %v914, %v915
    %1064 = vadd.xlane.f32.xlu0 %v1063
    %v1065 = vpop.xlane.xlu0 %1064
    %v1066 = vadd.f32 %v916, %v917
    %1067 = vadd.xlane.f32.xlu0 %v1066
    %v1068 = vpop.xlane.xlu0 %1067
    %v1069 = vadd.f32 %v918, %v919
    %1070 = vadd.xlane.f32.xlu0 %v1069
    %v1071 = vpop.xlane.xlu0 %1070
    %v1072 = vadd.f32 %v920, %v921
    %1073 = vadd.xlane.f32.xlu0 %v1072
    %v1074 = vpop.xlane.xlu0 %1073
    %v1075 = vadd.f32 %v922, %v923
    %1076 = vadd.xlane.f32.xlu0 %v1075
    %v1077 = vpop.xlane.xlu0 %1076
    %v1078 = vadd.f32 %v924, %v925
    %1079 = vadd.xlane.f32.xlu0 %v1078
    %v1080 = vpop.xlane.xlu0 %1079
    %v1081 = vadd.f32 %v926, %v927
    %1082 = vadd.xlane.f32.xlu0 %v1081
    %v1083 = vpop.xlane.xlu0 %1082
    %v1084 = vadd.f32 %v928, %v929
    %1085 = vadd.xlane.f32.xlu0 %v1084
    %v1086 = vpop.xlane.xlu0 %1085
    %v1087 = vadd.f32 %v930, %v931
    %1088 = vadd.xlane.f32.xlu0 %v1087
    %v1089 = vpop.xlane.xlu0 %1088
    %v1090 = vadd.f32 %v932, %v933
    %1091 = vadd.xlane.f32.xlu0 %v1090
    %v1092 = vpop.xlane.xlu0 %1091
    %v1093 = vadd.f32 %v934, %v935
    %1094 = vadd.xlane.f32.xlu0 %v1093
    %v1095 = vpop.xlane.xlu0 %1094
    %v1096 = vadd.f32 %v936, %v937
    %1097 = vadd.xlane.f32.xlu0 %v1096
    %v1098 = vpop.xlane.xlu0 %1097
    %v1099 = vadd.f32 %v938, %v939
    %1100 = vadd.xlane.f32.xlu0 %v1099
    %v1101 = vpop.xlane.xlu0 %1100
    %v1102 = vadd.f32 %v940, %v941
    %1103 = vadd.xlane.f32.xlu0 %v1102
    %v1104 = vpop.xlane.xlu0 %1103
    %v1105 = vadd.f32 %v942, %v943
    %1106 = vadd.xlane.f32.xlu0 %v1105
    %v1107 = vpop.xlane.xlu0 %1106
    %v1108 = vadd.f32 %v944, %v945
    %1109 = vadd.xlane.f32.xlu0 %v1108
    %v1110 = vpop.xlane.xlu0 %1109
    %v1111 = vadd.f32 %v946, %v947
    %1112 = vadd.xlane.f32.xlu0 %v1111
    %v1113 = vpop.xlane.xlu0 %1112
    %v1114 = vadd.f32 %v948, %v949
    %1115 = vadd.xlane.f32.xlu0 %v1114
    %v1116 = vpop.xlane.xlu0 %1115
    %v1117 = vadd.f32 %v950, %v951
    %1118 = vadd.xlane.f32.xlu0 %v1117
    %v1119 = vpop.xlane.xlu0 %1118
    %v1120 = vadd.f32 %v952, %v953
    %1121 = vadd.xlane.f32.xlu0 %v1120
    %v1122 = vpop.xlane.xlu0 %1121
    %v1123 = vadd.f32 %v954, %v955
    %1124 = vadd.xlane.f32.xlu0 %v1123
    %v1125 = vpop.xlane.xlu0 %1124
    %v1126 = vadd.f32 %v956, %v957
    %1127 = vadd.xlane.f32.xlu0 %v1126
    %v1128 = vpop.xlane.xlu0 %1127
    %v1129 = vadd.f32 %v958, %v959
    %1130 = vadd.xlane.f32.xlu0 %v1129
    %v1131 = vpop.xlane.xlu0 %1130
    %v1132 = vadd.f32 %v960, %v961
    %1133 = vadd.xlane.f32.xlu0 %v1132
    %v1134 = vpop.xlane.xlu0 %1133
    %v1135 = vadd.f32 %v962, %v963
    %1136 = vadd.xlane.f32.xlu0 %v1135
    %v1137 = vpop.xlane.xlu0 %1136
    %v1138 = vadd.f32 %v964, %v965
    %1139 = vadd.xlane.f32.xlu0 %v1138
    %v1140 = vpop.xlane.xlu0 %1139
    %v1141 = vadd.f32 %v966, %v967
    %1142 = vadd.xlane.f32.xlu0 %v1141
    %v1143 = vpop.xlane.xlu0 %1142
    %v1144 = vadd.f32 %v968, %v969
    %1145 = vadd.xlane.f32.xlu0 %v1144
    %v1146 = vpop.xlane.xlu0 %1145
    %v1147 = vadd.f32 %v970, %v971
    %1148 = vadd.xlane.f32.xlu0 %v1147
    %v1149 = vpop.xlane.xlu0 %1148
    %v1150 = vadd.f32 %v972, %v973
    %1151 = vadd.xlane.f32.xlu0 %v1150
    %v1152 = vpop.xlane.xlu0 %1151
    %v1153 = vadd.f32 %v974, %v975
    %1154 = vadd.xlane.f32.xlu0 %v1153
    %v1155 = vpop.xlane.xlu0 %1154
    %v1156 = vadd.f32 %v976, %v977
    %1157 = vadd.xlane.f32.xlu0 %v1156
    %v1158 = vpop.xlane.xlu0 %1157
    %v1159 = vadd.f32 %v978, %v979
    %1160 = vadd.xlane.f32.xlu0 %v1159
    %v1161 = vpop.xlane.xlu0 %1160
    %v1162 = vadd.f32 %v980, %v981
    %1163 = vadd.xlane.f32.xlu0 %v1162
    %v1164 = vpop.xlane.xlu0 %1163
    %v1165 = vadd.f32 %v982, %v983
    %1166 = vadd.xlane.f32.xlu0 %v1165
    %v1167 = vpop.xlane.xlu0 %1166
    %v1168 = vadd.f32 %v984, %v985
    %1169 = vadd.xlane.f32.xlu0 %v1168
    %v1170 = vpop.xlane.xlu0 %1169
    %v1171 = vadd.f32 %v986, %v987
    %1172 = vadd.xlane.f32.xlu0 %v1171
    %v1173 = vpop.xlane.xlu0 %1172
    %v1174 = vadd.f32 %v988, %v989
    %1175 = vadd.xlane.f32.xlu0 %v1174
    %v1176 = vpop.xlane.xlu0 %1175
    %v1177 = vadd.f32 %v990, %v991
    %1178 = vadd.xlane.f32.xlu0 %v1177
    %v1179 = vpop.xlane.xlu0 %1178
    %v1180 = vadd.f32 %v992, %v993
    %1181 = vadd.xlane.f32.xlu0 %v1180
    %v1182 = vpop.xlane.xlu0 %1181
    %v1183 = vadd.f32 %v994, %v995
    %1184 = vadd.xlane.f32.xlu0 %v1183
    %v1185 = vpop.xlane.xlu0 %1184
    %v1186 = vadd.f32 %v996, %v997
    %1187 = vadd.xlane.f32.xlu0 %v1186
    %v1188 = vpop.xlane.xlu0 %1187
    %v1189 = vadd.f32 %v998, %v999
    %1190 = vadd.xlane.f32.xlu0 %v1189
    %v1191 = vpop.xlane.xlu0 %1190
    %v1192 = vadd.f32 %v1000, %v1001
    %1193 = vadd.xlane.f32.xlu0 %v1192
    %v1194 = vpop.xlane.xlu0 %1193
    %v1195 = vadd.f32 %v1002, %v1003
    %1196 = vadd.xlane.f32.xlu0 %v1195
    %v1197 = vpop.xlane.xlu0 %1196
    %v1198 = vrcp.pop 256.0
    %v1199 = vmul.f32 256.0, %v1198
    %v1200 = vsub.f32 1.0, %v1199
    %v1201 = vmul.f32 %v1198, %v1200
    %v1202 = vadd.f32 %v1198, %v1201
    %vm1203 = vweird.f32 %v1198
    %v1204 = vsel %vm1203, %v1198, %v1202
    %v1205 = vmul.f32 %v1008, %v1204
    %v1206 = vmul.f32 %v1011, %v1204
    %v1207 = vmul.f32 %v1014, %v1204
    %v1208 = vmul.f32 %v1017, %v1204
    %v1209 = vmul.f32 %v1020, %v1204
    %v1210 = vmul.f32 %v1023, %v1204
    %v1211 = vmul.f32 %v1026, %v1204
    %v1212 = vmul.f32 %v1029, %v1204
    %v1213 = vmul.f32 %v1032, %v1204
    %v1214 = vmul.f32 %v1035, %v1204
    %v1215 = vmul.f32 %v1038, %v1204
    %v1216 = vmul.f32 %v1041, %v1204
    %v1217 = vmul.f32 %v1044, %v1204
    %v1218 = vmul.f32 %v1047, %v1204
    %v1219 = vmul.f32 %v1050, %v1204
    %v1220 = vmul.f32 %v1053, %v1204
    %v1221 = vmul.f32 %v1056, %v1204
    %v1222 = vmul.f32 %v1059, %v1204
    %v1223 = vmul.f32 %v1062, %v1204
    %v1224 = vmul.f32 %v1065, %v1204
    %v1225 = vmul.f32 %v1068, %v1204
    %v1226 = vmul.f32 %v1071, %v1204
    %v1227 = vmul.f32 %v1074, %v1204
    %v1228 = vmul.f32 %v1077, %v1204
    %v1229 = vmul.f32 %v1080, %v1204
    %v1230 = vmul.f32 %v1083, %v1204
    %v1231 = vmul.f32 %v1086, %v1204
    %v1232 = vmul.f32 %v1089, %v1204
    %v1233 = vmul.f32 %v1092, %v1204
    %v1234 = vmul.f32 %v1095, %v1204
    %v1235 = vmul.f32 %v1098, %v1204
    %v1236 = vmul.f32 %v1101, %v1204
    %v1237 = vmul.f32 %v1104, %v1204
    %v1238 = vmul.f32 %v1107, %v1204
    %v1239 = vmul.f32 %v1110, %v1204
    %v1240 = vmul.f32 %v1113, %v1204
    %v1241 = vmul.f32 %v1116, %v1204
    %v1242 = vmul.f32 %v1119, %v1204
    %v1243 = vmul.f32 %v1122, %v1204
    %v1244 = vmul.f32 %v1125, %v1204
    %v1245 = vmul.f32 %v1128, %v1204
    %v1246 = vmul.f32 %v1131, %v1204
    %v1247 = vmul.f32 %v1134, %v1204
    %v1248 = vmul.f32 %v1137, %v1204
    %v1249 = vmul.f32 %v1140, %v1204
    %v1250 = vmul.f32 %v1143, %v1204
    %v1251 = vmul.f32 %v1146, %v1204
    %v1252 = vmul.f32 %v1149, %v1204
    %v1253 = vmul.f32 %v1152, %v1204
    %v1254 = vmul.f32 %v1155, %v1204
    %v1255 = vmul.f32 %v1158, %v1204
    %v1256 = vmul.f32 %v1161, %v1204
    %v1257 = vmul.f32 %v1164, %v1204
    %v1258 = vmul.f32 %v1167, %v1204
    %v1259 = vmul.f32 %v1170, %v1204
    %v1260 = vmul.f32 %v1173, %v1204
    %v1261 = vmul.f32 %v1176, %v1204
    %v1262 = vmul.f32 %v1179, %v1204
    %v1263 = vmul.f32 %v1182, %v1204
    %v1264 = vmul.f32 %v1185, %v1204
    %v1265 = vmul.f32 %v1188, %v1204
    %v1266 = vmul.f32 %v1191, %v1204
    %v1267 = vmul.f32 %v1194, %v1204
    %v1268 = vmul.f32 %v1197, %v1204
    %v1269 = vmul.f32 %v876, %v876
    %v1270 = vmul.f32 %v877, %v877
    %v1271 = vmul.f32 %v878, %v878
    %v1272 = vmul.f32 %v879, %v879
    %v1273 = vmul.f32 %v880, %v880
    %v1274 = vmul.f32 %v881, %v881
    %v1275 = vmul.f32 %v882, %v882
    %v1276 = vmul.f32 %v883, %v883
    %v1277 = vmul.f32 %v884, %v884
    %v1278 = vmul.f32 %v885, %v885
    %v1279 = vmul.f32 %v886, %v886
    %v1280 = vmul.f32 %v887, %v887
    %v1281 = vmul.f32 %v888, %v888
    %v1282 = vmul.f32 %v889, %v889
    %v1283 = vmul.f32 %v890, %v890
    %v1284 = vmul.f32 %v891, %v891
    %v1285 = vmul.f32 %v892, %v892
    %v1286 = vmul.f32 %v893, %v893
    %v1287 = vmul.f32 %v894, %v894
    %v1288 = vmul.f32 %v895, %v895
    %v1289 = vmul.f32 %v896, %v896
    %v1290 = vmul.f32 %v897, %v897
    %v1291 = vmul.f32 %v898, %v898
    %v1292 = vmul.f32 %v899, %v899
    %v1293 = vmul.f32 %v900, %v900
    %v1294 = vmul.f32 %v901, %v901
    %v1295 = vmul.f32 %v902, %v902
    %v1296 = vmul.f32 %v903, %v903
    %v1297 = vmul.f32 %v904, %v904
    %v1298 = vmul.f32 %v905, %v905
    %v1299 = vmul.f32 %v906, %v906
    %v1300 = vmul.f32 %v907, %v907
    %v1301 = vmul.f32 %v908, %v908
    %v1302 = vmul.f32 %v909, %v909
    %v1303 = vmul.f32 %v910, %v910
    %v1304 = vmul.f32 %v911, %v911
    %v1305 = vmul.f32 %v912, %v912
    %v1306 = vmul.f32 %v913, %v913
    %v1307 = vmul.f32 %v914, %v914
    %v1308 = vmul.f32 %v915, %v915
    %v1309 = vmul.f32 %v916, %v916
    %v1310 = vmul.f32 %v917, %v917
    %v1311 = vmul.f32 %v918, %v918
    %v1312 = vmul.f32 %v919, %v919
    %v1313 = vmul.f32 %v920, %v920
    %v1314 = vmul.f32 %v921, %v921
    %v1315 = vmul.f32 %v922, %v922
    %v1316 = vmul.f32 %v923, %v923
    %v1317 = vmul.f32 %v924, %v924
    %v1318 = vmul.f32 %v925, %v925
    %v1319 = vmul.f32 %v926, %v926
    %v1320 = vmul.f32 %v927, %v927
    %v1321 = vmul.f32 %v928, %v928
    %v1322 = vmul.f32 %v929, %v929
    %v1323 = vmul.f32 %v930, %v930
    %v1324 = vmul.f32 %v931, %v931
    %v1325 = vmul.f32 %v932, %v932
    %v1326 = vmul.f32 %v933, %v933
    %v1327 = vmul.f32 %v934, %v934
    %v1328 = vmul.f32 %v935, %v935
    %v1329 = vmul.f32 %v936, %v936
    %v1330 = vmul.f32 %v937, %v937
    %v1331 = vmul.f32 %v938, %v938
    %v1332 = vmul.f32 %v939, %v939
    %v1333 = vmul.f32 %v940, %v940
    %v1334 = vmul.f32 %v941, %v941
    %v1335 = vmul.f32 %v942, %v942
    %v1336 = vmul.f32 %v943, %v943
    %v1337 = vmul.f32 %v944, %v944
    %v1338 = vmul.f32 %v945, %v945
    %v1339 = vmul.f32 %v946, %v946
    %v1340 = vmul.f32 %v947, %v947
    %v1341 = vmul.f32 %v948, %v948
    %v1342 = vmul.f32 %v949, %v949
    %v1343 = vmul.f32 %v950, %v950
    %v1344 = vmul.f32 %v951, %v951
    %v1345 = vmul.f32 %v952, %v952
    %v1346 = vmul.f32 %v953, %v953
    %v1347 = vmul.f32 %v954, %v954
    %v1348 = vmul.f32 %v955, %v955
    %v1349 = vmul.f32 %v956, %v956
    %v1350 = vmul.f32 %v957, %v957
    %v1351 = vmul.f32 %v958, %v958
    %v1352 = vmul.f32 %v959, %v959
    %v1353 = vmul.f32 %v960, %v960
    %v1354 = vmul.f32 %v961, %v961
    %v1355 = vmul.f32 %v962, %v962
    %v1356 = vmul.f32 %v963, %v963
    %v1357 = vmul.f32 %v964, %v964
    %v1358 = vmul.f32 %v965, %v965
    %v1359 = vmul.f32 %v966, %v966
    %v1360 = vmul.f32 %v967, %v967
    %v1361 = vmul.f32 %v968, %v968
    %v1362 = vmul.f32 %v969, %v969
    %v1363 = vmul.f32 %v970, %v970
    %v1364 = vmul.f32 %v971, %v971
    %v1365 = vmul.f32 %v972, %v972
    %v1366 = vmul.f32 %v973, %v973
    %v1367 = vmul.f32 %v974, %v974
    %v1368 = vmul.f32 %v975, %v975
    %v1369 = vmul.f32 %v976, %v976
    %v1370 = vmul.f32 %v977, %v977
    %v1371 = vmul.f32 %v978, %v978
    %v1372 = vmul.f32 %v979, %v979
    %v1373 = vmul.f32 %v980, %v980
    %v1374 = vmul.f32 %v981, %v981
    %v1375 = vmul.f32 %v982, %v982
    %v1376 = vmul.f32 %v983, %v983
    %v1377 = vmul.f32 %v984, %v984
    %v1378 = vmul.f32 %v985, %v985
    %v1379 = vmul.f32 %v986, %v986
    %v1380 = vmul.f32 %v987, %v987
    %v1381 = vmul.f32 %v988, %v988
    %v1382 = vmul.f32 %v989, %v989
    %v1383 = vmul.f32 %v990, %v990
    %v1384 = vmul.f32 %v991, %v991
    %v1385 = vmul.f32 %v992, %v992
    %v1386 = vmul.f32 %v993, %v993
    %v1387 = vmul.f32 %v994, %v994
    %v1388 = vmul.f32 %v995, %v995
    %v1389 = vmul.f32 %v996, %v996
    %v1390 = vmul.f32 %v997, %v997
    %v1391 = vmul.f32 %v998, %v998
    %v1392 = vmul.f32 %v999, %v999
    %v1393 = vmul.f32 %v1000, %v1000
    %v1394 = vmul.f32 %v1001, %v1001
    %v1395 = vmul.f32 %v1002, %v1002
    %v1396 = vmul.f32 %v1003, %v1003
    %v1397 = vadd.f32 %v1269, %v1270
    %1398 = vadd.xlane.f32.xlu0 %v1397
    %v1399 = vpop.xlane.xlu0 %1398
    %v1400 = vadd.f32 %v1271, %v1272
    %1401 = vadd.xlane.f32.xlu0 %v1400
    %v1402 = vpop.xlane.xlu0 %1401
    %v1403 = vadd.f32 %v1273, %v1274
    %1404 = vadd.xlane.f32.xlu0 %v1403
    %v1405 = vpop.xlane.xlu0 %1404
    %v1406 = vadd.f32 %v1275, %v1276
    %1407 = vadd.xlane.f32.xlu0 %v1406
    %v1408 = vpop.xlane.xlu0 %1407
    %v1409 = vadd.f32 %v1277, %v1278
    %1410 = vadd.xlane.f32.xlu0 %v1409
    %v1411 = vpop.xlane.xlu0 %1410
    %v1412 = vadd.f32 %v1279, %v1280
    %1413 = vadd.xlane.f32.xlu0 %v1412
    %v1414 = vpop.xlane.xlu0 %1413
    %v1415 = vadd.f32 %v1281, %v1282
    %1416 = vadd.xlane.f32.xlu0 %v1415
    %v1417 = vpop.xlane.xlu0 %1416
    %v1418 = vadd.f32 %v1283, %v1284
    %1419 = vadd.xlane.f32.xlu0 %v1418
    %v1420 = vpop.xlane.xlu0 %1419
    %v1421 = vadd.f32 %v1285, %v1286
    %1422 = vadd.xlane.f32.xlu0 %v1421
    %v1423 = vpop.xlane.xlu0 %1422
    %v1424 = vadd.f32 %v1287, %v1288
    %1425 = vadd.xlane.f32.xlu0 %v1424
    %v1426 = vpop.xlane.xlu0 %1425
    %v1427 = vadd.f32 %v1289, %v1290
    %1428 = vadd.xlane.f32.xlu0 %v1427
    %v1429 = vpop.xlane.xlu0 %1428
    %v1430 = vadd.f32 %v1291, %v1292
    %1431 = vadd.xlane.f32.xlu0 %v1430
    %v1432 = vpop.xlane.xlu0 %1431
    %v1433 = vadd.f32 %v1293, %v1294
    %1434 = vadd.xlane.f32.xlu0 %v1433
    %v1435 = vpop.xlane.xlu0 %1434
    %v1436 = vadd.f32 %v1295, %v1296
    %1437 = vadd.xlane.f32.xlu0 %v1436
    %v1438 = vpop.xlane.xlu0 %1437
    %v1439 = vadd.f32 %v1297, %v1298
    %1440 = vadd.xlane.f32.xlu0 %v1439
    %v1441 = vpop.xlane.xlu0 %1440
    %v1442 = vadd.f32 %v1299, %v1300
    %1443 = vadd.xlane.f32.xlu0 %v1442
    %v1444 = vpop.xlane.xlu0 %1443
    %v1445 = vadd.f32 %v1301, %v1302
    %1446 = vadd.xlane.f32.xlu0 %v1445
    %v1447 = vpop.xlane.xlu0 %1446
    %v1448 = vadd.f32 %v1303, %v1304
    %1449 = vadd.xlane.f32.xlu0 %v1448
    %v1450 = vpop.xlane.xlu0 %1449
    %v1451 = vadd.f32 %v1305, %v1306
    %1452 = vadd.xlane.f32.xlu0 %v1451
    %v1453 = vpop.xlane.xlu0 %1452
    %v1454 = vadd.f32 %v1307, %v1308
    %1455 = vadd.xlane.f32.xlu0 %v1454
    %v1456 = vpop.xlane.xlu0 %1455
    %v1457 = vadd.f32 %v1309, %v1310
    %1458 = vadd.xlane.f32.xlu0 %v1457
    %v1459 = vpop.xlane.xlu0 %1458
    %v1460 = vadd.f32 %v1311, %v1312
    %1461 = vadd.xlane.f32.xlu0 %v1460
    %v1462 = vpop.xlane.xlu0 %1461
    %v1463 = vadd.f32 %v1313, %v1314
    %1464 = vadd.xlane.f32.xlu0 %v1463
    %v1465 = vpop.xlane.xlu0 %1464
    %v1466 = vadd.f32 %v1315, %v1316
    %1467 = vadd.xlane.f32.xlu0 %v1466
    %v1468 = vpop.xlane.xlu0 %1467
    %v1469 = vadd.f32 %v1317, %v1318
    %1470 = vadd.xlane.f32.xlu0 %v1469
    %v1471 = vpop.xlane.xlu0 %1470
    %v1472 = vadd.f32 %v1319, %v1320
    %1473 = vadd.xlane.f32.xlu0 %v1472
    %v1474 = vpop.xlane.xlu0 %1473
    %v1475 = vadd.f32 %v1321, %v1322
    %1476 = vadd.xlane.f32.xlu0 %v1475
    %v1477 = vpop.xlane.xlu0 %1476
    %v1478 = vadd.f32 %v1323, %v1324
    %1479 = vadd.xlane.f32.xlu0 %v1478
    %v1480 = vpop.xlane.xlu0 %1479
    %v1481 = vadd.f32 %v1325, %v1326
    %1482 = vadd.xlane.f32.xlu0 %v1481
    %v1483 = vpop.xlane.xlu0 %1482
    %v1484 = vadd.f32 %v1327, %v1328
    %1485 = vadd.xlane.f32.xlu0 %v1484
    %v1486 = vpop.xlane.xlu0 %1485
    %v1487 = vadd.f32 %v1329, %v1330
    %1488 = vadd.xlane.f32.xlu0 %v1487
    %v1489 = vpop.xlane.xlu0 %1488
    %v1490 = vadd.f32 %v1331, %v1332
    %1491 = vadd.xlane.f32.xlu0 %v1490
    %v1492 = vpop.xlane.xlu0 %1491
    %v1493 = vadd.f32 %v1333, %v1334
    %1494 = vadd.xlane.f32.xlu0 %v1493
    %v1495 = vpop.xlane.xlu0 %1494
    %v1496 = vadd.f32 %v1335, %v1336
    %1497 = vadd.xlane.f32.xlu0 %v1496
    %v1498 = vpop.xlane.xlu0 %1497
    %v1499 = vadd.f32 %v1337, %v1338
    %1500 = vadd.xlane.f32.xlu0 %v1499
    %v1501 = vpop.xlane.xlu0 %1500
    %v1502 = vadd.f32 %v1339, %v1340
    %1503 = vadd.xlane.f32.xlu0 %v1502
    %v1504 = vpop.xlane.xlu0 %1503
    %v1505 = vadd.f32 %v1341, %v1342
    %1506 = vadd.xlane.f32.xlu0 %v1505
    %v1507 = vpop.xlane.xlu0 %1506
    %v1508 = vadd.f32 %v1343, %v1344
    %1509 = vadd.xlane.f32.xlu0 %v1508
    %v1510 = vpop.xlane.xlu0 %1509
    %v1511 = vadd.f32 %v1345, %v1346
    %1512 = vadd.xlane.f32.xlu0 %v1511
    %v1513 = vpop.xlane.xlu0 %1512
    %v1514 = vadd.f32 %v1347, %v1348
    %1515 = vadd.xlane.f32.xlu0 %v1514
    %v1516 = vpop.xlane.xlu0 %1515
    %v1517 = vadd.f32 %v1349, %v1350
    %1518 = vadd.xlane.f32.xlu0 %v1517
    %v1519 = vpop.xlane.xlu0 %1518
    %v1520 = vadd.f32 %v1351, %v1352
    %1521 = vadd.xlane.f32.xlu0 %v1520
    %v1522 = vpop.xlane.xlu0 %1521
    %v1523 = vadd.f32 %v1353, %v1354
    %1524 = vadd.xlane.f32.xlu0 %v1523
    %v1525 = vpop.xlane.xlu0 %1524
    %v1526 = vadd.f32 %v1355, %v1356
    %1527 = vadd.xlane.f32.xlu0 %v1526
    %v1528 = vpop.xlane.xlu0 %1527
    %v1529 = vadd.f32 %v1357, %v1358
    %1530 = vadd.xlane.f32.xlu0 %v1529
    %v1531 = vpop.xlane.xlu0 %1530
    %v1532 = vadd.f32 %v1359, %v1360
    %1533 = vadd.xlane.f32.xlu0 %v1532
    %v1534 = vpop.xlane.xlu0 %1533
    %v1535 = vadd.f32 %v1361, %v1362
    %1536 = vadd.xlane.f32.xlu0 %v1535
    %v1537 = vpop.xlane.xlu0 %1536
    %v1538 = vadd.f32 %v1363, %v1364
    %1539 = vadd.xlane.f32.xlu0 %v1538
    %v1540 = vpop.xlane.xlu0 %1539
    %v1541 = vadd.f32 %v1365, %v1366
    %1542 = vadd.xlane.f32.xlu0 %v1541
    %v1543 = vpop.xlane.xlu0 %1542
    %v1544 = vadd.f32 %v1367, %v1368
    %1545 = vadd.xlane.f32.xlu0 %v1544
    %v1546 = vpop.xlane.xlu0 %1545
    %v1547 = vadd.f32 %v1369, %v1370
    %1548 = vadd.xlane.f32.xlu0 %v1547
    %v1549 = vpop.xlane.xlu0 %1548
    %v1550 = vadd.f32 %v1371, %v1372
    %1551 = vadd.xlane.f32.xlu0 %v1550
    %v1552 = vpop.xlane.xlu0 %1551
    %v1553 = vadd.f32 %v1373, %v1374
    %1554 = vadd.xlane.f32.xlu0 %v1553
    %v1555 = vpop.xlane.xlu0 %1554
    %v1556 = vadd.f32 %v1375, %v1376
    %1557 = vadd.xlane.f32.xlu0 %v1556
    %v1558 = vpop.xlane.xlu0 %1557
    %v1559 = vadd.f32 %v1377, %v1378
    %1560 = vadd.xlane.f32.xlu0 %v1559
    %v1561 = vpop.xlane.xlu0 %1560
    %v1562 = vadd.f32 %v1379, %v1380
    %1563 = vadd.xlane.f32.xlu0 %v1562
    %v1564 = vpop.xlane.xlu0 %1563
    %v1565 = vadd.f32 %v1381, %v1382
    %1566 = vadd.xlane.f32.xlu0 %v1565
    %v1567 = vpop.xlane.xlu0 %1566
    %v1568 = vadd.f32 %v1383, %v1384
    %1569 = vadd.xlane.f32.xlu0 %v1568
    %v1570 = vpop.xlane.xlu0 %1569
    %v1571 = vadd.f32 %v1385, %v1386
    %1572 = vadd.xlane.f32.xlu0 %v1571
    %v1573 = vpop.xlane.xlu0 %1572
    %v1574 = vadd.f32 %v1387, %v1388
    %1575 = vadd.xlane.f32.xlu0 %v1574
    %v1576 = vpop.xlane.xlu0 %1575
    %v1577 = vadd.f32 %v1389, %v1390
    %1578 = vadd.xlane.f32.xlu0 %v1577
    %v1579 = vpop.xlane.xlu0 %1578
    %v1580 = vadd.f32 %v1391, %v1392
    %1581 = vadd.xlane.f32.xlu0 %v1580
    %v1582 = vpop.xlane.xlu0 %1581
    %v1583 = vadd.f32 %v1393, %v1394
    %1584 = vadd.xlane.f32.xlu0 %v1583
    %v1585 = vpop.xlane.xlu0 %1584
    %v1586 = vadd.f32 %v1395, %v1396
    %1587 = vadd.xlane.f32.xlu0 %v1586
    %v1588 = vpop.xlane.xlu0 %1587
    %v1589 = vmul.f32 %v1399, %v1204
    %v1590 = vmul.f32 %v1402, %v1204
    %v1591 = vmul.f32 %v1405, %v1204
    %v1592 = vmul.f32 %v1408, %v1204
    %v1593 = vmul.f32 %v1411, %v1204
    %v1594 = vmul.f32 %v1414, %v1204
    %v1595 = vmul.f32 %v1417, %v1204
    %v1596 = vmul.f32 %v1420, %v1204
    %v1597 = vmul.f32 %v1423, %v1204
    %v1598 = vmul.f32 %v1426, %v1204
    %v1599 = vmul.f32 %v1429, %v1204
    %v1600 = vmul.f32 %v1432, %v1204
    %v1601 = vmul.f32 %v1435, %v1204
    %v1602 = vmul.f32 %v1438, %v1204
    %v1603 = vmul.f32 %v1441, %v1204
    %v1604 = vmul.f32 %v1444, %v1204
    %v1605 = vmul.f32 %v1447, %v1204
    %v1606 = vmul.f32 %v1450, %v1204
    %v1607 = vmul.f32 %v1453, %v1204
    %v1608 = vmul.f32 %v1456, %v1204
    %v1609 = vmul.f32 %v1459, %v1204
    %v1610 = vmul.f32 %v1462, %v1204
    %v1611 = vmul.f32 %v1465, %v1204
    %v1612 = vmul.f32 %v1468, %v1204
    %v1613 = vmul.f32 %v1471, %v1204
    %v1614 = vmul.f32 %v1474, %v1204
    %v1615 = vmul.f32 %v1477, %v1204
    %v1616 = vmul.f32 %v1480, %v1204
    %v1617 = vmul.f32 %v1483, %v1204
    %v1618 = vmul.f32 %v1486, %v1204
    %v1619 = vmul.f32 %v1489, %v1204
    %v1620 = vmul.f32 %v1492, %v1204
    %v1621 = vmul.f32 %v1495, %v1204
    %v1622 = vmul.f32 %v1498, %v1204
    %v1623 = vmul.f32 %v1501, %v1204
    %v1624 = vmul.f32 %v1504, %v1204
    %v1625 = vmul.f32 %v1507, %v1204
    %v1626 = vmul.f32 %v1510, %v1204
    %v1627 = vmul.f32 %v1513, %v1204
    %v1628 = vmul.f32 %v1516, %v1204
    %v1629 = vmul.f32 %v1519, %v1204
    %v1630 = vmul.f32 %v1522, %v1204
    %v1631 = vmul.f32 %v1525, %v1204
    %v1632 = vmul.f32 %v1528, %v1204
    %v1633 = vmul.f32 %v1531, %v1204
    %v1634 = vmul.f32 %v1534, %v1204
    %v1635 = vmul.f32 %v1537, %v1204
    %v1636 = vmul.f32 %v1540, %v1204
    %v1637 = vmul.f32 %v1543, %v1204
    %v1638 = vmul.f32 %v1546, %v1204
    %v1639 = vmul.f32 %v1549, %v1204
    %v1640 = vmul.f32 %v1552, %v1204
    %v1641 = vmul.f32 %v1555, %v1204
    %v1642 = vmul.f32 %v1558, %v1204
    %v1643 = vmul.f32 %v1561, %v1204
    %v1644 = vmul.f32 %v1564, %v1204
    %v1645 = vmul.f32 %v1567, %v1204
    %v1646 = vmul.f32 %v1570, %v1204
    %v1647 = vmul.f32 %v1573, %v1204
    %v1648 = vmul.f32 %v1576, %v1204
    %v1649 = vmul.f32 %v1579, %v1204
    %v1650 = vmul.f32 %v1582, %v1204
    %v1651 = vmul.f32 %v1585, %v1204
    %v1652 = vmul.f32 %v1588, %v1204
    %v1653 = vmul.f32 %v1205, %v1205
    %v1654 = vmul.f32 %v1206, %v1206
    %v1655 = vmul.f32 %v1207, %v1207
    %v1656 = vmul.f32 %v1208, %v1208
    %v1657 = vmul.f32 %v1209, %v1209
    %v1658 = vmul.f32 %v1210, %v1210
    %v1659 = vmul.f32 %v1211, %v1211
    %v1660 = vmul.f32 %v1212, %v1212
    %v1661 = vmul.f32 %v1213, %v1213
    %v1662 = vmul.f32 %v1214, %v1214
    %v1663 = vmul.f32 %v1215, %v1215
    %v1664 = vmul.f32 %v1216, %v1216
    %v1665 = vmul.f32 %v1217, %v1217
    %v1666 = vmul.f32 %v1218, %v1218
    %v1667 = vmul.f32 %v1219, %v1219
    %v1668 = vmul.f32 %v1220, %v1220
    %v1669 = vmul.f32 %v1221, %v1221
    %v1670 = vmul.f32 %v1222, %v1222
    %v1671 = vmul.f32 %v1223, %v1223
    %v1672 = vmul.f32 %v1224, %v1224
    %v1673 = vmul.f32 %v1225, %v1225
    %v1674 = vmul.f32 %v1226, %v1226
    %v1675 = vmul.f32 %v1227, %v1227
    %v1676 = vmul.f32 %v1228, %v1228
    %v1677 = vmul.f32 %v1229, %v1229
    %v1678 = vmul.f32 %v1230, %v1230
    %v1679 = vmul.f32 %v1231, %v1231
    %v1680 = vmul.f32 %v1232, %v1232
    %v1681 = vmul.f32 %v1233, %v1233
    %v1682 = vmul.f32 %v1234, %v1234
    %v1683 = vmul.f32 %v1235, %v1235
    %v1684 = vmul.f32 %v1236, %v1236
    %v1685 = vmul.f32 %v1237, %v1237
    %v1686 = vmul.f32 %v1238, %v1238
    %v1687 = vmul.f32 %v1239, %v1239
    %v1688 = vmul.f32 %v1240, %v1240
    %v1689 = vmul.f32 %v1241, %v1241
    %v1690 = vmul.f32 %v1242, %v1242
    %v1691 = vmul.f32 %v1243, %v1243
    %v1692 = vmul.f32 %v1244, %v1244
    %v1693 = vmul.f32 %v1245, %v1245
    %v1694 = vmul.f32 %v1246, %v1246
    %v1695 = vmul.f32 %v1247, %v1247
    %v1696 = vmul.f32 %v1248, %v1248
    %v1697 = vmul.f32 %v1249, %v1249
    %v1698 = vmul.f32 %v1250, %v1250
    %v1699 = vmul.f32 %v1251, %v1251
    %v1700 = vmul.f32 %v1252, %v1252
    %v1701 = vmul.f32 %v1253, %v1253
    %v1702 = vmul.f32 %v1254, %v1254
    %v1703 = vmul.f32 %v1255, %v1255
    %v1704 = vmul.f32 %v1256, %v1256
    %v1705 = vmul.f32 %v1257, %v1257
    %v1706 = vmul.f32 %v1258, %v1258
    %v1707 = vmul.f32 %v1259, %v1259
    %v1708 = vmul.f32 %v1260, %v1260
    %v1709 = vmul.f32 %v1261, %v1261
    %v1710 = vmul.f32 %v1262, %v1262
    %v1711 = vmul.f32 %v1263, %v1263
    %v1712 = vmul.f32 %v1264, %v1264
    %v1713 = vmul.f32 %v1265, %v1265
    %v1714 = vmul.f32 %v1266, %v1266
    %v1715 = vmul.f32 %v1267, %v1267
    %v1716 = vmul.f32 %v1268, %v1268
    %v1717 = vsub.f32 %v1589, %v1653
    %v1718 = vsub.f32 %v1590, %v1654
    %v1719 = vsub.f32 %v1591, %v1655
    %v1720 = vsub.f32 %v1592, %v1656
    %v1721 = vsub.f32 %v1593, %v1657
    %v1722 = vsub.f32 %v1594, %v1658
    %v1723 = vsub.f32 %v1595, %v1659
    %v1724 = vsub.f32 %v1596, %v1660
    %v1725 = vsub.f32 %v1597, %v1661
    %v1726 = vsub.f32 %v1598, %v1662
    %v1727 = vsub.f32 %v1599, %v1663
    %v1728 = vsub.f32 %v1600, %v1664
    %v1729 = vsub.f32 %v1601, %v1665
    %v1730 = vsub.f32 %v1602, %v1666
    %v1731 = vsub.f32 %v1603, %v1667
    %v1732 = vsub.f32 %v1604, %v1668
    %v1733 = vsub.f32 %v1605, %v1669
    %v1734 = vsub.f32 %v1606, %v1670
    %v1735 = vsub.f32 %v1607, %v1671
    %v1736 = vsub.f32 %v1608, %v1672
    %v1737 = vsub.f32 %v1609, %v1673
    %v1738 = vsub.f32 %v1610, %v1674
    %v1739 = vsub.f32 %v1611, %v1675
    %v1740 = vsub.f32 %v1612, %v1676
    %v1741 = vsub.f32 %v1613, %v1677
    %v1742 = vsub.f32 %v1614, %v1678
    %v1743 = vsub.f32 %v1615, %v1679
    %v1744 = vsub.f32 %v1616, %v1680
    %v1745 = vsub.f32 %v1617, %v1681
    %v1746 = vsub.f32 %v1618, %v1682
    %v1747 = vsub.f32 %v1619, %v1683
    %v1748 = vsub.f32 %v1620, %v1684
    %v1749 = vsub.f32 %v1621, %v1685
    %v1750 = vsub.f32 %v1622, %v1686
    %v1751 = vsub.f32 %v1623, %v1687
    %v1752 = vsub.f32 %v1624, %v1688
    %v1753 = vsub.f32 %v1625, %v1689
    %v1754 = vsub.f32 %v1626, %v1690
    %v1755 = vsub.f32 %v1627, %v1691
    %v1756 = vsub.f32 %v1628, %v1692
    %v1757 = vsub.f32 %v1629, %v1693
    %v1758 = vsub.f32 %v1630, %v1694
    %v1759 = vsub.f32 %v1631, %v1695
    %v1760 = vsub.f32 %v1632, %v1696
    %v1761 = vsub.f32 %v1633, %v1697
    %v1762 = vsub.f32 %v1634, %v1698
    %v1763 = vsub.f32 %v1635, %v1699
    %v1764 = vsub.f32 %v1636, %v1700
    %v1765 = vsub.f32 %v1637, %v1701
    %v1766 = vsub.f32 %v1638, %v1702
    %v1767 = vsub.f32 %v1639, %v1703
    %v1768 = vsub.f32 %v1640, %v1704
    %v1769 = vsub.f32 %v1641, %v1705
    %v1770 = vsub.f32 %v1642, %v1706
    %v1771 = vsub.f32 %v1643, %v1707
    %v1772 = vsub.f32 %v1644, %v1708
    %v1773 = vsub.f32 %v1645, %v1709
    %v1774 = vsub.f32 %v1646, %v1710
    %v1775 = vsub.f32 %v1647, %v1711
    %v1776 = vsub.f32 %v1648, %v1712
    %v1777 = vsub.f32 %v1649, %v1713
    %v1778 = vsub.f32 %v1650, %v1714
    %v1779 = vsub.f32 %v1651, %v1715
    %v1780 = vsub.f32 %v1652, %v1716
    %v1781 = vmax.f32 %v1717, 0.0
    %v1782 = vmax.f32 %v1718, 0.0
    %v1783 = vmax.f32 %v1719, 0.0
    %v1784 = vmax.f32 %v1720, 0.0
    %v1785 = vmax.f32 %v1721, 0.0
    %v1786 = vmax.f32 %v1722, 0.0
    %v1787 = vmax.f32 %v1723, 0.0
    %v1788 = vmax.f32 %v1724, 0.0
    %v1789 = vmax.f32 %v1725, 0.0
    %v1790 = vmax.f32 %v1726, 0.0
    %v1791 = vmax.f32 %v1727, 0.0
    %v1792 = vmax.f32 %v1728, 0.0
    %v1793 = vmax.f32 %v1729, 0.0
    %v1794 = vmax.f32 %v1730, 0.0
    %v1795 = vmax.f32 %v1731, 0.0
    %v1796 = vmax.f32 %v1732, 0.0
    %v1797 = vmax.f32 %v1733, 0.0
    %v1798 = vmax.f32 %v1734, 0.0
    %v1799 = vmax.f32 %v1735, 0.0
    %v1800 = vmax.f32 %v1736, 0.0
    %v1801 = vmax.f32 %v1737, 0.0
    %v1802 = vmax.f32 %v1738, 0.0
    %v1803 = vmax.f32 %v1739, 0.0
    %v1804 = vmax.f32 %v1740, 0.0
    %v1805 = vmax.f32 %v1741, 0.0
    %v1806 = vmax.f32 %v1742, 0.0
    %v1807 = vmax.f32 %v1743, 0.0
    %v1808 = vmax.f32 %v1744, 0.0
    %v1809 = vmax.f32 %v1745, 0.0
    %v1810 = vmax.f32 %v1746, 0.0
    %v1811 = vmax.f32 %v1747, 0.0
    %v1812 = vmax.f32 %v1748, 0.0
    %v1813 = vmax.f32 %v1749, 0.0
    %v1814 = vmax.f32 %v1750, 0.0
    %v1815 = vmax.f32 %v1751, 0.0
    %v1816 = vmax.f32 %v1752, 0.0
    %v1817 = vmax.f32 %v1753, 0.0
    %v1818 = vmax.f32 %v1754, 0.0
    %v1819 = vmax.f32 %v1755, 0.0
    %v1820 = vmax.f32 %v1756, 0.0
    %v1821 = vmax.f32 %v1757, 0.0
    %v1822 = vmax.f32 %v1758, 0.0
    %v1823 = vmax.f32 %v1759, 0.0
    %v1824 = vmax.f32 %v1760, 0.0
    %v1825 = vmax.f32 %v1761, 0.0
    %v1826 = vmax.f32 %v1762, 0.0
    %v1827 = vmax.f32 %v1763, 0.0
    %v1828 = vmax.f32 %v1764, 0.0
    %v1829 = vmax.f32 %v1765, 0.0
    %v1830 = vmax.f32 %v1766, 0.0
    %v1831 = vmax.f32 %v1767, 0.0
    %v1832 = vmax.f32 %v1768, 0.0
    %v1833 = vmax.f32 %v1769, 0.0
    %v1834 = vmax.f32 %v1770, 0.0
    %v1835 = vmax.f32 %v1771, 0.0
    %v1836 = vmax.f32 %v1772, 0.0
    %v1837 = vmax.f32 %v1773, 0.0
    %v1838 = vmax.f32 %v1774, 0.0
    %v1839 = vmax.f32 %v1775, 0.0
    %v1840 = vmax.f32 %v1776, 0.0
    %v1841 = vmax.f32 %v1777, 0.0
    %v1842 = vmax.f32 %v1778, 0.0
    %v1843 = vmax.f32 %v1779, 0.0
    %v1844 = vmax.f32 %v1780, 0.0
    %v1845 = vadd.f32 %v1781, 1e-05
    %v1846 = vadd.f32 %v1782, 1e-05
    %v1847 = vadd.f32 %v1783, 1e-05
    %v1848 = vadd.f32 %v1784, 1e-05
    %v1849 = vadd.f32 %v1785, 1e-05
    %v1850 = vadd.f32 %v1786, 1e-05
    %v1851 = vadd.f32 %v1787, 1e-05
    %v1852 = vadd.f32 %v1788, 1e-05
    %v1853 = vadd.f32 %v1789, 1e-05
    %v1854 = vadd.f32 %v1790, 1e-05
    %v1855 = vadd.f32 %v1791, 1e-05
    %v1856 = vadd.f32 %v1792, 1e-05
    %v1857 = vadd.f32 %v1793, 1e-05
    %v1858 = vadd.f32 %v1794, 1e-05
    %v1859 = vadd.f32 %v1795, 1e-05
    %v1860 = vadd.f32 %v1796, 1e-05
    %v1861 = vadd.f32 %v1797, 1e-05
    %v1862 = vadd.f32 %v1798, 1e-05
    %v1863 = vadd.f32 %v1799, 1e-05
    %v1864 = vadd.f32 %v1800, 1e-05
    %v1865 = vadd.f32 %v1801, 1e-05
    %v1866 = vadd.f32 %v1802, 1e-05
    %v1867 = vadd.f32 %v1803, 1e-05
    %v1868 = vadd.f32 %v1804, 1e-05
    %v1869 = vadd.f32 %v1805, 1e-05
    %v1870 = vadd.f32 %v1806, 1e-05
    %v1871 = vadd.f32 %v1807, 1e-05
    %v1872 = vadd.f32 %v1808, 1e-05
    %v1873 = vadd.f32 %v1809, 1e-05
    %v1874 = vadd.f32 %v1810, 1e-05
    %v1875 = vadd.f32 %v1811, 1e-05
    %v1876 = vadd.f32 %v1812, 1e-05
    %v1877 = vadd.f32 %v1813, 1e-05
    %v1878 = vadd.f32 %v1814, 1e-05
    %v1879 = vadd.f32 %v1815, 1e-05
    %v1880 = vadd.f32 %v1816, 1e-05
    %v1881 = vadd.f32 %v1817, 1e-05
    %v1882 = vadd.f32 %v1818, 1e-05
    %v1883 = vadd.f32 %v1819, 1e-05
    %v1884 = vadd.f32 %v1820, 1e-05
    %v1885 = vadd.f32 %v1821, 1e-05
    %v1886 = vadd.f32 %v1822, 1e-05
    %v1887 = vadd.f32 %v1823, 1e-05
    %v1888 = vadd.f32 %v1824, 1e-05
    %v1889 = vadd.f32 %v1825, 1e-05
    %v1890 = vadd.f32 %v1826, 1e-05
    %v1891 = vadd.f32 %v1827, 1e-05
    %v1892 = vadd.f32 %v1828, 1e-05
    %v1893 = vadd.f32 %v1829, 1e-05
    %v1894 = vadd.f32 %v1830, 1e-05
    %v1895 = vadd.f32 %v1831, 1e-05
    %v1896 = vadd.f32 %v1832, 1e-05
    %v1897 = vadd.f32 %v1833, 1e-05
    %v1898 = vadd.f32 %v1834, 1e-05
    %v1899 = vadd.f32 %v1835, 1e-05
    %v1900 = vadd.f32 %v1836, 1e-05
    %v1901 = vadd.f32 %v1837, 1e-05
    %v1902 = vadd.f32 %v1838, 1e-05
    %v1903 = vadd.f32 %v1839, 1e-05
    %v1904 = vadd.f32 %v1840, 1e-05
    %v1905 = vadd.f32 %v1841, 1e-05
    %v1906 = vadd.f32 %v1842, 1e-05
    %v1907 = vadd.f32 %v1843, 1e-05
    %v1908 = vadd.f32 %v1844, 1e-05
    %v1909 = vrsqrt.pop %v1845
    %v1910 = vmul.f32 %v1909, %v1845
    %v1911 = vmul.f32 %v1910, %v1909
    %v1912 = vmul.f32 0.5, %v1911
    %v1913 = vsub.f32 1.5, %v1912
    %v1914 = vmul.f32 %v1909, %v1913
    %vm1915 = vweird.f32 %v1845
    %vm1916 = vweird.f32 %v1909
    %vm1917 = vmor %vm1915, %vm1916
    %v1918 = vsel %vm1917, %v1909, %v1914
    %v1919 = vrsqrt.pop %v1846
    %v1920 = vmul.f32 %v1919, %v1846
    %v1921 = vmul.f32 %v1920, %v1919
    %v1922 = vmul.f32 0.5, %v1921
    %v1923 = vsub.f32 1.5, %v1922
    %v1924 = vmul.f32 %v1919, %v1923
    %vm1925 = vweird.f32 %v1846
    %vm1926 = vweird.f32 %v1919
    %vm1927 = vmor %vm1925, %vm1926
    %v1928 = vsel %vm1927, %v1919, %v1924
    %v1929 = vrsqrt.pop %v1847
    %v1930 = vmul.f32 %v1929, %v1847
    %v1931 = vmul.f32 %v1930, %v1929
    %v1932 = vmul.f32 0.5, %v1931
    %v1933 = vsub.f32 1.5, %v1932
    %v1934 = vmul.f32 %v1929, %v1933
    %vm1935 = vweird.f32 %v1847
    %vm1936 = vweird.f32 %v1929
    %vm1937 = vmor %vm1935, %vm1936
    %v1938 = vsel %vm1937, %v1929, %v1934
    %v1939 = vrsqrt.pop %v1848
    %v1940 = vmul.f32 %v1939, %v1848
    %v1941 = vmul.f32 %v1940, %v1939
    %v1942 = vmul.f32 0.5, %v1941
    %v1943 = vsub.f32 1.5, %v1942
    %v1944 = vmul.f32 %v1939, %v1943
    %vm1945 = vweird.f32 %v1848
    %vm1946 = vweird.f32 %v1939
    %vm1947 = vmor %vm1945, %vm1946
    %v1948 = vsel %vm1947, %v1939, %v1944
    %v1949 = vrsqrt.pop %v1849
    %v1950 = vmul.f32 %v1949, %v1849
    %v1951 = vmul.f32 %v1950, %v1949
    %v1952 = vmul.f32 0.5, %v1951
    %v1953 = vsub.f32 1.5, %v1952
    %v1954 = vmul.f32 %v1949, %v1953
    %vm1955 = vweird.f32 %v1849
    %vm1956 = vweird.f32 %v1949
    %vm1957 = vmor %vm1955, %vm1956
    %v1958 = vsel %vm1957, %v1949, %v1954
    %v1959 = vrsqrt.pop %v1850
    %v1960 = vmul.f32 %v1959, %v1850
    %v1961 = vmul.f32 %v1960, %v1959
    %v1962 = vmul.f32 0.5, %v1961
    %v1963 = vsub.f32 1.5, %v1962
    %v1964 = vmul.f32 %v1959, %v1963
    %vm1965 = vweird.f32 %v1850
    %vm1966 = vweird.f32 %v1959
    %vm1967 = vmor %vm1965, %vm1966
    %v1968 = vsel %vm1967, %v1959, %v1964
    %v1969 = vrsqrt.pop %v1851
    %v1970 = vmul.f32 %v1969, %v1851
    %v1971 = vmul.f32 %v1970, %v1969
    %v1972 = vmul.f32 0.5, %v1971
    %v1973 = vsub.f32 1.5, %v1972
    %v1974 = vmul.f32 %v1969, %v1973
    %vm1975 = vweird.f32 %v1851
    %vm1976 = vweird.f32 %v1969
    %vm1977 = vmor %vm1975, %vm1976
    %v1978 = vsel %vm1977, %v1969, %v1974
    %v1979 = vrsqrt.pop %v1852
    %v1980 = vmul.f32 %v1979, %v1852
    %v1981 = vmul.f32 %v1980, %v1979
    %v1982 = vmul.f32 0.5, %v1981
    %v1983 = vsub.f32 1.5, %v1982
    %v1984 = vmul.f32 %v1979, %v1983
    %vm1985 = vweird.f32 %v1852
    %vm1986 = vweird.f32 %v1979
    %vm1987 = vmor %vm1985, %vm1986
    %v1988 = vsel %vm1987, %v1979, %v1984
    %v1989 = vrsqrt.pop %v1853
    %v1990 = vmul.f32 %v1989, %v1853
    %v1991 = vmul.f32 %v1990, %v1989
    %v1992 = vmul.f32 0.5, %v1991
    %v1993 = vsub.f32 1.5, %v1992
    %v1994 = vmul.f32 %v1989, %v1993
    %vm1995 = vweird.f32 %v1853
    %vm1996 = vweird.f32 %v1989
    %vm1997 = vmor %vm1995, %vm1996
    %v1998 = vsel %vm1997, %v1989, %v1994
    %v1999 = vrsqrt.pop %v1854
    %v2000 = vmul.f32 %v1999, %v1854
    %v2001 = vmul.f32 %v2000, %v1999
    %v2002 = vmul.f32 0.5, %v2001
    %v2003 = vsub.f32 1.5, %v2002
    %v2004 = vmul.f32 %v1999, %v2003
    %vm2005 = vweird.f32 %v1854
    %vm2006 = vweird.f32 %v1999
    %vm2007 = vmor %vm2005, %vm2006
    %v2008 = vsel %vm2007, %v1999, %v2004
    %v2009 = vrsqrt.pop %v1855
    %v2010 = vmul.f32 %v2009, %v1855
    %v2011 = vmul.f32 %v2010, %v2009
    %v2012 = vmul.f32 0.5, %v2011
    %v2013 = vsub.f32 1.5, %v2012
    %v2014 = vmul.f32 %v2009, %v2013
    %vm2015 = vweird.f32 %v1855
    %vm2016 = vweird.f32 %v2009
    %vm2017 = vmor %vm2015, %vm2016
    %v2018 = vsel %vm2017, %v2009, %v2014
    %v2019 = vrsqrt.pop %v1856
    %v2020 = vmul.f32 %v2019, %v1856
    %v2021 = vmul.f32 %v2020, %v2019
    %v2022 = vmul.f32 0.5, %v2021
    %v2023 = vsub.f32 1.5, %v2022
    %v2024 = vmul.f32 %v2019, %v2023
    %vm2025 = vweird.f32 %v1856
    %vm2026 = vweird.f32 %v2019
    %vm2027 = vmor %vm2025, %vm2026
    %v2028 = vsel %vm2027, %v2019, %v2024
    %v2029 = vrsqrt.pop %v1857
    %v2030 = vmul.f32 %v2029, %v1857
    %v2031 = vmul.f32 %v2030, %v2029
    %v2032 = vmul.f32 0.5, %v2031
    %v2033 = vsub.f32 1.5, %v2032
    %v2034 = vmul.f32 %v2029, %v2033
    %vm2035 = vweird.f32 %v1857
    %vm2036 = vweird.f32 %v2029
    %vm2037 = vmor %vm2035, %vm2036
    %v2038 = vsel %vm2037, %v2029, %v2034
    %v2039 = vrsqrt.pop %v1858
    %v2040 = vmul.f32 %v2039, %v1858
    %v2041 = vmul.f32 %v2040, %v2039
    %v2042 = vmul.f32 0.5, %v2041
    %v2043 = vsub.f32 1.5, %v2042
    %v2044 = vmul.f32 %v2039, %v2043
    %vm2045 = vweird.f32 %v1858
    %vm2046 = vweird.f32 %v2039
    %vm2047 = vmor %vm2045, %vm2046
    %v2048 = vsel %vm2047, %v2039, %v2044
    %v2049 = vrsqrt.pop %v1859
    %v2050 = vmul.f32 %v2049, %v1859
    %v2051 = vmul.f32 %v2050, %v2049
    %v2052 = vmul.f32 0.5, %v2051
    %v2053 = vsub.f32 1.5, %v2052
    %v2054 = vmul.f32 %v2049, %v2053
    %vm2055 = vweird.f32 %v1859
    %vm2056 = vweird.f32 %v2049
    %vm2057 = vmor %vm2055, %vm2056
    %v2058 = vsel %vm2057, %v2049, %v2054
    %v2059 = vrsqrt.pop %v1860
    %v2060 = vmul.f32 %v2059, %v1860
    %v2061 = vmul.f32 %v2060, %v2059
    %v2062 = vmul.f32 0.5, %v2061
    %v2063 = vsub.f32 1.5, %v2062
    %v2064 = vmul.f32 %v2059, %v2063
    %vm2065 = vweird.f32 %v1860
    %vm2066 = vweird.f32 %v2059
    %vm2067 = vmor %vm2065, %vm2066
    %v2068 = vsel %vm2067, %v2059, %v2064
    %v2069 = vrsqrt.pop %v1861
    %v2070 = vmul.f32 %v2069, %v1861
    %v2071 = vmul.f32 %v2070, %v2069
    %v2072 = vmul.f32 0.5, %v2071
    %v2073 = vsub.f32 1.5, %v2072
    %v2074 = vmul.f32 %v2069, %v2073
    %vm2075 = vweird.f32 %v1861
    %vm2076 = vweird.f32 %v2069
    %vm2077 = vmor %vm2075, %vm2076
    %v2078 = vsel %vm2077, %v2069, %v2074
    %v2079 = vrsqrt.pop %v1862
    %v2080 = vmul.f32 %v2079, %v1862
    %v2081 = vmul.f32 %v2080, %v2079
    %v2082 = vmul.f32 0.5, %v2081
    %v2083 = vsub.f32 1.5, %v2082
    %v2084 = vmul.f32 %v2079, %v2083
    %vm2085 = vweird.f32 %v1862
    %vm2086 = vweird.f32 %v2079
    %vm2087 = vmor %vm2085, %vm2086
    %v2088 = vsel %vm2087, %v2079, %v2084
    %v2089 = vrsqrt.pop %v1863
    %v2090 = vmul.f32 %v2089, %v1863
    %v2091 = vmul.f32 %v2090, %v2089
    %v2092 = vmul.f32 0.5, %v2091
    %v2093 = vsub.f32 1.5, %v2092
    %v2094 = vmul.f32 %v2089, %v2093
    %vm2095 = vweird.f32 %v1863
    %vm2096 = vweird.f32 %v2089
    %vm2097 = vmor %vm2095, %vm2096
    %v2098 = vsel %vm2097, %v2089, %v2094
    %v2099 = vrsqrt.pop %v1864
    %v2100 = vmul.f32 %v2099, %v1864
    %v2101 = vmul.f32 %v2100, %v2099
    %v2102 = vmul.f32 0.5, %v2101
    %v2103 = vsub.f32 1.5, %v2102
    %v2104 = vmul.f32 %v2099, %v2103
    %vm2105 = vweird.f32 %v1864
    %vm2106 = vweird.f32 %v2099
    %vm2107 = vmor %vm2105, %vm2106
    %v2108 = vsel %vm2107, %v2099, %v2104
    %v2109 = vrsqrt.pop %v1865
    %v2110 = vmul.f32 %v2109, %v1865
    %v2111 = vmul.f32 %v2110, %v2109
    %v2112 = vmul.f32 0.5, %v2111
    %v2113 = vsub.f32 1.5, %v2112
    %v2114 = vmul.f32 %v2109, %v2113
    %vm2115 = vweird.f32 %v1865
    %vm2116 = vweird.f32 %v2109
    %vm2117 = vmor %vm2115, %vm2116
    %v2118 = vsel %vm2117, %v2109, %v2114
    %v2119 = vrsqrt.pop %v1866
    %v2120 = vmul.f32 %v2119, %v1866
    %v2121 = vmul.f32 %v2120, %v2119
    %v2122 = vmul.f32 0.5, %v2121
    %v2123 = vsub.f32 1.5, %v2122
    %v2124 = vmul.f32 %v2119, %v2123
    %vm2125 = vweird.f32 %v1866
    %vm2126 = vweird.f32 %v2119
    %vm2127 = vmor %vm2125, %vm2126
    %v2128 = vsel %vm2127, %v2119, %v2124
    %v2129 = vrsqrt.pop %v1867
    %v2130 = vmul.f32 %v2129, %v1867
    %v2131 = vmul.f32 %v2130, %v2129
    %v2132 = vmul.f32 0.5, %v2131
    %v2133 = vsub.f32 1.5, %v2132
    %v2134 = vmul.f32 %v2129, %v2133
    %vm2135 = vweird.f32 %v1867
    %vm2136 = vweird.f32 %v2129
    %vm2137 = vmor %vm2135, %vm2136
    %v2138 = vsel %vm2137, %v2129, %v2134
    %v2139 = vrsqrt.pop %v1868
    %v2140 = vmul.f32 %v2139, %v1868
    %v2141 = vmul.f32 %v2140, %v2139
    %v2142 = vmul.f32 0.5, %v2141
    %v2143 = vsub.f32 1.5, %v2142
    %v2144 = vmul.f32 %v2139, %v2143
    %vm2145 = vweird.f32 %v1868
    %vm2146 = vweird.f32 %v2139
    %vm2147 = vmor %vm2145, %vm2146
    %v2148 = vsel %vm2147, %v2139, %v2144
    %v2149 = vrsqrt.pop %v1869
    %v2150 = vmul.f32 %v2149, %v1869
    %v2151 = vmul.f32 %v2150, %v2149
    %v2152 = vmul.f32 0.5, %v2151
    %v2153 = vsub.f32 1.5, %v2152
    %v2154 = vmul.f32 %v2149, %v2153
    %vm2155 = vweird.f32 %v1869
    %vm2156 = vweird.f32 %v2149
    %vm2157 = vmor %vm2155, %vm2156
    %v2158 = vsel %vm2157, %v2149, %v2154
    %v2159 = vrsqrt.pop %v1870
    %v2160 = vmul.f32 %v2159, %v1870
    %v2161 = vmul.f32 %v2160, %v2159
    %v2162 = vmul.f32 0.5, %v2161
    %v2163 = vsub.f32 1.5, %v2162
    %v2164 = vmul.f32 %v2159, %v2163
    %vm2165 = vweird.f32 %v1870
    %vm2166 = vweird.f32 %v2159
    %vm2167 = vmor %vm2165, %vm2166
    %v2168 = vsel %vm2167, %v2159, %v2164
    %v2169 = vrsqrt.pop %v1871
    %v2170 = vmul.f32 %v2169, %v1871
    %v2171 = vmul.f32 %v2170, %v2169
    %v2172 = vmul.f32 0.5, %v2171
    %v2173 = vsub.f32 1.5, %v2172
    %v2174 = vmul.f32 %v2169, %v2173
    %vm2175 = vweird.f32 %v1871
    %vm2176 = vweird.f32 %v2169
    %vm2177 = vmor %vm2175, %vm2176
    %v2178 = vsel %vm2177, %v2169, %v2174
    %v2179 = vrsqrt.pop %v1872
    %v2180 = vmul.f32 %v2179, %v1872
    %v2181 = vmul.f32 %v2180, %v2179
    %v2182 = vmul.f32 0.5, %v2181
    %v2183 = vsub.f32 1.5, %v2182
    %v2184 = vmul.f32 %v2179, %v2183
    %vm2185 = vweird.f32 %v1872
    %vm2186 = vweird.f32 %v2179
    %vm2187 = vmor %vm2185, %vm2186
    %v2188 = vsel %vm2187, %v2179, %v2184
    %v2189 = vrsqrt.pop %v1873
    %v2190 = vmul.f32 %v2189, %v1873
    %v2191 = vmul.f32 %v2190, %v2189
    %v2192 = vmul.f32 0.5, %v2191
    %v2193 = vsub.f32 1.5, %v2192
    %v2194 = vmul.f32 %v2189, %v2193
    %vm2195 = vweird.f32 %v1873
    %vm2196 = vweird.f32 %v2189
    %vm2197 = vmor %vm2195, %vm2196
    %v2198 = vsel %vm2197, %v2189, %v2194
    %v2199 = vrsqrt.pop %v1874
    %v2200 = vmul.f32 %v2199, %v1874
    %v2201 = vmul.f32 %v2200, %v2199
    %v2202 = vmul.f32 0.5, %v2201
    %v2203 = vsub.f32 1.5, %v2202
    %v2204 = vmul.f32 %v2199, %v2203
    %vm2205 = vweird.f32 %v1874
    %vm2206 = vweird.f32 %v2199
    %vm2207 = vmor %vm2205, %vm2206
    %v2208 = vsel %vm2207, %v2199, %v2204
    %v2209 = vrsqrt.pop %v1875
    %v2210 = vmul.f32 %v2209, %v1875
    %v2211 = vmul.f32 %v2210, %v2209
    %v2212 = vmul.f32 0.5, %v2211
    %v2213 = vsub.f32 1.5, %v2212
    %v2214 = vmul.f32 %v2209, %v2213
    %vm2215 = vweird.f32 %v1875
    %vm2216 = vweird.f32 %v2209
    %vm2217 = vmor %vm2215, %vm2216
    %v2218 = vsel %vm2217, %v2209, %v2214
    %v2219 = vrsqrt.pop %v1876
    %v2220 = vmul.f32 %v2219, %v1876
    %v2221 = vmul.f32 %v2220, %v2219
    %v2222 = vmul.f32 0.5, %v2221
    %v2223 = vsub.f32 1.5, %v2222
    %v2224 = vmul.f32 %v2219, %v2223
    %vm2225 = vweird.f32 %v1876
    %vm2226 = vweird.f32 %v2219
    %vm2227 = vmor %vm2225, %vm2226
    %v2228 = vsel %vm2227, %v2219, %v2224
    %v2229 = vrsqrt.pop %v1877
    %v2230 = vmul.f32 %v2229, %v1877
    %v2231 = vmul.f32 %v2230, %v2229
    %v2232 = vmul.f32 0.5, %v2231
    %v2233 = vsub.f32 1.5, %v2232
    %v2234 = vmul.f32 %v2229, %v2233
    %vm2235 = vweird.f32 %v1877
    %vm2236 = vweird.f32 %v2229
    %vm2237 = vmor %vm2235, %vm2236
    %v2238 = vsel %vm2237, %v2229, %v2234
    %v2239 = vrsqrt.pop %v1878
    %v2240 = vmul.f32 %v2239, %v1878
    %v2241 = vmul.f32 %v2240, %v2239
    %v2242 = vmul.f32 0.5, %v2241
    %v2243 = vsub.f32 1.5, %v2242
    %v2244 = vmul.f32 %v2239, %v2243
    %vm2245 = vweird.f32 %v1878
    %vm2246 = vweird.f32 %v2239
    %vm2247 = vmor %vm2245, %vm2246
    %v2248 = vsel %vm2247, %v2239, %v2244
    %v2249 = vrsqrt.pop %v1879
    %v2250 = vmul.f32 %v2249, %v1879
    %v2251 = vmul.f32 %v2250, %v2249
    %v2252 = vmul.f32 0.5, %v2251
    %v2253 = vsub.f32 1.5, %v2252
    %v2254 = vmul.f32 %v2249, %v2253
    %vm2255 = vweird.f32 %v1879
    %vm2256 = vweird.f32 %v2249
    %vm2257 = vmor %vm2255, %vm2256
    %v2258 = vsel %vm2257, %v2249, %v2254
    %v2259 = vrsqrt.pop %v1880
    %v2260 = vmul.f32 %v2259, %v1880
    %v2261 = vmul.f32 %v2260, %v2259
    %v2262 = vmul.f32 0.5, %v2261
    %v2263 = vsub.f32 1.5, %v2262
    %v2264 = vmul.f32 %v2259, %v2263
    %vm2265 = vweird.f32 %v1880
    %vm2266 = vweird.f32 %v2259
    %vm2267 = vmor %vm2265, %vm2266
    %v2268 = vsel %vm2267, %v2259, %v2264
    %v2269 = vrsqrt.pop %v1881
    %v2270 = vmul.f32 %v2269, %v1881
    %v2271 = vmul.f32 %v2270, %v2269
    %v2272 = vmul.f32 0.5, %v2271
    %v2273 = vsub.f32 1.5, %v2272
    %v2274 = vmul.f32 %v2269, %v2273
    %vm2275 = vweird.f32 %v1881
    %vm2276 = vweird.f32 %v2269
    %vm2277 = vmor %vm2275, %vm2276
    %v2278 = vsel %vm2277, %v2269, %v2274
    %v2279 = vrsqrt.pop %v1882
    %v2280 = vmul.f32 %v2279, %v1882
    %v2281 = vmul.f32 %v2280, %v2279
    %v2282 = vmul.f32 0.5, %v2281
    %v2283 = vsub.f32 1.5, %v2282
    %v2284 = vmul.f32 %v2279, %v2283
    %vm2285 = vweird.f32 %v1882
    %vm2286 = vweird.f32 %v2279
    %vm2287 = vmor %vm2285, %vm2286
    %v2288 = vsel %vm2287, %v2279, %v2284
    %v2289 = vrsqrt.pop %v1883
    %v2290 = vmul.f32 %v2289, %v1883
    %v2291 = vmul.f32 %v2290, %v2289
    %v2292 = vmul.f32 0.5, %v2291
    %v2293 = vsub.f32 1.5, %v2292
    %v2294 = vmul.f32 %v2289, %v2293
    %vm2295 = vweird.f32 %v1883
    %vm2296 = vweird.f32 %v2289
    %vm2297 = vmor %vm2295, %vm2296
    %v2298 = vsel %vm2297, %v2289, %v2294
    %v2299 = vrsqrt.pop %v1884
    %v2300 = vmul.f32 %v2299, %v1884
    %v2301 = vmul.f32 %v2300, %v2299
    %v2302 = vmul.f32 0.5, %v2301
    %v2303 = vsub.f32 1.5, %v2302
    %v2304 = vmul.f32 %v2299, %v2303
    %vm2305 = vweird.f32 %v1884
    %vm2306 = vweird.f32 %v2299
    %vm2307 = vmor %vm2305, %vm2306
    %v2308 = vsel %vm2307, %v2299, %v2304
    %v2309 = vrsqrt.pop %v1885
    %v2310 = vmul.f32 %v2309, %v1885
    %v2311 = vmul.f32 %v2310, %v2309
    %v2312 = vmul.f32 0.5, %v2311
    %v2313 = vsub.f32 1.5, %v2312
    %v2314 = vmul.f32 %v2309, %v2313
    %vm2315 = vweird.f32 %v1885
    %vm2316 = vweird.f32 %v2309
    %vm2317 = vmor %vm2315, %vm2316
    %v2318 = vsel %vm2317, %v2309, %v2314
    %v2319 = vrsqrt.pop %v1886
    %v2320 = vmul.f32 %v2319, %v1886
    %v2321 = vmul.f32 %v2320, %v2319
    %v2322 = vmul.f32 0.5, %v2321
    %v2323 = vsub.f32 1.5, %v2322
    %v2324 = vmul.f32 %v2319, %v2323
    %vm2325 = vweird.f32 %v1886
    %vm2326 = vweird.f32 %v2319
    %vm2327 = vmor %vm2325, %vm2326
    %v2328 = vsel %vm2327, %v2319, %v2324
    %v2329 = vrsqrt.pop %v1887
    %v2330 = vmul.f32 %v2329, %v1887
    %v2331 = vmul.f32 %v2330, %v2329
    %v2332 = vmul.f32 0.5, %v2331
    %v2333 = vsub.f32 1.5, %v2332
    %v2334 = vmul.f32 %v2329, %v2333
    %vm2335 = vweird.f32 %v1887
    %vm2336 = vweird.f32 %v2329
    %vm2337 = vmor %vm2335, %vm2336
    %v2338 = vsel %vm2337, %v2329, %v2334
    %v2339 = vrsqrt.pop %v1888
    %v2340 = vmul.f32 %v2339, %v1888
    %v2341 = vmul.f32 %v2340, %v2339
    %v2342 = vmul.f32 0.5, %v2341
    %v2343 = vsub.f32 1.5, %v2342
    %v2344 = vmul.f32 %v2339, %v2343
    %vm2345 = vweird.f32 %v1888
    %vm2346 = vweird.f32 %v2339
    %vm2347 = vmor %vm2345, %vm2346
    %v2348 = vsel %vm2347, %v2339, %v2344
    %v2349 = vrsqrt.pop %v1889
    %v2350 = vmul.f32 %v2349, %v1889
    %v2351 = vmul.f32 %v2350, %v2349
    %v2352 = vmul.f32 0.5, %v2351
    %v2353 = vsub.f32 1.5, %v2352
    %v2354 = vmul.f32 %v2349, %v2353
    %vm2355 = vweird.f32 %v1889
    %vm2356 = vweird.f32 %v2349
    %vm2357 = vmor %vm2355, %vm2356
    %v2358 = vsel %vm2357, %v2349, %v2354
    %v2359 = vrsqrt.pop %v1890
    %v2360 = vmul.f32 %v2359, %v1890
    %v2361 = vmul.f32 %v2360, %v2359
    %v2362 = vmul.f32 0.5, %v2361
    %v2363 = vsub.f32 1.5, %v2362
    %v2364 = vmul.f32 %v2359, %v2363
    %vm2365 = vweird.f32 %v1890
    %vm2366 = vweird.f32 %v2359
    %vm2367 = vmor %vm2365, %vm2366
    %v2368 = vsel %vm2367, %v2359, %v2364
    %v2369 = vrsqrt.pop %v1891
    %v2370 = vmul.f32 %v2369, %v1891
    %v2371 = vmul.f32 %v2370, %v2369
    %v2372 = vmul.f32 0.5, %v2371
    %v2373 = vsub.f32 1.5, %v2372
    %v2374 = vmul.f32 %v2369, %v2373
    %vm2375 = vweird.f32 %v1891
    %vm2376 = vweird.f32 %v2369
    %vm2377 = vmor %vm2375, %vm2376
    %v2378 = vsel %vm2377, %v2369, %v2374
    %v2379 = vrsqrt.pop %v1892
    %v2380 = vmul.f32 %v2379, %v1892
    %v2381 = vmul.f32 %v2380, %v2379
    %v2382 = vmul.f32 0.5, %v2381
    %v2383 = vsub.f32 1.5, %v2382
    %v2384 = vmul.f32 %v2379, %v2383
    %vm2385 = vweird.f32 %v1892
    %vm2386 = vweird.f32 %v2379
    %vm2387 = vmor %vm2385, %vm2386
    %v2388 = vsel %vm2387, %v2379, %v2384
    %v2389 = vrsqrt.pop %v1893
    %v2390 = vmul.f32 %v2389, %v1893
    %v2391 = vmul.f32 %v2390, %v2389
    %v2392 = vmul.f32 0.5, %v2391
    %v2393 = vsub.f32 1.5, %v2392
    %v2394 = vmul.f32 %v2389, %v2393
    %vm2395 = vweird.f32 %v1893
    %vm2396 = vweird.f32 %v2389
    %vm2397 = vmor %vm2395, %vm2396
    %v2398 = vsel %vm2397, %v2389, %v2394
    %v2399 = vrsqrt.pop %v1894
    %v2400 = vmul.f32 %v2399, %v1894
    %v2401 = vmul.f32 %v2400, %v2399
    %v2402 = vmul.f32 0.5, %v2401
    %v2403 = vsub.f32 1.5, %v2402
    %v2404 = vmul.f32 %v2399, %v2403
    %vm2405 = vweird.f32 %v1894
    %vm2406 = vweird.f32 %v2399
    %vm2407 = vmor %vm2405, %vm2406
    %v2408 = vsel %vm2407, %v2399, %v2404
    %v2409 = vrsqrt.pop %v1895
    %v2410 = vmul.f32 %v2409, %v1895
    %v2411 = vmul.f32 %v2410, %v2409
    %v2412 = vmul.f32 0.5, %v2411
    %v2413 = vsub.f32 1.5, %v2412
    %v2414 = vmul.f32 %v2409, %v2413
    %vm2415 = vweird.f32 %v1895
    %vm2416 = vweird.f32 %v2409
    %vm2417 = vmor %vm2415, %vm2416
    %v2418 = vsel %vm2417, %v2409, %v2414
    %v2419 = vrsqrt.pop %v1896
    %v2420 = vmul.f32 %v2419, %v1896
    %v2421 = vmul.f32 %v2420, %v2419
    %v2422 = vmul.f32 0.5, %v2421
    %v2423 = vsub.f32 1.5, %v2422
    %v2424 = vmul.f32 %v2419, %v2423
    %vm2425 = vweird.f32 %v1896
    %vm2426 = vweird.f32 %v2419
    %vm2427 = vmor %vm2425, %vm2426
    %v2428 = vsel %vm2427, %v2419, %v2424
    %v2429 = vrsqrt.pop %v1897
    %v2430 = vmul.f32 %v2429, %v1897
    %v2431 = vmul.f32 %v2430, %v2429
    %v2432 = vmul.f32 0.5, %v2431
    %v2433 = vsub.f32 1.5, %v2432
    %v2434 = vmul.f32 %v2429, %v2433
    %vm2435 = vweird.f32 %v1897
    %vm2436 = vweird.f32 %v2429
    %vm2437 = vmor %vm2435, %vm2436
    %v2438 = vsel %vm2437, %v2429, %v2434
    %v2439 = vrsqrt.pop %v1898
    %v2440 = vmul.f32 %v2439, %v1898
    %v2441 = vmul.f32 %v2440, %v2439
    %v2442 = vmul.f32 0.5, %v2441
    %v2443 = vsub.f32 1.5, %v2442
    %v2444 = vmul.f32 %v2439, %v2443
    %vm2445 = vweird.f32 %v1898
    %vm2446 = vweird.f32 %v2439
    %vm2447 = vmor %vm2445, %vm2446
    %v2448 = vsel %vm2447, %v2439, %v2444
    %v2449 = vrsqrt.pop %v1899
    %v2450 = vmul.f32 %v2449, %v1899
    %v2451 = vmul.f32 %v2450, %v2449
    %v2452 = vmul.f32 0.5, %v2451
    %v2453 = vsub.f32 1.5, %v2452
    %v2454 = vmul.f32 %v2449, %v2453
    %vm2455 = vweird.f32 %v1899
    %vm2456 = vweird.f32 %v2449
    %vm2457 = vmor %vm2455, %vm2456
    %v2458 = vsel %vm2457, %v2449, %v2454
    %v2459 = vrsqrt.pop %v1900
    %v2460 = vmul.f32 %v2459, %v1900
    %v2461 = vmul.f32 %v2460, %v2459
    %v2462 = vmul.f32 0.5, %v2461
    %v2463 = vsub.f32 1.5, %v2462
    %v2464 = vmul.f32 %v2459, %v2463
    %vm2465 = vweird.f32 %v1900
    %vm2466 = vweird.f32 %v2459
    %vm2467 = vmor %vm2465, %vm2466
    %v2468 = vsel %vm2467, %v2459, %v2464
    %v2469 = vrsqrt.pop %v1901
    %v2470 = vmul.f32 %v2469, %v1901
    %v2471 = vmul.f32 %v2470, %v2469
    %v2472 = vmul.f32 0.5, %v2471
    %v2473 = vsub.f32 1.5, %v2472
    %v2474 = vmul.f32 %v2469, %v2473
    %vm2475 = vweird.f32 %v1901
    %vm2476 = vweird.f32 %v2469
    %vm2477 = vmor %vm2475, %vm2476
    %v2478 = vsel %vm2477, %v2469, %v2474
    %v2479 = vrsqrt.pop %v1902
    %v2480 = vmul.f32 %v2479, %v1902
    %v2481 = vmul.f32 %v2480, %v2479
    %v2482 = vmul.f32 0.5, %v2481
    %v2483 = vsub.f32 1.5, %v2482
    %v2484 = vmul.f32 %v2479, %v2483
    %vm2485 = vweird.f32 %v1902
    %vm2486 = vweird.f32 %v2479
    %vm2487 = vmor %vm2485, %vm2486
    %v2488 = vsel %vm2487, %v2479, %v2484
    %v2489 = vrsqrt.pop %v1903
    %v2490 = vmul.f32 %v2489, %v1903
    %v2491 = vmul.f32 %v2490, %v2489
    %v2492 = vmul.f32 0.5, %v2491
    %v2493 = vsub.f32 1.5, %v2492
    %v2494 = vmul.f32 %v2489, %v2493
    %vm2495 = vweird.f32 %v1903
    %vm2496 = vweird.f32 %v2489
    %vm2497 = vmor %vm2495, %vm2496
    %v2498 = vsel %vm2497, %v2489, %v2494
    %v2499 = vrsqrt.pop %v1904
    %v2500 = vmul.f32 %v2499, %v1904
    %v2501 = vmul.f32 %v2500, %v2499
    %v2502 = vmul.f32 0.5, %v2501
    %v2503 = vsub.f32 1.5, %v2502
    %v2504 = vmul.f32 %v2499, %v2503
    %vm2505 = vweird.f32 %v1904
    %vm2506 = vweird.f32 %v2499
    %vm2507 = vmor %vm2505, %vm2506
    %v2508 = vsel %vm2507, %v2499, %v2504
    %v2509 = vrsqrt.pop %v1905
    %v2510 = vmul.f32 %v2509, %v1905
    %v2511 = vmul.f32 %v2510, %v2509
    %v2512 = vmul.f32 0.5, %v2511
    %v2513 = vsub.f32 1.5, %v2512
    %v2514 = vmul.f32 %v2509, %v2513
    %vm2515 = vweird.f32 %v1905
    %vm2516 = vweird.f32 %v2509
    %vm2517 = vmor %vm2515, %vm2516
    %v2518 = vsel %vm2517, %v2509, %v2514
    %v2519 = vrsqrt.pop %v1906
    %v2520 = vmul.f32 %v2519, %v1906
    %v2521 = vmul.f32 %v2520, %v2519
    %v2522 = vmul.f32 0.5, %v2521
    %v2523 = vsub.f32 1.5, %v2522
    %v2524 = vmul.f32 %v2519, %v2523
    %vm2525 = vweird.f32 %v1906
    %vm2526 = vweird.f32 %v2519
    %vm2527 = vmor %vm2525, %vm2526
    %v2528 = vsel %vm2527, %v2519, %v2524
    %v2529 = vrsqrt.pop %v1907
    %v2530 = vmul.f32 %v2529, %v1907
    %v2531 = vmul.f32 %v2530, %v2529
    %v2532 = vmul.f32 0.5, %v2531
    %v2533 = vsub.f32 1.5, %v2532
    %v2534 = vmul.f32 %v2529, %v2533
    %vm2535 = vweird.f32 %v1907
    %vm2536 = vweird.f32 %v2529
    %vm2537 = vmor %vm2535, %vm2536
    %v2538 = vsel %vm2537, %v2529, %v2534
    %v2539 = vrsqrt.pop %v1908
    %v2540 = vmul.f32 %v2539, %v1908
    %v2541 = vmul.f32 %v2540, %v2539
    %v2542 = vmul.f32 0.5, %v2541
    %v2543 = vsub.f32 1.5, %v2542
    %v2544 = vmul.f32 %v2539, %v2543
    %vm2545 = vweird.f32 %v1908
    %vm2546 = vweird.f32 %v2539
    %vm2547 = vmor %vm2545, %vm2546
    %v2548 = vsel %vm2547, %v2539, %v2544
    %v2549 = vsub.f32 %v876, %v1205
    %v2550 = vsub.f32 %v877, %v1205
    %v2551 = vsub.f32 %v878, %v1206
    %v2552 = vsub.f32 %v879, %v1206
    %v2553 = vsub.f32 %v880, %v1207
    %v2554 = vsub.f32 %v881, %v1207
    %v2555 = vsub.f32 %v882, %v1208
    %v2556 = vsub.f32 %v883, %v1208
    %v2557 = vsub.f32 %v884, %v1209
    %v2558 = vsub.f32 %v885, %v1209
    %v2559 = vsub.f32 %v886, %v1210
    %v2560 = vsub.f32 %v887, %v1210
    %v2561 = vsub.f32 %v888, %v1211
    %v2562 = vsub.f32 %v889, %v1211
    %v2563 = vsub.f32 %v890, %v1212
    %v2564 = vsub.f32 %v891, %v1212
    %v2565 = vsub.f32 %v892, %v1213
    %v2566 = vsub.f32 %v893, %v1213
    %v2567 = vsub.f32 %v894, %v1214
    %v2568 = vsub.f32 %v895, %v1214
    %v2569 = vsub.f32 %v896, %v1215
    %v2570 = vsub.f32 %v897, %v1215
    %v2571 = vsub.f32 %v898, %v1216
    %v2572 = vsub.f32 %v899, %v1216
    %v2573 = vsub.f32 %v900, %v1217
    %v2574 = vsub.f32 %v901, %v1217
    %v2575 = vsub.f32 %v902, %v1218
    %v2576 = vsub.f32 %v903, %v1218
    %v2577 = vsub.f32 %v904, %v1219
    %v2578 = vsub.f32 %v905, %v1219
    %v2579 = vsub.f32 %v906, %v1220
    %v2580 = vsub.f32 %v907, %v1220
    %v2581 = vsub.f32 %v908, %v1221
    %v2582 = vsub.f32 %v909, %v1221
    %v2583 = vsub.f32 %v910, %v1222
    %v2584 = vsub.f32 %v911, %v1222
    %v2585 = vsub.f32 %v912, %v1223
    %v2586 = vsub.f32 %v913, %v1223
    %v2587 = vsub.f32 %v914, %v1224
    %v2588 = vsub.f32 %v915, %v1224
    %v2589 = vsub.f32 %v916, %v1225
    %v2590 = vsub.f32 %v917, %v1225
    %v2591 = vsub.f32 %v918, %v1226
    %v2592 = vsub.f32 %v919, %v1226
    %v2593 = vsub.f32 %v920, %v1227
    %v2594 = vsub.f32 %v921, %v1227
    %v2595 = vsub.f32 %v922, %v1228
    %v2596 = vsub.f32 %v923, %v1228
    %v2597 = vsub.f32 %v924, %v1229
    %v2598 = vsub.f32 %v925, %v1229
    %v2599 = vsub.f32 %v926, %v1230
    %v2600 = vsub.f32 %v927, %v1230
    %v2601 = vsub.f32 %v928, %v1231
    %v2602 = vsub.f32 %v929, %v1231
    %v2603 = vsub.f32 %v930, %v1232
    %v2604 = vsub.f32 %v931, %v1232
    %v2605 = vsub.f32 %v932, %v1233
    %v2606 = vsub.f32 %v933, %v1233
    %v2607 = vsub.f32 %v934, %v1234
    %v2608 = vsub.f32 %v935, %v1234
    %v2609 = vsub.f32 %v936, %v1235
    %v2610 = vsub.f32 %v937, %v1235
    %v2611 = vsub.f32 %v938, %v1236
    %v2612 = vsub.f32 %v939, %v1236
    %v2613 = vsub.f32 %v940, %v1237
    %v2614 = vsub.f32 %v941, %v1237
    %v2615 = vsub.f32 %v942, %v1238
    %v2616 = vsub.f32 %v943, %v1238
    %v2617 = vsub.f32 %v944, %v1239
    %v2618 = vsub.f32 %v945, %v1239
    %v2619 = vsub.f32 %v946, %v1240
    %v2620 = vsub.f32 %v947, %v1240
    %v2621 = vsub.f32 %v948, %v1241
    %v2622 = vsub.f32 %v949, %v1241
    %v2623 = vsub.f32 %v950, %v1242
    %v2624 = vsub.f32 %v951, %v1242
    %v2625 = vsub.f32 %v952, %v1243
    %v2626 = vsub.f32 %v953, %v1243
    %v2627 = vsub.f32 %v954, %v1244
    %v2628 = vsub.f32 %v955, %v1244
    %v2629 = vsub.f32 %v956, %v1245
    %v2630 = vsub.f32 %v957, %v1245
    %v2631 = vsub.f32 %v958, %v1246
    %v2632 = vsub.f32 %v959, %v1246
    %v2633 = vsub.f32 %v960, %v1247
    %v2634 = vsub.f32 %v961, %v1247
    %v2635 = vsub.f32 %v962, %v1248
    %v2636 = vsub.f32 %v963, %v1248
    %v2637 = vsub.f32 %v964, %v1249
    %v2638 = vsub.f32 %v965, %v1249
    %v2639 = vsub.f32 %v966, %v1250
    %v2640 = vsub.f32 %v967, %v1250
    %v2641 = vsub.f32 %v968, %v1251
    %v2642 = vsub.f32 %v969, %v1251
    %v2643 = vsub.f32 %v970, %v1252
    %v2644 = vsub.f32 %v971, %v1252
    %v2645 = vsub.f32 %v972, %v1253
    %v2646 = vsub.f32 %v973, %v1253
    %v2647 = vsub.f32 %v974, %v1254
    %v2648 = vsub.f32 %v975, %v1254
    %v2649 = vsub.f32 %v976, %v1255
    %v2650 = vsub.f32 %v977, %v1255
    %v2651 = vsub.f32 %v978, %v1256
    %v2652 = vsub.f32 %v979, %v1256
    %v2653 = vsub.f32 %v980, %v1257
    %v2654 = vsub.f32 %v981, %v1257
    %v2655 = vsub.f32 %v982, %v1258
    %v2656 = vsub.f32 %v983, %v1258
    %v2657 = vsub.f32 %v984, %v1259
    %v2658 = vsub.f32 %v985, %v1259
    %v2659 = vsub.f32 %v986, %v1260
    %v2660 = vsub.f32 %v987, %v1260
    %v2661 = vsub.f32 %v988, %v1261
    %v2662 = vsub.f32 %v989, %v1261
    %v2663 = vsub.f32 %v990, %v1262
    %v2664 = vsub.f32 %v991, %v1262
    %v2665 = vsub.f32 %v992, %v1263
    %v2666 = vsub.f32 %v993, %v1263
    %v2667 = vsub.f32 %v994, %v1264
    %v2668 = vsub.f32 %v995, %v1264
    %v2669 = vsub.f32 %v996, %v1265
    %v2670 = vsub.f32 %v997, %v1265
    %v2671 = vsub.f32 %v998, %v1266
    %v2672 = vsub.f32 %v999, %v1266
    %v2673 = vsub.f32 %v1000, %v1267
    %v2674 = vsub.f32 %v1001, %v1267
    %v2675 = vsub.f32 %v1002, %v1268
    %v2676 = vsub.f32 %v1003, %v1268
    %v2677 = vmul.f32 %v2549, %v1918
    %v2678 = vmul.f32 %v2550, %v1918
    %v2679 = vmul.f32 %v2551, %v1928
    %v2680 = vmul.f32 %v2552, %v1928
    %v2681 = vmul.f32 %v2553, %v1938
    %v2682 = vmul.f32 %v2554, %v1938
    %v2683 = vmul.f32 %v2555, %v1948
    %v2684 = vmul.f32 %v2556, %v1948
    %v2685 = vmul.f32 %v2557, %v1958
    %v2686 = vmul.f32 %v2558, %v1958
    %v2687 = vmul.f32 %v2559, %v1968
    %v2688 = vmul.f32 %v2560, %v1968
    %v2689 = vmul.f32 %v2561, %v1978
    %v2690 = vmul.f32 %v2562, %v1978
    %v2691 = vmul.f32 %v2563, %v1988
    %v2692 = vmul.f32 %v2564, %v1988
    %v2693 = vmul.f32 %v2565, %v1998
    %v2694 = vmul.f32 %v2566, %v1998
    %v2695 = vmul.f32 %v2567, %v2008
    %v2696 = vmul.f32 %v2568, %v2008
    %v2697 = vmul.f32 %v2569, %v2018
    %v2698 = vmul.f32 %v2570, %v2018
    %v2699 = vmul.f32 %v2571, %v2028
    %v2700 = vmul.f32 %v2572, %v2028
    %v2701 = vmul.f32 %v2573, %v2038
    %v2702 = vmul.f32 %v2574, %v2038
    %v2703 = vmul.f32 %v2575, %v2048
    %v2704 = vmul.f32 %v2576, %v2048
    %v2705 = vmul.f32 %v2577, %v2058
    %v2706 = vmul.f32 %v2578, %v2058
    %v2707 = vmul.f32 %v2579, %v2068
    %v2708 = vmul.f32 %v2580, %v2068
    %v2709 = vmul.f32 %v2581, %v2078
    %v2710 = vmul.f32 %v2582, %v2078
    %v2711 = vmul.f32 %v2583, %v2088
    %v2712 = vmul.f32 %v2584, %v2088
    %v2713 = vmul.f32 %v2585, %v2098
    %v2714 = vmul.f32 %v2586, %v2098
    %v2715 = vmul.f32 %v2587, %v2108
    %v2716 = vmul.f32 %v2588, %v2108
    %v2717 = vmul.f32 %v2589, %v2118
    %v2718 = vmul.f32 %v2590, %v2118
    %v2719 = vmul.f32 %v2591, %v2128
    %v2720 = vmul.f32 %v2592, %v2128
    %v2721 = vmul.f32 %v2593, %v2138
    %v2722 = vmul.f32 %v2594, %v2138
    %v2723 = vmul.f32 %v2595, %v2148
    %v2724 = vmul.f32 %v2596, %v2148
    %v2725 = vmul.f32 %v2597, %v2158
    %v2726 = vmul.f32 %v2598, %v2158
    %v2727 = vmul.f32 %v2599, %v2168
    %v2728 = vmul.f32 %v2600, %v2168
    %v2729 = vmul.f32 %v2601, %v2178
    %v2730 = vmul.f32 %v2602, %v2178
    %v2731 = vmul.f32 %v2603, %v2188
    %v2732 = vmul.f32 %v2604, %v2188
    %v2733 = vmul.f32 %v2605, %v2198
    %v2734 = vmul.f32 %v2606, %v2198
    %v2735 = vmul.f32 %v2607, %v2208
    %v2736 = vmul.f32 %v2608, %v2208
    %v2737 = vmul.f32 %v2609, %v2218
    %v2738 = vmul.f32 %v2610, %v2218
    %v2739 = vmul.f32 %v2611, %v2228
    %v2740 = vmul.f32 %v2612, %v2228
    %v2741 = vmul.f32 %v2613, %v2238
    %v2742 = vmul.f32 %v2614, %v2238
    %v2743 = vmul.f32 %v2615, %v2248
    %v2744 = vmul.f32 %v2616, %v2248
    %v2745 = vmul.f32 %v2617, %v2258
    %v2746 = vmul.f32 %v2618, %v2258
    %v2747 = vmul.f32 %v2619, %v2268
    %v2748 = vmul.f32 %v2620, %v2268
    %v2749 = vmul.f32 %v2621, %v2278
    %v2750 = vmul.f32 %v2622, %v2278
    %v2751 = vmul.f32 %v2623, %v2288
    %v2752 = vmul.f32 %v2624, %v2288
    %v2753 = vmul.f32 %v2625, %v2298
    %v2754 = vmul.f32 %v2626, %v2298
    %v2755 = vmul.f32 %v2627, %v2308
    %v2756 = vmul.f32 %v2628, %v2308
    %v2757 = vmul.f32 %v2629, %v2318
    %v2758 = vmul.f32 %v2630, %v2318
    %v2759 = vmul.f32 %v2631, %v2328
    %v2760 = vmul.f32 %v2632, %v2328
    %v2761 = vmul.f32 %v2633, %v2338
    %v2762 = vmul.f32 %v2634, %v2338
    %v2763 = vmul.f32 %v2635, %v2348
    %v2764 = vmul.f32 %v2636, %v2348
    %v2765 = vmul.f32 %v2637, %v2358
    %v2766 = vmul.f32 %v2638, %v2358
    %v2767 = vmul.f32 %v2639, %v2368
    %v2768 = vmul.f32 %v2640, %v2368
    %v2769 = vmul.f32 %v2641, %v2378
    %v2770 = vmul.f32 %v2642, %v2378
    %v2771 = vmul.f32 %v2643, %v2388
    %v2772 = vmul.f32 %v2644, %v2388
    %v2773 = vmul.f32 %v2645, %v2398
    %v2774 = vmul.f32 %v2646, %v2398
    %v2775 = vmul.f32 %v2647, %v2408
    %v2776 = vmul.f32 %v2648, %v2408
    %v2777 = vmul.f32 %v2649, %v2418
    %v2778 = vmul.f32 %v2650, %v2418
    %v2779 = vmul.f32 %v2651, %v2428
    %v2780 = vmul.f32 %v2652, %v2428
    %v2781 = vmul.f32 %v2653, %v2438
    %v2782 = vmul.f32 %v2654, %v2438
    %v2783 = vmul.f32 %v2655, %v2448
    %v2784 = vmul.f32 %v2656, %v2448
    %v2785 = vmul.f32 %v2657, %v2458
    %v2786 = vmul.f32 %v2658, %v2458
    %v2787 = vmul.f32 %v2659, %v2468
    %v2788 = vmul.f32 %v2660, %v2468
    %v2789 = vmul.f32 %v2661, %v2478
    %v2790 = vmul.f32 %v2662, %v2478
    %v2791 = vmul.f32 %v2663, %v2488
    %v2792 = vmul.f32 %v2664, %v2488
    %v2793 = vmul.f32 %v2665, %v2498
    %v2794 = vmul.f32 %v2666, %v2498
    %v2795 = vmul.f32 %v2667, %v2508
    %v2796 = vmul.f32 %v2668, %v2508
    %v2797 = vmul.f32 %v2669, %v2518
    %v2798 = vmul.f32 %v2670, %v2518
    %v2799 = vmul.f32 %v2671, %v2528
    %v2800 = vmul.f32 %v2672, %v2528
    %v2801 = vmul.f32 %v2673, %v2538
    %v2802 = vmul.f32 %v2674, %v2538
    %v2803 = vmul.f32 %v2675, %v2548
    %v2804 = vmul.f32 %v2676, %v2548
    %v2806 = vperm.slane %v1004, 0
    %v2807 = vperm.slane %v1004, 1
    %v2810 = vmul.f32 %v2677, %v2806
    %v2811 = vmul.f32 %v2678, %v2807
    %v2812 = vmul.f32 %v2679, %v2806
    %v2813 = vmul.f32 %v2680, %v2807
    %v2814 = vmul.f32 %v2681, %v2806
    %v2815 = vmul.f32 %v2682, %v2807
    %v2816 = vmul.f32 %v2683, %v2806
    %v2817 = vmul.f32 %v2684, %v2807
    %v2818 = vmul.f32 %v2685, %v2806
    %v2819 = vmul.f32 %v2686, %v2807
    %v2820 = vmul.f32 %v2687, %v2806
    %v2821 = vmul.f32 %v2688, %v2807
    %v2822 = vmul.f32 %v2689, %v2806
    %v2823 = vmul.f32 %v2690, %v2807
    %v2824 = vmul.f32 %v2691, %v2806
    %v2825 = vmul.f32 %v2692, %v2807
    %v2826 = vmul.f32 %v2693, %v2806
    %v2827 = vmul.f32 %v2694, %v2807
    %v2828 = vmul.f32 %v2695, %v2806
    %v2829 = vmul.f32 %v2696, %v2807
    %v2830 = vmul.f32 %v2697, %v2806
    %v2831 = vmul.f32 %v2698, %v2807
    %v2832 = vmul.f32 %v2699, %v2806
    %v2833 = vmul.f32 %v2700, %v2807
    %v2834 = vmul.f32 %v2701, %v2806
    %v2835 = vmul.f32 %v2702, %v2807
    %v2836 = vmul.f32 %v2703, %v2806
    %v2837 = vmul.f32 %v2704, %v2807
    %v2838 = vmul.f32 %v2705, %v2806
    %v2839 = vmul.f32 %v2706, %v2807
    %v2840 = vmul.f32 %v2707, %v2806
    %v2841 = vmul.f32 %v2708, %v2807
    %v2842 = vmul.f32 %v2709, %v2806
    %v2843 = vmul.f32 %v2710, %v2807
    %v2844 = vmul.f32 %v2711, %v2806
    %v2845 = vmul.f32 %v2712, %v2807
    %v2846 = vmul.f32 %v2713, %v2806
    %v2847 = vmul.f32 %v2714, %v2807
    %v2848 = vmul.f32 %v2715, %v2806
    %v2849 = vmul.f32 %v2716, %v2807
    %v2850 = vmul.f32 %v2717, %v2806
    %v2851 = vmul.f32 %v2718, %v2807
    %v2852 = vmul.f32 %v2719, %v2806
    %v2853 = vmul.f32 %v2720, %v2807
    %v2854 = vmul.f32 %v2721, %v2806
    %v2855 = vmul.f32 %v2722, %v2807
    %v2856 = vmul.f32 %v2723, %v2806
    %v2857 = vmul.f32 %v2724, %v2807
    %v2858 = vmul.f32 %v2725, %v2806
    %v2859 = vmul.f32 %v2726, %v2807
    %v2860 = vmul.f32 %v2727, %v2806
    %v2861 = vmul.f32 %v2728, %v2807
    %v2862 = vmul.f32 %v2729, %v2806
    %v2863 = vmul.f32 %v2730, %v2807
    %v2864 = vmul.f32 %v2731, %v2806
    %v2865 = vmul.f32 %v2732, %v2807
    %v2866 = vmul.f32 %v2733, %v2806
    %v2867 = vmul.f32 %v2734, %v2807
    %v2868 = vmul.f32 %v2735, %v2806
    %v2869 = vmul.f32 %v2736, %v2807
    %v2870 = vmul.f32 %v2737, %v2806
    %v2871 = vmul.f32 %v2738, %v2807
    %v2872 = vmul.f32 %v2739, %v2806
    %v2873 = vmul.f32 %v2740, %v2807
    %v2874 = vmul.f32 %v2741, %v2806
    %v2875 = vmul.f32 %v2742, %v2807
    %v2876 = vmul.f32 %v2743, %v2806
    %v2877 = vmul.f32 %v2744, %v2807
    %v2878 = vmul.f32 %v2745, %v2806
    %v2879 = vmul.f32 %v2746, %v2807
    %v2880 = vmul.f32 %v2747, %v2806
    %v2881 = vmul.f32 %v2748, %v2807
    %v2882 = vmul.f32 %v2749, %v2806
    %v2883 = vmul.f32 %v2750, %v2807
    %v2884 = vmul.f32 %v2751, %v2806
    %v2885 = vmul.f32 %v2752, %v2807
    %v2886 = vmul.f32 %v2753, %v2806
    %v2887 = vmul.f32 %v2754, %v2807
    %v2888 = vmul.f32 %v2755, %v2806
    %v2889 = vmul.f32 %v2756, %v2807
    %v2890 = vmul.f32 %v2757, %v2806
    %v2891 = vmul.f32 %v2758, %v2807
    %v2892 = vmul.f32 %v2759, %v2806
    %v2893 = vmul.f32 %v2760, %v2807
    %v2894 = vmul.f32 %v2761, %v2806
    %v2895 = vmul.f32 %v2762, %v2807
    %v2896 = vmul.f32 %v2763, %v2806
    %v2897 = vmul.f32 %v2764, %v2807
    %v2898 = vmul.f32 %v2765, %v2806
    %v2899 = vmul.f32 %v2766, %v2807
    %v2900 = vmul.f32 %v2767, %v2806
    %v2901 = vmul.f32 %v2768, %v2807
    %v2902 = vmul.f32 %v2769, %v2806
    %v2903 = vmul.f32 %v2770, %v2807
    %v2904 = vmul.f32 %v2771, %v2806
    %v2905 = vmul.f32 %v2772, %v2807
    %v2906 = vmul.f32 %v2773, %v2806
    %v2907 = vmul.f32 %v2774, %v2807
    %v2908 = vmul.f32 %v2775, %v2806
    %v2909 = vmul.f32 %v2776, %v2807
    %v2910 = vmul.f32 %v2777, %v2806
    %v2911 = vmul.f32 %v2778, %v2807
    %v2912 = vmul.f32 %v2779, %v2806
    %v2913 = vmul.f32 %v2780, %v2807
    %v2914 = vmul.f32 %v2781, %v2806
    %v2915 = vmul.f32 %v2782, %v2807
    %v2916 = vmul.f32 %v2783, %v2806
    %v2917 = vmul.f32 %v2784, %v2807
    %v2918 = vmul.f32 %v2785, %v2806
    %v2919 = vmul.f32 %v2786, %v2807
    %v2920 = vmul.f32 %v2787, %v2806
    %v2921 = vmul.f32 %v2788, %v2807
    %v2922 = vmul.f32 %v2789, %v2806
    %v2923 = vmul.f32 %v2790, %v2807
    %v2924 = vmul.f32 %v2791, %v2806
    %v2925 = vmul.f32 %v2792, %v2807
    %v2926 = vmul.f32 %v2793, %v2806
    %v2927 = vmul.f32 %v2794, %v2807
    %v2928 = vmul.f32 %v2795, %v2806
    %v2929 = vmul.f32 %v2796, %v2807
    %v2930 = vmul.f32 %v2797, %v2806
    %v2931 = vmul.f32 %v2798, %v2807
    %v2932 = vmul.f32 %v2799, %v2806
    %v2933 = vmul.f32 %v2800, %v2807
    %v2934 = vmul.f32 %v2801, %v2806
    %v2935 = vmul.f32 %v2802, %v2807
    %v2936 = vmul.f32 %v2803, %v2806
    %v2937 = vmul.f32 %v2804, %v2807
    %v2939 = vperm.slane %v1005, 0
    %v2940 = vperm.slane %v1005, 1
    %v2943 = vadd.f32 %v2810, %v2939
    %v2944 = vadd.f32 %v2811, %v2940
    %v2945 = vadd.f32 %v2812, %v2939
    %v2946 = vadd.f32 %v2813, %v2940
    %v2947 = vadd.f32 %v2814, %v2939
    %v2948 = vadd.f32 %v2815, %v2940
    %v2949 = vadd.f32 %v2816, %v2939
    %v2950 = vadd.f32 %v2817, %v2940
    %v2951 = vadd.f32 %v2818, %v2939
    %v2952 = vadd.f32 %v2819, %v2940
    %v2953 = vadd.f32 %v2820, %v2939
    %v2954 = vadd.f32 %v2821, %v2940
    %v2955 = vadd.f32 %v2822, %v2939
    %v2956 = vadd.f32 %v2823, %v2940
    %v2957 = vadd.f32 %v2824, %v2939
    %v2958 = vadd.f32 %v2825, %v2940
    %v2959 = vadd.f32 %v2826, %v2939
    %v2960 = vadd.f32 %v2827, %v2940
    %v2961 = vadd.f32 %v2828, %v2939
    %v2962 = vadd.f32 %v2829, %v2940
    %v2963 = vadd.f32 %v2830, %v2939
    %v2964 = vadd.f32 %v2831, %v2940
    %v2965 = vadd.f32 %v2832, %v2939
    %v2966 = vadd.f32 %v2833, %v2940
    %v2967 = vadd.f32 %v2834, %v2939
    %v2968 = vadd.f32 %v2835, %v2940
    %v2969 = vadd.f32 %v2836, %v2939
    %v2970 = vadd.f32 %v2837, %v2940
    %v2971 = vadd.f32 %v2838, %v2939
    %v2972 = vadd.f32 %v2839, %v2940
    %v2973 = vadd.f32 %v2840, %v2939
    %v2974 = vadd.f32 %v2841, %v2940
    %v2975 = vadd.f32 %v2842, %v2939
    %v2976 = vadd.f32 %v2843, %v2940
    %v2977 = vadd.f32 %v2844, %v2939
    %v2978 = vadd.f32 %v2845, %v2940
    %v2979 = vadd.f32 %v2846, %v2939
    %v2980 = vadd.f32 %v2847, %v2940
    %v2981 = vadd.f32 %v2848, %v2939
    %v2982 = vadd.f32 %v2849, %v2940
    %v2983 = vadd.f32 %v2850, %v2939
    %v2984 = vadd.f32 %v2851, %v2940
    %v2985 = vadd.f32 %v2852, %v2939
    %v2986 = vadd.f32 %v2853, %v2940
    %v2987 = vadd.f32 %v2854, %v2939
    %v2988 = vadd.f32 %v2855, %v2940
    %v2989 = vadd.f32 %v2856, %v2939
    %v2990 = vadd.f32 %v2857, %v2940
    %v2991 = vadd.f32 %v2858, %v2939
    %v2992 = vadd.f32 %v2859, %v2940
    %v2993 = vadd.f32 %v2860, %v2939
    %v2994 = vadd.f32 %v2861, %v2940
    %v2995 = vadd.f32 %v2862, %v2939
    %v2996 = vadd.f32 %v2863, %v2940
    %v2997 = vadd.f32 %v2864, %v2939
    %v2998 = vadd.f32 %v2865, %v2940
    %v2999 = vadd.f32 %v2866, %v2939
    %v3000 = vadd.f32 %v2867, %v2940
    %v3001 = vadd.f32 %v2868, %v2939
    %v3002 = vadd.f32 %v2869, %v2940
    %v3003 = vadd.f32 %v2870, %v2939
    %v3004 = vadd.f32 %v2871, %v2940
    %v3005 = vadd.f32 %v2872, %v2939
    %v3006 = vadd.f32 %v2873, %v2940
    %v3007 = vadd.f32 %v2874, %v2939
    %v3008 = vadd.f32 %v2875, %v2940
    %v3009 = vadd.f32 %v2876, %v2939
    %v3010 = vadd.f32 %v2877, %v2940
    %v3011 = vadd.f32 %v2878, %v2939
    %v3012 = vadd.f32 %v2879, %v2940
    %v3013 = vadd.f32 %v2880, %v2939
    %v3014 = vadd.f32 %v2881, %v2940
    %v3015 = vadd.f32 %v2882, %v2939
    %v3016 = vadd.f32 %v2883, %v2940
    %v3017 = vadd.f32 %v2884, %v2939
    %v3018 = vadd.f32 %v2885, %v2940
    %v3019 = vadd.f32 %v2886, %v2939
    %v3020 = vadd.f32 %v2887, %v2940
    %v3021 = vadd.f32 %v2888, %v2939
    %v3022 = vadd.f32 %v2889, %v2940
    %v3023 = vadd.f32 %v2890, %v2939
    %v3024 = vadd.f32 %v2891, %v2940
    %v3025 = vadd.f32 %v2892, %v2939
    %v3026 = vadd.f32 %v2893, %v2940
    %v3027 = vadd.f32 %v2894, %v2939
    %v3028 = vadd.f32 %v2895, %v2940
    %v3029 = vadd.f32 %v2896, %v2939
    %v3030 = vadd.f32 %v2897, %v2940
    %v3031 = vadd.f32 %v2898, %v2939
    %v3032 = vadd.f32 %v2899, %v2940
    %v3033 = vadd.f32 %v2900, %v2939
    %v3034 = vadd.f32 %v2901, %v2940
    %v3035 = vadd.f32 %v2902, %v2939
    %v3036 = vadd.f32 %v2903, %v2940
    %v3037 = vadd.f32 %v2904, %v2939
    %v3038 = vadd.f32 %v2905, %v2940
    %v3039 = vadd.f32 %v2906, %v2939
    %v3040 = vadd.f32 %v2907, %v2940
    %v3041 = vadd.f32 %v2908, %v2939
    %v3042 = vadd.f32 %v2909, %v2940
    %v3043 = vadd.f32 %v2910, %v2939
    %v3044 = vadd.f32 %v2911, %v2940
    %v3045 = vadd.f32 %v2912, %v2939
    %v3046 = vadd.f32 %v2913, %v2940
    %v3047 = vadd.f32 %v2914, %v2939
    %v3048 = vadd.f32 %v2915, %v2940
    %v3049 = vadd.f32 %v2916, %v2939
    %v3050 = vadd.f32 %v2917, %v2940
    %v3051 = vadd.f32 %v2918, %v2939
    %v3052 = vadd.f32 %v2919, %v2940
    %v3053 = vadd.f32 %v2920, %v2939
    %v3054 = vadd.f32 %v2921, %v2940
    %v3055 = vadd.f32 %v2922, %v2939
    %v3056 = vadd.f32 %v2923, %v2940
    %v3057 = vadd.f32 %v2924, %v2939
    %v3058 = vadd.f32 %v2925, %v2940
    %v3059 = vadd.f32 %v2926, %v2939
    %v3060 = vadd.f32 %v2927, %v2940
    %v3061 = vadd.f32 %v2928, %v2939
    %v3062 = vadd.f32 %v2929, %v2940
    %v3063 = vadd.f32 %v2930, %v2939
    %v3064 = vadd.f32 %v2931, %v2940
    %v3065 = vadd.f32 %v2932, %v2939
    %v3066 = vadd.f32 %v2933, %v2940
    %v3067 = vadd.f32 %v2934, %v2939
    %v3068 = vadd.f32 %v2935, %v2940
    %v3069 = vadd.f32 %v2936, %v2939
    %v3070 = vadd.f32 %v2937, %v2940
    %v3071 = vpack.c.bf16 %v2945, %v2943
    %v3072 = vpack.c.bf16 %v2946, %v2944
    %v3073 = vpack.c.bf16 %v2949, %v2947
    %v3074 = vpack.c.bf16 %v2950, %v2948
    %v3075 = vpack.c.bf16 %v2953, %v2951
    %v3076 = vpack.c.bf16 %v2954, %v2952
    %v3077 = vpack.c.bf16 %v2957, %v2955
    %v3078 = vpack.c.bf16 %v2958, %v2956
    %v3079 = vpack.c.bf16 %v2961, %v2959
    %v3080 = vpack.c.bf16 %v2962, %v2960
    %v3081 = vpack.c.bf16 %v2965, %v2963
    %v3082 = vpack.c.bf16 %v2966, %v2964
    %v3083 = vpack.c.bf16 %v2969, %v2967
    %v3084 = vpack.c.bf16 %v2970, %v2968
    %v3085 = vpack.c.bf16 %v2973, %v2971
    %v3086 = vpack.c.bf16 %v2974, %v2972
    %v3087 = vpack.c.bf16 %v2977, %v2975
    %v3088 = vpack.c.bf16 %v2978, %v2976
    %v3089 = vpack.c.bf16 %v2981, %v2979
    %v3090 = vpack.c.bf16 %v2982, %v2980
    %v3091 = vpack.c.bf16 %v2985, %v2983
    %v3092 = vpack.c.bf16 %v2986, %v2984
    %v3093 = vpack.c.bf16 %v2989, %v2987
    %v3094 = vpack.c.bf16 %v2990, %v2988
    %v3095 = vpack.c.bf16 %v2993, %v2991
    %v3096 = vpack.c.bf16 %v2994, %v2992
    %v3097 = vpack.c.bf16 %v2997, %v2995
    %v3098 = vpack.c.bf16 %v2998, %v2996
    %v3099 = vpack.c.bf16 %v3001, %v2999
    %v3100 = vpack.c.bf16 %v3002, %v3000
    %v3101 = vpack.c.bf16 %v3005, %v3003
    %v3102 = vpack.c.bf16 %v3006, %v3004
    %v3103 = vpack.c.bf16 %v3009, %v3007
    %v3104 = vpack.c.bf16 %v3010, %v3008
    %v3105 = vpack.c.bf16 %v3013, %v3011
    %v3106 = vpack.c.bf16 %v3014, %v3012
    %v3107 = vpack.c.bf16 %v3017, %v3015
    %v3108 = vpack.c.bf16 %v3018, %v3016
    %v3109 = vpack.c.bf16 %v3021, %v3019
    %v3110 = vpack.c.bf16 %v3022, %v3020
    %v3111 = vpack.c.bf16 %v3025, %v3023
    %v3112 = vpack.c.bf16 %v3026, %v3024
    %v3113 = vpack.c.bf16 %v3029, %v3027
    %v3114 = vpack.c.bf16 %v3030, %v3028
    %v3115 = vpack.c.bf16 %v3033, %v3031
    %v3116 = vpack.c.bf16 %v3034, %v3032
    %v3117 = vpack.c.bf16 %v3037, %v3035
    %v3118 = vpack.c.bf16 %v3038, %v3036
    %v3119 = vpack.c.bf16 %v3041, %v3039
    %v3120 = vpack.c.bf16 %v3042, %v3040
    %v3121 = vpack.c.bf16 %v3045, %v3043
    %v3122 = vpack.c.bf16 %v3046, %v3044
    %v3123 = vpack.c.bf16 %v3049, %v3047
    %v3124 = vpack.c.bf16 %v3050, %v3048
    %v3125 = vpack.c.bf16 %v3053, %v3051
    %v3126 = vpack.c.bf16 %v3054, %v3052
    %v3127 = vpack.c.bf16 %v3057, %v3055
    %v3128 = vpack.c.bf16 %v3058, %v3056
    %v3129 = vpack.c.bf16 %v3061, %v3059
    %v3130 = vpack.c.bf16 %v3062, %v3060
    %v3131 = vpack.c.bf16 %v3065, %v3063
    %v3132 = vpack.c.bf16 %v3066, %v3064
    %v3133 = vpack.c.bf16 %v3069, %v3067
    %v3134 = vpack.c.bf16 %v3070, %v3068
    %v3135 = vld [vmem:[#allocation7] sm:$0xff]
    %v3136 = vld [vmem:[#allocation7 + $0x8] sm:$0xff]
    %v3137 = vld [vmem:[#allocation7 + $0x10] sm:$0xff]
    %v3138 = vld [vmem:[#allocation7 + $0x18] sm:$0xff]
    %v3139 = vld [vmem:[#allocation7 + $0x20] sm:$0xff]
    %v3140 = vld [vmem:[#allocation7 + $0x28] sm:$0xff]
    %v3141 = vld [vmem:[#allocation7 + $0x30] sm:$0xff]
    %v3142 = vld [vmem:[#allocation7 + $0x38] sm:$0xff]
    %v3143 = vld [vmem:[#allocation7 + $0x40] sm:$0xff]
    %v3144 = vld [vmem:[#allocation7 + $0x48] sm:$0xff]
    %v3145 = vld [vmem:[#allocation7 + $0x50] sm:$0xff]
    %v3146 = vld [vmem:[#allocation7 + $0x58] sm:$0xff]
    %v3147 = vld [vmem:[#allocation7 + $0x60] sm:$0xff]
    %v3148 = vld [vmem:[#allocation7 + $0x68] sm:$0xff]
    %v3149 = vld [vmem:[#allocation7 + $0x70] sm:$0xff]
    %v3150 = vld [vmem:[#allocation7 + $0x78] sm:$0xff]
    %v3151 = vld [vmem:[#allocation7 + $0x80] sm:$0xff]
    %v3152 = vld [vmem:[#allocation7 + $0x88] sm:$0xff]
    %v3153 = vld [vmem:[#allocation7 + $0x90] sm:$0xff]
    %v3154 = vld [vmem:[#allocation7 + $0x98] sm:$0xff]
    %v3155 = vld [vmem:[#allocation7 + $0xa0] sm:$0xff]
    %v3156 = vld [vmem:[#allocation7 + $0xa8] sm:$0xff]
    %v3157 = vld [vmem:[#allocation7 + $0xb0] sm:$0xff]
    %v3158 = vld [vmem:[#allocation7 + $0xb8] sm:$0xff]
    %v3159 = vld [vmem:[#allocation7 + $0xc0] sm:$0xff]
    %v3160 = vld [vmem:[#allocation7 + $0xc8] sm:$0xff]
    %v3161 = vld [vmem:[#allocation7 + $0xd0] sm:$0xff]
    %v3162 = vld [vmem:[#allocation7 + $0xd8] sm:$0xff]
    %v3163 = vld [vmem:[#allocation7 + $0xe0] sm:$0xff]
    %v3164 = vld [vmem:[#allocation7 + $0xe8] sm:$0xff]
    %v3165 = vld [vmem:[#allocation7 + $0xf0] sm:$0xff]
    %v3166 = vld [vmem:[#allocation7 + $0xf8] sm:$0xff]
    %v3167 = vld [vmem:[#allocation11 + $0x6] sm:$0x3]
    %v3169 = vperm.slane %v3167, 0
    %v3170 = vperm.slane %v3167, 1
    %v3205 = vunpack.c.l.b16 %v3135
    %v3206 = vunpack.c.h.b16 %v3135
    %v3207 = vunpack.c.l.b16 %v3136
    %v3208 = vunpack.c.h.b16 %v3136
    %v3209 = vunpack.c.l.b16 %v3137
    %v3210 = vunpack.c.h.b16 %v3137
    %v3211 = vunpack.c.l.b16 %v3138
    %v3212 = vunpack.c.h.b16 %v3138
    %v3213 = vunpack.c.l.b16 %v3139
    %v3214 = vunpack.c.h.b16 %v3139
    %v3215 = vunpack.c.l.b16 %v3140
    %v3216 = vunpack.c.h.b16 %v3140
    %v3217 = vunpack.c.l.b16 %v3141
    %v3218 = vunpack.c.h.b16 %v3141
    %v3219 = vunpack.c.l.b16 %v3142
    %v3220 = vunpack.c.h.b16 %v3142
    %v3221 = vunpack.c.l.b16 %v3143
    %v3222 = vunpack.c.h.b16 %v3143
    %v3223 = vunpack.c.l.b16 %v3144
    %v3224 = vunpack.c.h.b16 %v3144
    %v3225 = vunpack.c.l.b16 %v3145
    %v3226 = vunpack.c.h.b16 %v3145
    %v3227 = vunpack.c.l.b16 %v3146
    %v3228 = vunpack.c.h.b16 %v3146
    %v3229 = vunpack.c.l.b16 %v3147
    %v3230 = vunpack.c.h.b16 %v3147
    %v3231 = vunpack.c.l.b16 %v3148
    %v3232 = vunpack.c.h.b16 %v3148
    %v3233 = vunpack.c.l.b16 %v3149
    %v3234 = vunpack.c.h.b16 %v3149
    %v3235 = vunpack.c.l.b16 %v3150
    %v3236 = vunpack.c.h.b16 %v3150
    %v3237 = vunpack.c.l.b16 %v3151
    %v3238 = vunpack.c.h.b16 %v3151
    %v3239 = vunpack.c.l.b16 %v3152
    %v3240 = vunpack.c.h.b16 %v3152
    %v3241 = vunpack.c.l.b16 %v3153
    %v3242 = vunpack.c.h.b16 %v3153
    %v3243 = vunpack.c.l.b16 %v3154
    %v3244 = vunpack.c.h.b16 %v3154
    %v3245 = vunpack.c.l.b16 %v3155
    %v3246 = vunpack.c.h.b16 %v3155
    %v3247 = vunpack.c.l.b16 %v3156
    %v3248 = vunpack.c.h.b16 %v3156
    %v3249 = vunpack.c.l.b16 %v3157
    %v3250 = vunpack.c.h.b16 %v3157
    %v3251 = vunpack.c.l.b16 %v3158
    %v3252 = vunpack.c.h.b16 %v3158
    %v3253 = vunpack.c.l.b16 %v3159
    %v3254 = vunpack.c.h.b16 %v3159
    %v3255 = vunpack.c.l.b16 %v3160
    %v3256 = vunpack.c.h.b16 %v3160
    %v3257 = vunpack.c.l.b16 %v3161
    %v3258 = vunpack.c.h.b16 %v3161
    %v3259 = vunpack.c.l.b16 %v3162
    %v3260 = vunpack.c.h.b16 %v3162
    %v3261 = vunpack.c.l.b16 %v3163
    %v3262 = vunpack.c.h.b16 %v3163
    %v3263 = vunpack.c.l.b16 %v3164
    %v3264 = vunpack.c.h.b16 %v3164
    %v3265 = vunpack.c.l.b16 %v3165
    %v3266 = vunpack.c.h.b16 %v3165
    %v3267 = vunpack.c.l.b16 %v3166
    %v3268 = vunpack.c.h.b16 %v3166
    %v3269 = vpack.c.b16 %v3207, %v3205
    %v3270 = vpack.c.b16 %v3208, %v3206
    %v3271 = vpack.c.b16 %v3211, %v3209
    %v3272 = vpack.c.b16 %v3212, %v3210
    %v3273 = vpack.c.b16 %v3215, %v3213
    %v3274 = vpack.c.b16 %v3216, %v3214
    %v3275 = vpack.c.b16 %v3219, %v3217
    %v3276 = vpack.c.b16 %v3220, %v3218
    %v3277 = vpack.c.b16 %v3223, %v3221
    %v3278 = vpack.c.b16 %v3224, %v3222
    %v3279 = vpack.c.b16 %v3227, %v3225
    %v3280 = vpack.c.b16 %v3228, %v3226
    %v3281 = vpack.c.b16 %v3231, %v3229
    %v3282 = vpack.c.b16 %v3232, %v3230
    %v3283 = vpack.c.b16 %v3235, %v3233
    %v3284 = vpack.c.b16 %v3236, %v3234
    %v3285 = vpack.c.b16 %v3239, %v3237
    %v3286 = vpack.c.b16 %v3240, %v3238
    %v3287 = vpack.c.b16 %v3243, %v3241
    %v3288 = vpack.c.b16 %v3244, %v3242
    %v3289 = vpack.c.b16 %v3247, %v3245
    %v3290 = vpack.c.b16 %v3248, %v3246
    %v3291 = vpack.c.b16 %v3251, %v3249
    %v3292 = vpack.c.b16 %v3252, %v3250
    %v3293 = vpack.c.b16 %v3255, %v3253
    %v3294 = vpack.c.b16 %v3256, %v3254
    %v3295 = vpack.c.b16 %v3259, %v3257
    %v3296 = vpack.c.b16 %v3260, %v3258
    %v3297 = vpack.c.b16 %v3263, %v3261
    %v3298 = vpack.c.b16 %v3264, %v3262
    %v3299 = vpack.c.b16 %v3267, %v3265
    %v3300 = vpack.c.b16 %v3268, %v3266
    %3333 = vmatpush.bf16.msra.mxu0 %v3283
    %3334 = vmatpush.bf16.msra.mxu0 %v3281
    %3335 = vmatpush.bf16.msra.mxu0 %v3279
    %3336 = vmatpush.bf16.msra.mxu0 %v3277
    %3337 = vmatpush.bf16.msra.mxu0 %v3275
    %3338 = vmatpush.bf16.msra.mxu0 %v3273
    %3339 = vmatpush.bf16.msra.mxu0 %v3271
    %3340 = vmatpush.bf16.msra.mxu0 %v3269
    %3341 = vmatmul.bf16.gmra.mxu0 %v3071
    %v3342 = vpop.f32.mrf.mxu0
    %v3343 = vadd.f32 %v3169, %v3342
    %v3344 = vpop.f32.mrf.mxu0
    %v3345 = vadd.f32 %v3169, %v3344
    %3346 = vmatmul.bf16.gmra.mxu0 %v3073
    %v3347 = vpop.f32.mrf.mxu0
    %v3348 = vadd.f32 %v3169, %v3347
    %v3349 = vpop.f32.mrf.mxu0
    %v3350 = vadd.f32 %v3169, %v3349
    %3351 = vmatmul.bf16.gmra.mxu0 %v3075
    %v3352 = vpop.f32.mrf.mxu0
    %v3353 = vadd.f32 %v3169, %v3352
    %v3354 = vpop.f32.mrf.mxu0
    %v3355 = vadd.f32 %v3169, %v3354
    %3356 = vmatmul.bf16.gmra.mxu0 %v3077
    %v3357 = vpop.f32.mrf.mxu0
    %v3358 = vadd.f32 %v3169, %v3357
    %v3359 = vpop.f32.mrf.mxu0
    %v3360 = vadd.f32 %v3169, %v3359
    %3361 = vmatmul.bf16.gmra.mxu0 %v3079
    %v3362 = vpop.f32.mrf.mxu0
    %v3363 = vadd.f32 %v3169, %v3362
    %v3364 = vpop.f32.mrf.mxu0
    %v3365 = vadd.f32 %v3169, %v3364
    %3366 = vmatmul.bf16.gmra.mxu0 %v3081
    %v3367 = vpop.f32.mrf.mxu0
    %v3368 = vadd.f32 %v3169, %v3367
    %v3369 = vpop.f32.mrf.mxu0
    %v3370 = vadd.f32 %v3169, %v3369
    %3371 = vmatmul.bf16.gmra.mxu0 %v3083
    %v3372 = vpop.f32.mrf.mxu0
    %v3373 = vadd.f32 %v3169, %v3372
    %v3374 = vpop.f32.mrf.mxu0
    %v3375 = vadd.f32 %v3169, %v3374
    %3376 = vmatmul.bf16.gmra.mxu0 %v3085
    %v3377 = vpop.f32.mrf.mxu0
    %v3378 = vadd.f32 %v3169, %v3377
    %v3379 = vpop.f32.mrf.mxu0
    %v3380 = vadd.f32 %v3169, %v3379
    %3381 = vmatmul.bf16.gmra.mxu0 %v3087
    %v3382 = vpop.f32.mrf.mxu0
    %v3383 = vadd.f32 %v3169, %v3382
    %v3384 = vpop.f32.mrf.mxu0
    %v3385 = vadd.f32 %v3169, %v3384
    %3386 = vmatmul.bf16.gmra.mxu0 %v3089
    %v3387 = vpop.f32.mrf.mxu0
    %v3388 = vadd.f32 %v3169, %v3387
    %v3389 = vpop.f32.mrf.mxu0
    %v3390 = vadd.f32 %v3169, %v3389
    %3391 = vmatmul.bf16.gmra.mxu0 %v3091
    %v3392 = vpop.f32.mrf.mxu0
    %v3393 = vadd.f32 %v3169, %v3392
    %v3394 = vpop.f32.mrf.mxu0
    %v3395 = vadd.f32 %v3169, %v3394
    %3396 = vmatmul.bf16.gmra.mxu0 %v3093
    %v3397 = vpop.f32.mrf.mxu0
    %v3398 = vadd.f32 %v3169, %v3397
    %v3399 = vpop.f32.mrf.mxu0
    %v3400 = vadd.f32 %v3169, %v3399
    %3401 = vmatmul.bf16.gmra.mxu0 %v3095
    %v3402 = vpop.f32.mrf.mxu0
    %v3403 = vadd.f32 %v3169, %v3402
    %v3404 = vpop.f32.mrf.mxu0
    %v3405 = vadd.f32 %v3169, %v3404
    %3406 = vmatmul.bf16.gmra.mxu0 %v3097
    %v3407 = vpop.f32.mrf.mxu0
    %v3408 = vadd.f32 %v3169, %v3407
    %v3409 = vpop.f32.mrf.mxu0
    %v3410 = vadd.f32 %v3169, %v3409
    %3411 = vmatmul.bf16.gmra.mxu0 %v3099
    %v3412 = vpop.f32.mrf.mxu0
    %v3413 = vadd.f32 %v3169, %v3412
    %v3414 = vpop.f32.mrf.mxu0
    %v3415 = vadd.f32 %v3169, %v3414
    %3416 = vmatmul.bf16.gmra.mxu0 %v3101
    %v3417 = vpop.f32.mrf.mxu0
    %v3418 = vadd.f32 %v3169, %v3417
    %v3419 = vpop.f32.mrf.mxu0
    %v3420 = vadd.f32 %v3169, %v3419
    %3421 = vmatmul.bf16.gmra.mxu0 %v3103
    %v3422 = vpop.f32.mrf.mxu0
    %v3423 = vadd.f32 %v3169, %v3422
    %v3424 = vpop.f32.mrf.mxu0
    %v3425 = vadd.f32 %v3169, %v3424
    %3426 = vmatmul.bf16.gmra.mxu0 %v3105
    %v3427 = vpop.f32.mrf.mxu0
    %v3428 = vadd.f32 %v3169, %v3427
    %v3429 = vpop.f32.mrf.mxu0
    %v3430 = vadd.f32 %v3169, %v3429
    %3431 = vmatmul.bf16.gmra.mxu0 %v3107
    %v3432 = vpop.f32.mrf.mxu0
    %v3433 = vadd.f32 %v3169, %v3432
    %v3434 = vpop.f32.mrf.mxu0
    %v3435 = vadd.f32 %v3169, %v3434
    %3436 = vmatmul.bf16.gmra.mxu0 %v3109
    %v3437 = vpop.f32.mrf.mxu0
    %v3438 = vadd.f32 %v3169, %v3437
    %v3439 = vpop.f32.mrf.mxu0
    %v3440 = vadd.f32 %v3169, %v3439
    %3441 = vmatmul.bf16.gmra.mxu0 %v3111
    %v3442 = vpop.f32.mrf.mxu0
    %v3443 = vadd.f32 %v3169, %v3442
    %v3444 = vpop.f32.mrf.mxu0
    %v3445 = vadd.f32 %v3169, %v3444
    %3446 = vmatmul.bf16.gmra.mxu0 %v3113
    %v3447 = vpop.f32.mrf.mxu0
    %v3448 = vadd.f32 %v3169, %v3447
    %v3449 = vpop.f32.mrf.mxu0
    %v3450 = vadd.f32 %v3169, %v3449
    %3451 = vmatmul.bf16.gmra.mxu0 %v3115
    %v3452 = vpop.f32.mrf.mxu0
    %v3453 = vadd.f32 %v3169, %v3452
    %v3454 = vpop.f32.mrf.mxu0
    %v3455 = vadd.f32 %v3169, %v3454
    %3456 = vmatmul.bf16.gmra.mxu0 %v3117
    %v3457 = vpop.f32.mrf.mxu0
    %v3458 = vadd.f32 %v3169, %v3457
    %v3459 = vpop.f32.mrf.mxu0
    %v3460 = vadd.f32 %v3169, %v3459
    %3461 = vmatmul.bf16.gmra.mxu0 %v3119
    %v3462 = vpop.f32.mrf.mxu0
    %v3463 = vadd.f32 %v3169, %v3462
    %v3464 = vpop.f32.mrf.mxu0
    %v3465 = vadd.f32 %v3169, %v3464
    %3466 = vmatmul.bf16.gmra.mxu0 %v3121
    %v3467 = vpop.f32.mrf.mxu0
    %v3468 = vadd.f32 %v3169, %v3467
    %v3469 = vpop.f32.mrf.mxu0
    %v3470 = vadd.f32 %v3169, %v3469
    %3471 = vmatmul.bf16.gmra.mxu0 %v3123
    %v3472 = vpop.f32.mrf.mxu0
    %v3473 = vadd.f32 %v3169, %v3472
    %v3474 = vpop.f32.mrf.mxu0
    %v3475 = vadd.f32 %v3169, %v3474
    %3476 = vmatmul.bf16.gmra.mxu0 %v3125
    %v3477 = vpop.f32.mrf.mxu0
    %v3478 = vadd.f32 %v3169, %v3477
    %v3479 = vpop.f32.mrf.mxu0
    %v3480 = vadd.f32 %v3169, %v3479
    %3481 = vmatmul.bf16.gmra.mxu0 %v3127
    %v3482 = vpop.f32.mrf.mxu0
    %v3483 = vadd.f32 %v3169, %v3482
    %v3484 = vpop.f32.mrf.mxu0
    %v3485 = vadd.f32 %v3169, %v3484
    %3486 = vmatmul.bf16.gmra.mxu0 %v3129
    %v3487 = vpop.f32.mrf.mxu0
    %v3488 = vadd.f32 %v3169, %v3487
    %v3489 = vpop.f32.mrf.mxu0
    %v3490 = vadd.f32 %v3169, %v3489
    %3491 = vmatmul.bf16.gmra.mxu0 %v3131
    %v3492 = vpop.f32.mrf.mxu0
    %v3493 = vadd.f32 %v3169, %v3492
    %v3494 = vpop.f32.mrf.mxu0
    %v3495 = vadd.f32 %v3169, %v3494
    %3496 = vmatmul.bf16.gmra.mxu0 %v3133
    %v3497 = vpop.f32.mrf.mxu0
    %v3498 = vadd.f32 %v3169, %v3497
    %v3499 = vpop.f32.mrf.mxu0
    %v3500 = vadd.f32 %v3169, %v3499
    %3501 = vdwg.mxu0
    %3502 = vmatpush.bf16.msra.mxu0 %v3299
    %3503 = vmatpush.bf16.msra.mxu0 %v3297
    %3504 = vmatpush.bf16.msra.mxu0 %v3295
    %3505 = vmatpush.bf16.msra.mxu0 %v3293
    %3506 = vmatpush.bf16.msra.mxu0 %v3291
    %3507 = vmatpush.bf16.msra.mxu0 %v3289
    %3508 = vmatpush.bf16.msra.mxu0 %v3287
    %3509 = vmatpush.bf16.msra.mxu0 %v3285
    %3510 = vmatmul.bf16.gmra.mxu0 %v3072
    %v3511 = vpop.f32.mrf.mxu0
    %v3512 = vadd.f32 %v3343, %v3511
    %v3513 = vpop.f32.mrf.mxu0
    %v3514 = vadd.f32 %v3345, %v3513
    %3515 = vmatmul.bf16.gmra.mxu0 %v3074
    %v3516 = vpop.f32.mrf.mxu0
    %v3517 = vadd.f32 %v3348, %v3516
    %v3518 = vpop.f32.mrf.mxu0
    %v3519 = vadd.f32 %v3350, %v3518
    %3520 = vmatmul.bf16.gmra.mxu0 %v3076
    %v3521 = vpop.f32.mrf.mxu0
    %v3522 = vadd.f32 %v3353, %v3521
    %v3523 = vpop.f32.mrf.mxu0
    %v3524 = vadd.f32 %v3355, %v3523
    %3525 = vmatmul.bf16.gmra.mxu0 %v3078
    %v3526 = vpop.f32.mrf.mxu0
    %v3527 = vadd.f32 %v3358, %v3526
    %v3528 = vpop.f32.mrf.mxu0
    %v3529 = vadd.f32 %v3360, %v3528
    %3530 = vmatmul.bf16.gmra.mxu0 %v3080
    %v3531 = vpop.f32.mrf.mxu0
    %v3532 = vadd.f32 %v3363, %v3531
    %v3533 = vpop.f32.mrf.mxu0
    %v3534 = vadd.f32 %v3365, %v3533
    %3535 = vmatmul.bf16.gmra.mxu0 %v3082
    %v3536 = vpop.f32.mrf.mxu0
    %v3537 = vadd.f32 %v3368, %v3536
    %v3538 = vpop.f32.mrf.mxu0
    %v3539 = vadd.f32 %v3370, %v3538
    %3540 = vmatmul.bf16.gmra.mxu0 %v3084
    %v3541 = vpop.f32.mrf.mxu0
    %v3542 = vadd.f32 %v3373, %v3541
    %v3543 = vpop.f32.mrf.mxu0
    %v3544 = vadd.f32 %v3375, %v3543
    %3545 = vmatmul.bf16.gmra.mxu0 %v3086
    %v3546 = vpop.f32.mrf.mxu0
    %v3547 = vadd.f32 %v3378, %v3546
    %v3548 = vpop.f32.mrf.mxu0
    %v3549 = vadd.f32 %v3380, %v3548
    %3550 = vmatmul.bf16.gmra.mxu0 %v3088
    %v3551 = vpop.f32.mrf.mxu0
    %v3552 = vadd.f32 %v3383, %v3551
    %v3553 = vpop.f32.mrf.mxu0
    %v3554 = vadd.f32 %v3385, %v3553
    %3555 = vmatmul.bf16.gmra.mxu0 %v3090
    %v3556 = vpop.f32.mrf.mxu0
    %v3557 = vadd.f32 %v3388, %v3556
    %v3558 = vpop.f32.mrf.mxu0
    %v3559 = vadd.f32 %v3390, %v3558
    %3560 = vmatmul.bf16.gmra.mxu0 %v3092
    %v3561 = vpop.f32.mrf.mxu0
    %v3562 = vadd.f32 %v3393, %v3561
    %v3563 = vpop.f32.mrf.mxu0
    %v3564 = vadd.f32 %v3395, %v3563
    %3565 = vmatmul.bf16.gmra.mxu0 %v3094
    %v3566 = vpop.f32.mrf.mxu0
    %v3567 = vadd.f32 %v3398, %v3566
    %v3568 = vpop.f32.mrf.mxu0
    %v3569 = vadd.f32 %v3400, %v3568
    %3570 = vmatmul.bf16.gmra.mxu0 %v3096
    %v3571 = vpop.f32.mrf.mxu0
    %v3572 = vadd.f32 %v3403, %v3571
    %v3573 = vpop.f32.mrf.mxu0
    %v3574 = vadd.f32 %v3405, %v3573
    %3575 = vmatmul.bf16.gmra.mxu0 %v3098
    %v3576 = vpop.f32.mrf.mxu0
    %v3577 = vadd.f32 %v3408, %v3576
    %v3578 = vpop.f32.mrf.mxu0
    %v3579 = vadd.f32 %v3410, %v3578
    %3580 = vmatmul.bf16.gmra.mxu0 %v3100
    %v3581 = vpop.f32.mrf.mxu0
    %v3582 = vadd.f32 %v3413, %v3581
    %v3583 = vpop.f32.mrf.mxu0
    %v3584 = vadd.f32 %v3415, %v3583
    %3585 = vmatmul.bf16.gmra.mxu0 %v3102
    %v3586 = vpop.f32.mrf.mxu0
    %v3587 = vadd.f32 %v3418, %v3586
    %v3588 = vpop.f32.mrf.mxu0
    %v3589 = vadd.f32 %v3420, %v3588
    %3590 = vmatmul.bf16.gmra.mxu0 %v3104
    %v3591 = vpop.f32.mrf.mxu0
    %v3592 = vadd.f32 %v3423, %v3591
    %v3593 = vpop.f32.mrf.mxu0
    %v3594 = vadd.f32 %v3425, %v3593
    %3595 = vmatmul.bf16.gmra.mxu0 %v3106
    %v3596 = vpop.f32.mrf.mxu0
    %v3597 = vadd.f32 %v3428, %v3596
    %v3598 = vpop.f32.mrf.mxu0
    %v3599 = vadd.f32 %v3430, %v3598
    %3600 = vmatmul.bf16.gmra.mxu0 %v3108
    %v3601 = vpop.f32.mrf.mxu0
    %v3602 = vadd.f32 %v3433, %v3601
    %v3603 = vpop.f32.mrf.mxu0
    %v3604 = vadd.f32 %v3435, %v3603
    %3605 = vmatmul.bf16.gmra.mxu0 %v3110
    %v3606 = vpop.f32.mrf.mxu0
    %v3607 = vadd.f32 %v3438, %v3606
    %v3608 = vpop.f32.mrf.mxu0
    %v3609 = vadd.f32 %v3440, %v3608
    %3610 = vmatmul.bf16.gmra.mxu0 %v3112
    %v3611 = vpop.f32.mrf.mxu0
    %v3612 = vadd.f32 %v3443, %v3611
    %v3613 = vpop.f32.mrf.mxu0
    %v3614 = vadd.f32 %v3445, %v3613
    %3615 = vmatmul.bf16.gmra.mxu0 %v3114
    %v3616 = vpop.f32.mrf.mxu0
    %v3617 = vadd.f32 %v3448, %v3616
    %v3618 = vpop.f32.mrf.mxu0
    %v3619 = vadd.f32 %v3450, %v3618
    %3620 = vmatmul.bf16.gmra.mxu0 %v3116
    %v3621 = vpop.f32.mrf.mxu0
    %v3622 = vadd.f32 %v3453, %v3621
    %v3623 = vpop.f32.mrf.mxu0
    %v3624 = vadd.f32 %v3455, %v3623
    %3625 = vmatmul.bf16.gmra.mxu0 %v3118
    %v3626 = vpop.f32.mrf.mxu0
    %v3627 = vadd.f32 %v3458, %v3626
    %v3628 = vpop.f32.mrf.mxu0
    %v3629 = vadd.f32 %v3460, %v3628
    %3630 = vmatmul.bf16.gmra.mxu0 %v3120
    %v3631 = vpop.f32.mrf.mxu0
    %v3632 = vadd.f32 %v3463, %v3631
    %v3633 = vpop.f32.mrf.mxu0
    %v3634 = vadd.f32 %v3465, %v3633
    %3635 = vmatmul.bf16.gmra.mxu0 %v3122
    %v3636 = vpop.f32.mrf.mxu0
    %v3637 = vadd.f32 %v3468, %v3636
    %v3638 = vpop.f32.mrf.mxu0
    %v3639 = vadd.f32 %v3470, %v3638
    %3640 = vmatmul.bf16.gmra.mxu0 %v3124
    %v3641 = vpop.f32.mrf.mxu0
    %v3642 = vadd.f32 %v3473, %v3641
    %v3643 = vpop.f32.mrf.mxu0
    %v3644 = vadd.f32 %v3475, %v3643
    %3645 = vmatmul.bf16.gmra.mxu0 %v3126
    %v3646 = vpop.f32.mrf.mxu0
    %v3647 = vadd.f32 %v3478, %v3646
    %v3648 = vpop.f32.mrf.mxu0
    %v3649 = vadd.f32 %v3480, %v3648
    %3650 = vmatmul.bf16.gmra.mxu0 %v3128
    %v3651 = vpop.f32.mrf.mxu0
    %v3652 = vadd.f32 %v3483, %v3651
    %v3653 = vpop.f32.mrf.mxu0
    %v3654 = vadd.f32 %v3485, %v3653
    %3655 = vmatmul.bf16.gmra.mxu0 %v3130
    %v3656 = vpop.f32.mrf.mxu0
    %v3657 = vadd.f32 %v3488, %v3656
    %v3658 = vpop.f32.mrf.mxu0
    %v3659 = vadd.f32 %v3490, %v3658
    %3660 = vmatmul.bf16.gmra.mxu0 %v3132
    %v3661 = vpop.f32.mrf.mxu0
    %v3662 = vadd.f32 %v3493, %v3661
    %v3663 = vpop.f32.mrf.mxu0
    %v3664 = vadd.f32 %v3495, %v3663
    %3665 = vmatmul.bf16.gmra.mxu0 %v3134
    %v3666 = vpop.f32.mrf.mxu0
    %v3667 = vadd.f32 %v3498, %v3666
    %v3668 = vpop.f32.mrf.mxu0
    %v3669 = vadd.f32 %v3500, %v3668
    %3670 = vdwg.mxu0
    %3671 = vmatpush.bf16.msra.mxu0 %v3284
    %3672 = vmatpush.bf16.msra.mxu0 %v3282
    %3673 = vmatpush.bf16.msra.mxu0 %v3280
    %3674 = vmatpush.bf16.msra.mxu0 %v3278
    %3675 = vmatpush.bf16.msra.mxu0 %v3276
    %3676 = vmatpush.bf16.msra.mxu0 %v3274
    %3677 = vmatpush.bf16.msra.mxu0 %v3272
    %3678 = vmatpush.bf16.msra.mxu0 %v3270
    %3679 = vmatmul.bf16.gmra.mxu0 %v3071
    %v3680 = vpop.f32.mrf.mxu0
    %v3681 = vadd.f32 %v3170, %v3680
    %v3682 = vpop.f32.mrf.mxu0
    %v3683 = vadd.f32 %v3170, %v3682
    %3684 = vmatmul.bf16.gmra.mxu0 %v3073
    %v3685 = vpop.f32.mrf.mxu0
    %v3686 = vadd.f32 %v3170, %v3685
    %v3687 = vpop.f32.mrf.mxu0
    %v3688 = vadd.f32 %v3170, %v3687
    %3689 = vmatmul.bf16.gmra.mxu0 %v3075
    %v3690 = vpop.f32.mrf.mxu0
    %v3691 = vadd.f32 %v3170, %v3690
    %v3692 = vpop.f32.mrf.mxu0
    %v3693 = vadd.f32 %v3170, %v3692
    %3694 = vmatmul.bf16.gmra.mxu0 %v3077
    %v3695 = vpop.f32.mrf.mxu0
    %v3696 = vadd.f32 %v3170, %v3695
    %v3697 = vpop.f32.mrf.mxu0
    %v3698 = vadd.f32 %v3170, %v3697
    %3699 = vmatmul.bf16.gmra.mxu0 %v3079
    %v3700 = vpop.f32.mrf.mxu0
    %v3701 = vadd.f32 %v3170, %v3700
    %v3702 = vpop.f32.mrf.mxu0
    %v3703 = vadd.f32 %v3170, %v3702
    %3704 = vmatmul.bf16.gmra.mxu0 %v3081
    %v3705 = vpop.f32.mrf.mxu0
    %v3706 = vadd.f32 %v3170, %v3705
    %v3707 = vpop.f32.mrf.mxu0
    %v3708 = vadd.f32 %v3170, %v3707
    %3709 = vmatmul.bf16.gmra.mxu0 %v3083
    %v3710 = vpop.f32.mrf.mxu0
    %v3711 = vadd.f32 %v3170, %v3710
    %v3712 = vpop.f32.mrf.mxu0
    %v3713 = vadd.f32 %v3170, %v3712
    %3714 = vmatmul.bf16.gmra.mxu0 %v3085
    %v3715 = vpop.f32.mrf.mxu0
    %v3716 = vadd.f32 %v3170, %v3715
    %v3717 = vpop.f32.mrf.mxu0
    %v3718 = vadd.f32 %v3170, %v3717
    %3719 = vmatmul.bf16.gmra.mxu0 %v3087
    %v3720 = vpop.f32.mrf.mxu0
    %v3721 = vadd.f32 %v3170, %v3720
    %v3722 = vpop.f32.mrf.mxu0
    %v3723 = vadd.f32 %v3170, %v3722
    %3724 = vmatmul.bf16.gmra.mxu0 %v3089
    %v3725 = vpop.f32.mrf.mxu0
    %v3726 = vadd.f32 %v3170, %v3725
    %v3727 = vpop.f32.mrf.mxu0
    %v3728 = vadd.f32 %v3170, %v3727
    %3729 = vmatmul.bf16.gmra.mxu0 %v3091
    %v3730 = vpop.f32.mrf.mxu0
    %v3731 = vadd.f32 %v3170, %v3730
    %v3732 = vpop.f32.mrf.mxu0
    %v3733 = vadd.f32 %v3170, %v3732
    %3734 = vmatmul.bf16.gmra.mxu0 %v3093
    %v3735 = vpop.f32.mrf.mxu0
    %v3736 = vadd.f32 %v3170, %v3735
    %v3737 = vpop.f32.mrf.mxu0
    %v3738 = vadd.f32 %v3170, %v3737
    %3739 = vmatmul.bf16.gmra.mxu0 %v3095
    %v3740 = vpop.f32.mrf.mxu0
    %v3741 = vadd.f32 %v3170, %v3740
    %v3742 = vpop.f32.mrf.mxu0
    %v3743 = vadd.f32 %v3170, %v3742
    %3744 = vmatmul.bf16.gmra.mxu0 %v3097
    %v3745 = vpop.f32.mrf.mxu0
    %v3746 = vadd.f32 %v3170, %v3745
    %v3747 = vpop.f32.mrf.mxu0
    %v3748 = vadd.f32 %v3170, %v3747
    %3749 = vmatmul.bf16.gmra.mxu0 %v3099
    %v3750 = vpop.f32.mrf.mxu0
    %v3751 = vadd.f32 %v3170, %v3750
    %v3752 = vpop.f32.mrf.mxu0
    %v3753 = vadd.f32 %v3170, %v3752
    %3754 = vmatmul.bf16.gmra.mxu0 %v3101
    %v3755 = vpop.f32.mrf.mxu0
    %v3756 = vadd.f32 %v3170, %v3755
    %v3757 = vpop.f32.mrf.mxu0
    %v3758 = vadd.f32 %v3170, %v3757
    %3759 = vmatmul.bf16.gmra.mxu0 %v3103
    %v3760 = vpop.f32.mrf.mxu0
    %v3761 = vadd.f32 %v3170, %v3760
    %v3762 = vpop.f32.mrf.mxu0
    %v3763 = vadd.f32 %v3170, %v3762
    %3764 = vmatmul.bf16.gmra.mxu0 %v3105
    %v3765 = vpop.f32.mrf.mxu0
    %v3766 = vadd.f32 %v3170, %v3765
    %v3767 = vpop.f32.mrf.mxu0
    %v3768 = vadd.f32 %v3170, %v3767
    %3769 = vmatmul.bf16.gmra.mxu0 %v3107
    %v3770 = vpop.f32.mrf.mxu0
    %v3771 = vadd.f32 %v3170, %v3770
    %v3772 = vpop.f32.mrf.mxu0
    %v3773 = vadd.f32 %v3170, %v3772
    %3774 = vmatmul.bf16.gmra.mxu0 %v3109
    %v3775 = vpop.f32.mrf.mxu0
    %v3776 = vadd.f32 %v3170, %v3775
    %v3777 = vpop.f32.mrf.mxu0
    %v3778 = vadd.f32 %v3170, %v3777
    %3779 = vmatmul.bf16.gmra.mxu0 %v3111
    %v3780 = vpop.f32.mrf.mxu0
    %v3781 = vadd.f32 %v3170, %v3780
    %v3782 = vpop.f32.mrf.mxu0
    %v3783 = vadd.f32 %v3170, %v3782
    %3784 = vmatmul.bf16.gmra.mxu0 %v3113
    %v3785 = vpop.f32.mrf.mxu0
    %v3786 = vadd.f32 %v3170, %v3785
    %v3787 = vpop.f32.mrf.mxu0
    %v3788 = vadd.f32 %v3170, %v3787
    %3789 = vmatmul.bf16.gmra.mxu0 %v3115
    %v3790 = vpop.f32.mrf.mxu0
    %v3791 = vadd.f32 %v3170, %v3790
    %v3792 = vpop.f32.mrf.mxu0
    %v3793 = vadd.f32 %v3170, %v3792
    %3794 = vmatmul.bf16.gmra.mxu0 %v3117
    %v3795 = vpop.f32.mrf.mxu0
    %v3796 = vadd.f32 %v3170, %v3795
    %v3797 = vpop.f32.mrf.mxu0
    %v3798 = vadd.f32 %v3170, %v3797
    %3799 = vmatmul.bf16.gmra.mxu0 %v3119
    %v3800 = vpop.f32.mrf.mxu0
    %v3801 = vadd.f32 %v3170, %v3800
    %v3802 = vpop.f32.mrf.mxu0
    %v3803 = vadd.f32 %v3170, %v3802
    %3804 = vmatmul.bf16.gmra.mxu0 %v3121
    %v3805 = vpop.f32.mrf.mxu0
    %v3806 = vadd.f32 %v3170, %v3805
    %v3807 = vpop.f32.mrf.mxu0
    %v3808 = vadd.f32 %v3170, %v3807
    %3809 = vmatmul.bf16.gmra.mxu0 %v3123
    %v3810 = vpop.f32.mrf.mxu0
    %v3811 = vadd.f32 %v3170, %v3810
    %v3812 = vpop.f32.mrf.mxu0
    %v3813 = vadd.f32 %v3170, %v3812
    %3814 = vmatmul.bf16.gmra.mxu0 %v3125
    %v3815 = vpop.f32.mrf.mxu0
    %v3816 = vadd.f32 %v3170, %v3815
    %v3817 = vpop.f32.mrf.mxu0
    %v3818 = vadd.f32 %v3170, %v3817
    %3819 = vmatmul.bf16.gmra.mxu0 %v3127
    %v3820 = vpop.f32.mrf.mxu0
    %v3821 = vadd.f32 %v3170, %v3820
    %v3822 = vpop.f32.mrf.mxu0
    %v3823 = vadd.f32 %v3170, %v3822
    %3824 = vmatmul.bf16.gmra.mxu0 %v3129
    %v3825 = vpop.f32.mrf.mxu0
    %v3826 = vadd.f32 %v3170, %v3825
    %v3827 = vpop.f32.mrf.mxu0
    %v3828 = vadd.f32 %v3170, %v3827
    %3829 = vmatmul.bf16.gmra.mxu0 %v3131
    %v3830 = vpop.f32.mrf.mxu0
    %v3831 = vadd.f32 %v3170, %v3830
    %v3832 = vpop.f32.mrf.mxu0
    %v3833 = vadd.f32 %v3170, %v3832
    %3834 = vmatmul.bf16.gmra.mxu0 %v3133
    %v3835 = vpop.f32.mrf.mxu0
    %v3836 = vadd.f32 %v3170, %v3835
    %v3837 = vpop.f32.mrf.mxu0
    %v3838 = vadd.f32 %v3170, %v3837
    %3839 = vdwg.mxu0
    %3840 = vmatpush.bf16.msra.mxu0 %v3300
    %3841 = vmatpush.bf16.msra.mxu0 %v3298
    %3842 = vmatpush.bf16.msra.mxu0 %v3296
    %3843 = vmatpush.bf16.msra.mxu0 %v3294
    %3844 = vmatpush.bf16.msra.mxu0 %v3292
    %3845 = vmatpush.bf16.msra.mxu0 %v3290
    %3846 = vmatpush.bf16.msra.mxu0 %v3288
    %3847 = vmatpush.bf16.msra.mxu0 %v3286
    %3848 = vmatmul.bf16.gmra.mxu0 %v3072
    %v3849 = vpop.f32.mrf.mxu0
    %v3850 = vadd.f32 %v3681, %v3849
    %v3851 = vpop.f32.mrf.mxu0
    %v3852 = vadd.f32 %v3683, %v3851
    %3853 = vmatmul.bf16.gmra.mxu0 %v3074
    %v3854 = vpop.f32.mrf.mxu0
    %v3855 = vadd.f32 %v3686, %v3854
    %v3856 = vpop.f32.mrf.mxu0
    %v3857 = vadd.f32 %v3688, %v3856
    %3858 = vmatmul.bf16.gmra.mxu0 %v3076
    %v3859 = vpop.f32.mrf.mxu0
    %v3860 = vadd.f32 %v3691, %v3859
    %v3861 = vpop.f32.mrf.mxu0
    %v3862 = vadd.f32 %v3693, %v3861
    %3863 = vmatmul.bf16.gmra.mxu0 %v3078
    %v3864 = vpop.f32.mrf.mxu0
    %v3865 = vadd.f32 %v3696, %v3864
    %v3866 = vpop.f32.mrf.mxu0
    %v3867 = vadd.f32 %v3698, %v3866
    %3868 = vmatmul.bf16.gmra.mxu0 %v3080
    %v3869 = vpop.f32.mrf.mxu0
    %v3870 = vadd.f32 %v3701, %v3869
    %v3871 = vpop.f32.mrf.mxu0
    %v3872 = vadd.f32 %v3703, %v3871
    %3873 = vmatmul.bf16.gmra.mxu0 %v3082
    %v3874 = vpop.f32.mrf.mxu0
    %v3875 = vadd.f32 %v3706, %v3874
    %v3876 = vpop.f32.mrf.mxu0
    %v3877 = vadd.f32 %v3708, %v3876
    %3878 = vmatmul.bf16.gmra.mxu0 %v3084
    %v3879 = vpop.f32.mrf.mxu0
    %v3880 = vadd.f32 %v3711, %v3879
    %v3881 = vpop.f32.mrf.mxu0
    %v3882 = vadd.f32 %v3713, %v3881
    %3883 = vmatmul.bf16.gmra.mxu0 %v3086
    %v3884 = vpop.f32.mrf.mxu0
    %v3885 = vadd.f32 %v3716, %v3884
    %v3886 = vpop.f32.mrf.mxu0
    %v3887 = vadd.f32 %v3718, %v3886
    %3888 = vmatmul.bf16.gmra.mxu0 %v3088
    %v3889 = vpop.f32.mrf.mxu0
    %v3890 = vadd.f32 %v3721, %v3889
    %v3891 = vpop.f32.mrf.mxu0
    %v3892 = vadd.f32 %v3723, %v3891
    %3893 = vmatmul.bf16.gmra.mxu0 %v3090
    %v3894 = vpop.f32.mrf.mxu0
    %v3895 = vadd.f32 %v3726, %v3894
    %v3896 = vpop.f32.mrf.mxu0
    %v3897 = vadd.f32 %v3728, %v3896
    %3898 = vmatmul.bf16.gmra.mxu0 %v3092
    %v3899 = vpop.f32.mrf.mxu0
    %v3900 = vadd.f32 %v3731, %v3899
    %v3901 = vpop.f32.mrf.mxu0
    %v3902 = vadd.f32 %v3733, %v3901
    %3903 = vmatmul.bf16.gmra.mxu0 %v3094
    %v3904 = vpop.f32.mrf.mxu0
    %v3905 = vadd.f32 %v3736, %v3904
    %v3906 = vpop.f32.mrf.mxu0
    %v3907 = vadd.f32 %v3738, %v3906
    %3908 = vmatmul.bf16.gmra.mxu0 %v3096
    %v3909 = vpop.f32.mrf.mxu0
    %v3910 = vadd.f32 %v3741, %v3909
    %v3911 = vpop.f32.mrf.mxu0
    %v3912 = vadd.f32 %v3743, %v3911
    %3913 = vmatmul.bf16.gmra.mxu0 %v3098
    %v3914 = vpop.f32.mrf.mxu0
    %v3915 = vadd.f32 %v3746, %v3914
    %v3916 = vpop.f32.mrf.mxu0
    %v3917 = vadd.f32 %v3748, %v3916
    %3918 = vmatmul.bf16.gmra.mxu0 %v3100
    %v3919 = vpop.f32.mrf.mxu0
    %v3920 = vadd.f32 %v3751, %v3919
    %v3921 = vpop.f32.mrf.mxu0
    %v3922 = vadd.f32 %v3753, %v3921
    %3923 = vmatmul.bf16.gmra.mxu0 %v3102
    %v3924 = vpop.f32.mrf.mxu0
    %v3925 = vadd.f32 %v3756, %v3924
    %v3926 = vpop.f32.mrf.mxu0
    %v3927 = vadd.f32 %v3758, %v3926
    %3928 = vmatmul.bf16.gmra.mxu0 %v3104
    %v3929 = vpop.f32.mrf.mxu0
    %v3930 = vadd.f32 %v3761, %v3929
    %v3931 = vpop.f32.mrf.mxu0
    %v3932 = vadd.f32 %v3763, %v3931
    %3933 = vmatmul.bf16.gmra.mxu0 %v3106
    %v3934 = vpop.f32.mrf.mxu0
    %v3935 = vadd.f32 %v3766, %v3934
    %v3936 = vpop.f32.mrf.mxu0
    %v3937 = vadd.f32 %v3768, %v3936
    %3938 = vmatmul.bf16.gmra.mxu0 %v3108
    %v3939 = vpop.f32.mrf.mxu0
    %v3940 = vadd.f32 %v3771, %v3939
    %v3941 = vpop.f32.mrf.mxu0
    %v3942 = vadd.f32 %v3773, %v3941
    %3943 = vmatmul.bf16.gmra.mxu0 %v3110
    %v3944 = vpop.f32.mrf.mxu0
    %v3945 = vadd.f32 %v3776, %v3944
    %v3946 = vpop.f32.mrf.mxu0
    %v3947 = vadd.f32 %v3778, %v3946
    %3948 = vmatmul.bf16.gmra.mxu0 %v3112
    %v3949 = vpop.f32.mrf.mxu0
    %v3950 = vadd.f32 %v3781, %v3949
    %v3951 = vpop.f32.mrf.mxu0
    %v3952 = vadd.f32 %v3783, %v3951
    %3953 = vmatmul.bf16.gmra.mxu0 %v3114
    %v3954 = vpop.f32.mrf.mxu0
    %v3955 = vadd.f32 %v3786, %v3954
    %v3956 = vpop.f32.mrf.mxu0
    %v3957 = vadd.f32 %v3788, %v3956
    %3958 = vmatmul.bf16.gmra.mxu0 %v3116
    %v3959 = vpop.f32.mrf.mxu0
    %v3960 = vadd.f32 %v3791, %v3959
    %v3961 = vpop.f32.mrf.mxu0
    %v3962 = vadd.f32 %v3793, %v3961
    %3963 = vmatmul.bf16.gmra.mxu0 %v3118
    %v3964 = vpop.f32.mrf.mxu0
    %v3965 = vadd.f32 %v3796, %v3964
    %v3966 = vpop.f32.mrf.mxu0
    %v3967 = vadd.f32 %v3798, %v3966
    %3968 = vmatmul.bf16.gmra.mxu0 %v3120
    %v3969 = vpop.f32.mrf.mxu0
    %v3970 = vadd.f32 %v3801, %v3969
    %v3971 = vpop.f32.mrf.mxu0
    %v3972 = vadd.f32 %v3803, %v3971
    %3973 = vmatmul.bf16.gmra.mxu0 %v3122
    %v3974 = vpop.f32.mrf.mxu0
    %v3975 = vadd.f32 %v3806, %v3974
    %v3976 = vpop.f32.mrf.mxu0
    %v3977 = vadd.f32 %v3808, %v3976
    %3978 = vmatmul.bf16.gmra.mxu0 %v3124
    %v3979 = vpop.f32.mrf.mxu0
    %v3980 = vadd.f32 %v3811, %v3979
    %v3981 = vpop.f32.mrf.mxu0
    %v3982 = vadd.f32 %v3813, %v3981
    %3983 = vmatmul.bf16.gmra.mxu0 %v3126
    %v3984 = vpop.f32.mrf.mxu0
    %v3985 = vadd.f32 %v3816, %v3984
    %v3986 = vpop.f32.mrf.mxu0
    %v3987 = vadd.f32 %v3818, %v3986
    %3988 = vmatmul.bf16.gmra.mxu0 %v3128
    %v3989 = vpop.f32.mrf.mxu0
    %v3990 = vadd.f32 %v3821, %v3989
    %v3991 = vpop.f32.mrf.mxu0
    %v3992 = vadd.f32 %v3823, %v3991
    %3993 = vmatmul.bf16.gmra.mxu0 %v3130
    %v3994 = vpop.f32.mrf.mxu0
    %v3995 = vadd.f32 %v3826, %v3994
    %v3996 = vpop.f32.mrf.mxu0
    %v3997 = vadd.f32 %v3828, %v3996
    %3998 = vmatmul.bf16.gmra.mxu0 %v3132
    %v3999 = vpop.f32.mrf.mxu0
    %v4000 = vadd.f32 %v3831, %v3999
    %v4001 = vpop.f32.mrf.mxu0
    %v4002 = vadd.f32 %v3833, %v4001
    %4003 = vmatmul.bf16.gmra.mxu0 %v3134
    %v4004 = vpop.f32.mrf.mxu0
    %v4005 = vadd.f32 %v3836, %v4004
    %v4006 = vpop.f32.mrf.mxu0
    %v4007 = vadd.f32 %v3838, %v4006
    %4008 = vdwg.mxu0
    %v4009 = vmax.f32 %v3512, 0.0
    %v4010 = vmax.f32 %v3850, 0.0
    %v4011 = vmax.f32 %v3514, 0.0
    %v4012 = vmax.f32 %v3852, 0.0
    %v4013 = vmax.f32 %v3517, 0.0
    %v4014 = vmax.f32 %v3855, 0.0
    %v4015 = vmax.f32 %v3519, 0.0
    %v4016 = vmax.f32 %v3857, 0.0
    %v4017 = vmax.f32 %v3522, 0.0
    %v4018 = vmax.f32 %v3860, 0.0
    %v4019 = vmax.f32 %v3524, 0.0
    %v4020 = vmax.f32 %v3862, 0.0
    %v4021 = vmax.f32 %v3527, 0.0
    %v4022 = vmax.f32 %v3865, 0.0
    %v4023 = vmax.f32 %v3529, 0.0
    %v4024 = vmax.f32 %v3867, 0.0
    %v4025 = vmax.f32 %v3532, 0.0
    %v4026 = vmax.f32 %v3870, 0.0
    %v4027 = vmax.f32 %v3534, 0.0
    %v4028 = vmax.f32 %v3872, 0.0
    %v4029 = vmax.f32 %v3537, 0.0
    %v4030 = vmax.f32 %v3875, 0.0
    %v4031 = vmax.f32 %v3539, 0.0
    %v4032 = vmax.f32 %v3877, 0.0
    %v4033 = vmax.f32 %v3542, 0.0
    %v4034 = vmax.f32 %v3880, 0.0
    %v4035 = vmax.f32 %v3544, 0.0
    %v4036 = vmax.f32 %v3882, 0.0
    %v4037 = vmax.f32 %v3547, 0.0
    %v4038 = vmax.f32 %v3885, 0.0
    %v4039 = vmax.f32 %v3549, 0.0
    %v4040 = vmax.f32 %v3887, 0.0
    %v4041 = vmax.f32 %v3552, 0.0
    %v4042 = vmax.f32 %v3890, 0.0
    %v4043 = vmax.f32 %v3554, 0.0
    %v4044 = vmax.f32 %v3892, 0.0
    %v4045 = vmax.f32 %v3557, 0.0
    %v4046 = vmax.f32 %v3895, 0.0
    %v4047 = vmax.f32 %v3559, 0.0
    %v4048 = vmax.f32 %v3897, 0.0
    %v4049 = vmax.f32 %v3562, 0.0
    %v4050 = vmax.f32 %v3900, 0.0
    %v4051 = vmax.f32 %v3564, 0.0
    %v4052 = vmax.f32 %v3902, 0.0
    %v4053 = vmax.f32 %v3567, 0.0
    %v4054 = vmax.f32 %v3905, 0.0
    %v4055 = vmax.f32 %v3569, 0.0
    %v4056 = vmax.f32 %v3907, 0.0
    %v4057 = vmax.f32 %v3572, 0.0
    %v4058 = vmax.f32 %v3910, 0.0
    %v4059 = vmax.f32 %v3574, 0.0
    %v4060 = vmax.f32 %v3912, 0.0
    %v4061 = vmax.f32 %v3577, 0.0
    %v4062 = vmax.f32 %v3915, 0.0
    %v4063 = vmax.f32 %v3579, 0.0
    %v4064 = vmax.f32 %v3917, 0.0
    %v4065 = vmax.f32 %v3582, 0.0
    %v4066 = vmax.f32 %v3920, 0.0
    %v4067 = vmax.f32 %v3584, 0.0
    %v4068 = vmax.f32 %v3922, 0.0
    %v4069 = vmax.f32 %v3587, 0.0
    %v4070 = vmax.f32 %v3925, 0.0
    %v4071 = vmax.f32 %v3589, 0.0
    %v4072 = vmax.f32 %v3927, 0.0
    %v4073 = vmax.f32 %v3592, 0.0
    %v4074 = vmax.f32 %v3930, 0.0
    %v4075 = vmax.f32 %v3594, 0.0
    %v4076 = vmax.f32 %v3932, 0.0
    %v4077 = vmax.f32 %v3597, 0.0
    %v4078 = vmax.f32 %v3935, 0.0
    %v4079 = vmax.f32 %v3599, 0.0
    %v4080 = vmax.f32 %v3937, 0.0
    %v4081 = vmax.f32 %v3602, 0.0
    %v4082 = vmax.f32 %v3940, 0.0
    %v4083 = vmax.f32 %v3604, 0.0
    %v4084 = vmax.f32 %v3942, 0.0
    %v4085 = vmax.f32 %v3607, 0.0
    %v4086 = vmax.f32 %v3945, 0.0
    %v4087 = vmax.f32 %v3609, 0.0
    %v4088 = vmax.f32 %v3947, 0.0
    %v4089 = vmax.f32 %v3612, 0.0
    %v4090 = vmax.f32 %v3950, 0.0
    %v4091 = vmax.f32 %v3614, 0.0
    %v4092 = vmax.f32 %v3952, 0.0
    %v4093 = vmax.f32 %v3617, 0.0
    %v4094 = vmax.f32 %v3955, 0.0
    %v4095 = vmax.f32 %v3619, 0.0
    %v4096 = vmax.f32 %v3957, 0.0
    %v4097 = vmax.f32 %v3622, 0.0
    %v4098 = vmax.f32 %v3960, 0.0
    %v4099 = vmax.f32 %v3624, 0.0
    %v4100 = vmax.f32 %v3962, 0.0
    %v4101 = vmax.f32 %v3627, 0.0
    %v4102 = vmax.f32 %v3965, 0.0
    %v4103 = vmax.f32 %v3629, 0.0
    %v4104 = vmax.f32 %v3967, 0.0
    %v4105 = vmax.f32 %v3632, 0.0
    %v4106 = vmax.f32 %v3970, 0.0
    %v4107 = vmax.f32 %v3634, 0.0
    %v4108 = vmax.f32 %v3972, 0.0
    %v4109 = vmax.f32 %v3637, 0.0
    %v4110 = vmax.f32 %v3975, 0.0
    %v4111 = vmax.f32 %v3639, 0.0
    %v4112 = vmax.f32 %v3977, 0.0
    %v4113 = vmax.f32 %v3642, 0.0
    %v4114 = vmax.f32 %v3980, 0.0
    %v4115 = vmax.f32 %v3644, 0.0
    %v4116 = vmax.f32 %v3982, 0.0
    %v4117 = vmax.f32 %v3647, 0.0
    %v4118 = vmax.f32 %v3985, 0.0
    %v4119 = vmax.f32 %v3649, 0.0
    %v4120 = vmax.f32 %v3987, 0.0
    %v4121 = vmax.f32 %v3652, 0.0
    %v4122 = vmax.f32 %v3990, 0.0
    %v4123 = vmax.f32 %v3654, 0.0
    %v4124 = vmax.f32 %v3992, 0.0
    %v4125 = vmax.f32 %v3657, 0.0
    %v4126 = vmax.f32 %v3995, 0.0
    %v4127 = vmax.f32 %v3659, 0.0
    %v4128 = vmax.f32 %v3997, 0.0
    %v4129 = vmax.f32 %v3662, 0.0
    %v4130 = vmax.f32 %v4000, 0.0
    %v4131 = vmax.f32 %v3664, 0.0
    %v4132 = vmax.f32 %v4002, 0.0
    %v4133 = vmax.f32 %v3667, 0.0
    %v4134 = vmax.f32 %v4005, 0.0
    %v4135 = vmax.f32 %v3669, 0.0
    %v4136 = vmax.f32 %v4007, 0.0
    %v4137 = vld [vmem:[#allocation11 + $0x8] sm:$0x3]
    %v4138 = vld [vmem:[#allocation11 + $0xa] sm:$0x3]
    %v4139 = vadd.f32 %v4009, %v4010
    %4140 = vadd.xlane.f32.xlu0 %v4139
    %v4141 = vpop.xlane.xlu0 %4140
    %v4142 = vadd.f32 %v4011, %v4012
    %4143 = vadd.xlane.f32.xlu0 %v4142
    %v4144 = vpop.xlane.xlu0 %4143
    %v4145 = vadd.f32 %v4013, %v4014
    %4146 = vadd.xlane.f32.xlu0 %v4145
    %v4147 = vpop.xlane.xlu0 %4146
    %v4148 = vadd.f32 %v4015, %v4016
    %4149 = vadd.xlane.f32.xlu0 %v4148
    %v4150 = vpop.xlane.xlu0 %4149
    %v4151 = vadd.f32 %v4017, %v4018
    %4152 = vadd.xlane.f32.xlu0 %v4151
    %v4153 = vpop.xlane.xlu0 %4152
    %v4154 = vadd.f32 %v4019, %v4020
    %4155 = vadd.xlane.f32.xlu0 %v4154
    %v4156 = vpop.xlane.xlu0 %4155
    %v4157 = vadd.f32 %v4021, %v4022
    %4158 = vadd.xlane.f32.xlu0 %v4157
    %v4159 = vpop.xlane.xlu0 %4158
    %v4160 = vadd.f32 %v4023, %v4024
    %4161 = vadd.xlane.f32.xlu0 %v4160
    %v4162 = vpop.xlane.xlu0 %4161
    %v4163 = vadd.f32 %v4025, %v4026
    %4164 = vadd.xlane.f32.xlu0 %v4163
    %v4165 = vpop.xlane.xlu0 %4164
    %v4166 = vadd.f32 %v4027, %v4028
    %4167 = vadd.xlane.f32.xlu0 %v4166
    %v4168 = vpop.xlane.xlu0 %4167
    %v4169 = vadd.f32 %v4029, %v4030
    %4170 = vadd.xlane.f32.xlu0 %v4169
    %v4171 = vpop.xlane.xlu0 %4170
    %v4172 = vadd.f32 %v4031, %v4032
    %4173 = vadd.xlane.f32.xlu0 %v4172
    %v4174 = vpop.xlane.xlu0 %4173
    %v4175 = vadd.f32 %v4033, %v4034
    %4176 = vadd.xlane.f32.xlu0 %v4175
    %v4177 = vpop.xlane.xlu0 %4176
    %v4178 = vadd.f32 %v4035, %v4036
    %4179 = vadd.xlane.f32.xlu0 %v4178
    %v4180 = vpop.xlane.xlu0 %4179
    %v4181 = vadd.f32 %v4037, %v4038
    %4182 = vadd.xlane.f32.xlu0 %v4181
    %v4183 = vpop.xlane.xlu0 %4182
    %v4184 = vadd.f32 %v4039, %v4040
    %4185 = vadd.xlane.f32.xlu0 %v4184
    %v4186 = vpop.xlane.xlu0 %4185
    %v4187 = vadd.f32 %v4041, %v4042
    %4188 = vadd.xlane.f32.xlu0 %v4187
    %v4189 = vpop.xlane.xlu0 %4188
    %v4190 = vadd.f32 %v4043, %v4044
    %4191 = vadd.xlane.f32.xlu0 %v4190
    %v4192 = vpop.xlane.xlu0 %4191
    %v4193 = vadd.f32 %v4045, %v4046
    %4194 = vadd.xlane.f32.xlu0 %v4193
    %v4195 = vpop.xlane.xlu0 %4194
    %v4196 = vadd.f32 %v4047, %v4048
    %4197 = vadd.xlane.f32.xlu0 %v4196
    %v4198 = vpop.xlane.xlu0 %4197
    %v4199 = vadd.f32 %v4049, %v4050
    %4200 = vadd.xlane.f32.xlu0 %v4199
    %v4201 = vpop.xlane.xlu0 %4200
    %v4202 = vadd.f32 %v4051, %v4052
    %4203 = vadd.xlane.f32.xlu0 %v4202
    %v4204 = vpop.xlane.xlu0 %4203
    %v4205 = vadd.f32 %v4053, %v4054
    %4206 = vadd.xlane.f32.xlu0 %v4205
    %v4207 = vpop.xlane.xlu0 %4206
    %v4208 = vadd.f32 %v4055, %v4056
    %4209 = vadd.xlane.f32.xlu0 %v4208
    %v4210 = vpop.xlane.xlu0 %4209
    %v4211 = vadd.f32 %v4057, %v4058
    %4212 = vadd.xlane.f32.xlu0 %v4211
    %v4213 = vpop.xlane.xlu0 %4212
    %v4214 = vadd.f32 %v4059, %v4060
    %4215 = vadd.xlane.f32.xlu0 %v4214
    %v4216 = vpop.xlane.xlu0 %4215
    %v4217 = vadd.f32 %v4061, %v4062
    %4218 = vadd.xlane.f32.xlu0 %v4217
    %v4219 = vpop.xlane.xlu0 %4218
    %v4220 = vadd.f32 %v4063, %v4064
    %4221 = vadd.xlane.f32.xlu0 %v4220
    %v4222 = vpop.xlane.xlu0 %4221
    %v4223 = vadd.f32 %v4065, %v4066
    %4224 = vadd.xlane.f32.xlu0 %v4223
    %v4225 = vpop.xlane.xlu0 %4224
    %v4226 = vadd.f32 %v4067, %v4068
    %4227 = vadd.xlane.f32.xlu0 %v4226
    %v4228 = vpop.xlane.xlu0 %4227
    %v4229 = vadd.f32 %v4069, %v4070
    %4230 = vadd.xlane.f32.xlu0 %v4229
    %v4231 = vpop.xlane.xlu0 %4230
    %v4232 = vadd.f32 %v4071, %v4072
    %4233 = vadd.xlane.f32.xlu0 %v4232
    %v4234 = vpop.xlane.xlu0 %4233
    %v4235 = vadd.f32 %v4073, %v4074
    %4236 = vadd.xlane.f32.xlu0 %v4235
    %v4237 = vpop.xlane.xlu0 %4236
    %v4238 = vadd.f32 %v4075, %v4076
    %4239 = vadd.xlane.f32.xlu0 %v4238
    %v4240 = vpop.xlane.xlu0 %4239
    %v4241 = vadd.f32 %v4077, %v4078
    %4242 = vadd.xlane.f32.xlu0 %v4241
    %v4243 = vpop.xlane.xlu0 %4242
    %v4244 = vadd.f32 %v4079, %v4080
    %4245 = vadd.xlane.f32.xlu0 %v4244
    %v4246 = vpop.xlane.xlu0 %4245
    %v4247 = vadd.f32 %v4081, %v4082
    %4248 = vadd.xlane.f32.xlu0 %v4247
    %v4249 = vpop.xlane.xlu0 %4248
    %v4250 = vadd.f32 %v4083, %v4084
    %4251 = vadd.xlane.f32.xlu0 %v4250
    %v4252 = vpop.xlane.xlu0 %4251
    %v4253 = vadd.f32 %v4085, %v4086
    %4254 = vadd.xlane.f32.xlu0 %v4253
    %v4255 = vpop.xlane.xlu0 %4254
    %v4256 = vadd.f32 %v4087, %v4088
    %4257 = vadd.xlane.f32.xlu0 %v4256
    %v4258 = vpop.xlane.xlu0 %4257
    %v4259 = vadd.f32 %v4089, %v4090
    %4260 = vadd.xlane.f32.xlu0 %v4259
    %v4261 = vpop.xlane.xlu0 %4260
    %v4262 = vadd.f32 %v4091, %v4092
    %4263 = vadd.xlane.f32.xlu0 %v4262
    %v4264 = vpop.xlane.xlu0 %4263
    %v4265 = vadd.f32 %v4093, %v4094
    %4266 = vadd.xlane.f32.xlu0 %v4265
    %v4267 = vpop.xlane.xlu0 %4266
    %v4268 = vadd.f32 %v4095, %v4096
    %4269 = vadd.xlane.f32.xlu0 %v4268
    %v4270 = vpop.xlane.xlu0 %4269
    %v4271 = vadd.f32 %v4097, %v4098
    %4272 = vadd.xlane.f32.xlu0 %v4271
    %v4273 = vpop.xlane.xlu0 %4272
    %v4274 = vadd.f32 %v4099, %v4100
    %4275 = vadd.xlane.f32.xlu0 %v4274
    %v4276 = vpop.xlane.xlu0 %4275
    %v4277 = vadd.f32 %v4101, %v4102
    %4278 = vadd.xlane.f32.xlu0 %v4277
    %v4279 = vpop.xlane.xlu0 %4278
    %v4280 = vadd.f32 %v4103, %v4104
    %4281 = vadd.xlane.f32.xlu0 %v4280
    %v4282 = vpop.xlane.xlu0 %4281
    %v4283 = vadd.f32 %v4105, %v4106
    %4284 = vadd.xlane.f32.xlu0 %v4283
    %v4285 = vpop.xlane.xlu0 %4284
    %v4286 = vadd.f32 %v4107, %v4108
    %4287 = vadd.xlane.f32.xlu0 %v4286
    %v4288 = vpop.xlane.xlu0 %4287
    %v4289 = vadd.f32 %v4109, %v4110
    %4290 = vadd.xlane.f32.xlu0 %v4289
    %v4291 = vpop.xlane.xlu0 %4290
    %v4292 = vadd.f32 %v4111, %v4112
    %4293 = vadd.xlane.f32.xlu0 %v4292
    %v4294 = vpop.xlane.xlu0 %4293
    %v4295 = vadd.f32 %v4113, %v4114
    %4296 = vadd.xlane.f32.xlu0 %v4295
    %v4297 = vpop.xlane.xlu0 %4296
    %v4298 = vadd.f32 %v4115, %v4116
    %4299 = vadd.xlane.f32.xlu0 %v4298
    %v4300 = vpop.xlane.xlu0 %4299
    %v4301 = vadd.f32 %v4117, %v4118
    %4302 = vadd.xlane.f32.xlu0 %v4301
    %v4303 = vpop.xlane.xlu0 %4302
    %v4304 = vadd.f32 %v4119, %v4120
    %4305 = vadd.xlane.f32.xlu0 %v4304
    %v4306 = vpop.xlane.xlu0 %4305
    %v4307 = vadd.f32 %v4121, %v4122
    %4308 = vadd.xlane.f32.xlu0 %v4307
    %v4309 = vpop.xlane.xlu0 %4308
    %v4310 = vadd.f32 %v4123, %v4124
    %4311 = vadd.xlane.f32.xlu0 %v4310
    %v4312 = vpop.xlane.xlu0 %4311
    %v4313 = vadd.f32 %v4125, %v4126
    %4314 = vadd.xlane.f32.xlu0 %v4313
    %v4315 = vpop.xlane.xlu0 %4314
    %v4316 = vadd.f32 %v4127, %v4128
    %4317 = vadd.xlane.f32.xlu0 %v4316
    %v4318 = vpop.xlane.xlu0 %4317
    %v4319 = vadd.f32 %v4129, %v4130
    %4320 = vadd.xlane.f32.xlu0 %v4319
    %v4321 = vpop.xlane.xlu0 %4320
    %v4322 = vadd.f32 %v4131, %v4132
    %4323 = vadd.xlane.f32.xlu0 %v4322
    %v4324 = vpop.xlane.xlu0 %4323
    %v4325 = vadd.f32 %v4133, %v4134
    %4326 = vadd.xlane.f32.xlu0 %v4325
    %v4327 = vpop.xlane.xlu0 %4326
    %v4328 = vadd.f32 %v4135, %v4136
    %4329 = vadd.xlane.f32.xlu0 %v4328
    %v4330 = vpop.xlane.xlu0 %4329
    %v4331 = vmul.f32 %v4141, %v1204
    %v4332 = vmul.f32 %v4144, %v1204
    %v4333 = vmul.f32 %v4147, %v1204
    %v4334 = vmul.f32 %v4150, %v1204
    %v4335 = vmul.f32 %v4153, %v1204
    %v4336 = vmul.f32 %v4156, %v1204
    %v4337 = vmul.f32 %v4159, %v1204
    %v4338 = vmul.f32 %v4162, %v1204
    %v4339 = vmul.f32 %v4165, %v1204
    %v4340 = vmul.f32 %v4168, %v1204
    %v4341 = vmul.f32 %v4171, %v1204
    %v4342 = vmul.f32 %v4174, %v1204
    %v4343 = vmul.f32 %v4177, %v1204
    %v4344 = vmul.f32 %v4180, %v1204
    %v4345 = vmul.f32 %v4183, %v1204
    %v4346 = vmul.f32 %v4186, %v1204
    %v4347 = vmul.f32 %v4189, %v1204
    %v4348 = vmul.f32 %v4192, %v1204
    %v4349 = vmul.f32 %v4195, %v1204
    %v4350 = vmul.f32 %v4198, %v1204
    %v4351 = vmul.f32 %v4201, %v1204
    %v4352 = vmul.f32 %v4204, %v1204
    %v4353 = vmul.f32 %v4207, %v1204
    %v4354 = vmul.f32 %v4210, %v1204
    %v4355 = vmul.f32 %v4213, %v1204
    %v4356 = vmul.f32 %v4216, %v1204
    %v4357 = vmul.f32 %v4219, %v1204
    %v4358 = vmul.f32 %v4222, %v1204
    %v4359 = vmul.f32 %v4225, %v1204
    %v4360 = vmul.f32 %v4228, %v1204
    %v4361 = vmul.f32 %v4231, %v1204
    %v4362 = vmul.f32 %v4234, %v1204
    %v4363 = vmul.f32 %v4237, %v1204
    %v4364 = vmul.f32 %v4240, %v1204
    %v4365 = vmul.f32 %v4243, %v1204
    %v4366 = vmul.f32 %v4246, %v1204
    %v4367 = vmul.f32 %v4249, %v1204
    %v4368 = vmul.f32 %v4252, %v1204
    %v4369 = vmul.f32 %v4255, %v1204
    %v4370 = vmul.f32 %v4258, %v1204
    %v4371 = vmul.f32 %v4261, %v1204
    %v4372 = vmul.f32 %v4264, %v1204
    %v4373 = vmul.f32 %v4267, %v1204
    %v4374 = vmul.f32 %v4270, %v1204
    %v4375 = vmul.f32 %v4273, %v1204
    %v4376 = vmul.f32 %v4276, %v1204
    %v4377 = vmul.f32 %v4279, %v1204
    %v4378 = vmul.f32 %v4282, %v1204
    %v4379 = vmul.f32 %v4285, %v1204
    %v4380 = vmul.f32 %v4288, %v1204
    %v4381 = vmul.f32 %v4291, %v1204
    %v4382 = vmul.f32 %v4294, %v1204
    %v4383 = vmul.f32 %v4297, %v1204
    %v4384 = vmul.f32 %v4300, %v1204
    %v4385 = vmul.f32 %v4303, %v1204
    %v4386 = vmul.f32 %v4306, %v1204
    %v4387 = vmul.f32 %v4309, %v1204
    %v4388 = vmul.f32 %v4312, %v1204
    %v4389 = vmul.f32 %v4315, %v1204
    %v4390 = vmul.f32 %v4318, %v1204
    %v4391 = vmul.f32 %v4321, %v1204
    %v4392 = vmul.f32 %v4324, %v1204
    %v4393 = vmul.f32 %v4327, %v1204
    %v4394 = vmul.f32 %v4330, %v1204
    %v4395 = vmul.f32 %v4009, %v4009
    %v4396 = vmul.f32 %v4010, %v4010
    %v4397 = vmul.f32 %v4011, %v4011
    %v4398 = vmul.f32 %v4012, %v4012
    %v4399 = vmul.f32 %v4013, %v4013
    %v4400 = vmul.f32 %v4014, %v4014
    %v4401 = vmul.f32 %v4015, %v4015
    %v4402 = vmul.f32 %v4016, %v4016
    %v4403 = vmul.f32 %v4017, %v4017
    %v4404 = vmul.f32 %v4018, %v4018
    %v4405 = vmul.f32 %v4019, %v4019
    %v4406 = vmul.f32 %v4020, %v4020
    %v4407 = vmul.f32 %v4021, %v4021
    %v4408 = vmul.f32 %v4022, %v4022
    %v4409 = vmul.f32 %v4023, %v4023
    %v4410 = vmul.f32 %v4024, %v4024
    %v4411 = vmul.f32 %v4025, %v4025
    %v4412 = vmul.f32 %v4026, %v4026
    %v4413 = vmul.f32 %v4027, %v4027
    %v4414 = vmul.f32 %v4028, %v4028
    %v4415 = vmul.f32 %v4029, %v4029
    %v4416 = vmul.f32 %v4030, %v4030
    %v4417 = vmul.f32 %v4031, %v4031
    %v4418 = vmul.f32 %v4032, %v4032
    %v4419 = vmul.f32 %v4033, %v4033
    %v4420 = vmul.f32 %v4034, %v4034
    %v4421 = vmul.f32 %v4035, %v4035
    %v4422 = vmul.f32 %v4036, %v4036
    %v4423 = vmul.f32 %v4037, %v4037
    %v4424 = vmul.f32 %v4038, %v4038
    %v4425 = vmul.f32 %v4039, %v4039
    %v4426 = vmul.f32 %v4040, %v4040
    %v4427 = vmul.f32 %v4041, %v4041
    %v4428 = vmul.f32 %v4042, %v4042
    %v4429 = vmul.f32 %v4043, %v4043
    %v4430 = vmul.f32 %v4044, %v4044
    %v4431 = vmul.f32 %v4045, %v4045
    %v4432 = vmul.f32 %v4046, %v4046
    %v4433 = vmul.f32 %v4047, %v4047
    %v4434 = vmul.f32 %v4048, %v4048
    %v4435 = vmul.f32 %v4049, %v4049
    %v4436 = vmul.f32 %v4050, %v4050
    %v4437 = vmul.f32 %v4051, %v4051
    %v4438 = vmul.f32 %v4052, %v4052
    %v4439 = vmul.f32 %v4053, %v4053
    %v4440 = vmul.f32 %v4054, %v4054
    %v4441 = vmul.f32 %v4055, %v4055
    %v4442 = vmul.f32 %v4056, %v4056
    %v4443 = vmul.f32 %v4057, %v4057
    %v4444 = vmul.f32 %v4058, %v4058
    %v4445 = vmul.f32 %v4059, %v4059
    %v4446 = vmul.f32 %v4060, %v4060
    %v4447 = vmul.f32 %v4061, %v4061
    %v4448 = vmul.f32 %v4062, %v4062
    %v4449 = vmul.f32 %v4063, %v4063
    %v4450 = vmul.f32 %v4064, %v4064
    %v4451 = vmul.f32 %v4065, %v4065
    %v4452 = vmul.f32 %v4066, %v4066
    %v4453 = vmul.f32 %v4067, %v4067
    %v4454 = vmul.f32 %v4068, %v4068
    %v4455 = vmul.f32 %v4069, %v4069
    %v4456 = vmul.f32 %v4070, %v4070
    %v4457 = vmul.f32 %v4071, %v4071
    %v4458 = vmul.f32 %v4072, %v4072
    %v4459 = vmul.f32 %v4073, %v4073
    %v4460 = vmul.f32 %v4074, %v4074
    %v4461 = vmul.f32 %v4075, %v4075
    %v4462 = vmul.f32 %v4076, %v4076
    %v4463 = vmul.f32 %v4077, %v4077
    %v4464 = vmul.f32 %v4078, %v4078
    %v4465 = vmul.f32 %v4079, %v4079
    %v4466 = vmul.f32 %v4080, %v4080
    %v4467 = vmul.f32 %v4081, %v4081
    %v4468 = vmul.f32 %v4082, %v4082
    %v4469 = vmul.f32 %v4083, %v4083
    %v4470 = vmul.f32 %v4084, %v4084
    %v4471 = vmul.f32 %v4085, %v4085
    %v4472 = vmul.f32 %v4086, %v4086
    %v4473 = vmul.f32 %v4087, %v4087
    %v4474 = vmul.f32 %v4088, %v4088
    %v4475 = vmul.f32 %v4089, %v4089
    %v4476 = vmul.f32 %v4090, %v4090
    %v4477 = vmul.f32 %v4091, %v4091
    %v4478 = vmul.f32 %v4092, %v4092
    %v4479 = vmul.f32 %v4093, %v4093
    %v4480 = vmul.f32 %v4094, %v4094
    %v4481 = vmul.f32 %v4095, %v4095
    %v4482 = vmul.f32 %v4096, %v4096
    %v4483 = vmul.f32 %v4097, %v4097
    %v4484 = vmul.f32 %v4098, %v4098
    %v4485 = vmul.f32 %v4099, %v4099
    %v4486 = vmul.f32 %v4100, %v4100
    %v4487 = vmul.f32 %v4101, %v4101
    %v4488 = vmul.f32 %v4102, %v4102
    %v4489 = vmul.f32 %v4103, %v4103
    %v4490 = vmul.f32 %v4104, %v4104
    %v4491 = vmul.f32 %v4105, %v4105
    %v4492 = vmul.f32 %v4106, %v4106
    %v4493 = vmul.f32 %v4107, %v4107
    %v4494 = vmul.f32 %v4108, %v4108
    %v4495 = vmul.f32 %v4109, %v4109
    %v4496 = vmul.f32 %v4110, %v4110
    %v4497 = vmul.f32 %v4111, %v4111
    %v4498 = vmul.f32 %v4112, %v4112
    %v4499 = vmul.f32 %v4113, %v4113
    %v4500 = vmul.f32 %v4114, %v4114
    %v4501 = vmul.f32 %v4115, %v4115
    %v4502 = vmul.f32 %v4116, %v4116
    %v4503 = vmul.f32 %v4117, %v4117
    %v4504 = vmul.f32 %v4118, %v4118
    %v4505 = vmul.f32 %v4119, %v4119
    %v4506 = vmul.f32 %v4120, %v4120
    %v4507 = vmul.f32 %v4121, %v4121
    %v4508 = vmul.f32 %v4122, %v4122
    %v4509 = vmul.f32 %v4123, %v4123
    %v4510 = vmul.f32 %v4124, %v4124
    %v4511 = vmul.f32 %v4125, %v4125
    %v4512 = vmul.f32 %v4126, %v4126
    %v4513 = vmul.f32 %v4127, %v4127
    %v4514 = vmul.f32 %v4128, %v4128
    %v4515 = vmul.f32 %v4129, %v4129
    %v4516 = vmul.f32 %v4130, %v4130
    %v4517 = vmul.f32 %v4131, %v4131
    %v4518 = vmul.f32 %v4132, %v4132
    %v4519 = vmul.f32 %v4133, %v4133
    %v4520 = vmul.f32 %v4134, %v4134
    %v4521 = vmul.f32 %v4135, %v4135
    %v4522 = vmul.f32 %v4136, %v4136
    %v4523 = vadd.f32 %v4395, %v4396
    %4524 = vadd.xlane.f32.xlu0 %v4523
    %v4525 = vpop.xlane.xlu0 %4524
    %v4526 = vadd.f32 %v4397, %v4398
    %4527 = vadd.xlane.f32.xlu0 %v4526
    %v4528 = vpop.xlane.xlu0 %4527
    %v4529 = vadd.f32 %v4399, %v4400
    %4530 = vadd.xlane.f32.xlu0 %v4529
    %v4531 = vpop.xlane.xlu0 %4530
    %v4532 = vadd.f32 %v4401, %v4402
    %4533 = vadd.xlane.f32.xlu0 %v4532
    %v4534 = vpop.xlane.xlu0 %4533
    %v4535 = vadd.f32 %v4403, %v4404
    %4536 = vadd.xlane.f32.xlu0 %v4535
    %v4537 = vpop.xlane.xlu0 %4536
    %v4538 = vadd.f32 %v4405, %v4406
    %4539 = vadd.xlane.f32.xlu0 %v4538
    %v4540 = vpop.xlane.xlu0 %4539
    %v4541 = vadd.f32 %v4407, %v4408
    %4542 = vadd.xlane.f32.xlu0 %v4541
    %v4543 = vpop.xlane.xlu0 %4542
    %v4544 = vadd.f32 %v4409, %v4410
    %4545 = vadd.xlane.f32.xlu0 %v4544
    %v4546 = vpop.xlane.xlu0 %4545
    %v4547 = vadd.f32 %v4411, %v4412
    %4548 = vadd.xlane.f32.xlu0 %v4547
    %v4549 = vpop.xlane.xlu0 %4548
    %v4550 = vadd.f32 %v4413, %v4414
    %4551 = vadd.xlane.f32.xlu0 %v4550
    %v4552 = vpop.xlane.xlu0 %4551
    %v4553 = vadd.f32 %v4415, %v4416
    %4554 = vadd.xlane.f32.xlu0 %v4553
    %v4555 = vpop.xlane.xlu0 %4554
    %v4556 = vadd.f32 %v4417, %v4418
    %4557 = vadd.xlane.f32.xlu0 %v4556
    %v4558 = vpop.xlane.xlu0 %4557
    %v4559 = vadd.f32 %v4419, %v4420
    %4560 = vadd.xlane.f32.xlu0 %v4559
    %v4561 = vpop.xlane.xlu0 %4560
    %v4562 = vadd.f32 %v4421, %v4422
    %4563 = vadd.xlane.f32.xlu0 %v4562
    %v4564 = vpop.xlane.xlu0 %4563
    %v4565 = vadd.f32 %v4423, %v4424
    %4566 = vadd.xlane.f32.xlu0 %v4565
    %v4567 = vpop.xlane.xlu0 %4566
    %v4568 = vadd.f32 %v4425, %v4426
    %4569 = vadd.xlane.f32.xlu0 %v4568
    %v4570 = vpop.xlane.xlu0 %4569
    %v4571 = vadd.f32 %v4427, %v4428
    %4572 = vadd.xlane.f32.xlu0 %v4571
    %v4573 = vpop.xlane.xlu0 %4572
    %v4574 = vadd.f32 %v4429, %v4430
    %4575 = vadd.xlane.f32.xlu0 %v4574
    %v4576 = vpop.xlane.xlu0 %4575
    %v4577 = vadd.f32 %v4431, %v4432
    %4578 = vadd.xlane.f32.xlu0 %v4577
    %v4579 = vpop.xlane.xlu0 %4578
    %v4580 = vadd.f32 %v4433, %v4434
    %4581 = vadd.xlane.f32.xlu0 %v4580
    %v4582 = vpop.xlane.xlu0 %4581
    %v4583 = vadd.f32 %v4435, %v4436
    %4584 = vadd.xlane.f32.xlu0 %v4583
    %v4585 = vpop.xlane.xlu0 %4584
    %v4586 = vadd.f32 %v4437, %v4438
    %4587 = vadd.xlane.f32.xlu0 %v4586
    %v4588 = vpop.xlane.xlu0 %4587
    %v4589 = vadd.f32 %v4439, %v4440
    %4590 = vadd.xlane.f32.xlu0 %v4589
    %v4591 = vpop.xlane.xlu0 %4590
    %v4592 = vadd.f32 %v4441, %v4442
    %4593 = vadd.xlane.f32.xlu0 %v4592
    %v4594 = vpop.xlane.xlu0 %4593
    %v4595 = vadd.f32 %v4443, %v4444
    %4596 = vadd.xlane.f32.xlu0 %v4595
    %v4597 = vpop.xlane.xlu0 %4596
    %v4598 = vadd.f32 %v4445, %v4446
    %4599 = vadd.xlane.f32.xlu0 %v4598
    %v4600 = vpop.xlane.xlu0 %4599
    %v4601 = vadd.f32 %v4447, %v4448
    %4602 = vadd.xlane.f32.xlu0 %v4601
    %v4603 = vpop.xlane.xlu0 %4602
    %v4604 = vadd.f32 %v4449, %v4450
    %4605 = vadd.xlane.f32.xlu0 %v4604
    %v4606 = vpop.xlane.xlu0 %4605
    %v4607 = vadd.f32 %v4451, %v4452
    %4608 = vadd.xlane.f32.xlu0 %v4607
    %v4609 = vpop.xlane.xlu0 %4608
    %v4610 = vadd.f32 %v4453, %v4454
    %4611 = vadd.xlane.f32.xlu0 %v4610
    %v4612 = vpop.xlane.xlu0 %4611
    %v4613 = vadd.f32 %v4455, %v4456
    %4614 = vadd.xlane.f32.xlu0 %v4613
    %v4615 = vpop.xlane.xlu0 %4614
    %v4616 = vadd.f32 %v4457, %v4458
    %4617 = vadd.xlane.f32.xlu0 %v4616
    %v4618 = vpop.xlane.xlu0 %4617
    %v4619 = vadd.f32 %v4459, %v4460
    %4620 = vadd.xlane.f32.xlu0 %v4619
    %v4621 = vpop.xlane.xlu0 %4620
    %v4622 = vadd.f32 %v4461, %v4462
    %4623 = vadd.xlane.f32.xlu0 %v4622
    %v4624 = vpop.xlane.xlu0 %4623
    %v4625 = vadd.f32 %v4463, %v4464
    %4626 = vadd.xlane.f32.xlu0 %v4625
    %v4627 = vpop.xlane.xlu0 %4626
    %v4628 = vadd.f32 %v4465, %v4466
    %4629 = vadd.xlane.f32.xlu0 %v4628
    %v4630 = vpop.xlane.xlu0 %4629
    %v4631 = vadd.f32 %v4467, %v4468
    %4632 = vadd.xlane.f32.xlu0 %v4631
    %v4633 = vpop.xlane.xlu0 %4632
    %v4634 = vadd.f32 %v4469, %v4470
    %4635 = vadd.xlane.f32.xlu0 %v4634
    %v4636 = vpop.xlane.xlu0 %4635
    %v4637 = vadd.f32 %v4471, %v4472
    %4638 = vadd.xlane.f32.xlu0 %v4637
    %v4639 = vpop.xlane.xlu0 %4638
    %v4640 = vadd.f32 %v4473, %v4474
    %4641 = vadd.xlane.f32.xlu0 %v4640
    %v4642 = vpop.xlane.xlu0 %4641
    %v4643 = vadd.f32 %v4475, %v4476
    %4644 = vadd.xlane.f32.xlu0 %v4643
    %v4645 = vpop.xlane.xlu0 %4644
    %v4646 = vadd.f32 %v4477, %v4478
    %4647 = vadd.xlane.f32.xlu0 %v4646
    %v4648 = vpop.xlane.xlu0 %4647
    %v4649 = vadd.f32 %v4479, %v4480
    %4650 = vadd.xlane.f32.xlu0 %v4649
    %v4651 = vpop.xlane.xlu0 %4650
    %v4652 = vadd.f32 %v4481, %v4482
    %4653 = vadd.xlane.f32.xlu0 %v4652
    %v4654 = vpop.xlane.xlu0 %4653
    %v4655 = vadd.f32 %v4483, %v4484
    %4656 = vadd.xlane.f32.xlu0 %v4655
    %v4657 = vpop.xlane.xlu0 %4656
    %v4658 = vadd.f32 %v4485, %v4486
    %4659 = vadd.xlane.f32.xlu0 %v4658
    %v4660 = vpop.xlane.xlu0 %4659
    %v4661 = vadd.f32 %v4487, %v4488
    %4662 = vadd.xlane.f32.xlu0 %v4661
    %v4663 = vpop.xlane.xlu0 %4662
    %v4664 = vadd.f32 %v4489, %v4490
    %4665 = vadd.xlane.f32.xlu0 %v4664
    %v4666 = vpop.xlane.xlu0 %4665
    %v4667 = vadd.f32 %v4491, %v4492
    %4668 = vadd.xlane.f32.xlu0 %v4667
    %v4669 = vpop.xlane.xlu0 %4668
    %v4670 = vadd.f32 %v4493, %v4494
    %4671 = vadd.xlane.f32.xlu0 %v4670
    %v4672 = vpop.xlane.xlu0 %4671
    %v4673 = vadd.f32 %v4495, %v4496
    %4674 = vadd.xlane.f32.xlu0 %v4673
    %v4675 = vpop.xlane.xlu0 %4674
    %v4676 = vadd.f32 %v4497, %v4498
    %4677 = vadd.xlane.f32.xlu0 %v4676
    %v4678 = vpop.xlane.xlu0 %4677
    %v4679 = vadd.f32 %v4499, %v4500
    %4680 = vadd.xlane.f32.xlu0 %v4679
    %v4681 = vpop.xlane.xlu0 %4680
    %v4682 = vadd.f32 %v4501, %v4502
    %4683 = vadd.xlane.f32.xlu0 %v4682
    %v4684 = vpop.xlane.xlu0 %4683
    %v4685 = vadd.f32 %v4503, %v4504
    %4686 = vadd.xlane.f32.xlu0 %v4685
    %v4687 = vpop.xlane.xlu0 %4686
    %v4688 = vadd.f32 %v4505, %v4506
    %4689 = vadd.xlane.f32.xlu0 %v4688
    %v4690 = vpop.xlane.xlu0 %4689
    %v4691 = vadd.f32 %v4507, %v4508
    %4692 = vadd.xlane.f32.xlu0 %v4691
    %v4693 = vpop.xlane.xlu0 %4692
    %v4694 = vadd.f32 %v4509, %v4510
    %4695 = vadd.xlane.f32.xlu0 %v4694
    %v4696 = vpop.xlane.xlu0 %4695
    %v4697 = vadd.f32 %v4511, %v4512
    %4698 = vadd.xlane.f32.xlu0 %v4697
    %v4699 = vpop.xlane.xlu0 %4698
    %v4700 = vadd.f32 %v4513, %v4514
    %4701 = vadd.xlane.f32.xlu0 %v4700
    %v4702 = vpop.xlane.xlu0 %4701
    %v4703 = vadd.f32 %v4515, %v4516
    %4704 = vadd.xlane.f32.xlu0 %v4703
    %v4705 = vpop.xlane.xlu0 %4704
    %v4706 = vadd.f32 %v4517, %v4518
    %4707 = vadd.xlane.f32.xlu0 %v4706
    %v4708 = vpop.xlane.xlu0 %4707
    %v4709 = vadd.f32 %v4519, %v4520
    %4710 = vadd.xlane.f32.xlu0 %v4709
    %v4711 = vpop.xlane.xlu0 %4710
    %v4712 = vadd.f32 %v4521, %v4522
    %4713 = vadd.xlane.f32.xlu0 %v4712
    %v4714 = vpop.xlane.xlu0 %4713
    %v4715 = vmul.f32 %v4525, %v1204
    %v4716 = vmul.f32 %v4528, %v1204
    %v4717 = vmul.f32 %v4531, %v1204
    %v4718 = vmul.f32 %v4534, %v1204
    %v4719 = vmul.f32 %v4537, %v1204
    %v4720 = vmul.f32 %v4540, %v1204
    %v4721 = vmul.f32 %v4543, %v1204
    %v4722 = vmul.f32 %v4546, %v1204
    %v4723 = vmul.f32 %v4549, %v1204
    %v4724 = vmul.f32 %v4552, %v1204
    %v4725 = vmul.f32 %v4555, %v1204
    %v4726 = vmul.f32 %v4558, %v1204
    %v4727 = vmul.f32 %v4561, %v1204
    %v4728 = vmul.f32 %v4564, %v1204
    %v4729 = vmul.f32 %v4567, %v1204
    %v4730 = vmul.f32 %v4570, %v1204
    %v4731 = vmul.f32 %v4573, %v1204
    %v4732 = vmul.f32 %v4576, %v1204
    %v4733 = vmul.f32 %v4579, %v1204
    %v4734 = vmul.f32 %v4582, %v1204
    %v4735 = vmul.f32 %v4585, %v1204
    %v4736 = vmul.f32 %v4588, %v1204
    %v4737 = vmul.f32 %v4591, %v1204
    %v4738 = vmul.f32 %v4594, %v1204
    %v4739 = vmul.f32 %v4597, %v1204
    %v4740 = vmul.f32 %v4600, %v1204
    %v4741 = vmul.f32 %v4603, %v1204
    %v4742 = vmul.f32 %v4606, %v1204
    %v4743 = vmul.f32 %v4609, %v1204
    %v4744 = vmul.f32 %v4612, %v1204
    %v4745 = vmul.f32 %v4615, %v1204
    %v4746 = vmul.f32 %v4618, %v1204
    %v4747 = vmul.f32 %v4621, %v1204
    %v4748 = vmul.f32 %v4624, %v1204
    %v4749 = vmul.f32 %v4627, %v1204
    %v4750 = vmul.f32 %v4630, %v1204
    %v4751 = vmul.f32 %v4633, %v1204
    %v4752 = vmul.f32 %v4636, %v1204
    %v4753 = vmul.f32 %v4639, %v1204
    %v4754 = vmul.f32 %v4642, %v1204
    %v4755 = vmul.f32 %v4645, %v1204
    %v4756 = vmul.f32 %v4648, %v1204
    %v4757 = vmul.f32 %v4651, %v1204
    %v4758 = vmul.f32 %v4654, %v1204
    %v4759 = vmul.f32 %v4657, %v1204
    %v4760 = vmul.f32 %v4660, %v1204
    %v4761 = vmul.f32 %v4663, %v1204
    %v4762 = vmul.f32 %v4666, %v1204
    %v4763 = vmul.f32 %v4669, %v1204
    %v4764 = vmul.f32 %v4672, %v1204
    %v4765 = vmul.f32 %v4675, %v1204
    %v4766 = vmul.f32 %v4678, %v1204
    %v4767 = vmul.f32 %v4681, %v1204
    %v4768 = vmul.f32 %v4684, %v1204
    %v4769 = vmul.f32 %v4687, %v1204
    %v4770 = vmul.f32 %v4690, %v1204
    %v4771 = vmul.f32 %v4693, %v1204
    %v4772 = vmul.f32 %v4696, %v1204
    %v4773 = vmul.f32 %v4699, %v1204
    %v4774 = vmul.f32 %v4702, %v1204
    %v4775 = vmul.f32 %v4705, %v1204
    %v4776 = vmul.f32 %v4708, %v1204
    %v4777 = vmul.f32 %v4711, %v1204
    %v4778 = vmul.f32 %v4714, %v1204
    %v4779 = vmul.f32 %v4331, %v4331
    %v4780 = vmul.f32 %v4332, %v4332
    %v4781 = vmul.f32 %v4333, %v4333
    %v4782 = vmul.f32 %v4334, %v4334
    %v4783 = vmul.f32 %v4335, %v4335
    %v4784 = vmul.f32 %v4336, %v4336
    %v4785 = vmul.f32 %v4337, %v4337
    %v4786 = vmul.f32 %v4338, %v4338
    %v4787 = vmul.f32 %v4339, %v4339
    %v4788 = vmul.f32 %v4340, %v4340
    %v4789 = vmul.f32 %v4341, %v4341
    %v4790 = vmul.f32 %v4342, %v4342
    %v4791 = vmul.f32 %v4343, %v4343
    %v4792 = vmul.f32 %v4344, %v4344
    %v4793 = vmul.f32 %v4345, %v4345
    %v4794 = vmul.f32 %v4346, %v4346
    %v4795 = vmul.f32 %v4347, %v4347
    %v4796 = vmul.f32 %v4348, %v4348
    %v4797 = vmul.f32 %v4349, %v4349
    %v4798 = vmul.f32 %v4350, %v4350
    %v4799 = vmul.f32 %v4351, %v4351
    %v4800 = vmul.f32 %v4352, %v4352
    %v4801 = vmul.f32 %v4353, %v4353
    %v4802 = vmul.f32 %v4354, %v4354
    %v4803 = vmul.f32 %v4355, %v4355
    %v4804 = vmul.f32 %v4356, %v4356
    %v4805 = vmul.f32 %v4357, %v4357
    %v4806 = vmul.f32 %v4358, %v4358
    %v4807 = vmul.f32 %v4359, %v4359
    %v4808 = vmul.f32 %v4360, %v4360
    %v4809 = vmul.f32 %v4361, %v4361
    %v4810 = vmul.f32 %v4362, %v4362
    %v4811 = vmul.f32 %v4363, %v4363
    %v4812 = vmul.f32 %v4364, %v4364
    %v4813 = vmul.f32 %v4365, %v4365
    %v4814 = vmul.f32 %v4366, %v4366
    %v4815 = vmul.f32 %v4367, %v4367
    %v4816 = vmul.f32 %v4368, %v4368
    %v4817 = vmul.f32 %v4369, %v4369
    %v4818 = vmul.f32 %v4370, %v4370
    %v4819 = vmul.f32 %v4371, %v4371
    %v4820 = vmul.f32 %v4372, %v4372
    %v4821 = vmul.f32 %v4373, %v4373
    %v4822 = vmul.f32 %v4374, %v4374
    %v4823 = vmul.f32 %v4375, %v4375
    %v4824 = vmul.f32 %v4376, %v4376
    %v4825 = vmul.f32 %v4377, %v4377
    %v4826 = vmul.f32 %v4378, %v4378
    %v4827 = vmul.f32 %v4379, %v4379
    %v4828 = vmul.f32 %v4380, %v4380
    %v4829 = vmul.f32 %v4381, %v4381
    %v4830 = vmul.f32 %v4382, %v4382
    %v4831 = vmul.f32 %v4383, %v4383
    %v4832 = vmul.f32 %v4384, %v4384
    %v4833 = vmul.f32 %v4385, %v4385
    %v4834 = vmul.f32 %v4386, %v4386
    %v4835 = vmul.f32 %v4387, %v4387
    %v4836 = vmul.f32 %v4388, %v4388
    %v4837 = vmul.f32 %v4389, %v4389
    %v4838 = vmul.f32 %v4390, %v4390
    %v4839 = vmul.f32 %v4391, %v4391
    %v4840 = vmul.f32 %v4392, %v4392
    %v4841 = vmul.f32 %v4393, %v4393
    %v4842 = vmul.f32 %v4394, %v4394
    %v4843 = vsub.f32 %v4715, %v4779
    %v4844 = vsub.f32 %v4716, %v4780
    %v4845 = vsub.f32 %v4717, %v4781
    %v4846 = vsub.f32 %v4718, %v4782
    %v4847 = vsub.f32 %v4719, %v4783
    %v4848 = vsub.f32 %v4720, %v4784
    %v4849 = vsub.f32 %v4721, %v4785
    %v4850 = vsub.f32 %v4722, %v4786
    %v4851 = vsub.f32 %v4723, %v4787
    %v4852 = vsub.f32 %v4724, %v4788
    %v4853 = vsub.f32 %v4725, %v4789
    %v4854 = vsub.f32 %v4726, %v4790
    %v4855 = vsub.f32 %v4727, %v4791
    %v4856 = vsub.f32 %v4728, %v4792
    %v4857 = vsub.f32 %v4729, %v4793
    %v4858 = vsub.f32 %v4730, %v4794
    %v4859 = vsub.f32 %v4731, %v4795
    %v4860 = vsub.f32 %v4732, %v4796
    %v4861 = vsub.f32 %v4733, %v4797
    %v4862 = vsub.f32 %v4734, %v4798
    %v4863 = vsub.f32 %v4735, %v4799
    %v4864 = vsub.f32 %v4736, %v4800
    %v4865 = vsub.f32 %v4737, %v4801
    %v4866 = vsub.f32 %v4738, %v4802
    %v4867 = vsub.f32 %v4739, %v4803
    %v4868 = vsub.f32 %v4740, %v4804
    %v4869 = vsub.f32 %v4741, %v4805
    %v4870 = vsub.f32 %v4742, %v4806
    %v4871 = vsub.f32 %v4743, %v4807
    %v4872 = vsub.f32 %v4744, %v4808
    %v4873 = vsub.f32 %v4745, %v4809
    %v4874 = vsub.f32 %v4746, %v4810
    %v4875 = vsub.f32 %v4747, %v4811
    %v4876 = vsub.f32 %v4748, %v4812
    %v4877 = vsub.f32 %v4749, %v4813
    %v4878 = vsub.f32 %v4750, %v4814
    %v4879 = vsub.f32 %v4751, %v4815
    %v4880 = vsub.f32 %v4752, %v4816
    %v4881 = vsub.f32 %v4753, %v4817
    %v4882 = vsub.f32 %v4754, %v4818
    %v4883 = vsub.f32 %v4755, %v4819
    %v4884 = vsub.f32 %v4756, %v4820
    %v4885 = vsub.f32 %v4757, %v4821
    %v4886 = vsub.f32 %v4758, %v4822
    %v4887 = vsub.f32 %v4759, %v4823
    %v4888 = vsub.f32 %v4760, %v4824
    %v4889 = vsub.f32 %v4761, %v4825
    %v4890 = vsub.f32 %v4762, %v4826
    %v4891 = vsub.f32 %v4763, %v4827
    %v4892 = vsub.f32 %v4764, %v4828
    %v4893 = vsub.f32 %v4765, %v4829
    %v4894 = vsub.f32 %v4766, %v4830
    %v4895 = vsub.f32 %v4767, %v4831
    %v4896 = vsub.f32 %v4768, %v4832
    %v4897 = vsub.f32 %v4769, %v4833
    %v4898 = vsub.f32 %v4770, %v4834
    %v4899 = vsub.f32 %v4771, %v4835
    %v4900 = vsub.f32 %v4772, %v4836
    %v4901 = vsub.f32 %v4773, %v4837
    %v4902 = vsub.f32 %v4774, %v4838
    %v4903 = vsub.f32 %v4775, %v4839
    %v4904 = vsub.f32 %v4776, %v4840
    %v4905 = vsub.f32 %v4777, %v4841
    %v4906 = vsub.f32 %v4778, %v4842
    %v4907 = vmax.f32 %v4843, 0.0
    %v4908 = vmax.f32 %v4844, 0.0
    %v4909 = vmax.f32 %v4845, 0.0
    %v4910 = vmax.f32 %v4846, 0.0
    %v4911 = vmax.f32 %v4847, 0.0
    %v4912 = vmax.f32 %v4848, 0.0
    %v4913 = vmax.f32 %v4849, 0.0
    %v4914 = vmax.f32 %v4850, 0.0
    %v4915 = vmax.f32 %v4851, 0.0
    %v4916 = vmax.f32 %v4852, 0.0
    %v4917 = vmax.f32 %v4853, 0.0
    %v4918 = vmax.f32 %v4854, 0.0
    %v4919 = vmax.f32 %v4855, 0.0
    %v4920 = vmax.f32 %v4856, 0.0
    %v4921 = vmax.f32 %v4857, 0.0
    %v4922 = vmax.f32 %v4858, 0.0
    %v4923 = vmax.f32 %v4859, 0.0
    %v4924 = vmax.f32 %v4860, 0.0
    %v4925 = vmax.f32 %v4861, 0.0
    %v4926 = vmax.f32 %v4862, 0.0
    %v4927 = vmax.f32 %v4863, 0.0
    %v4928 = vmax.f32 %v4864, 0.0
    %v4929 = vmax.f32 %v4865, 0.0
    %v4930 = vmax.f32 %v4866, 0.0
    %v4931 = vmax.f32 %v4867, 0.0
    %v4932 = vmax.f32 %v4868, 0.0
    %v4933 = vmax.f32 %v4869, 0.0
    %v4934 = vmax.f32 %v4870, 0.0
    %v4935 = vmax.f32 %v4871, 0.0
    %v4936 = vmax.f32 %v4872, 0.0
    %v4937 = vmax.f32 %v4873, 0.0
    %v4938 = vmax.f32 %v4874, 0.0
    %v4939 = vmax.f32 %v4875, 0.0
    %v4940 = vmax.f32 %v4876, 0.0
    %v4941 = vmax.f32 %v4877, 0.0
    %v4942 = vmax.f32 %v4878, 0.0
    %v4943 = vmax.f32 %v4879, 0.0
    %v4944 = vmax.f32 %v4880, 0.0
    %v4945 = vmax.f32 %v4881, 0.0
    %v4946 = vmax.f32 %v4882, 0.0
    %v4947 = vmax.f32 %v4883, 0.0
    %v4948 = vmax.f32 %v4884, 0.0
    %v4949 = vmax.f32 %v4885, 0.0
    %v4950 = vmax.f32 %v4886, 0.0
    %v4951 = vmax.f32 %v4887, 0.0
    %v4952 = vmax.f32 %v4888, 0.0
    %v4953 = vmax.f32 %v4889, 0.0
    %v4954 = vmax.f32 %v4890, 0.0
    %v4955 = vmax.f32 %v4891, 0.0
    %v4956 = vmax.f32 %v4892, 0.0
    %v4957 = vmax.f32 %v4893, 0.0
    %v4958 = vmax.f32 %v4894, 0.0
    %v4959 = vmax.f32 %v4895, 0.0
    %v4960 = vmax.f32 %v4896, 0.0
    %v4961 = vmax.f32 %v4897, 0.0
    %v4962 = vmax.f32 %v4898, 0.0
    %v4963 = vmax.f32 %v4899, 0.0
    %v4964 = vmax.f32 %v4900, 0.0
    %v4965 = vmax.f32 %v4901, 0.0
    %v4966 = vmax.f32 %v4902, 0.0
    %v4967 = vmax.f32 %v4903, 0.0
    %v4968 = vmax.f32 %v4904, 0.0
    %v4969 = vmax.f32 %v4905, 0.0
    %v4970 = vmax.f32 %v4906, 0.0
    %v4971 = vadd.f32 %v4907, 1e-05
    %v4972 = vadd.f32 %v4908, 1e-05
    %v4973 = vadd.f32 %v4909, 1e-05
    %v4974 = vadd.f32 %v4910, 1e-05
    %v4975 = vadd.f32 %v4911, 1e-05
    %v4976 = vadd.f32 %v4912, 1e-05
    %v4977 = vadd.f32 %v4913, 1e-05
    %v4978 = vadd.f32 %v4914, 1e-05
    %v4979 = vadd.f32 %v4915, 1e-05
    %v4980 = vadd.f32 %v4916, 1e-05
    %v4981 = vadd.f32 %v4917, 1e-05
    %v4982 = vadd.f32 %v4918, 1e-05
    %v4983 = vadd.f32 %v4919, 1e-05
    %v4984 = vadd.f32 %v4920, 1e-05
    %v4985 = vadd.f32 %v4921, 1e-05
    %v4986 = vadd.f32 %v4922, 1e-05
    %v4987 = vadd.f32 %v4923, 1e-05
    %v4988 = vadd.f32 %v4924, 1e-05
    %v4989 = vadd.f32 %v4925, 1e-05
    %v4990 = vadd.f32 %v4926, 1e-05
    %v4991 = vadd.f32 %v4927, 1e-05
    %v4992 = vadd.f32 %v4928, 1e-05
    %v4993 = vadd.f32 %v4929, 1e-05
    %v4994 = vadd.f32 %v4930, 1e-05
    %v4995 = vadd.f32 %v4931, 1e-05
    %v4996 = vadd.f32 %v4932, 1e-05
    %v4997 = vadd.f32 %v4933, 1e-05
    %v4998 = vadd.f32 %v4934, 1e-05
    %v4999 = vadd.f32 %v4935, 1e-05
    %v5000 = vadd.f32 %v4936, 1e-05
    %v5001 = vadd.f32 %v4937, 1e-05
    %v5002 = vadd.f32 %v4938, 1e-05
    %v5003 = vadd.f32 %v4939, 1e-05
    %v5004 = vadd.f32 %v4940, 1e-05
    %v5005 = vadd.f32 %v4941, 1e-05
    %v5006 = vadd.f32 %v4942, 1e-05
    %v5007 = vadd.f32 %v4943, 1e-05
    %v5008 = vadd.f32 %v4944, 1e-05
    %v5009 = vadd.f32 %v4945, 1e-05
    %v5010 = vadd.f32 %v4946, 1e-05
    %v5011 = vadd.f32 %v4947, 1e-05
    %v5012 = vadd.f32 %v4948, 1e-05
    %v5013 = vadd.f32 %v4949, 1e-05
    %v5014 = vadd.f32 %v4950, 1e-05
    %v5015 = vadd.f32 %v4951, 1e-05
    %v5016 = vadd.f32 %v4952, 1e-05
    %v5017 = vadd.f32 %v4953, 1e-05
    %v5018 = vadd.f32 %v4954, 1e-05
    %v5019 = vadd.f32 %v4955, 1e-05
    %v5020 = vadd.f32 %v4956, 1e-05
    %v5021 = vadd.f32 %v4957, 1e-05
    %v5022 = vadd.f32 %v4958, 1e-05
    %v5023 = vadd.f32 %v4959, 1e-05
    %v5024 = vadd.f32 %v4960, 1e-05
    %v5025 = vadd.f32 %v4961, 1e-05
    %v5026 = vadd.f32 %v4962, 1e-05
    %v5027 = vadd.f32 %v4963, 1e-05
    %v5028 = vadd.f32 %v4964, 1e-05
    %v5029 = vadd.f32 %v4965, 1e-05
    %v5030 = vadd.f32 %v4966, 1e-05
    %v5031 = vadd.f32 %v4967, 1e-05
    %v5032 = vadd.f32 %v4968, 1e-05
    %v5033 = vadd.f32 %v4969, 1e-05
    %v5034 = vadd.f32 %v4970, 1e-05
    %v5035 = vrsqrt.pop %v4971
    %v5036 = vmul.f32 %v5035, %v4971
    %v5037 = vmul.f32 %v5036, %v5035
    %v5038 = vmul.f32 0.5, %v5037
    %v5039 = vsub.f32 1.5, %v5038
    %v5040 = vmul.f32 %v5035, %v5039
    %vm5041 = vweird.f32 %v4971
    %vm5042 = vweird.f32 %v5035
    %vm5043 = vmor %vm5041, %vm5042
    %v5044 = vsel %vm5043, %v5035, %v5040
    %v5045 = vrsqrt.pop %v4972
    %v5046 = vmul.f32 %v5045, %v4972
    %v5047 = vmul.f32 %v5046, %v5045
    %v5048 = vmul.f32 0.5, %v5047
    %v5049 = vsub.f32 1.5, %v5048
    %v5050 = vmul.f32 %v5045, %v5049
    %vm5051 = vweird.f32 %v4972
    %vm5052 = vweird.f32 %v5045
    %vm5053 = vmor %vm5051, %vm5052
    %v5054 = vsel %vm5053, %v5045, %v5050
    %v5055 = vrsqrt.pop %v4973
    %v5056 = vmul.f32 %v5055, %v4973
    %v5057 = vmul.f32 %v5056, %v5055
    %v5058 = vmul.f32 0.5, %v5057
    %v5059 = vsub.f32 1.5, %v5058
    %v5060 = vmul.f32 %v5055, %v5059
    %vm5061 = vweird.f32 %v4973
    %vm5062 = vweird.f32 %v5055
    %vm5063 = vmor %vm5061, %vm5062
    %v5064 = vsel %vm5063, %v5055, %v5060
    %v5065 = vrsqrt.pop %v4974
    %v5066 = vmul.f32 %v5065, %v4974
    %v5067 = vmul.f32 %v5066, %v5065
    %v5068 = vmul.f32 0.5, %v5067
    %v5069 = vsub.f32 1.5, %v5068
    %v5070 = vmul.f32 %v5065, %v5069
    %vm5071 = vweird.f32 %v4974
    %vm5072 = vweird.f32 %v5065
    %vm5073 = vmor %vm5071, %vm5072
    %v5074 = vsel %vm5073, %v5065, %v5070
    %v5075 = vrsqrt.pop %v4975
    %v5076 = vmul.f32 %v5075, %v4975
    %v5077 = vmul.f32 %v5076, %v5075
    %v5078 = vmul.f32 0.5, %v5077
    %v5079 = vsub.f32 1.5, %v5078
    %v5080 = vmul.f32 %v5075, %v5079
    %vm5081 = vweird.f32 %v4975
    %vm5082 = vweird.f32 %v5075
    %vm5083 = vmor %vm5081, %vm5082
    %v5084 = vsel %vm5083, %v5075, %v5080
    %v5085 = vrsqrt.pop %v4976
    %v5086 = vmul.f32 %v5085, %v4976
    %v5087 = vmul.f32 %v5086, %v5085
    %v5088 = vmul.f32 0.5, %v5087
    %v5089 = vsub.f32 1.5, %v5088
    %v5090 = vmul.f32 %v5085, %v5089
    %vm5091 = vweird.f32 %v4976
    %vm5092 = vweird.f32 %v5085
    %vm5093 = vmor %vm5091, %vm5092
    %v5094 = vsel %vm5093, %v5085, %v5090
    %v5095 = vrsqrt.pop %v4977
    %v5096 = vmul.f32 %v5095, %v4977
    %v5097 = vmul.f32 %v5096, %v5095
    %v5098 = vmul.f32 0.5, %v5097
    %v5099 = vsub.f32 1.5, %v5098
    %v5100 = vmul.f32 %v5095, %v5099
    %vm5101 = vweird.f32 %v4977
    %vm5102 = vweird.f32 %v5095
    %vm5103 = vmor %vm5101, %vm5102
    %v5104 = vsel %vm5103, %v5095, %v5100
    %v5105 = vrsqrt.pop %v4978
    %v5106 = vmul.f32 %v5105, %v4978
    %v5107 = vmul.f32 %v5106, %v5105
    %v5108 = vmul.f32 0.5, %v5107
    %v5109 = vsub.f32 1.5, %v5108
    %v5110 = vmul.f32 %v5105, %v5109
    %vm5111 = vweird.f32 %v4978
    %vm5112 = vweird.f32 %v5105
    %vm5113 = vmor %vm5111, %vm5112
    %v5114 = vsel %vm5113, %v5105, %v5110
    %v5115 = vrsqrt.pop %v4979
    %v5116 = vmul.f32 %v5115, %v4979
    %v5117 = vmul.f32 %v5116, %v5115
    %v5118 = vmul.f32 0.5, %v5117
    %v5119 = vsub.f32 1.5, %v5118
    %v5120 = vmul.f32 %v5115, %v5119
    %vm5121 = vweird.f32 %v4979
    %vm5122 = vweird.f32 %v5115
    %vm5123 = vmor %vm5121, %vm5122
    %v5124 = vsel %vm5123, %v5115, %v5120
    %v5125 = vrsqrt.pop %v4980
    %v5126 = vmul.f32 %v5125, %v4980
    %v5127 = vmul.f32 %v5126, %v5125
    %v5128 = vmul.f32 0.5, %v5127
    %v5129 = vsub.f32 1.5, %v5128
    %v5130 = vmul.f32 %v5125, %v5129
    %vm5131 = vweird.f32 %v4980
    %vm5132 = vweird.f32 %v5125
    %vm5133 = vmor %vm5131, %vm5132
    %v5134 = vsel %vm5133, %v5125, %v5130
    %v5135 = vrsqrt.pop %v4981
    %v5136 = vmul.f32 %v5135, %v4981
    %v5137 = vmul.f32 %v5136, %v5135
    %v5138 = vmul.f32 0.5, %v5137
    %v5139 = vsub.f32 1.5, %v5138
    %v5140 = vmul.f32 %v5135, %v5139
    %vm5141 = vweird.f32 %v4981
    %vm5142 = vweird.f32 %v5135
    %vm5143 = vmor %vm5141, %vm5142
    %v5144 = vsel %vm5143, %v5135, %v5140
    %v5145 = vrsqrt.pop %v4982
    %v5146 = vmul.f32 %v5145, %v4982
    %v5147 = vmul.f32 %v5146, %v5145
    %v5148 = vmul.f32 0.5, %v5147
    %v5149 = vsub.f32 1.5, %v5148
    %v5150 = vmul.f32 %v5145, %v5149
    %vm5151 = vweird.f32 %v4982
    %vm5152 = vweird.f32 %v5145
    %vm5153 = vmor %vm5151, %vm5152
    %v5154 = vsel %vm5153, %v5145, %v5150
    %v5155 = vrsqrt.pop %v4983
    %v5156 = vmul.f32 %v5155, %v4983
    %v5157 = vmul.f32 %v5156, %v5155
    %v5158 = vmul.f32 0.5, %v5157
    %v5159 = vsub.f32 1.5, %v5158
    %v5160 = vmul.f32 %v5155, %v5159
    %vm5161 = vweird.f32 %v4983
    %vm5162 = vweird.f32 %v5155
    %vm5163 = vmor %vm5161, %vm5162
    %v5164 = vsel %vm5163, %v5155, %v5160
    %v5165 = vrsqrt.pop %v4984
    %v5166 = vmul.f32 %v5165, %v4984
    %v5167 = vmul.f32 %v5166, %v5165
    %v5168 = vmul.f32 0.5, %v5167
    %v5169 = vsub.f32 1.5, %v5168
    %v5170 = vmul.f32 %v5165, %v5169
    %vm5171 = vweird.f32 %v4984
    %vm5172 = vweird.f32 %v5165
    %vm5173 = vmor %vm5171, %vm5172
    %v5174 = vsel %vm5173, %v5165, %v5170
    %v5175 = vrsqrt.pop %v4985
    %v5176 = vmul.f32 %v5175, %v4985
    %v5177 = vmul.f32 %v5176, %v5175
    %v5178 = vmul.f32 0.5, %v5177
    %v5179 = vsub.f32 1.5, %v5178
    %v5180 = vmul.f32 %v5175, %v5179
    %vm5181 = vweird.f32 %v4985
    %vm5182 = vweird.f32 %v5175
    %vm5183 = vmor %vm5181, %vm5182
    %v5184 = vsel %vm5183, %v5175, %v5180
    %v5185 = vrsqrt.pop %v4986
    %v5186 = vmul.f32 %v5185, %v4986
    %v5187 = vmul.f32 %v5186, %v5185
    %v5188 = vmul.f32 0.5, %v5187
    %v5189 = vsub.f32 1.5, %v5188
    %v5190 = vmul.f32 %v5185, %v5189
    %vm5191 = vweird.f32 %v4986
    %vm5192 = vweird.f32 %v5185
    %vm5193 = vmor %vm5191, %vm5192
    %v5194 = vsel %vm5193, %v5185, %v5190
    %v5195 = vrsqrt.pop %v4987
    %v5196 = vmul.f32 %v5195, %v4987
    %v5197 = vmul.f32 %v5196, %v5195
    %v5198 = vmul.f32 0.5, %v5197
    %v5199 = vsub.f32 1.5, %v5198
    %v5200 = vmul.f32 %v5195, %v5199
    %vm5201 = vweird.f32 %v4987
    %vm5202 = vweird.f32 %v5195
    %vm5203 = vmor %vm5201, %vm5202
    %v5204 = vsel %vm5203, %v5195, %v5200
    %v5205 = vrsqrt.pop %v4988
    %v5206 = vmul.f32 %v5205, %v4988
    %v5207 = vmul.f32 %v5206, %v5205
    %v5208 = vmul.f32 0.5, %v5207
    %v5209 = vsub.f32 1.5, %v5208
    %v5210 = vmul.f32 %v5205, %v5209
    %vm5211 = vweird.f32 %v4988
    %vm5212 = vweird.f32 %v5205
    %vm5213 = vmor %vm5211, %vm5212
    %v5214 = vsel %vm5213, %v5205, %v5210
    %v5215 = vrsqrt.pop %v4989
    %v5216 = vmul.f32 %v5215, %v4989
    %v5217 = vmul.f32 %v5216, %v5215
    %v5218 = vmul.f32 0.5, %v5217
    %v5219 = vsub.f32 1.5, %v5218
    %v5220 = vmul.f32 %v5215, %v5219
    %vm5221 = vweird.f32 %v4989
    %vm5222 = vweird.f32 %v5215
    %vm5223 = vmor %vm5221, %vm5222
    %v5224 = vsel %vm5223, %v5215, %v5220
    %v5225 = vrsqrt.pop %v4990
    %v5226 = vmul.f32 %v5225, %v4990
    %v5227 = vmul.f32 %v5226, %v5225
    %v5228 = vmul.f32 0.5, %v5227
    %v5229 = vsub.f32 1.5, %v5228
    %v5230 = vmul.f32 %v5225, %v5229
    %vm5231 = vweird.f32 %v4990
    %vm5232 = vweird.f32 %v5225
    %vm5233 = vmor %vm5231, %vm5232
    %v5234 = vsel %vm5233, %v5225, %v5230
    %v5235 = vrsqrt.pop %v4991
    %v5236 = vmul.f32 %v5235, %v4991
    %v5237 = vmul.f32 %v5236, %v5235
    %v5238 = vmul.f32 0.5, %v5237
    %v5239 = vsub.f32 1.5, %v5238
    %v5240 = vmul.f32 %v5235, %v5239
    %vm5241 = vweird.f32 %v4991
    %vm5242 = vweird.f32 %v5235
    %vm5243 = vmor %vm5241, %vm5242
    %v5244 = vsel %vm5243, %v5235, %v5240
    %v5245 = vrsqrt.pop %v4992
    %v5246 = vmul.f32 %v5245, %v4992
    %v5247 = vmul.f32 %v5246, %v5245
    %v5248 = vmul.f32 0.5, %v5247
    %v5249 = vsub.f32 1.5, %v5248
    %v5250 = vmul.f32 %v5245, %v5249
    %vm5251 = vweird.f32 %v4992
    %vm5252 = vweird.f32 %v5245
    %vm5253 = vmor %vm5251, %vm5252
    %v5254 = vsel %vm5253, %v5245, %v5250
    %v5255 = vrsqrt.pop %v4993
    %v5256 = vmul.f32 %v5255, %v4993
    %v5257 = vmul.f32 %v5256, %v5255
    %v5258 = vmul.f32 0.5, %v5257
    %v5259 = vsub.f32 1.5, %v5258
    %v5260 = vmul.f32 %v5255, %v5259
    %vm5261 = vweird.f32 %v4993
    %vm5262 = vweird.f32 %v5255
    %vm5263 = vmor %vm5261, %vm5262
    %v5264 = vsel %vm5263, %v5255, %v5260
    %v5265 = vrsqrt.pop %v4994
    %v5266 = vmul.f32 %v5265, %v4994
    %v5267 = vmul.f32 %v5266, %v5265
    %v5268 = vmul.f32 0.5, %v5267
    %v5269 = vsub.f32 1.5, %v5268
    %v5270 = vmul.f32 %v5265, %v5269
    %vm5271 = vweird.f32 %v4994
    %vm5272 = vweird.f32 %v5265
    %vm5273 = vmor %vm5271, %vm5272
    %v5274 = vsel %vm5273, %v5265, %v5270
    %v5275 = vrsqrt.pop %v4995
    %v5276 = vmul.f32 %v5275, %v4995
    %v5277 = vmul.f32 %v5276, %v5275
    %v5278 = vmul.f32 0.5, %v5277
    %v5279 = vsub.f32 1.5, %v5278
    %v5280 = vmul.f32 %v5275, %v5279
    %vm5281 = vweird.f32 %v4995
    %vm5282 = vweird.f32 %v5275
    %vm5283 = vmor %vm5281, %vm5282
    %v5284 = vsel %vm5283, %v5275, %v5280
    %v5285 = vrsqrt.pop %v4996
    %v5286 = vmul.f32 %v5285, %v4996
    %v5287 = vmul.f32 %v5286, %v5285
    %v5288 = vmul.f32 0.5, %v5287
    %v5289 = vsub.f32 1.5, %v5288
    %v5290 = vmul.f32 %v5285, %v5289
    %vm5291 = vweird.f32 %v4996
    %vm5292 = vweird.f32 %v5285
    %vm5293 = vmor %vm5291, %vm5292
    %v5294 = vsel %vm5293, %v5285, %v5290
    %v5295 = vrsqrt.pop %v4997
    %v5296 = vmul.f32 %v5295, %v4997
    %v5297 = vmul.f32 %v5296, %v5295
    %v5298 = vmul.f32 0.5, %v5297
    %v5299 = vsub.f32 1.5, %v5298
    %v5300 = vmul.f32 %v5295, %v5299
    %vm5301 = vweird.f32 %v4997
    %vm5302 = vweird.f32 %v5295
    %vm5303 = vmor %vm5301, %vm5302
    %v5304 = vsel %vm5303, %v5295, %v5300
    %v5305 = vrsqrt.pop %v4998
    %v5306 = vmul.f32 %v5305, %v4998
    %v5307 = vmul.f32 %v5306, %v5305
    %v5308 = vmul.f32 0.5, %v5307
    %v5309 = vsub.f32 1.5, %v5308
    %v5310 = vmul.f32 %v5305, %v5309
    %vm5311 = vweird.f32 %v4998
    %vm5312 = vweird.f32 %v5305
    %vm5313 = vmor %vm5311, %vm5312
    %v5314 = vsel %vm5313, %v5305, %v5310
    %v5315 = vrsqrt.pop %v4999
    %v5316 = vmul.f32 %v5315, %v4999
    %v5317 = vmul.f32 %v5316, %v5315
    %v5318 = vmul.f32 0.5, %v5317
    %v5319 = vsub.f32 1.5, %v5318
    %v5320 = vmul.f32 %v5315, %v5319
    %vm5321 = vweird.f32 %v4999
    %vm5322 = vweird.f32 %v5315
    %vm5323 = vmor %vm5321, %vm5322
    %v5324 = vsel %vm5323, %v5315, %v5320
    %v5325 = vrsqrt.pop %v5000
    %v5326 = vmul.f32 %v5325, %v5000
    %v5327 = vmul.f32 %v5326, %v5325
    %v5328 = vmul.f32 0.5, %v5327
    %v5329 = vsub.f32 1.5, %v5328
    %v5330 = vmul.f32 %v5325, %v5329
    %vm5331 = vweird.f32 %v5000
    %vm5332 = vweird.f32 %v5325
    %vm5333 = vmor %vm5331, %vm5332
    %v5334 = vsel %vm5333, %v5325, %v5330
    %v5335 = vrsqrt.pop %v5001
    %v5336 = vmul.f32 %v5335, %v5001
    %v5337 = vmul.f32 %v5336, %v5335
    %v5338 = vmul.f32 0.5, %v5337
    %v5339 = vsub.f32 1.5, %v5338
    %v5340 = vmul.f32 %v5335, %v5339
    %vm5341 = vweird.f32 %v5001
    %vm5342 = vweird.f32 %v5335
    %vm5343 = vmor %vm5341, %vm5342
    %v5344 = vsel %vm5343, %v5335, %v5340
    %v5345 = vrsqrt.pop %v5002
    %v5346 = vmul.f32 %v5345, %v5002
    %v5347 = vmul.f32 %v5346, %v5345
    %v5348 = vmul.f32 0.5, %v5347
    %v5349 = vsub.f32 1.5, %v5348
    %v5350 = vmul.f32 %v5345, %v5349
    %vm5351 = vweird.f32 %v5002
    %vm5352 = vweird.f32 %v5345
    %vm5353 = vmor %vm5351, %vm5352
    %v5354 = vsel %vm5353, %v5345, %v5350
    %v5355 = vrsqrt.pop %v5003
    %v5356 = vmul.f32 %v5355, %v5003
    %v5357 = vmul.f32 %v5356, %v5355
    %v5358 = vmul.f32 0.5, %v5357
    %v5359 = vsub.f32 1.5, %v5358
    %v5360 = vmul.f32 %v5355, %v5359
    %vm5361 = vweird.f32 %v5003
    %vm5362 = vweird.f32 %v5355
    %vm5363 = vmor %vm5361, %vm5362
    %v5364 = vsel %vm5363, %v5355, %v5360
    %v5365 = vrsqrt.pop %v5004
    %v5366 = vmul.f32 %v5365, %v5004
    %v5367 = vmul.f32 %v5366, %v5365
    %v5368 = vmul.f32 0.5, %v5367
    %v5369 = vsub.f32 1.5, %v5368
    %v5370 = vmul.f32 %v5365, %v5369
    %vm5371 = vweird.f32 %v5004
    %vm5372 = vweird.f32 %v5365
    %vm5373 = vmor %vm5371, %vm5372
    %v5374 = vsel %vm5373, %v5365, %v5370
    %v5375 = vrsqrt.pop %v5005
    %v5376 = vmul.f32 %v5375, %v5005
    %v5377 = vmul.f32 %v5376, %v5375
    %v5378 = vmul.f32 0.5, %v5377
    %v5379 = vsub.f32 1.5, %v5378
    %v5380 = vmul.f32 %v5375, %v5379
    %vm5381 = vweird.f32 %v5005
    %vm5382 = vweird.f32 %v5375
    %vm5383 = vmor %vm5381, %vm5382
    %v5384 = vsel %vm5383, %v5375, %v5380
    %v5385 = vrsqrt.pop %v5006
    %v5386 = vmul.f32 %v5385, %v5006
    %v5387 = vmul.f32 %v5386, %v5385
    %v5388 = vmul.f32 0.5, %v5387
    %v5389 = vsub.f32 1.5, %v5388
    %v5390 = vmul.f32 %v5385, %v5389
    %vm5391 = vweird.f32 %v5006
    %vm5392 = vweird.f32 %v5385
    %vm5393 = vmor %vm5391, %vm5392
    %v5394 = vsel %vm5393, %v5385, %v5390
    %v5395 = vrsqrt.pop %v5007
    %v5396 = vmul.f32 %v5395, %v5007
    %v5397 = vmul.f32 %v5396, %v5395
    %v5398 = vmul.f32 0.5, %v5397
    %v5399 = vsub.f32 1.5, %v5398
    %v5400 = vmul.f32 %v5395, %v5399
    %vm5401 = vweird.f32 %v5007
    %vm5402 = vweird.f32 %v5395
    %vm5403 = vmor %vm5401, %vm5402
    %v5404 = vsel %vm5403, %v5395, %v5400
    %v5405 = vrsqrt.pop %v5008
    %v5406 = vmul.f32 %v5405, %v5008
    %v5407 = vmul.f32 %v5406, %v5405
    %v5408 = vmul.f32 0.5, %v5407
    %v5409 = vsub.f32 1.5, %v5408
    %v5410 = vmul.f32 %v5405, %v5409
    %vm5411 = vweird.f32 %v5008
    %vm5412 = vweird.f32 %v5405
    %vm5413 = vmor %vm5411, %vm5412
    %v5414 = vsel %vm5413, %v5405, %v5410
    %v5415 = vrsqrt.pop %v5009
    %v5416 = vmul.f32 %v5415, %v5009
    %v5417 = vmul.f32 %v5416, %v5415
    %v5418 = vmul.f32 0.5, %v5417
    %v5419 = vsub.f32 1.5, %v5418
    %v5420 = vmul.f32 %v5415, %v5419
    %vm5421 = vweird.f32 %v5009
    %vm5422 = vweird.f32 %v5415
    %vm5423 = vmor %vm5421, %vm5422
    %v5424 = vsel %vm5423, %v5415, %v5420
    %v5425 = vrsqrt.pop %v5010
    %v5426 = vmul.f32 %v5425, %v5010
    %v5427 = vmul.f32 %v5426, %v5425
    %v5428 = vmul.f32 0.5, %v5427
    %v5429 = vsub.f32 1.5, %v5428
    %v5430 = vmul.f32 %v5425, %v5429
    %vm5431 = vweird.f32 %v5010
    %vm5432 = vweird.f32 %v5425
    %vm5433 = vmor %vm5431, %vm5432
    %v5434 = vsel %vm5433, %v5425, %v5430
    %v5435 = vrsqrt.pop %v5011
    %v5436 = vmul.f32 %v5435, %v5011
    %v5437 = vmul.f32 %v5436, %v5435
    %v5438 = vmul.f32 0.5, %v5437
    %v5439 = vsub.f32 1.5, %v5438
    %v5440 = vmul.f32 %v5435, %v5439
    %vm5441 = vweird.f32 %v5011
    %vm5442 = vweird.f32 %v5435
    %vm5443 = vmor %vm5441, %vm5442
    %v5444 = vsel %vm5443, %v5435, %v5440
    %v5445 = vrsqrt.pop %v5012
    %v5446 = vmul.f32 %v5445, %v5012
    %v5447 = vmul.f32 %v5446, %v5445
    %v5448 = vmul.f32 0.5, %v5447
    %v5449 = vsub.f32 1.5, %v5448
    %v5450 = vmul.f32 %v5445, %v5449
    %vm5451 = vweird.f32 %v5012
    %vm5452 = vweird.f32 %v5445
    %vm5453 = vmor %vm5451, %vm5452
    %v5454 = vsel %vm5453, %v5445, %v5450
    %v5455 = vrsqrt.pop %v5013
    %v5456 = vmul.f32 %v5455, %v5013
    %v5457 = vmul.f32 %v5456, %v5455
    %v5458 = vmul.f32 0.5, %v5457
    %v5459 = vsub.f32 1.5, %v5458
    %v5460 = vmul.f32 %v5455, %v5459
    %vm5461 = vweird.f32 %v5013
    %vm5462 = vweird.f32 %v5455
    %vm5463 = vmor %vm5461, %vm5462
    %v5464 = vsel %vm5463, %v5455, %v5460
    %v5465 = vrsqrt.pop %v5014
    %v5466 = vmul.f32 %v5465, %v5014
    %v5467 = vmul.f32 %v5466, %v5465
    %v5468 = vmul.f32 0.5, %v5467
    %v5469 = vsub.f32 1.5, %v5468
    %v5470 = vmul.f32 %v5465, %v5469
    %vm5471 = vweird.f32 %v5014
    %vm5472 = vweird.f32 %v5465
    %vm5473 = vmor %vm5471, %vm5472
    %v5474 = vsel %vm5473, %v5465, %v5470
    %v5475 = vrsqrt.pop %v5015
    %v5476 = vmul.f32 %v5475, %v5015
    %v5477 = vmul.f32 %v5476, %v5475
    %v5478 = vmul.f32 0.5, %v5477
    %v5479 = vsub.f32 1.5, %v5478
    %v5480 = vmul.f32 %v5475, %v5479
    %vm5481 = vweird.f32 %v5015
    %vm5482 = vweird.f32 %v5475
    %vm5483 = vmor %vm5481, %vm5482
    %v5484 = vsel %vm5483, %v5475, %v5480
    %v5485 = vrsqrt.pop %v5016
    %v5486 = vmul.f32 %v5485, %v5016
    %v5487 = vmul.f32 %v5486, %v5485
    %v5488 = vmul.f32 0.5, %v5487
    %v5489 = vsub.f32 1.5, %v5488
    %v5490 = vmul.f32 %v5485, %v5489
    %vm5491 = vweird.f32 %v5016
    %vm5492 = vweird.f32 %v5485
    %vm5493 = vmor %vm5491, %vm5492
    %v5494 = vsel %vm5493, %v5485, %v5490
    %v5495 = vrsqrt.pop %v5017
    %v5496 = vmul.f32 %v5495, %v5017
    %v5497 = vmul.f32 %v5496, %v5495
    %v5498 = vmul.f32 0.5, %v5497
    %v5499 = vsub.f32 1.5, %v5498
    %v5500 = vmul.f32 %v5495, %v5499
    %vm5501 = vweird.f32 %v5017
    %vm5502 = vweird.f32 %v5495
    %vm5503 = vmor %vm5501, %vm5502
    %v5504 = vsel %vm5503, %v5495, %v5500
    %v5505 = vrsqrt.pop %v5018
    %v5506 = vmul.f32 %v5505, %v5018
    %v5507 = vmul.f32 %v5506, %v5505
    %v5508 = vmul.f32 0.5, %v5507
    %v5509 = vsub.f32 1.5, %v5508
    %v5510 = vmul.f32 %v5505, %v5509
    %vm5511 = vweird.f32 %v5018
    %vm5512 = vweird.f32 %v5505
    %vm5513 = vmor %vm5511, %vm5512
    %v5514 = vsel %vm5513, %v5505, %v5510
    %v5515 = vrsqrt.pop %v5019
    %v5516 = vmul.f32 %v5515, %v5019
    %v5517 = vmul.f32 %v5516, %v5515
    %v5518 = vmul.f32 0.5, %v5517
    %v5519 = vsub.f32 1.5, %v5518
    %v5520 = vmul.f32 %v5515, %v5519
    %vm5521 = vweird.f32 %v5019
    %vm5522 = vweird.f32 %v5515
    %vm5523 = vmor %vm5521, %vm5522
    %v5524 = vsel %vm5523, %v5515, %v5520
    %v5525 = vrsqrt.pop %v5020
    %v5526 = vmul.f32 %v5525, %v5020
    %v5527 = vmul.f32 %v5526, %v5525
    %v5528 = vmul.f32 0.5, %v5527
    %v5529 = vsub.f32 1.5, %v5528
    %v5530 = vmul.f32 %v5525, %v5529
    %vm5531 = vweird.f32 %v5020
    %vm5532 = vweird.f32 %v5525
    %vm5533 = vmor %vm5531, %vm5532
    %v5534 = vsel %vm5533, %v5525, %v5530
    %v5535 = vrsqrt.pop %v5021
    %v5536 = vmul.f32 %v5535, %v5021
    %v5537 = vmul.f32 %v5536, %v5535
    %v5538 = vmul.f32 0.5, %v5537
    %v5539 = vsub.f32 1.5, %v5538
    %v5540 = vmul.f32 %v5535, %v5539
    %vm5541 = vweird.f32 %v5021
    %vm5542 = vweird.f32 %v5535
    %vm5543 = vmor %vm5541, %vm5542
    %v5544 = vsel %vm5543, %v5535, %v5540
    %v5545 = vrsqrt.pop %v5022
    %v5546 = vmul.f32 %v5545, %v5022
    %v5547 = vmul.f32 %v5546, %v5545
    %v5548 = vmul.f32 0.5, %v5547
    %v5549 = vsub.f32 1.5, %v5548
    %v5550 = vmul.f32 %v5545, %v5549
    %vm5551 = vweird.f32 %v5022
    %vm5552 = vweird.f32 %v5545
    %vm5553 = vmor %vm5551, %vm5552
    %v5554 = vsel %vm5553, %v5545, %v5550
    %v5555 = vrsqrt.pop %v5023
    %v5556 = vmul.f32 %v5555, %v5023
    %v5557 = vmul.f32 %v5556, %v5555
    %v5558 = vmul.f32 0.5, %v5557
    %v5559 = vsub.f32 1.5, %v5558
    %v5560 = vmul.f32 %v5555, %v5559
    %vm5561 = vweird.f32 %v5023
    %vm5562 = vweird.f32 %v5555
    %vm5563 = vmor %vm5561, %vm5562
    %v5564 = vsel %vm5563, %v5555, %v5560
    %v5565 = vrsqrt.pop %v5024
    %v5566 = vmul.f32 %v5565, %v5024
    %v5567 = vmul.f32 %v5566, %v5565
    %v5568 = vmul.f32 0.5, %v5567
    %v5569 = vsub.f32 1.5, %v5568
    %v5570 = vmul.f32 %v5565, %v5569
    %vm5571 = vweird.f32 %v5024
    %vm5572 = vweird.f32 %v5565
    %vm5573 = vmor %vm5571, %vm5572
    %v5574 = vsel %vm5573, %v5565, %v5570
    %v5575 = vrsqrt.pop %v5025
    %v5576 = vmul.f32 %v5575, %v5025
    %v5577 = vmul.f32 %v5576, %v5575
    %v5578 = vmul.f32 0.5, %v5577
    %v5579 = vsub.f32 1.5, %v5578
    %v5580 = vmul.f32 %v5575, %v5579
    %vm5581 = vweird.f32 %v5025
    %vm5582 = vweird.f32 %v5575
    %vm5583 = vmor %vm5581, %vm5582
    %v5584 = vsel %vm5583, %v5575, %v5580
    %v5585 = vrsqrt.pop %v5026
    %v5586 = vmul.f32 %v5585, %v5026
    %v5587 = vmul.f32 %v5586, %v5585
    %v5588 = vmul.f32 0.5, %v5587
    %v5589 = vsub.f32 1.5, %v5588
    %v5590 = vmul.f32 %v5585, %v5589
    %vm5591 = vweird.f32 %v5026
    %vm5592 = vweird.f32 %v5585
    %vm5593 = vmor %vm5591, %vm5592
    %v5594 = vsel %vm5593, %v5585, %v5590
    %v5595 = vrsqrt.pop %v5027
    %v5596 = vmul.f32 %v5595, %v5027
    %v5597 = vmul.f32 %v5596, %v5595
    %v5598 = vmul.f32 0.5, %v5597
    %v5599 = vsub.f32 1.5, %v5598
    %v5600 = vmul.f32 %v5595, %v5599
    %vm5601 = vweird.f32 %v5027
    %vm5602 = vweird.f32 %v5595
    %vm5603 = vmor %vm5601, %vm5602
    %v5604 = vsel %vm5603, %v5595, %v5600
    %v5605 = vrsqrt.pop %v5028
    %v5606 = vmul.f32 %v5605, %v5028
    %v5607 = vmul.f32 %v5606, %v5605
    %v5608 = vmul.f32 0.5, %v5607
    %v5609 = vsub.f32 1.5, %v5608
    %v5610 = vmul.f32 %v5605, %v5609
    %vm5611 = vweird.f32 %v5028
    %vm5612 = vweird.f32 %v5605
    %vm5613 = vmor %vm5611, %vm5612
    %v5614 = vsel %vm5613, %v5605, %v5610
    %v5615 = vrsqrt.pop %v5029
    %v5616 = vmul.f32 %v5615, %v5029
    %v5617 = vmul.f32 %v5616, %v5615
    %v5618 = vmul.f32 0.5, %v5617
    %v5619 = vsub.f32 1.5, %v5618
    %v5620 = vmul.f32 %v5615, %v5619
    %vm5621 = vweird.f32 %v5029
    %vm5622 = vweird.f32 %v5615
    %vm5623 = vmor %vm5621, %vm5622
    %v5624 = vsel %vm5623, %v5615, %v5620
    %v5625 = vrsqrt.pop %v5030
    %v5626 = vmul.f32 %v5625, %v5030
    %v5627 = vmul.f32 %v5626, %v5625
    %v5628 = vmul.f32 0.5, %v5627
    %v5629 = vsub.f32 1.5, %v5628
    %v5630 = vmul.f32 %v5625, %v5629
    %vm5631 = vweird.f32 %v5030
    %vm5632 = vweird.f32 %v5625
    %vm5633 = vmor %vm5631, %vm5632
    %v5634 = vsel %vm5633, %v5625, %v5630
    %v5635 = vrsqrt.pop %v5031
    %v5636 = vmul.f32 %v5635, %v5031
    %v5637 = vmul.f32 %v5636, %v5635
    %v5638 = vmul.f32 0.5, %v5637
    %v5639 = vsub.f32 1.5, %v5638
    %v5640 = vmul.f32 %v5635, %v5639
    %vm5641 = vweird.f32 %v5031
    %vm5642 = vweird.f32 %v5635
    %vm5643 = vmor %vm5641, %vm5642
    %v5644 = vsel %vm5643, %v5635, %v5640
    %v5645 = vrsqrt.pop %v5032
    %v5646 = vmul.f32 %v5645, %v5032
    %v5647 = vmul.f32 %v5646, %v5645
    %v5648 = vmul.f32 0.5, %v5647
    %v5649 = vsub.f32 1.5, %v5648
    %v5650 = vmul.f32 %v5645, %v5649
    %vm5651 = vweird.f32 %v5032
    %vm5652 = vweird.f32 %v5645
    %vm5653 = vmor %vm5651, %vm5652
    %v5654 = vsel %vm5653, %v5645, %v5650
    %v5655 = vrsqrt.pop %v5033
    %v5656 = vmul.f32 %v5655, %v5033
    %v5657 = vmul.f32 %v5656, %v5655
    %v5658 = vmul.f32 0.5, %v5657
    %v5659 = vsub.f32 1.5, %v5658
    %v5660 = vmul.f32 %v5655, %v5659
    %vm5661 = vweird.f32 %v5033
    %vm5662 = vweird.f32 %v5655
    %vm5663 = vmor %vm5661, %vm5662
    %v5664 = vsel %vm5663, %v5655, %v5660
    %v5665 = vrsqrt.pop %v5034
    %v5666 = vmul.f32 %v5665, %v5034
    %v5667 = vmul.f32 %v5666, %v5665
    %v5668 = vmul.f32 0.5, %v5667
    %v5669 = vsub.f32 1.5, %v5668
    %v5670 = vmul.f32 %v5665, %v5669
    %vm5671 = vweird.f32 %v5034
    %vm5672 = vweird.f32 %v5665
    %vm5673 = vmor %vm5671, %vm5672
    %v5674 = vsel %vm5673, %v5665, %v5670
    %v5675 = vsub.f32 %v4009, %v4331
    %v5676 = vsub.f32 %v4010, %v4331
    %v5677 = vsub.f32 %v4011, %v4332
    %v5678 = vsub.f32 %v4012, %v4332
    %v5679 = vsub.f32 %v4013, %v4333
    %v5680 = vsub.f32 %v4014, %v4333
    %v5681 = vsub.f32 %v4015, %v4334
    %v5682 = vsub.f32 %v4016, %v4334
    %v5683 = vsub.f32 %v4017, %v4335
    %v5684 = vsub.f32 %v4018, %v4335
    %v5685 = vsub.f32 %v4019, %v4336
    %v5686 = vsub.f32 %v4020, %v4336
    %v5687 = vsub.f32 %v4021, %v4337
    %v5688 = vsub.f32 %v4022, %v4337
    %v5689 = vsub.f32 %v4023, %v4338
    %v5690 = vsub.f32 %v4024, %v4338
    %v5691 = vsub.f32 %v4025, %v4339
    %v5692 = vsub.f32 %v4026, %v4339
    %v5693 = vsub.f32 %v4027, %v4340
    %v5694 = vsub.f32 %v4028, %v4340
    %v5695 = vsub.f32 %v4029, %v4341
    %v5696 = vsub.f32 %v4030, %v4341
    %v5697 = vsub.f32 %v4031, %v4342
    %v5698 = vsub.f32 %v4032, %v4342
    %v5699 = vsub.f32 %v4033, %v4343
    %v5700 = vsub.f32 %v4034, %v4343
    %v5701 = vsub.f32 %v4035, %v4344
    %v5702 = vsub.f32 %v4036, %v4344
    %v5703 = vsub.f32 %v4037, %v4345
    %v5704 = vsub.f32 %v4038, %v4345
    %v5705 = vsub.f32 %v4039, %v4346
    %v5706 = vsub.f32 %v4040, %v4346
    %v5707 = vsub.f32 %v4041, %v4347
    %v5708 = vsub.f32 %v4042, %v4347
    %v5709 = vsub.f32 %v4043, %v4348
    %v5710 = vsub.f32 %v4044, %v4348
    %v5711 = vsub.f32 %v4045, %v4349
    %v5712 = vsub.f32 %v4046, %v4349
    %v5713 = vsub.f32 %v4047, %v4350
    %v5714 = vsub.f32 %v4048, %v4350
    %v5715 = vsub.f32 %v4049, %v4351
    %v5716 = vsub.f32 %v4050, %v4351
    %v5717 = vsub.f32 %v4051, %v4352
    %v5718 = vsub.f32 %v4052, %v4352
    %v5719 = vsub.f32 %v4053, %v4353
    %v5720 = vsub.f32 %v4054, %v4353
    %v5721 = vsub.f32 %v4055, %v4354
    %v5722 = vsub.f32 %v4056, %v4354
    %v5723 = vsub.f32 %v4057, %v4355
    %v5724 = vsub.f32 %v4058, %v4355
    %v5725 = vsub.f32 %v4059, %v4356
    %v5726 = vsub.f32 %v4060, %v4356
    %v5727 = vsub.f32 %v4061, %v4357
    %v5728 = vsub.f32 %v4062, %v4357
    %v5729 = vsub.f32 %v4063, %v4358
    %v5730 = vsub.f32 %v4064, %v4358
    %v5731 = vsub.f32 %v4065, %v4359
    %v5732 = vsub.f32 %v4066, %v4359
    %v5733 = vsub.f32 %v4067, %v4360
    %v5734 = vsub.f32 %v4068, %v4360
    %v5735 = vsub.f32 %v4069, %v4361
    %v5736 = vsub.f32 %v4070, %v4361
    %v5737 = vsub.f32 %v4071, %v4362
    %v5738 = vsub.f32 %v4072, %v4362
    %v5739 = vsub.f32 %v4073, %v4363
    %v5740 = vsub.f32 %v4074, %v4363
    %v5741 = vsub.f32 %v4075, %v4364
    %v5742 = vsub.f32 %v4076, %v4364
    %v5743 = vsub.f32 %v4077, %v4365
    %v5744 = vsub.f32 %v4078, %v4365
    %v5745 = vsub.f32 %v4079, %v4366
    %v5746 = vsub.f32 %v4080, %v4366
    %v5747 = vsub.f32 %v4081, %v4367
    %v5748 = vsub.f32 %v4082, %v4367
    %v5749 = vsub.f32 %v4083, %v4368
    %v5750 = vsub.f32 %v4084, %v4368
    %v5751 = vsub.f32 %v4085, %v4369
    %v5752 = vsub.f32 %v4086, %v4369
    %v5753 = vsub.f32 %v4087, %v4370
    %v5754 = vsub.f32 %v4088, %v4370
    %v5755 = vsub.f32 %v4089, %v4371
    %v5756 = vsub.f32 %v4090, %v4371
    %v5757 = vsub.f32 %v4091, %v4372
    %v5758 = vsub.f32 %v4092, %v4372
    %v5759 = vsub.f32 %v4093, %v4373
    %v5760 = vsub.f32 %v4094, %v4373
    %v5761 = vsub.f32 %v4095, %v4374
    %v5762 = vsub.f32 %v4096, %v4374
    %v5763 = vsub.f32 %v4097, %v4375
    %v5764 = vsub.f32 %v4098, %v4375
    %v5765 = vsub.f32 %v4099, %v4376
    %v5766 = vsub.f32 %v4100, %v4376
    %v5767 = vsub.f32 %v4101, %v4377
    %v5768 = vsub.f32 %v4102, %v4377
    %v5769 = vsub.f32 %v4103, %v4378
    %v5770 = vsub.f32 %v4104, %v4378
    %v5771 = vsub.f32 %v4105, %v4379
    %v5772 = vsub.f32 %v4106, %v4379
    %v5773 = vsub.f32 %v4107, %v4380
    %v5774 = vsub.f32 %v4108, %v4380
    %v5775 = vsub.f32 %v4109, %v4381
    %v5776 = vsub.f32 %v4110, %v4381
    %v5777 = vsub.f32 %v4111, %v4382
    %v5778 = vsub.f32 %v4112, %v4382
    %v5779 = vsub.f32 %v4113, %v4383
    %v5780 = vsub.f32 %v4114, %v4383
    %v5781 = vsub.f32 %v4115, %v4384
    %v5782 = vsub.f32 %v4116, %v4384
    %v5783 = vsub.f32 %v4117, %v4385
    %v5784 = vsub.f32 %v4118, %v4385
    %v5785 = vsub.f32 %v4119, %v4386
    %v5786 = vsub.f32 %v4120, %v4386
    %v5787 = vsub.f32 %v4121, %v4387
    %v5788 = vsub.f32 %v4122, %v4387
    %v5789 = vsub.f32 %v4123, %v4388
    %v5790 = vsub.f32 %v4124, %v4388
    %v5791 = vsub.f32 %v4125, %v4389
    %v5792 = vsub.f32 %v4126, %v4389
    %v5793 = vsub.f32 %v4127, %v4390
    %v5794 = vsub.f32 %v4128, %v4390
    %v5795 = vsub.f32 %v4129, %v4391
    %v5796 = vsub.f32 %v4130, %v4391
    %v5797 = vsub.f32 %v4131, %v4392
    %v5798 = vsub.f32 %v4132, %v4392
    %v5799 = vsub.f32 %v4133, %v4393
    %v5800 = vsub.f32 %v4134, %v4393
    %v5801 = vsub.f32 %v4135, %v4394
    %v5802 = vsub.f32 %v4136, %v4394
    %v5803 = vmul.f32 %v5675, %v5044
    %v5804 = vmul.f32 %v5676, %v5044
    %v5805 = vmul.f32 %v5677, %v5054
    %v5806 = vmul.f32 %v5678, %v5054
    %v5807 = vmul.f32 %v5679, %v5064
    %v5808 = vmul.f32 %v5680, %v5064
    %v5809 = vmul.f32 %v5681, %v5074
    %v5810 = vmul.f32 %v5682, %v5074
    %v5811 = vmul.f32 %v5683, %v5084
    %v5812 = vmul.f32 %v5684, %v5084
    %v5813 = vmul.f32 %v5685, %v5094
    %v5814 = vmul.f32 %v5686, %v5094
    %v5815 = vmul.f32 %v5687, %v5104
    %v5816 = vmul.f32 %v5688, %v5104
    %v5817 = vmul.f32 %v5689, %v5114
    %v5818 = vmul.f32 %v5690, %v5114
    %v5819 = vmul.f32 %v5691, %v5124
    %v5820 = vmul.f32 %v5692, %v5124
    %v5821 = vmul.f32 %v5693, %v5134
    %v5822 = vmul.f32 %v5694, %v5134
    %v5823 = vmul.f32 %v5695, %v5144
    %v5824 = vmul.f32 %v5696, %v5144
    %v5825 = vmul.f32 %v5697, %v5154
    %v5826 = vmul.f32 %v5698, %v5154
    %v5827 = vmul.f32 %v5699, %v5164
    %v5828 = vmul.f32 %v5700, %v5164
    %v5829 = vmul.f32 %v5701, %v5174
    %v5830 = vmul.f32 %v5702, %v5174
    %v5831 = vmul.f32 %v5703, %v5184
    %v5832 = vmul.f32 %v5704, %v5184
    %v5833 = vmul.f32 %v5705, %v5194
    %v5834 = vmul.f32 %v5706, %v5194
    %v5835 = vmul.f32 %v5707, %v5204
    %v5836 = vmul.f32 %v5708, %v5204
    %v5837 = vmul.f32 %v5709, %v5214
    %v5838 = vmul.f32 %v5710, %v5214
    %v5839 = vmul.f32 %v5711, %v5224
    %v5840 = vmul.f32 %v5712, %v5224
    %v5841 = vmul.f32 %v5713, %v5234
    %v5842 = vmul.f32 %v5714, %v5234
    %v5843 = vmul.f32 %v5715, %v5244
    %v5844 = vmul.f32 %v5716, %v5244
    %v5845 = vmul.f32 %v5717, %v5254
    %v5846 = vmul.f32 %v5718, %v5254
    %v5847 = vmul.f32 %v5719, %v5264
    %v5848 = vmul.f32 %v5720, %v5264
    %v5849 = vmul.f32 %v5721, %v5274
    %v5850 = vmul.f32 %v5722, %v5274
    %v5851 = vmul.f32 %v5723, %v5284
    %v5852 = vmul.f32 %v5724, %v5284
    %v5853 = vmul.f32 %v5725, %v5294
    %v5854 = vmul.f32 %v5726, %v5294
    %v5855 = vmul.f32 %v5727, %v5304
    %v5856 = vmul.f32 %v5728, %v5304
    %v5857 = vmul.f32 %v5729, %v5314
    %v5858 = vmul.f32 %v5730, %v5314
    %v5859 = vmul.f32 %v5731, %v5324
    %v5860 = vmul.f32 %v5732, %v5324
    %v5861 = vmul.f32 %v5733, %v5334
    %v5862 = vmul.f32 %v5734, %v5334
    %v5863 = vmul.f32 %v5735, %v5344
    %v5864 = vmul.f32 %v5736, %v5344
    %v5865 = vmul.f32 %v5737, %v5354
    %v5866 = vmul.f32 %v5738, %v5354
    %v5867 = vmul.f32 %v5739, %v5364
    %v5868 = vmul.f32 %v5740, %v5364
    %v5869 = vmul.f32 %v5741, %v5374
    %v5870 = vmul.f32 %v5742, %v5374
    %v5871 = vmul.f32 %v5743, %v5384
    %v5872 = vmul.f32 %v5744, %v5384
    %v5873 = vmul.f32 %v5745, %v5394
    %v5874 = vmul.f32 %v5746, %v5394
    %v5875 = vmul.f32 %v5747, %v5404
    %v5876 = vmul.f32 %v5748, %v5404
    %v5877 = vmul.f32 %v5749, %v5414
    %v5878 = vmul.f32 %v5750, %v5414
    %v5879 = vmul.f32 %v5751, %v5424
    %v5880 = vmul.f32 %v5752, %v5424
    %v5881 = vmul.f32 %v5753, %v5434
    %v5882 = vmul.f32 %v5754, %v5434
    %v5883 = vmul.f32 %v5755, %v5444
    %v5884 = vmul.f32 %v5756, %v5444
    %v5885 = vmul.f32 %v5757, %v5454
    %v5886 = vmul.f32 %v5758, %v5454
    %v5887 = vmul.f32 %v5759, %v5464
    %v5888 = vmul.f32 %v5760, %v5464
    %v5889 = vmul.f32 %v5761, %v5474
    %v5890 = vmul.f32 %v5762, %v5474
    %v5891 = vmul.f32 %v5763, %v5484
    %v5892 = vmul.f32 %v5764, %v5484
    %v5893 = vmul.f32 %v5765, %v5494
    %v5894 = vmul.f32 %v5766, %v5494
    %v5895 = vmul.f32 %v5767, %v5504
    %v5896 = vmul.f32 %v5768, %v5504
    %v5897 = vmul.f32 %v5769, %v5514
    %v5898 = vmul.f32 %v5770, %v5514
    %v5899 = vmul.f32 %v5771, %v5524
    %v5900 = vmul.f32 %v5772, %v5524
    %v5901 = vmul.f32 %v5773, %v5534
    %v5902 = vmul.f32 %v5774, %v5534
    %v5903 = vmul.f32 %v5775, %v5544
    %v5904 = vmul.f32 %v5776, %v5544
    %v5905 = vmul.f32 %v5777, %v5554
    %v5906 = vmul.f32 %v5778, %v5554
    %v5907 = vmul.f32 %v5779, %v5564
    %v5908 = vmul.f32 %v5780, %v5564
    %v5909 = vmul.f32 %v5781, %v5574
    %v5910 = vmul.f32 %v5782, %v5574
    %v5911 = vmul.f32 %v5783, %v5584
    %v5912 = vmul.f32 %v5784, %v5584
    %v5913 = vmul.f32 %v5785, %v5594
    %v5914 = vmul.f32 %v5786, %v5594
    %v5915 = vmul.f32 %v5787, %v5604
    %v5916 = vmul.f32 %v5788, %v5604
    %v5917 = vmul.f32 %v5789, %v5614
    %v5918 = vmul.f32 %v5790, %v5614
    %v5919 = vmul.f32 %v5791, %v5624
    %v5920 = vmul.f32 %v5792, %v5624
    %v5921 = vmul.f32 %v5793, %v5634
    %v5922 = vmul.f32 %v5794, %v5634
    %v5923 = vmul.f32 %v5795, %v5644
    %v5924 = vmul.f32 %v5796, %v5644
    %v5925 = vmul.f32 %v5797, %v5654
    %v5926 = vmul.f32 %v5798, %v5654
    %v5927 = vmul.f32 %v5799, %v5664
    %v5928 = vmul.f32 %v5800, %v5664
    %v5929 = vmul.f32 %v5801, %v5674
    %v5930 = vmul.f32 %v5802, %v5674
    %v5932 = vperm.slane %v4137, 0
    %v5933 = vperm.slane %v4137, 1
    %v5936 = vmul.f32 %v5803, %v5932
    %v5937 = vmul.f32 %v5804, %v5933
    %v5938 = vmul.f32 %v5805, %v5932
    %v5939 = vmul.f32 %v5806, %v5933
    %v5940 = vmul.f32 %v5807, %v5932
    %v5941 = vmul.f32 %v5808, %v5933
    %v5942 = vmul.f32 %v5809, %v5932
    %v5943 = vmul.f32 %v5810, %v5933
    %v5944 = vmul.f32 %v5811, %v5932
    %v5945 = vmul.f32 %v5812, %v5933
    %v5946 = vmul.f32 %v5813, %v5932
    %v5947 = vmul.f32 %v5814, %v5933
    %v5948 = vmul.f32 %v5815, %v5932
    %v5949 = vmul.f32 %v5816, %v5933
    %v5950 = vmul.f32 %v5817, %v5932
    %v5951 = vmul.f32 %v5818, %v5933
    %v5952 = vmul.f32 %v5819, %v5932
    %v5953 = vmul.f32 %v5820, %v5933
    %v5954 = vmul.f32 %v5821, %v5932
    %v5955 = vmul.f32 %v5822, %v5933
    %v5956 = vmul.f32 %v5823, %v5932
    %v5957 = vmul.f32 %v5824, %v5933
    %v5958 = vmul.f32 %v5825, %v5932
    %v5959 = vmul.f32 %v5826, %v5933
    %v5960 = vmul.f32 %v5827, %v5932
    %v5961 = vmul.f32 %v5828, %v5933
    %v5962 = vmul.f32 %v5829, %v5932
    %v5963 = vmul.f32 %v5830, %v5933
    %v5964 = vmul.f32 %v5831, %v5932
    %v5965 = vmul.f32 %v5832, %v5933
    %v5966 = vmul.f32 %v5833, %v5932
    %v5967 = vmul.f32 %v5834, %v5933
    %v5968 = vmul.f32 %v5835, %v5932
    %v5969 = vmul.f32 %v5836, %v5933
    %v5970 = vmul.f32 %v5837, %v5932
    %v5971 = vmul.f32 %v5838, %v5933
    %v5972 = vmul.f32 %v5839, %v5932
    %v5973 = vmul.f32 %v5840, %v5933
    %v5974 = vmul.f32 %v5841, %v5932
    %v5975 = vmul.f32 %v5842, %v5933
    %v5976 = vmul.f32 %v5843, %v5932
    %v5977 = vmul.f32 %v5844, %v5933
    %v5978 = vmul.f32 %v5845, %v5932
    %v5979 = vmul.f32 %v5846, %v5933
    %v5980 = vmul.f32 %v5847, %v5932
    %v5981 = vmul.f32 %v5848, %v5933
    %v5982 = vmul.f32 %v5849, %v5932
    %v5983 = vmul.f32 %v5850, %v5933
    %v5984 = vmul.f32 %v5851, %v5932
    %v5985 = vmul.f32 %v5852, %v5933
    %v5986 = vmul.f32 %v5853, %v5932
    %v5987 = vmul.f32 %v5854, %v5933
    %v5988 = vmul.f32 %v5855, %v5932
    %v5989 = vmul.f32 %v5856, %v5933
    %v5990 = vmul.f32 %v5857, %v5932
    %v5991 = vmul.f32 %v5858, %v5933
    %v5992 = vmul.f32 %v5859, %v5932
    %v5993 = vmul.f32 %v5860, %v5933
    %v5994 = vmul.f32 %v5861, %v5932
    %v5995 = vmul.f32 %v5862, %v5933
    %v5996 = vmul.f32 %v5863, %v5932
    %v5997 = vmul.f32 %v5864, %v5933
    %v5998 = vmul.f32 %v5865, %v5932
    %v5999 = vmul.f32 %v5866, %v5933
    %v6000 = vmul.f32 %v5867, %v5932
    %v6001 = vmul.f32 %v5868, %v5933
    %v6002 = vmul.f32 %v5869, %v5932
    %v6003 = vmul.f32 %v5870, %v5933
    %v6004 = vmul.f32 %v5871, %v5932
    %v6005 = vmul.f32 %v5872, %v5933
    %v6006 = vmul.f32 %v5873, %v5932
    %v6007 = vmul.f32 %v5874, %v5933
    %v6008 = vmul.f32 %v5875, %v5932
    %v6009 = vmul.f32 %v5876, %v5933
    %v6010 = vmul.f32 %v5877, %v5932
    %v6011 = vmul.f32 %v5878, %v5933
    %v6012 = vmul.f32 %v5879, %v5932
    %v6013 = vmul.f32 %v5880, %v5933
    %v6014 = vmul.f32 %v5881, %v5932
    %v6015 = vmul.f32 %v5882, %v5933
    %v6016 = vmul.f32 %v5883, %v5932
    %v6017 = vmul.f32 %v5884, %v5933
    %v6018 = vmul.f32 %v5885, %v5932
    %v6019 = vmul.f32 %v5886, %v5933
    %v6020 = vmul.f32 %v5887, %v5932
    %v6021 = vmul.f32 %v5888, %v5933
    %v6022 = vmul.f32 %v5889, %v5932
    %v6023 = vmul.f32 %v5890, %v5933
    %v6024 = vmul.f32 %v5891, %v5932
    %v6025 = vmul.f32 %v5892, %v5933
    %v6026 = vmul.f32 %v5893, %v5932
    %v6027 = vmul.f32 %v5894, %v5933
    %v6028 = vmul.f32 %v5895, %v5932
    %v6029 = vmul.f32 %v5896, %v5933
    %v6030 = vmul.f32 %v5897, %v5932
    %v6031 = vmul.f32 %v5898, %v5933
    %v6032 = vmul.f32 %v5899, %v5932
    %v6033 = vmul.f32 %v5900, %v5933
    %v6034 = vmul.f32 %v5901, %v5932
    %v6035 = vmul.f32 %v5902, %v5933
    %v6036 = vmul.f32 %v5903, %v5932
    %v6037 = vmul.f32 %v5904, %v5933
    %v6038 = vmul.f32 %v5905, %v5932
    %v6039 = vmul.f32 %v5906, %v5933
    %v6040 = vmul.f32 %v5907, %v5932
    %v6041 = vmul.f32 %v5908, %v5933
    %v6042 = vmul.f32 %v5909, %v5932
    %v6043 = vmul.f32 %v5910, %v5933
    %v6044 = vmul.f32 %v5911, %v5932
    %v6045 = vmul.f32 %v5912, %v5933
    %v6046 = vmul.f32 %v5913, %v5932
    %v6047 = vmul.f32 %v5914, %v5933
    %v6048 = vmul.f32 %v5915, %v5932
    %v6049 = vmul.f32 %v5916, %v5933
    %v6050 = vmul.f32 %v5917, %v5932
    %v6051 = vmul.f32 %v5918, %v5933
    %v6052 = vmul.f32 %v5919, %v5932
    %v6053 = vmul.f32 %v5920, %v5933
    %v6054 = vmul.f32 %v5921, %v5932
    %v6055 = vmul.f32 %v5922, %v5933
    %v6056 = vmul.f32 %v5923, %v5932
    %v6057 = vmul.f32 %v5924, %v5933
    %v6058 = vmul.f32 %v5925, %v5932
    %v6059 = vmul.f32 %v5926, %v5933
    %v6060 = vmul.f32 %v5927, %v5932
    %v6061 = vmul.f32 %v5928, %v5933
    %v6062 = vmul.f32 %v5929, %v5932
    %v6063 = vmul.f32 %v5930, %v5933
    %v6065 = vperm.slane %v4138, 0
    %v6066 = vperm.slane %v4138, 1
    %v6069 = vadd.f32 %v5936, %v6065
    %v6070 = vadd.f32 %v5937, %v6066
    %v6071 = vadd.f32 %v5938, %v6065
    %v6072 = vadd.f32 %v5939, %v6066
    %v6073 = vadd.f32 %v5940, %v6065
    %v6074 = vadd.f32 %v5941, %v6066
    %v6075 = vadd.f32 %v5942, %v6065
    %v6076 = vadd.f32 %v5943, %v6066
    %v6077 = vadd.f32 %v5944, %v6065
    %v6078 = vadd.f32 %v5945, %v6066
    %v6079 = vadd.f32 %v5946, %v6065
    %v6080 = vadd.f32 %v5947, %v6066
    %v6081 = vadd.f32 %v5948, %v6065
    %v6082 = vadd.f32 %v5949, %v6066
    %v6083 = vadd.f32 %v5950, %v6065
    %v6084 = vadd.f32 %v5951, %v6066
    %v6085 = vadd.f32 %v5952, %v6065
    %v6086 = vadd.f32 %v5953, %v6066
    %v6087 = vadd.f32 %v5954, %v6065
    %v6088 = vadd.f32 %v5955, %v6066
    %v6089 = vadd.f32 %v5956, %v6065
    %v6090 = vadd.f32 %v5957, %v6066
    %v6091 = vadd.f32 %v5958, %v6065
    %v6092 = vadd.f32 %v5959, %v6066
    %v6093 = vadd.f32 %v5960, %v6065
    %v6094 = vadd.f32 %v5961, %v6066
    %v6095 = vadd.f32 %v5962, %v6065
    %v6096 = vadd.f32 %v5963, %v6066
    %v6097 = vadd.f32 %v5964, %v6065
    %v6098 = vadd.f32 %v5965, %v6066
    %v6099 = vadd.f32 %v5966, %v6065
    %v6100 = vadd.f32 %v5967, %v6066
    %v6101 = vadd.f32 %v5968, %v6065
    %v6102 = vadd.f32 %v5969, %v6066
    %v6103 = vadd.f32 %v5970, %v6065
    %v6104 = vadd.f32 %v5971, %v6066
    %v6105 = vadd.f32 %v5972, %v6065
    %v6106 = vadd.f32 %v5973, %v6066
    %v6107 = vadd.f32 %v5974, %v6065
    %v6108 = vadd.f32 %v5975, %v6066
    %v6109 = vadd.f32 %v5976, %v6065
    %v6110 = vadd.f32 %v5977, %v6066
    %v6111 = vadd.f32 %v5978, %v6065
    %v6112 = vadd.f32 %v5979, %v6066
    %v6113 = vadd.f32 %v5980, %v6065
    %v6114 = vadd.f32 %v5981, %v6066
    %v6115 = vadd.f32 %v5982, %v6065
    %v6116 = vadd.f32 %v5983, %v6066
    %v6117 = vadd.f32 %v5984, %v6065
    %v6118 = vadd.f32 %v5985, %v6066
    %v6119 = vadd.f32 %v5986, %v6065
    %v6120 = vadd.f32 %v5987, %v6066
    %v6121 = vadd.f32 %v5988, %v6065
    %v6122 = vadd.f32 %v5989, %v6066
    %v6123 = vadd.f32 %v5990, %v6065
    %v6124 = vadd.f32 %v5991, %v6066
    %v6125 = vadd.f32 %v5992, %v6065
    %v6126 = vadd.f32 %v5993, %v6066
    %v6127 = vadd.f32 %v5994, %v6065
    %v6128 = vadd.f32 %v5995, %v6066
    %v6129 = vadd.f32 %v5996, %v6065
    %v6130 = vadd.f32 %v5997, %v6066
    %v6131 = vadd.f32 %v5998, %v6065
    %v6132 = vadd.f32 %v5999, %v6066
    %v6133 = vadd.f32 %v6000, %v6065
    %v6134 = vadd.f32 %v6001, %v6066
    %v6135 = vadd.f32 %v6002, %v6065
    %v6136 = vadd.f32 %v6003, %v6066
    %v6137 = vadd.f32 %v6004, %v6065
    %v6138 = vadd.f32 %v6005, %v6066
    %v6139 = vadd.f32 %v6006, %v6065
    %v6140 = vadd.f32 %v6007, %v6066
    %v6141 = vadd.f32 %v6008, %v6065
    %v6142 = vadd.f32 %v6009, %v6066
    %v6143 = vadd.f32 %v6010, %v6065
    %v6144 = vadd.f32 %v6011, %v6066
    %v6145 = vadd.f32 %v6012, %v6065
    %v6146 = vadd.f32 %v6013, %v6066
    %v6147 = vadd.f32 %v6014, %v6065
    %v6148 = vadd.f32 %v6015, %v6066
    %v6149 = vadd.f32 %v6016, %v6065
    %v6150 = vadd.f32 %v6017, %v6066
    %v6151 = vadd.f32 %v6018, %v6065
    %v6152 = vadd.f32 %v6019, %v6066
    %v6153 = vadd.f32 %v6020, %v6065
    %v6154 = vadd.f32 %v6021, %v6066
    %v6155 = vadd.f32 %v6022, %v6065
    %v6156 = vadd.f32 %v6023, %v6066
    %v6157 = vadd.f32 %v6024, %v6065
    %v6158 = vadd.f32 %v6025, %v6066
    %v6159 = vadd.f32 %v6026, %v6065
    %v6160 = vadd.f32 %v6027, %v6066
    %v6161 = vadd.f32 %v6028, %v6065
    %v6162 = vadd.f32 %v6029, %v6066
    %v6163 = vadd.f32 %v6030, %v6065
    %v6164 = vadd.f32 %v6031, %v6066
    %v6165 = vadd.f32 %v6032, %v6065
    %v6166 = vadd.f32 %v6033, %v6066
    %v6167 = vadd.f32 %v6034, %v6065
    %v6168 = vadd.f32 %v6035, %v6066
    %v6169 = vadd.f32 %v6036, %v6065
    %v6170 = vadd.f32 %v6037, %v6066
    %v6171 = vadd.f32 %v6038, %v6065
    %v6172 = vadd.f32 %v6039, %v6066
    %v6173 = vadd.f32 %v6040, %v6065
    %v6174 = vadd.f32 %v6041, %v6066
    %v6175 = vadd.f32 %v6042, %v6065
    %v6176 = vadd.f32 %v6043, %v6066
    %v6177 = vadd.f32 %v6044, %v6065
    %v6178 = vadd.f32 %v6045, %v6066
    %v6179 = vadd.f32 %v6046, %v6065
    %v6180 = vadd.f32 %v6047, %v6066
    %v6181 = vadd.f32 %v6048, %v6065
    %v6182 = vadd.f32 %v6049, %v6066
    %v6183 = vadd.f32 %v6050, %v6065
    %v6184 = vadd.f32 %v6051, %v6066
    %v6185 = vadd.f32 %v6052, %v6065
    %v6186 = vadd.f32 %v6053, %v6066
    %v6187 = vadd.f32 %v6054, %v6065
    %v6188 = vadd.f32 %v6055, %v6066
    %v6189 = vadd.f32 %v6056, %v6065
    %v6190 = vadd.f32 %v6057, %v6066
    %v6191 = vadd.f32 %v6058, %v6065
    %v6192 = vadd.f32 %v6059, %v6066
    %v6193 = vadd.f32 %v6060, %v6065
    %v6194 = vadd.f32 %v6061, %v6066
    %v6195 = vadd.f32 %v6062, %v6065
    %v6196 = vadd.f32 %v6063, %v6066
    %v6197 = vpack.c.bf16 %v6071, %v6069
    %v6198 = vpack.c.bf16 %v6072, %v6070
    %v6199 = vpack.c.bf16 %v6075, %v6073
    %v6200 = vpack.c.bf16 %v6076, %v6074
    %v6201 = vpack.c.bf16 %v6079, %v6077
    %v6202 = vpack.c.bf16 %v6080, %v6078
    %v6203 = vpack.c.bf16 %v6083, %v6081
    %v6204 = vpack.c.bf16 %v6084, %v6082
    %v6205 = vpack.c.bf16 %v6087, %v6085
    %v6206 = vpack.c.bf16 %v6088, %v6086
    %v6207 = vpack.c.bf16 %v6091, %v6089
    %v6208 = vpack.c.bf16 %v6092, %v6090
    %v6209 = vpack.c.bf16 %v6095, %v6093
    %v6210 = vpack.c.bf16 %v6096, %v6094
    %v6211 = vpack.c.bf16 %v6099, %v6097
    %v6212 = vpack.c.bf16 %v6100, %v6098
    %v6213 = vpack.c.bf16 %v6103, %v6101
    %v6214 = vpack.c.bf16 %v6104, %v6102
    %v6215 = vpack.c.bf16 %v6107, %v6105
    %v6216 = vpack.c.bf16 %v6108, %v6106
    %v6217 = vpack.c.bf16 %v6111, %v6109
    %v6218 = vpack.c.bf16 %v6112, %v6110
    %v6219 = vpack.c.bf16 %v6115, %v6113
    %v6220 = vpack.c.bf16 %v6116, %v6114
    %v6221 = vpack.c.bf16 %v6119, %v6117
    %v6222 = vpack.c.bf16 %v6120, %v6118
    %v6223 = vpack.c.bf16 %v6123, %v6121
    %v6224 = vpack.c.bf16 %v6124, %v6122
    %v6225 = vpack.c.bf16 %v6127, %v6125
    %v6226 = vpack.c.bf16 %v6128, %v6126
    %v6227 = vpack.c.bf16 %v6131, %v6129
    %v6228 = vpack.c.bf16 %v6132, %v6130
    %v6229 = vpack.c.bf16 %v6135, %v6133
    %v6230 = vpack.c.bf16 %v6136, %v6134
    %v6231 = vpack.c.bf16 %v6139, %v6137
    %v6232 = vpack.c.bf16 %v6140, %v6138
    %v6233 = vpack.c.bf16 %v6143, %v6141
    %v6234 = vpack.c.bf16 %v6144, %v6142
    %v6235 = vpack.c.bf16 %v6147, %v6145
    %v6236 = vpack.c.bf16 %v6148, %v6146
    %v6237 = vpack.c.bf16 %v6151, %v6149
    %v6238 = vpack.c.bf16 %v6152, %v6150
    %v6239 = vpack.c.bf16 %v6155, %v6153
    %v6240 = vpack.c.bf16 %v6156, %v6154
    %v6241 = vpack.c.bf16 %v6159, %v6157
    %v6242 = vpack.c.bf16 %v6160, %v6158
    %v6243 = vpack.c.bf16 %v6163, %v6161
    %v6244 = vpack.c.bf16 %v6164, %v6162
    %v6245 = vpack.c.bf16 %v6167, %v6165
    %v6246 = vpack.c.bf16 %v6168, %v6166
    %v6247 = vpack.c.bf16 %v6171, %v6169
    %v6248 = vpack.c.bf16 %v6172, %v6170
    %v6249 = vpack.c.bf16 %v6175, %v6173
    %v6250 = vpack.c.bf16 %v6176, %v6174
    %v6251 = vpack.c.bf16 %v6179, %v6177
    %v6252 = vpack.c.bf16 %v6180, %v6178
    %v6253 = vpack.c.bf16 %v6183, %v6181
    %v6254 = vpack.c.bf16 %v6184, %v6182
    %v6255 = vpack.c.bf16 %v6187, %v6185
    %v6256 = vpack.c.bf16 %v6188, %v6186
    %v6257 = vpack.c.bf16 %v6191, %v6189
    %v6258 = vpack.c.bf16 %v6192, %v6190
    %v6259 = vpack.c.bf16 %v6195, %v6193
    %v6260 = vpack.c.bf16 %v6196, %v6194
    %v6261 = vld [vmem:[#allocation8] sm:$0xf]
    %v6262 = vld [vmem:[#allocation8 + $0x4] sm:$0xf]
    %v6263 = vld [vmem:[#allocation8 + $0x8] sm:$0xf]
    %v6264 = vld [vmem:[#allocation8 + $0xc] sm:$0xf]
    %v6265 = vld [vmem:[#allocation8 + $0x10] sm:$0xf]
    %v6266 = vld [vmem:[#allocation8 + $0x14] sm:$0xf]
    %v6267 = vld [vmem:[#allocation8 + $0x18] sm:$0xf]
    %v6268 = vld [vmem:[#allocation8 + $0x1c] sm:$0xf]
    %v6269 = vld [vmem:[#allocation8 + $0x20] sm:$0xf]
    %v6270 = vld [vmem:[#allocation8 + $0x24] sm:$0xf]
    %v6271 = vld [vmem:[#allocation8 + $0x28] sm:$0xf]
    %v6272 = vld [vmem:[#allocation8 + $0x2c] sm:$0xf]
    %v6273 = vld [vmem:[#allocation8 + $0x30] sm:$0xf]
    %v6274 = vld [vmem:[#allocation8 + $0x34] sm:$0xf]
    %v6275 = vld [vmem:[#allocation8 + $0x38] sm:$0xf]
    %v6276 = vld [vmem:[#allocation8 + $0x3c] sm:$0xf]
    %v6277 = vld [vmem:[#allocation8 + $0x40] sm:$0xf]
    %v6278 = vld [vmem:[#allocation8 + $0x44] sm:$0xf]
    %v6279 = vld [vmem:[#allocation8 + $0x48] sm:$0xf]
    %v6280 = vld [vmem:[#allocation8 + $0x4c] sm:$0xf]
    %v6281 = vld [vmem:[#allocation8 + $0x50] sm:$0xf]
    %v6282 = vld [vmem:[#allocation8 + $0x54] sm:$0xf]
    %v6283 = vld [vmem:[#allocation8 + $0x58] sm:$0xf]
    %v6284 = vld [vmem:[#allocation8 + $0x5c] sm:$0xf]
    %v6285 = vld [vmem:[#allocation8 + $0x60] sm:$0xf]
    %v6286 = vld [vmem:[#allocation8 + $0x64] sm:$0xf]
    %v6287 = vld [vmem:[#allocation8 + $0x68] sm:$0xf]
    %v6288 = vld [vmem:[#allocation8 + $0x6c] sm:$0xf]
    %v6289 = vld [vmem:[#allocation8 + $0x70] sm:$0xf]
    %v6290 = vld [vmem:[#allocation8 + $0x74] sm:$0xf]
    %v6291 = vld [vmem:[#allocation8 + $0x78] sm:$0xf]
    %v6292 = vld [vmem:[#allocation8 + $0x7c] sm:$0xf]
    %v6293 = vld [vmem:[#allocation11 + $0xc] sm:$0x1]
    %v6295 = vperm.slane %v6293, 0
    %v6329 = vunpack.c.l.b16 %v6261
    %v6330 = vunpack.c.l.b16 %v6262
    %v6331 = vunpack.c.l.b16 %v6263
    %v6332 = vunpack.c.l.b16 %v6264
    %v6333 = vunpack.c.l.b16 %v6265
    %v6334 = vunpack.c.l.b16 %v6266
    %v6335 = vunpack.c.l.b16 %v6267
    %v6336 = vunpack.c.l.b16 %v6268
    %v6337 = vunpack.c.l.b16 %v6269
    %v6338 = vunpack.c.l.b16 %v6270
    %v6339 = vunpack.c.l.b16 %v6271
    %v6340 = vunpack.c.l.b16 %v6272
    %v6341 = vunpack.c.l.b16 %v6273
    %v6342 = vunpack.c.l.b16 %v6274
    %v6343 = vunpack.c.l.b16 %v6275
    %v6344 = vunpack.c.l.b16 %v6276
    %v6345 = vunpack.c.l.b16 %v6277
    %v6346 = vunpack.c.l.b16 %v6278
    %v6347 = vunpack.c.l.b16 %v6279
    %v6348 = vunpack.c.l.b16 %v6280
    %v6349 = vunpack.c.l.b16 %v6281
    %v6350 = vunpack.c.l.b16 %v6282
    %v6351 = vunpack.c.l.b16 %v6283
    %v6352 = vunpack.c.l.b16 %v6284
    %v6353 = vunpack.c.l.b16 %v6285
    %v6354 = vunpack.c.l.b16 %v6286
    %v6355 = vunpack.c.l.b16 %v6287
    %v6356 = vunpack.c.l.b16 %v6288
    %v6357 = vunpack.c.l.b16 %v6289
    %v6358 = vunpack.c.l.b16 %v6290
    %v6359 = vunpack.c.l.b16 %v6291
    %v6360 = vunpack.c.l.b16 %v6292
    %v6361 = vpack.c.b16 %v6330, %v6329
    %v6362 = vpack.c.b16 %v6332, %v6331
    %v6363 = vpack.c.b16 %v6334, %v6333
    %v6364 = vpack.c.b16 %v6336, %v6335
    %v6365 = vpack.c.b16 %v6338, %v6337
    %v6366 = vpack.c.b16 %v6340, %v6339
    %v6367 = vpack.c.b16 %v6342, %v6341
    %v6368 = vpack.c.b16 %v6344, %v6343
    %v6369 = vpack.c.b16 %v6346, %v6345
    %v6370 = vpack.c.b16 %v6348, %v6347
    %v6371 = vpack.c.b16 %v6350, %v6349
    %v6372 = vpack.c.b16 %v6352, %v6351
    %v6373 = vpack.c.b16 %v6354, %v6353
    %v6374 = vpack.c.b16 %v6356, %v6355
    %v6375 = vpack.c.b16 %v6358, %v6357
    %v6376 = vpack.c.b16 %v6360, %v6359
    %6393 = vmatpush.bf16.msra.mxu0 %v6368
    %6394 = vmatpush.bf16.msra.mxu0 %v6367
    %6395 = vmatpush.bf16.msra.mxu0 %v6366
    %6396 = vmatpush.bf16.msra.mxu0 %v6365
    %6397 = vmatpush.bf16.msra.mxu0 %v6364
    %6398 = vmatpush.bf16.msra.mxu0 %v6363
    %6399 = vmatpush.bf16.msra.mxu0 %v6362
    %6400 = vmatpush.bf16.msra.mxu0 %v6361
    %6401 = vmatmul.bf16.gmra.mxu0 %v6197
    %v6402 = vpop.f32.mrf.mxu0
    %v6403 = vadd.f32 %v6295, %v6402
    %v6404 = vpop.f32.mrf.mxu0
    %v6405 = vadd.f32 %v6295, %v6404
    %6406 = vmatmul.bf16.gmra.mxu0 %v6199
    %v6407 = vpop.f32.mrf.mxu0
    %v6408 = vadd.f32 %v6295, %v6407
    %v6409 = vpop.f32.mrf.mxu0
    %v6410 = vadd.f32 %v6295, %v6409
    %6411 = vmatmul.bf16.gmra.mxu0 %v6201
    %v6412 = vpop.f32.mrf.mxu0
    %v6413 = vadd.f32 %v6295, %v6412
    %v6414 = vpop.f32.mrf.mxu0
    %v6415 = vadd.f32 %v6295, %v6414
    %6416 = vmatmul.bf16.gmra.mxu0 %v6203
    %v6417 = vpop.f32.mrf.mxu0
    %v6418 = vadd.f32 %v6295, %v6417
    %v6419 = vpop.f32.mrf.mxu0
    %v6420 = vadd.f32 %v6295, %v6419
    %6421 = vmatmul.bf16.gmra.mxu0 %v6205
    %v6422 = vpop.f32.mrf.mxu0
    %v6423 = vadd.f32 %v6295, %v6422
    %v6424 = vpop.f32.mrf.mxu0
    %v6425 = vadd.f32 %v6295, %v6424
    %6426 = vmatmul.bf16.gmra.mxu0 %v6207
    %v6427 = vpop.f32.mrf.mxu0
    %v6428 = vadd.f32 %v6295, %v6427
    %v6429 = vpop.f32.mrf.mxu0
    %v6430 = vadd.f32 %v6295, %v6429
    %6431 = vmatmul.bf16.gmra.mxu0 %v6209
    %v6432 = vpop.f32.mrf.mxu0
    %v6433 = vadd.f32 %v6295, %v6432
    %v6434 = vpop.f32.mrf.mxu0
    %v6435 = vadd.f32 %v6295, %v6434
    %6436 = vmatmul.bf16.gmra.mxu0 %v6211
    %v6437 = vpop.f32.mrf.mxu0
    %v6438 = vadd.f32 %v6295, %v6437
    %v6439 = vpop.f32.mrf.mxu0
    %v6440 = vadd.f32 %v6295, %v6439
    %6441 = vmatmul.bf16.gmra.mxu0 %v6213
    %v6442 = vpop.f32.mrf.mxu0
    %v6443 = vadd.f32 %v6295, %v6442
    %v6444 = vpop.f32.mrf.mxu0
    %v6445 = vadd.f32 %v6295, %v6444
    %6446 = vmatmul.bf16.gmra.mxu0 %v6215
    %v6447 = vpop.f32.mrf.mxu0
    %v6448 = vadd.f32 %v6295, %v6447
    %v6449 = vpop.f32.mrf.mxu0
    %v6450 = vadd.f32 %v6295, %v6449
    %6451 = vmatmul.bf16.gmra.mxu0 %v6217
    %v6452 = vpop.f32.mrf.mxu0
    %v6453 = vadd.f32 %v6295, %v6452
    %v6454 = vpop.f32.mrf.mxu0
    %v6455 = vadd.f32 %v6295, %v6454
    %6456 = vmatmul.bf16.gmra.mxu0 %v6219
    %v6457 = vpop.f32.mrf.mxu0
    %v6458 = vadd.f32 %v6295, %v6457
    %v6459 = vpop.f32.mrf.mxu0
    %v6460 = vadd.f32 %v6295, %v6459
    %6461 = vmatmul.bf16.gmra.mxu0 %v6221
    %v6462 = vpop.f32.mrf.mxu0
    %v6463 = vadd.f32 %v6295, %v6462
    %v6464 = vpop.f32.mrf.mxu0
    %v6465 = vadd.f32 %v6295, %v6464
    %6466 = vmatmul.bf16.gmra.mxu0 %v6223
    %v6467 = vpop.f32.mrf.mxu0
    %v6468 = vadd.f32 %v6295, %v6467
    %v6469 = vpop.f32.mrf.mxu0
    %v6470 = vadd.f32 %v6295, %v6469
    %6471 = vmatmul.bf16.gmra.mxu0 %v6225
    %v6472 = vpop.f32.mrf.mxu0
    %v6473 = vadd.f32 %v6295, %v6472
    %v6474 = vpop.f32.mrf.mxu0
    %v6475 = vadd.f32 %v6295, %v6474
    %6476 = vmatmul.bf16.gmra.mxu0 %v6227
    %v6477 = vpop.f32.mrf.mxu0
    %v6478 = vadd.f32 %v6295, %v6477
    %v6479 = vpop.f32.mrf.mxu0
    %v6480 = vadd.f32 %v6295, %v6479
    %6481 = vmatmul.bf16.gmra.mxu0 %v6229
    %v6482 = vpop.f32.mrf.mxu0
    %v6483 = vadd.f32 %v6295, %v6482
    %v6484 = vpop.f32.mrf.mxu0
    %v6485 = vadd.f32 %v6295, %v6484
    %6486 = vmatmul.bf16.gmra.mxu0 %v6231
    %v6487 = vpop.f32.mrf.mxu0
    %v6488 = vadd.f32 %v6295, %v6487
    %v6489 = vpop.f32.mrf.mxu0
    %v6490 = vadd.f32 %v6295, %v6489
    %6491 = vmatmul.bf16.gmra.mxu0 %v6233
    %v6492 = vpop.f32.mrf.mxu0
    %v6493 = vadd.f32 %v6295, %v6492
    %v6494 = vpop.f32.mrf.mxu0
    %v6495 = vadd.f32 %v6295, %v6494
    %6496 = vmatmul.bf16.gmra.mxu0 %v6235
    %v6497 = vpop.f32.mrf.mxu0
    %v6498 = vadd.f32 %v6295, %v6497
    %v6499 = vpop.f32.mrf.mxu0
    %v6500 = vadd.f32 %v6295, %v6499
    %6501 = vmatmul.bf16.gmra.mxu0 %v6237
    %v6502 = vpop.f32.mrf.mxu0
    %v6503 = vadd.f32 %v6295, %v6502
    %v6504 = vpop.f32.mrf.mxu0
    %v6505 = vadd.f32 %v6295, %v6504
    %6506 = vmatmul.bf16.gmra.mxu0 %v6239
    %v6507 = vpop.f32.mrf.mxu0
    %v6508 = vadd.f32 %v6295, %v6507
    %v6509 = vpop.f32.mrf.mxu0
    %v6510 = vadd.f32 %v6295, %v6509
    %6511 = vmatmul.bf16.gmra.mxu0 %v6241
    %v6512 = vpop.f32.mrf.mxu0
    %v6513 = vadd.f32 %v6295, %v6512
    %v6514 = vpop.f32.mrf.mxu0
    %v6515 = vadd.f32 %v6295, %v6514
    %6516 = vmatmul.bf16.gmra.mxu0 %v6243
    %v6517 = vpop.f32.mrf.mxu0
    %v6518 = vadd.f32 %v6295, %v6517
    %v6519 = vpop.f32.mrf.mxu0
    %v6520 = vadd.f32 %v6295, %v6519
    %6521 = vmatmul.bf16.gmra.mxu0 %v6245
    %v6522 = vpop.f32.mrf.mxu0
    %v6523 = vadd.f32 %v6295, %v6522
    %v6524 = vpop.f32.mrf.mxu0
    %v6525 = vadd.f32 %v6295, %v6524
    %6526 = vmatmul.bf16.gmra.mxu0 %v6247
    %v6527 = vpop.f32.mrf.mxu0
    %v6528 = vadd.f32 %v6295, %v6527
    %v6529 = vpop.f32.mrf.mxu0
    %v6530 = vadd.f32 %v6295, %v6529
    %6531 = vmatmul.bf16.gmra.mxu0 %v6249
    %v6532 = vpop.f32.mrf.mxu0
    %v6533 = vadd.f32 %v6295, %v6532
    %v6534 = vpop.f32.mrf.mxu0
    %v6535 = vadd.f32 %v6295, %v6534
    %6536 = vmatmul.bf16.gmra.mxu0 %v6251
    %v6537 = vpop.f32.mrf.mxu0
    %v6538 = vadd.f32 %v6295, %v6537
    %v6539 = vpop.f32.mrf.mxu0
    %v6540 = vadd.f32 %v6295, %v6539
    %6541 = vmatmul.bf16.gmra.mxu0 %v6253
    %v6542 = vpop.f32.mrf.mxu0
    %v6543 = vadd.f32 %v6295, %v6542
    %v6544 = vpop.f32.mrf.mxu0
    %v6545 = vadd.f32 %v6295, %v6544
    %6546 = vmatmul.bf16.gmra.mxu0 %v6255
    %v6547 = vpop.f32.mrf.mxu0
    %v6548 = vadd.f32 %v6295, %v6547
    %v6549 = vpop.f32.mrf.mxu0
    %v6550 = vadd.f32 %v6295, %v6549
    %6551 = vmatmul.bf16.gmra.mxu0 %v6257
    %v6552 = vpop.f32.mrf.mxu0
    %v6553 = vadd.f32 %v6295, %v6552
    %v6554 = vpop.f32.mrf.mxu0
    %v6555 = vadd.f32 %v6295, %v6554
    %6556 = vmatmul.bf16.gmra.mxu0 %v6259
    %v6557 = vpop.f32.mrf.mxu0
    %v6558 = vadd.f32 %v6295, %v6557
    %v6559 = vpop.f32.mrf.mxu0
    %v6560 = vadd.f32 %v6295, %v6559
    %6561 = vdwg.mxu0
    %6562 = vmatpush.bf16.msra.mxu0 %v6376
    %6563 = vmatpush.bf16.msra.mxu0 %v6375
    %6564 = vmatpush.bf16.msra.mxu0 %v6374
    %6565 = vmatpush.bf16.msra.mxu0 %v6373
    %6566 = vmatpush.bf16.msra.mxu0 %v6372
    %6567 = vmatpush.bf16.msra.mxu0 %v6371
    %6568 = vmatpush.bf16.msra.mxu0 %v6370
    %6569 = vmatpush.bf16.msra.mxu0 %v6369
    %6570 = vmatmul.bf16.gmra.mxu0 %v6198
    %v6571 = vpop.f32.mrf.mxu0
    %v6572 = vadd.f32 %v6403, %v6571
    %v6573 = vpop.f32.mrf.mxu0
    %v6574 = vadd.f32 %v6405, %v6573
    %6575 = vmatmul.bf16.gmra.mxu0 %v6200
    %v6576 = vpop.f32.mrf.mxu0
    %v6577 = vadd.f32 %v6408, %v6576
    %v6578 = vpop.f32.mrf.mxu0
    %v6579 = vadd.f32 %v6410, %v6578
    %6580 = vmatmul.bf16.gmra.mxu0 %v6202
    %v6581 = vpop.f32.mrf.mxu0
    %v6582 = vadd.f32 %v6413, %v6581
    %v6583 = vpop.f32.mrf.mxu0
    %v6584 = vadd.f32 %v6415, %v6583
    %6585 = vmatmul.bf16.gmra.mxu0 %v6204
    %v6586 = vpop.f32.mrf.mxu0
    %v6587 = vadd.f32 %v6418, %v6586
    %v6588 = vpop.f32.mrf.mxu0
    %v6589 = vadd.f32 %v6420, %v6588
    %6590 = vmatmul.bf16.gmra.mxu0 %v6206
    %v6591 = vpop.f32.mrf.mxu0
    %v6592 = vadd.f32 %v6423, %v6591
    %v6593 = vpop.f32.mrf.mxu0
    %v6594 = vadd.f32 %v6425, %v6593
    %6595 = vmatmul.bf16.gmra.mxu0 %v6208
    %v6596 = vpop.f32.mrf.mxu0
    %v6597 = vadd.f32 %v6428, %v6596
    %v6598 = vpop.f32.mrf.mxu0
    %v6599 = vadd.f32 %v6430, %v6598
    %6600 = vmatmul.bf16.gmra.mxu0 %v6210
    %v6601 = vpop.f32.mrf.mxu0
    %v6602 = vadd.f32 %v6433, %v6601
    %v6603 = vpop.f32.mrf.mxu0
    %v6604 = vadd.f32 %v6435, %v6603
    %6605 = vmatmul.bf16.gmra.mxu0 %v6212
    %v6606 = vpop.f32.mrf.mxu0
    %v6607 = vadd.f32 %v6438, %v6606
    %v6608 = vpop.f32.mrf.mxu0
    %v6609 = vadd.f32 %v6440, %v6608
    %6610 = vmatmul.bf16.gmra.mxu0 %v6214
    %v6611 = vpop.f32.mrf.mxu0
    %v6612 = vadd.f32 %v6443, %v6611
    %v6613 = vpop.f32.mrf.mxu0
    %v6614 = vadd.f32 %v6445, %v6613
    %6615 = vmatmul.bf16.gmra.mxu0 %v6216
    %v6616 = vpop.f32.mrf.mxu0
    %v6617 = vadd.f32 %v6448, %v6616
    %v6618 = vpop.f32.mrf.mxu0
    %v6619 = vadd.f32 %v6450, %v6618
    %6620 = vmatmul.bf16.gmra.mxu0 %v6218
    %v6621 = vpop.f32.mrf.mxu0
    %v6622 = vadd.f32 %v6453, %v6621
    %v6623 = vpop.f32.mrf.mxu0
    %v6624 = vadd.f32 %v6455, %v6623
    %6625 = vmatmul.bf16.gmra.mxu0 %v6220
    %v6626 = vpop.f32.mrf.mxu0
    %v6627 = vadd.f32 %v6458, %v6626
    %v6628 = vpop.f32.mrf.mxu0
    %v6629 = vadd.f32 %v6460, %v6628
    %6630 = vmatmul.bf16.gmra.mxu0 %v6222
    %v6631 = vpop.f32.mrf.mxu0
    %v6632 = vadd.f32 %v6463, %v6631
    %v6633 = vpop.f32.mrf.mxu0
    %v6634 = vadd.f32 %v6465, %v6633
    %6635 = vmatmul.bf16.gmra.mxu0 %v6224
    %v6636 = vpop.f32.mrf.mxu0
    %v6637 = vadd.f32 %v6468, %v6636
    %v6638 = vpop.f32.mrf.mxu0
    %v6639 = vadd.f32 %v6470, %v6638
    %6640 = vmatmul.bf16.gmra.mxu0 %v6226
    %v6641 = vpop.f32.mrf.mxu0
    %v6642 = vadd.f32 %v6473, %v6641
    %v6643 = vpop.f32.mrf.mxu0
    %v6644 = vadd.f32 %v6475, %v6643
    %6645 = vmatmul.bf16.gmra.mxu0 %v6228
    %v6646 = vpop.f32.mrf.mxu0
    %v6647 = vadd.f32 %v6478, %v6646
    %v6648 = vpop.f32.mrf.mxu0
    %v6649 = vadd.f32 %v6480, %v6648
    %6650 = vmatmul.bf16.gmra.mxu0 %v6230
    %v6651 = vpop.f32.mrf.mxu0
    %v6652 = vadd.f32 %v6483, %v6651
    %v6653 = vpop.f32.mrf.mxu0
    %v6654 = vadd.f32 %v6485, %v6653
    %6655 = vmatmul.bf16.gmra.mxu0 %v6232
    %v6656 = vpop.f32.mrf.mxu0
    %v6657 = vadd.f32 %v6488, %v6656
    %v6658 = vpop.f32.mrf.mxu0
    %v6659 = vadd.f32 %v6490, %v6658
    %6660 = vmatmul.bf16.gmra.mxu0 %v6234
    %v6661 = vpop.f32.mrf.mxu0
    %v6662 = vadd.f32 %v6493, %v6661
    %v6663 = vpop.f32.mrf.mxu0
    %v6664 = vadd.f32 %v6495, %v6663
    %6665 = vmatmul.bf16.gmra.mxu0 %v6236
    %v6666 = vpop.f32.mrf.mxu0
    %v6667 = vadd.f32 %v6498, %v6666
    %v6668 = vpop.f32.mrf.mxu0
    %v6669 = vadd.f32 %v6500, %v6668
    %6670 = vmatmul.bf16.gmra.mxu0 %v6238
    %v6671 = vpop.f32.mrf.mxu0
    %v6672 = vadd.f32 %v6503, %v6671
    %v6673 = vpop.f32.mrf.mxu0
    %v6674 = vadd.f32 %v6505, %v6673
    %6675 = vmatmul.bf16.gmra.mxu0 %v6240
    %v6676 = vpop.f32.mrf.mxu0
    %v6677 = vadd.f32 %v6508, %v6676
    %v6678 = vpop.f32.mrf.mxu0
    %v6679 = vadd.f32 %v6510, %v6678
    %6680 = vmatmul.bf16.gmra.mxu0 %v6242
    %v6681 = vpop.f32.mrf.mxu0
    %v6682 = vadd.f32 %v6513, %v6681
    %v6683 = vpop.f32.mrf.mxu0
    %v6684 = vadd.f32 %v6515, %v6683
    %6685 = vmatmul.bf16.gmra.mxu0 %v6244
    %v6686 = vpop.f32.mrf.mxu0
    %v6687 = vadd.f32 %v6518, %v6686
    %v6688 = vpop.f32.mrf.mxu0
    %v6689 = vadd.f32 %v6520, %v6688
    %6690 = vmatmul.bf16.gmra.mxu0 %v6246
    %v6691 = vpop.f32.mrf.mxu0
    %v6692 = vadd.f32 %v6523, %v6691
    %v6693 = vpop.f32.mrf.mxu0
    %v6694 = vadd.f32 %v6525, %v6693
    %6695 = vmatmul.bf16.gmra.mxu0 %v6248
    %v6696 = vpop.f32.mrf.mxu0
    %v6697 = vadd.f32 %v6528, %v6696
    %v6698 = vpop.f32.mrf.mxu0
    %v6699 = vadd.f32 %v6530, %v6698
    %6700 = vmatmul.bf16.gmra.mxu0 %v6250
    %v6701 = vpop.f32.mrf.mxu0
    %v6702 = vadd.f32 %v6533, %v6701
    %v6703 = vpop.f32.mrf.mxu0
    %v6704 = vadd.f32 %v6535, %v6703
    %6705 = vmatmul.bf16.gmra.mxu0 %v6252
    %v6706 = vpop.f32.mrf.mxu0
    %v6707 = vadd.f32 %v6538, %v6706
    %v6708 = vpop.f32.mrf.mxu0
    %v6709 = vadd.f32 %v6540, %v6708
    %6710 = vmatmul.bf16.gmra.mxu0 %v6254
    %v6711 = vpop.f32.mrf.mxu0
    %v6712 = vadd.f32 %v6543, %v6711
    %v6713 = vpop.f32.mrf.mxu0
    %v6714 = vadd.f32 %v6545, %v6713
    %6715 = vmatmul.bf16.gmra.mxu0 %v6256
    %v6716 = vpop.f32.mrf.mxu0
    %v6717 = vadd.f32 %v6548, %v6716
    %v6718 = vpop.f32.mrf.mxu0
    %v6719 = vadd.f32 %v6550, %v6718
    %6720 = vmatmul.bf16.gmra.mxu0 %v6258
    %v6721 = vpop.f32.mrf.mxu0
    %v6722 = vadd.f32 %v6553, %v6721
    %v6723 = vpop.f32.mrf.mxu0
    %v6724 = vadd.f32 %v6555, %v6723
    %6725 = vmatmul.bf16.gmra.mxu0 %v6260
    %v6726 = vpop.f32.mrf.mxu0
    %v6727 = vadd.f32 %v6558, %v6726
    %v6728 = vpop.f32.mrf.mxu0
    %v6729 = vadd.f32 %v6560, %v6728
    %6730 = vdwg.mxu0
    %v6731 = vmax.f32 %v6572, 0.0
    %v6732 = vmax.f32 %v6574, 0.0
    %v6733 = vmax.f32 %v6577, 0.0
    %v6734 = vmax.f32 %v6579, 0.0
    %v6735 = vmax.f32 %v6582, 0.0
    %v6736 = vmax.f32 %v6584, 0.0
    %v6737 = vmax.f32 %v6587, 0.0
    %v6738 = vmax.f32 %v6589, 0.0
    %v6739 = vmax.f32 %v6592, 0.0
    %v6740 = vmax.f32 %v6594, 0.0
    %v6741 = vmax.f32 %v6597, 0.0
    %v6742 = vmax.f32 %v6599, 0.0
    %v6743 = vmax.f32 %v6602, 0.0
    %v6744 = vmax.f32 %v6604, 0.0
    %v6745 = vmax.f32 %v6607, 0.0
    %v6746 = vmax.f32 %v6609, 0.0
    %v6747 = vmax.f32 %v6612, 0.0
    %v6748 = vmax.f32 %v6614, 0.0
    %v6749 = vmax.f32 %v6617, 0.0
    %v6750 = vmax.f32 %v6619, 0.0
    %v6751 = vmax.f32 %v6622, 0.0
    %v6752 = vmax.f32 %v6624, 0.0
    %v6753 = vmax.f32 %v6627, 0.0
    %v6754 = vmax.f32 %v6629, 0.0
    %v6755 = vmax.f32 %v6632, 0.0
    %v6756 = vmax.f32 %v6634, 0.0
    %v6757 = vmax.f32 %v6637, 0.0
    %v6758 = vmax.f32 %v6639, 0.0
    %v6759 = vmax.f32 %v6642, 0.0
    %v6760 = vmax.f32 %v6644, 0.0
    %v6761 = vmax.f32 %v6647, 0.0
    %v6762 = vmax.f32 %v6649, 0.0
    %v6763 = vmax.f32 %v6652, 0.0
    %v6764 = vmax.f32 %v6654, 0.0
    %v6765 = vmax.f32 %v6657, 0.0
    %v6766 = vmax.f32 %v6659, 0.0
    %v6767 = vmax.f32 %v6662, 0.0
    %v6768 = vmax.f32 %v6664, 0.0
    %v6769 = vmax.f32 %v6667, 0.0
    %v6770 = vmax.f32 %v6669, 0.0
    %v6771 = vmax.f32 %v6672, 0.0
    %v6772 = vmax.f32 %v6674, 0.0
    %v6773 = vmax.f32 %v6677, 0.0
    %v6774 = vmax.f32 %v6679, 0.0
    %v6775 = vmax.f32 %v6682, 0.0
    %v6776 = vmax.f32 %v6684, 0.0
    %v6777 = vmax.f32 %v6687, 0.0
    %v6778 = vmax.f32 %v6689, 0.0
    %v6779 = vmax.f32 %v6692, 0.0
    %v6780 = vmax.f32 %v6694, 0.0
    %v6781 = vmax.f32 %v6697, 0.0
    %v6782 = vmax.f32 %v6699, 0.0
    %v6783 = vmax.f32 %v6702, 0.0
    %v6784 = vmax.f32 %v6704, 0.0
    %v6785 = vmax.f32 %v6707, 0.0
    %v6786 = vmax.f32 %v6709, 0.0
    %v6787 = vmax.f32 %v6712, 0.0
    %v6788 = vmax.f32 %v6714, 0.0
    %v6789 = vmax.f32 %v6717, 0.0
    %v6790 = vmax.f32 %v6719, 0.0
    %v6791 = vmax.f32 %v6722, 0.0
    %v6792 = vmax.f32 %v6724, 0.0
    %v6793 = vmax.f32 %v6727, 0.0
    %v6794 = vmax.f32 %v6729, 0.0
    %v6795 = vld [vmem:[#allocation11 + $0xd] sm:$0x1]
    %v6796 = vld [vmem:[#allocation11 + $0xe] sm:$0x1]
    %6797 = vadd.xlane.f32.xlu0 %v6731
    %v6798 = vpop.xlane.xlu0 %6797
    %6799 = vadd.xlane.f32.xlu0 %v6732
    %v6800 = vpop.xlane.xlu0 %6799
    %6801 = vadd.xlane.f32.xlu0 %v6733
    %v6802 = vpop.xlane.xlu0 %6801
    %6803 = vadd.xlane.f32.xlu0 %v6734
    %v6804 = vpop.xlane.xlu0 %6803
    %6805 = vadd.xlane.f32.xlu0 %v6735
    %v6806 = vpop.xlane.xlu0 %6805
    %6807 = vadd.xlane.f32.xlu0 %v6736
    %v6808 = vpop.xlane.xlu0 %6807
    %6809 = vadd.xlane.f32.xlu0 %v6737
    %v6810 = vpop.xlane.xlu0 %6809
    %6811 = vadd.xlane.f32.xlu0 %v6738
    %v6812 = vpop.xlane.xlu0 %6811
    %6813 = vadd.xlane.f32.xlu0 %v6739
    %v6814 = vpop.xlane.xlu0 %6813
    %6815 = vadd.xlane.f32.xlu0 %v6740
    %v6816 = vpop.xlane.xlu0 %6815
    %6817 = vadd.xlane.f32.xlu0 %v6741
    %v6818 = vpop.xlane.xlu0 %6817
    %6819 = vadd.xlane.f32.xlu0 %v6742
    %v6820 = vpop.xlane.xlu0 %6819
    %6821 = vadd.xlane.f32.xlu0 %v6743
    %v6822 = vpop.xlane.xlu0 %6821
    %6823 = vadd.xlane.f32.xlu0 %v6744
    %v6824 = vpop.xlane.xlu0 %6823
    %6825 = vadd.xlane.f32.xlu0 %v6745
    %v6826 = vpop.xlane.xlu0 %6825
    %6827 = vadd.xlane.f32.xlu0 %v6746
    %v6828 = vpop.xlane.xlu0 %6827
    %6829 = vadd.xlane.f32.xlu0 %v6747
    %v6830 = vpop.xlane.xlu0 %6829
    %6831 = vadd.xlane.f32.xlu0 %v6748
    %v6832 = vpop.xlane.xlu0 %6831
    %6833 = vadd.xlane.f32.xlu0 %v6749
    %v6834 = vpop.xlane.xlu0 %6833
    %6835 = vadd.xlane.f32.xlu0 %v6750
    %v6836 = vpop.xlane.xlu0 %6835
    %6837 = vadd.xlane.f32.xlu0 %v6751
    %v6838 = vpop.xlane.xlu0 %6837
    %6839 = vadd.xlane.f32.xlu0 %v6752
    %v6840 = vpop.xlane.xlu0 %6839
    %6841 = vadd.xlane.f32.xlu0 %v6753
    %v6842 = vpop.xlane.xlu0 %6841
    %6843 = vadd.xlane.f32.xlu0 %v6754
    %v6844 = vpop.xlane.xlu0 %6843
    %6845 = vadd.xlane.f32.xlu0 %v6755
    %v6846 = vpop.xlane.xlu0 %6845
    %6847 = vadd.xlane.f32.xlu0 %v6756
    %v6848 = vpop.xlane.xlu0 %6847
    %6849 = vadd.xlane.f32.xlu0 %v6757
    %v6850 = vpop.xlane.xlu0 %6849
    %6851 = vadd.xlane.f32.xlu0 %v6758
    %v6852 = vpop.xlane.xlu0 %6851
    %6853 = vadd.xlane.f32.xlu0 %v6759
    %v6854 = vpop.xlane.xlu0 %6853
    %6855 = vadd.xlane.f32.xlu0 %v6760
    %v6856 = vpop.xlane.xlu0 %6855
    %6857 = vadd.xlane.f32.xlu0 %v6761
    %v6858 = vpop.xlane.xlu0 %6857
    %6859 = vadd.xlane.f32.xlu0 %v6762
    %v6860 = vpop.xlane.xlu0 %6859
    %6861 = vadd.xlane.f32.xlu0 %v6763
    %v6862 = vpop.xlane.xlu0 %6861
    %6863 = vadd.xlane.f32.xlu0 %v6764
    %v6864 = vpop.xlane.xlu0 %6863
    %6865 = vadd.xlane.f32.xlu0 %v6765
    %v6866 = vpop.xlane.xlu0 %6865
    %6867 = vadd.xlane.f32.xlu0 %v6766
    %v6868 = vpop.xlane.xlu0 %6867
    %6869 = vadd.xlane.f32.xlu0 %v6767
    %v6870 = vpop.xlane.xlu0 %6869
    %6871 = vadd.xlane.f32.xlu0 %v6768
    %v6872 = vpop.xlane.xlu0 %6871
    %6873 = vadd.xlane.f32.xlu0 %v6769
    %v6874 = vpop.xlane.xlu0 %6873
    %6875 = vadd.xlane.f32.xlu0 %v6770
    %v6876 = vpop.xlane.xlu0 %6875
    %6877 = vadd.xlane.f32.xlu0 %v6771
    %v6878 = vpop.xlane.xlu0 %6877
    %6879 = vadd.xlane.f32.xlu0 %v6772
    %v6880 = vpop.xlane.xlu0 %6879
    %6881 = vadd.xlane.f32.xlu0 %v6773
    %v6882 = vpop.xlane.xlu0 %6881
    %6883 = vadd.xlane.f32.xlu0 %v6774
    %v6884 = vpop.xlane.xlu0 %6883
    %6885 = vadd.xlane.f32.xlu0 %v6775
    %v6886 = vpop.xlane.xlu0 %6885
    %6887 = vadd.xlane.f32.xlu0 %v6776
    %v6888 = vpop.xlane.xlu0 %6887
    %6889 = vadd.xlane.f32.xlu0 %v6777
    %v6890 = vpop.xlane.xlu0 %6889
    %6891 = vadd.xlane.f32.xlu0 %v6778
    %v6892 = vpop.xlane.xlu0 %6891
    %6893 = vadd.xlane.f32.xlu0 %v6779
    %v6894 = vpop.xlane.xlu0 %6893
    %6895 = vadd.xlane.f32.xlu0 %v6780
    %v6896 = vpop.xlane.xlu0 %6895
    %6897 = vadd.xlane.f32.xlu0 %v6781
    %v6898 = vpop.xlane.xlu0 %6897
    %6899 = vadd.xlane.f32.xlu0 %v6782
    %v6900 = vpop.xlane.xlu0 %6899
    %6901 = vadd.xlane.f32.xlu0 %v6783
    %v6902 = vpop.xlane.xlu0 %6901
    %6903 = vadd.xlane.f32.xlu0 %v6784
    %v6904 = vpop.xlane.xlu0 %6903
    %6905 = vadd.xlane.f32.xlu0 %v6785
    %v6906 = vpop.xlane.xlu0 %6905
    %6907 = vadd.xlane.f32.xlu0 %v6786
    %v6908 = vpop.xlane.xlu0 %6907
    %6909 = vadd.xlane.f32.xlu0 %v6787
    %v6910 = vpop.xlane.xlu0 %6909
    %6911 = vadd.xlane.f32.xlu0 %v6788
    %v6912 = vpop.xlane.xlu0 %6911
    %6913 = vadd.xlane.f32.xlu0 %v6789
    %v6914 = vpop.xlane.xlu0 %6913
    %6915 = vadd.xlane.f32.xlu0 %v6790
    %v6916 = vpop.xlane.xlu0 %6915
    %6917 = vadd.xlane.f32.xlu0 %v6791
    %v6918 = vpop.xlane.xlu0 %6917
    %6919 = vadd.xlane.f32.xlu0 %v6792
    %v6920 = vpop.xlane.xlu0 %6919
    %6921 = vadd.xlane.f32.xlu0 %v6793
    %v6922 = vpop.xlane.xlu0 %6921
    %6923 = vadd.xlane.f32.xlu0 %v6794
    %v6924 = vpop.xlane.xlu0 %6923
    %v6925 = vrcp.pop 128.0
    %v6926 = vmul.f32 128.0, %v6925
    %v6927 = vsub.f32 1.0, %v6926
    %v6928 = vmul.f32 %v6925, %v6927
    %v6929 = vadd.f32 %v6925, %v6928
    %vm6930 = vweird.f32 %v6925
    %v6931 = vsel %vm6930, %v6925, %v6929
    %v6932 = vmul.f32 %v6798, %v6931
    %v6933 = vmul.f32 %v6800, %v6931
    %v6934 = vmul.f32 %v6802, %v6931
    %v6935 = vmul.f32 %v6804, %v6931
    %v6936 = vmul.f32 %v6806, %v6931
    %v6937 = vmul.f32 %v6808, %v6931
    %v6938 = vmul.f32 %v6810, %v6931
    %v6939 = vmul.f32 %v6812, %v6931
    %v6940 = vmul.f32 %v6814, %v6931
    %v6941 = vmul.f32 %v6816, %v6931
    %v6942 = vmul.f32 %v6818, %v6931
    %v6943 = vmul.f32 %v6820, %v6931
    %v6944 = vmul.f32 %v6822, %v6931
    %v6945 = vmul.f32 %v6824, %v6931
    %v6946 = vmul.f32 %v6826, %v6931
    %v6947 = vmul.f32 %v6828, %v6931
    %v6948 = vmul.f32 %v6830, %v6931
    %v6949 = vmul.f32 %v6832, %v6931
    %v6950 = vmul.f32 %v6834, %v6931
    %v6951 = vmul.f32 %v6836, %v6931
    %v6952 = vmul.f32 %v6838, %v6931
    %v6953 = vmul.f32 %v6840, %v6931
    %v6954 = vmul.f32 %v6842, %v6931
    %v6955 = vmul.f32 %v6844, %v6931
    %v6956 = vmul.f32 %v6846, %v6931
    %v6957 = vmul.f32 %v6848, %v6931
    %v6958 = vmul.f32 %v6850, %v6931
    %v6959 = vmul.f32 %v6852, %v6931
    %v6960 = vmul.f32 %v6854, %v6931
    %v6961 = vmul.f32 %v6856, %v6931
    %v6962 = vmul.f32 %v6858, %v6931
    %v6963 = vmul.f32 %v6860, %v6931
    %v6964 = vmul.f32 %v6862, %v6931
    %v6965 = vmul.f32 %v6864, %v6931
    %v6966 = vmul.f32 %v6866, %v6931
    %v6967 = vmul.f32 %v6868, %v6931
    %v6968 = vmul.f32 %v6870, %v6931
    %v6969 = vmul.f32 %v6872, %v6931
    %v6970 = vmul.f32 %v6874, %v6931
    %v6971 = vmul.f32 %v6876, %v6931
    %v6972 = vmul.f32 %v6878, %v6931
    %v6973 = vmul.f32 %v6880, %v6931
    %v6974 = vmul.f32 %v6882, %v6931
    %v6975 = vmul.f32 %v6884, %v6931
    %v6976 = vmul.f32 %v6886, %v6931
    %v6977 = vmul.f32 %v6888, %v6931
    %v6978 = vmul.f32 %v6890, %v6931
    %v6979 = vmul.f32 %v6892, %v6931
    %v6980 = vmul.f32 %v6894, %v6931
    %v6981 = vmul.f32 %v6896, %v6931
    %v6982 = vmul.f32 %v6898, %v6931
    %v6983 = vmul.f32 %v6900, %v6931
    %v6984 = vmul.f32 %v6902, %v6931
    %v6985 = vmul.f32 %v6904, %v6931
    %v6986 = vmul.f32 %v6906, %v6931
    %v6987 = vmul.f32 %v6908, %v6931
    %v6988 = vmul.f32 %v6910, %v6931
    %v6989 = vmul.f32 %v6912, %v6931
    %v6990 = vmul.f32 %v6914, %v6931
    %v6991 = vmul.f32 %v6916, %v6931
    %v6992 = vmul.f32 %v6918, %v6931
    %v6993 = vmul.f32 %v6920, %v6931
    %v6994 = vmul.f32 %v6922, %v6931
    %v6995 = vmul.f32 %v6924, %v6931
    %v6996 = vmul.f32 %v6731, %v6731
    %v6997 = vmul.f32 %v6732, %v6732
    %v6998 = vmul.f32 %v6733, %v6733
    %v6999 = vmul.f32 %v6734, %v6734
    %v7000 = vmul.f32 %v6735, %v6735
    %v7001 = vmul.f32 %v6736, %v6736
    %v7002 = vmul.f32 %v6737, %v6737
    %v7003 = vmul.f32 %v6738, %v6738
    %v7004 = vmul.f32 %v6739, %v6739
    %v7005 = vmul.f32 %v6740, %v6740
    %v7006 = vmul.f32 %v6741, %v6741
    %v7007 = vmul.f32 %v6742, %v6742
    %v7008 = vmul.f32 %v6743, %v6743
    %v7009 = vmul.f32 %v6744, %v6744
    %v7010 = vmul.f32 %v6745, %v6745
    %v7011 = vmul.f32 %v6746, %v6746
    %v7012 = vmul.f32 %v6747, %v6747
    %v7013 = vmul.f32 %v6748, %v6748
    %v7014 = vmul.f32 %v6749, %v6749
    %v7015 = vmul.f32 %v6750, %v6750
    %v7016 = vmul.f32 %v6751, %v6751
    %v7017 = vmul.f32 %v6752, %v6752
    %v7018 = vmul.f32 %v6753, %v6753
    %v7019 = vmul.f32 %v6754, %v6754
    %v7020 = vmul.f32 %v6755, %v6755
    %v7021 = vmul.f32 %v6756, %v6756
    %v7022 = vmul.f32 %v6757, %v6757
    %v7023 = vmul.f32 %v6758, %v6758
    %v7024 = vmul.f32 %v6759, %v6759
    %v7025 = vmul.f32 %v6760, %v6760
    %v7026 = vmul.f32 %v6761, %v6761
    %v7027 = vmul.f32 %v6762, %v6762
    %v7028 = vmul.f32 %v6763, %v6763
    %v7029 = vmul.f32 %v6764, %v6764
    %v7030 = vmul.f32 %v6765, %v6765
    %v7031 = vmul.f32 %v6766, %v6766
    %v7032 = vmul.f32 %v6767, %v6767
    %v7033 = vmul.f32 %v6768, %v6768
    %v7034 = vmul.f32 %v6769, %v6769
    %v7035 = vmul.f32 %v6770, %v6770
    %v7036 = vmul.f32 %v6771, %v6771
    %v7037 = vmul.f32 %v6772, %v6772
    %v7038 = vmul.f32 %v6773, %v6773
    %v7039 = vmul.f32 %v6774, %v6774
    %v7040 = vmul.f32 %v6775, %v6775
    %v7041 = vmul.f32 %v6776, %v6776
    %v7042 = vmul.f32 %v6777, %v6777
    %v7043 = vmul.f32 %v6778, %v6778
    %v7044 = vmul.f32 %v6779, %v6779
    %v7045 = vmul.f32 %v6780, %v6780
    %v7046 = vmul.f32 %v6781, %v6781
    %v7047 = vmul.f32 %v6782, %v6782
    %v7048 = vmul.f32 %v6783, %v6783
    %v7049 = vmul.f32 %v6784, %v6784
    %v7050 = vmul.f32 %v6785, %v6785
    %v7051 = vmul.f32 %v6786, %v6786
    %v7052 = vmul.f32 %v6787, %v6787
    %v7053 = vmul.f32 %v6788, %v6788
    %v7054 = vmul.f32 %v6789, %v6789
    %v7055 = vmul.f32 %v6790, %v6790
    %v7056 = vmul.f32 %v6791, %v6791
    %v7057 = vmul.f32 %v6792, %v6792
    %v7058 = vmul.f32 %v6793, %v6793
    %v7059 = vmul.f32 %v6794, %v6794
    %7060 = vadd.xlane.f32.xlu0 %v6996
    %v7061 = vpop.xlane.xlu0 %7060
    %7062 = vadd.xlane.f32.xlu0 %v6997
    %v7063 = vpop.xlane.xlu0 %7062
    %7064 = vadd.xlane.f32.xlu0 %v6998
    %v7065 = vpop.xlane.xlu0 %7064
    %7066 = vadd.xlane.f32.xlu0 %v6999
    %v7067 = vpop.xlane.xlu0 %7066
    %7068 = vadd.xlane.f32.xlu0 %v7000
    %v7069 = vpop.xlane.xlu0 %7068
    %7070 = vadd.xlane.f32.xlu0 %v7001
    %v7071 = vpop.xlane.xlu0 %7070
    %7072 = vadd.xlane.f32.xlu0 %v7002
    %v7073 = vpop.xlane.xlu0 %7072
    %7074 = vadd.xlane.f32.xlu0 %v7003
    %v7075 = vpop.xlane.xlu0 %7074
    %7076 = vadd.xlane.f32.xlu0 %v7004
    %v7077 = vpop.xlane.xlu0 %7076
    %7078 = vadd.xlane.f32.xlu0 %v7005
    %v7079 = vpop.xlane.xlu0 %7078
    %7080 = vadd.xlane.f32.xlu0 %v7006
    %v7081 = vpop.xlane.xlu0 %7080
    %7082 = vadd.xlane.f32.xlu0 %v7007
    %v7083 = vpop.xlane.xlu0 %7082
    %7084 = vadd.xlane.f32.xlu0 %v7008
    %v7085 = vpop.xlane.xlu0 %7084
    %7086 = vadd.xlane.f32.xlu0 %v7009
    %v7087 = vpop.xlane.xlu0 %7086
    %7088 = vadd.xlane.f32.xlu0 %v7010
    %v7089 = vpop.xlane.xlu0 %7088
    %7090 = vadd.xlane.f32.xlu0 %v7011
    %v7091 = vpop.xlane.xlu0 %7090
    %7092 = vadd.xlane.f32.xlu0 %v7012
    %v7093 = vpop.xlane.xlu0 %7092
    %7094 = vadd.xlane.f32.xlu0 %v7013
    %v7095 = vpop.xlane.xlu0 %7094
    %7096 = vadd.xlane.f32.xlu0 %v7014
    %v7097 = vpop.xlane.xlu0 %7096
    %7098 = vadd.xlane.f32.xlu0 %v7015
    %v7099 = vpop.xlane.xlu0 %7098
    %7100 = vadd.xlane.f32.xlu0 %v7016
    %v7101 = vpop.xlane.xlu0 %7100
    %7102 = vadd.xlane.f32.xlu0 %v7017
    %v7103 = vpop.xlane.xlu0 %7102
    %7104 = vadd.xlane.f32.xlu0 %v7018
    %v7105 = vpop.xlane.xlu0 %7104
    %7106 = vadd.xlane.f32.xlu0 %v7019
    %v7107 = vpop.xlane.xlu0 %7106
    %7108 = vadd.xlane.f32.xlu0 %v7020
    %v7109 = vpop.xlane.xlu0 %7108
    %7110 = vadd.xlane.f32.xlu0 %v7021
    %v7111 = vpop.xlane.xlu0 %7110
    %7112 = vadd.xlane.f32.xlu0 %v7022
    %v7113 = vpop.xlane.xlu0 %7112
    %7114 = vadd.xlane.f32.xlu0 %v7023
    %v7115 = vpop.xlane.xlu0 %7114
    %7116 = vadd.xlane.f32.xlu0 %v7024
    %v7117 = vpop.xlane.xlu0 %7116
    %7118 = vadd.xlane.f32.xlu0 %v7025
    %v7119 = vpop.xlane.xlu0 %7118
    %7120 = vadd.xlane.f32.xlu0 %v7026
    %v7121 = vpop.xlane.xlu0 %7120
    %7122 = vadd.xlane.f32.xlu0 %v7027
    %v7123 = vpop.xlane.xlu0 %7122
    %7124 = vadd.xlane.f32.xlu0 %v7028
    %v7125 = vpop.xlane.xlu0 %7124
    %7126 = vadd.xlane.f32.xlu0 %v7029
    %v7127 = vpop.xlane.xlu0 %7126
    %7128 = vadd.xlane.f32.xlu0 %v7030
    %v7129 = vpop.xlane.xlu0 %7128
    %7130 = vadd.xlane.f32.xlu0 %v7031
    %v7131 = vpop.xlane.xlu0 %7130
    %7132 = vadd.xlane.f32.xlu0 %v7032
    %v7133 = vpop.xlane.xlu0 %7132
    %7134 = vadd.xlane.f32.xlu0 %v7033
    %v7135 = vpop.xlane.xlu0 %7134
    %7136 = vadd.xlane.f32.xlu0 %v7034
    %v7137 = vpop.xlane.xlu0 %7136
    %7138 = vadd.xlane.f32.xlu0 %v7035
    %v7139 = vpop.xlane.xlu0 %7138
    %7140 = vadd.xlane.f32.xlu0 %v7036
    %v7141 = vpop.xlane.xlu0 %7140
    %7142 = vadd.xlane.f32.xlu0 %v7037
    %v7143 = vpop.xlane.xlu0 %7142
    %7144 = vadd.xlane.f32.xlu0 %v7038
    %v7145 = vpop.xlane.xlu0 %7144
    %7146 = vadd.xlane.f32.xlu0 %v7039
    %v7147 = vpop.xlane.xlu0 %7146
    %7148 = vadd.xlane.f32.xlu0 %v7040
    %v7149 = vpop.xlane.xlu0 %7148
    %7150 = vadd.xlane.f32.xlu0 %v7041
    %v7151 = vpop.xlane.xlu0 %7150
    %7152 = vadd.xlane.f32.xlu0 %v7042
    %v7153 = vpop.xlane.xlu0 %7152
    %7154 = vadd.xlane.f32.xlu0 %v7043
    %v7155 = vpop.xlane.xlu0 %7154
    %7156 = vadd.xlane.f32.xlu0 %v7044
    %v7157 = vpop.xlane.xlu0 %7156
    %7158 = vadd.xlane.f32.xlu0 %v7045
    %v7159 = vpop.xlane.xlu0 %7158
    %7160 = vadd.xlane.f32.xlu0 %v7046
    %v7161 = vpop.xlane.xlu0 %7160
    %7162 = vadd.xlane.f32.xlu0 %v7047
    %v7163 = vpop.xlane.xlu0 %7162
    %7164 = vadd.xlane.f32.xlu0 %v7048
    %v7165 = vpop.xlane.xlu0 %7164
    %7166 = vadd.xlane.f32.xlu0 %v7049
    %v7167 = vpop.xlane.xlu0 %7166
    %7168 = vadd.xlane.f32.xlu0 %v7050
    %v7169 = vpop.xlane.xlu0 %7168
    %7170 = vadd.xlane.f32.xlu0 %v7051
    %v7171 = vpop.xlane.xlu0 %7170
    %7172 = vadd.xlane.f32.xlu0 %v7052
    %v7173 = vpop.xlane.xlu0 %7172
    %7174 = vadd.xlane.f32.xlu0 %v7053
    %v7175 = vpop.xlane.xlu0 %7174
    %7176 = vadd.xlane.f32.xlu0 %v7054
    %v7177 = vpop.xlane.xlu0 %7176
    %7178 = vadd.xlane.f32.xlu0 %v7055
    %v7179 = vpop.xlane.xlu0 %7178
    %7180 = vadd.xlane.f32.xlu0 %v7056
    %v7181 = vpop.xlane.xlu0 %7180
    %7182 = vadd.xlane.f32.xlu0 %v7057
    %v7183 = vpop.xlane.xlu0 %7182
    %7184 = vadd.xlane.f32.xlu0 %v7058
    %v7185 = vpop.xlane.xlu0 %7184
    %7186 = vadd.xlane.f32.xlu0 %v7059
    %v7187 = vpop.xlane.xlu0 %7186
    %v7188 = vmul.f32 %v7061, %v6931
    %v7189 = vmul.f32 %v7063, %v6931
    %v7190 = vmul.f32 %v7065, %v6931
    %v7191 = vmul.f32 %v7067, %v6931
    %v7192 = vmul.f32 %v7069, %v6931
    %v7193 = vmul.f32 %v7071, %v6931
    %v7194 = vmul.f32 %v7073, %v6931
    %v7195 = vmul.f32 %v7075, %v6931
    %v7196 = vmul.f32 %v7077, %v6931
    %v7197 = vmul.f32 %v7079, %v6931
    %v7198 = vmul.f32 %v7081, %v6931
    %v7199 = vmul.f32 %v7083, %v6931
    %v7200 = vmul.f32 %v7085, %v6931
    %v7201 = vmul.f32 %v7087, %v6931
    %v7202 = vmul.f32 %v7089, %v6931
    %v7203 = vmul.f32 %v7091, %v6931
    %v7204 = vmul.f32 %v7093, %v6931
    %v7205 = vmul.f32 %v7095, %v6931
    %v7206 = vmul.f32 %v7097, %v6931
    %v7207 = vmul.f32 %v7099, %v6931
    %v7208 = vmul.f32 %v7101, %v6931
    %v7209 = vmul.f32 %v7103, %v6931
    %v7210 = vmul.f32 %v7105, %v6931
    %v7211 = vmul.f32 %v7107, %v6931
    %v7212 = vmul.f32 %v7109, %v6931
    %v7213 = vmul.f32 %v7111, %v6931
    %v7214 = vmul.f32 %v7113, %v6931
    %v7215 = vmul.f32 %v7115, %v6931
    %v7216 = vmul.f32 %v7117, %v6931
    %v7217 = vmul.f32 %v7119, %v6931
    %v7218 = vmul.f32 %v7121, %v6931
    %v7219 = vmul.f32 %v7123, %v6931
    %v7220 = vmul.f32 %v7125, %v6931
    %v7221 = vmul.f32 %v7127, %v6931
    %v7222 = vmul.f32 %v7129, %v6931
    %v7223 = vmul.f32 %v7131, %v6931
    %v7224 = vmul.f32 %v7133, %v6931
    %v7225 = vmul.f32 %v7135, %v6931
    %v7226 = vmul.f32 %v7137, %v6931
    %v7227 = vmul.f32 %v7139, %v6931
    %v7228 = vmul.f32 %v7141, %v6931
    %v7229 = vmul.f32 %v7143, %v6931
    %v7230 = vmul.f32 %v7145, %v6931
    %v7231 = vmul.f32 %v7147, %v6931
    %v7232 = vmul.f32 %v7149, %v6931
    %v7233 = vmul.f32 %v7151, %v6931
    %v7234 = vmul.f32 %v7153, %v6931
    %v7235 = vmul.f32 %v7155, %v6931
    %v7236 = vmul.f32 %v7157, %v6931
    %v7237 = vmul.f32 %v7159, %v6931
    %v7238 = vmul.f32 %v7161, %v6931
    %v7239 = vmul.f32 %v7163, %v6931
    %v7240 = vmul.f32 %v7165, %v6931
    %v7241 = vmul.f32 %v7167, %v6931
    %v7242 = vmul.f32 %v7169, %v6931
    %v7243 = vmul.f32 %v7171, %v6931
    %v7244 = vmul.f32 %v7173, %v6931
    %v7245 = vmul.f32 %v7175, %v6931
    %v7246 = vmul.f32 %v7177, %v6931
    %v7247 = vmul.f32 %v7179, %v6931
    %v7248 = vmul.f32 %v7181, %v6931
    %v7249 = vmul.f32 %v7183, %v6931
    %v7250 = vmul.f32 %v7185, %v6931
    %v7251 = vmul.f32 %v7187, %v6931
    %v7252 = vmul.f32 %v6932, %v6932
    %v7253 = vmul.f32 %v6933, %v6933
    %v7254 = vmul.f32 %v6934, %v6934
    %v7255 = vmul.f32 %v6935, %v6935
    %v7256 = vmul.f32 %v6936, %v6936
    %v7257 = vmul.f32 %v6937, %v6937
    %v7258 = vmul.f32 %v6938, %v6938
    %v7259 = vmul.f32 %v6939, %v6939
    %v7260 = vmul.f32 %v6940, %v6940
    %v7261 = vmul.f32 %v6941, %v6941
    %v7262 = vmul.f32 %v6942, %v6942
    %v7263 = vmul.f32 %v6943, %v6943
    %v7264 = vmul.f32 %v6944, %v6944
    %v7265 = vmul.f32 %v6945, %v6945
    %v7266 = vmul.f32 %v6946, %v6946
    %v7267 = vmul.f32 %v6947, %v6947
    %v7268 = vmul.f32 %v6948, %v6948
    %v7269 = vmul.f32 %v6949, %v6949
    %v7270 = vmul.f32 %v6950, %v6950
    %v7271 = vmul.f32 %v6951, %v6951
    %v7272 = vmul.f32 %v6952, %v6952
    %v7273 = vmul.f32 %v6953, %v6953
    %v7274 = vmul.f32 %v6954, %v6954
    %v7275 = vmul.f32 %v6955, %v6955
    %v7276 = vmul.f32 %v6956, %v6956
    %v7277 = vmul.f32 %v6957, %v6957
    %v7278 = vmul.f32 %v6958, %v6958
    %v7279 = vmul.f32 %v6959, %v6959
    %v7280 = vmul.f32 %v6960, %v6960
    %v7281 = vmul.f32 %v6961, %v6961
    %v7282 = vmul.f32 %v6962, %v6962
    %v7283 = vmul.f32 %v6963, %v6963
    %v7284 = vmul.f32 %v6964, %v6964
    %v7285 = vmul.f32 %v6965, %v6965
    %v7286 = vmul.f32 %v6966, %v6966
    %v7287 = vmul.f32 %v6967, %v6967
    %v7288 = vmul.f32 %v6968, %v6968
    %v7289 = vmul.f32 %v6969, %v6969
    %v7290 = vmul.f32 %v6970, %v6970
    %v7291 = vmul.f32 %v6971, %v6971
    %v7292 = vmul.f32 %v6972, %v6972
    %v7293 = vmul.f32 %v6973, %v6973
    %v7294 = vmul.f32 %v6974, %v6974
    %v7295 = vmul.f32 %v6975, %v6975
    %v7296 = vmul.f32 %v6976, %v6976
    %v7297 = vmul.f32 %v6977, %v6977
    %v7298 = vmul.f32 %v6978, %v6978
    %v7299 = vmul.f32 %v6979, %v6979
    %v7300 = vmul.f32 %v6980, %v6980
    %v7301 = vmul.f32 %v6981, %v6981
    %v7302 = vmul.f32 %v6982, %v6982
    %v7303 = vmul.f32 %v6983, %v6983
    %v7304 = vmul.f32 %v6984, %v6984
    %v7305 = vmul.f32 %v6985, %v6985
    %v7306 = vmul.f32 %v6986, %v6986
    %v7307 = vmul.f32 %v6987, %v6987
    %v7308 = vmul.f32 %v6988, %v6988
    %v7309 = vmul.f32 %v6989, %v6989
    %v7310 = vmul.f32 %v6990, %v6990
    %v7311 = vmul.f32 %v6991, %v6991
    %v7312 = vmul.f32 %v6992, %v6992
    %v7313 = vmul.f32 %v6993, %v6993
    %v7314 = vmul.f32 %v6994, %v6994
    %v7315 = vmul.f32 %v6995, %v6995
    %v7316 = vsub.f32 %v7188, %v7252
    %v7317 = vsub.f32 %v7189, %v7253
    %v7318 = vsub.f32 %v7190, %v7254
    %v7319 = vsub.f32 %v7191, %v7255
    %v7320 = vsub.f32 %v7192, %v7256
    %v7321 = vsub.f32 %v7193, %v7257
    %v7322 = vsub.f32 %v7194, %v7258
    %v7323 = vsub.f32 %v7195, %v7259
    %v7324 = vsub.f32 %v7196, %v7260
    %v7325 = vsub.f32 %v7197, %v7261
    %v7326 = vsub.f32 %v7198, %v7262
    %v7327 = vsub.f32 %v7199, %v7263
    %v7328 = vsub.f32 %v7200, %v7264
    %v7329 = vsub.f32 %v7201, %v7265
    %v7330 = vsub.f32 %v7202, %v7266
    %v7331 = vsub.f32 %v7203, %v7267
    %v7332 = vsub.f32 %v7204, %v7268
    %v7333 = vsub.f32 %v7205, %v7269
    %v7334 = vsub.f32 %v7206, %v7270
    %v7335 = vsub.f32 %v7207, %v7271
    %v7336 = vsub.f32 %v7208, %v7272
    %v7337 = vsub.f32 %v7209, %v7273
    %v7338 = vsub.f32 %v7210, %v7274
    %v7339 = vsub.f32 %v7211, %v7275
    %v7340 = vsub.f32 %v7212, %v7276
    %v7341 = vsub.f32 %v7213, %v7277
    %v7342 = vsub.f32 %v7214, %v7278
    %v7343 = vsub.f32 %v7215, %v7279
    %v7344 = vsub.f32 %v7216, %v7280
    %v7345 = vsub.f32 %v7217, %v7281
    %v7346 = vsub.f32 %v7218, %v7282
    %v7347 = vsub.f32 %v7219, %v7283
    %v7348 = vsub.f32 %v7220, %v7284
    %v7349 = vsub.f32 %v7221, %v7285
    %v7350 = vsub.f32 %v7222, %v7286
    %v7351 = vsub.f32 %v7223, %v7287
    %v7352 = vsub.f32 %v7224, %v7288
    %v7353 = vsub.f32 %v7225, %v7289
    %v7354 = vsub.f32 %v7226, %v7290
    %v7355 = vsub.f32 %v7227, %v7291
    %v7356 = vsub.f32 %v7228, %v7292
    %v7357 = vsub.f32 %v7229, %v7293
    %v7358 = vsub.f32 %v7230, %v7294
    %v7359 = vsub.f32 %v7231, %v7295
    %v7360 = vsub.f32 %v7232, %v7296
    %v7361 = vsub.f32 %v7233, %v7297
    %v7362 = vsub.f32 %v7234, %v7298
    %v7363 = vsub.f32 %v7235, %v7299
    %v7364 = vsub.f32 %v7236, %v7300
    %v7365 = vsub.f32 %v7237, %v7301
    %v7366 = vsub.f32 %v7238, %v7302
    %v7367 = vsub.f32 %v7239, %v7303
    %v7368 = vsub.f32 %v7240, %v7304
    %v7369 = vsub.f32 %v7241, %v7305
    %v7370 = vsub.f32 %v7242, %v7306
    %v7371 = vsub.f32 %v7243, %v7307
    %v7372 = vsub.f32 %v7244, %v7308
    %v7373 = vsub.f32 %v7245, %v7309
    %v7374 = vsub.f32 %v7246, %v7310
    %v7375 = vsub.f32 %v7247, %v7311
    %v7376 = vsub.f32 %v7248, %v7312
    %v7377 = vsub.f32 %v7249, %v7313
    %v7378 = vsub.f32 %v7250, %v7314
    %v7379 = vsub.f32 %v7251, %v7315
    %v7380 = vmax.f32 %v7316, 0.0
    %v7381 = vmax.f32 %v7317, 0.0
    %v7382 = vmax.f32 %v7318, 0.0
    %v7383 = vmax.f32 %v7319, 0.0
    %v7384 = vmax.f32 %v7320, 0.0
    %v7385 = vmax.f32 %v7321, 0.0
    %v7386 = vmax.f32 %v7322, 0.0
    %v7387 = vmax.f32 %v7323, 0.0
    %v7388 = vmax.f32 %v7324, 0.0
    %v7389 = vmax.f32 %v7325, 0.0
    %v7390 = vmax.f32 %v7326, 0.0
    %v7391 = vmax.f32 %v7327, 0.0
    %v7392 = vmax.f32 %v7328, 0.0
    %v7393 = vmax.f32 %v7329, 0.0
    %v7394 = vmax.f32 %v7330, 0.0
    %v7395 = vmax.f32 %v7331, 0.0
    %v7396 = vmax.f32 %v7332, 0.0
    %v7397 = vmax.f32 %v7333, 0.0
    %v7398 = vmax.f32 %v7334, 0.0
    %v7399 = vmax.f32 %v7335, 0.0
    %v7400 = vmax.f32 %v7336, 0.0
    %v7401 = vmax.f32 %v7337, 0.0
    %v7402 = vmax.f32 %v7338, 0.0
    %v7403 = vmax.f32 %v7339, 0.0
    %v7404 = vmax.f32 %v7340, 0.0
    %v7405 = vmax.f32 %v7341, 0.0
    %v7406 = vmax.f32 %v7342, 0.0
    %v7407 = vmax.f32 %v7343, 0.0
    %v7408 = vmax.f32 %v7344, 0.0
    %v7409 = vmax.f32 %v7345, 0.0
    %v7410 = vmax.f32 %v7346, 0.0
    %v7411 = vmax.f32 %v7347, 0.0
    %v7412 = vmax.f32 %v7348, 0.0
    %v7413 = vmax.f32 %v7349, 0.0
    %v7414 = vmax.f32 %v7350, 0.0
    %v7415 = vmax.f32 %v7351, 0.0
    %v7416 = vmax.f32 %v7352, 0.0
    %v7417 = vmax.f32 %v7353, 0.0
    %v7418 = vmax.f32 %v7354, 0.0
    %v7419 = vmax.f32 %v7355, 0.0
    %v7420 = vmax.f32 %v7356, 0.0
    %v7421 = vmax.f32 %v7357, 0.0
    %v7422 = vmax.f32 %v7358, 0.0
    %v7423 = vmax.f32 %v7359, 0.0
    %v7424 = vmax.f32 %v7360, 0.0
    %v7425 = vmax.f32 %v7361, 0.0
    %v7426 = vmax.f32 %v7362, 0.0
    %v7427 = vmax.f32 %v7363, 0.0
    %v7428 = vmax.f32 %v7364, 0.0
    %v7429 = vmax.f32 %v7365, 0.0
    %v7430 = vmax.f32 %v7366, 0.0
    %v7431 = vmax.f32 %v7367, 0.0
    %v7432 = vmax.f32 %v7368, 0.0
    %v7433 = vmax.f32 %v7369, 0.0
    %v7434 = vmax.f32 %v7370, 0.0
    %v7435 = vmax.f32 %v7371, 0.0
    %v7436 = vmax.f32 %v7372, 0.0
    %v7437 = vmax.f32 %v7373, 0.0
    %v7438 = vmax.f32 %v7374, 0.0
    %v7439 = vmax.f32 %v7375, 0.0
    %v7440 = vmax.f32 %v7376, 0.0
    %v7441 = vmax.f32 %v7377, 0.0
    %v7442 = vmax.f32 %v7378, 0.0
    %v7443 = vmax.f32 %v7379, 0.0
    %v7444 = vadd.f32 %v7380, 1e-05
    %v7445 = vadd.f32 %v7381, 1e-05
    %v7446 = vadd.f32 %v7382, 1e-05
    %v7447 = vadd.f32 %v7383, 1e-05
    %v7448 = vadd.f32 %v7384, 1e-05
    %v7449 = vadd.f32 %v7385, 1e-05
    %v7450 = vadd.f32 %v7386, 1e-05
    %v7451 = vadd.f32 %v7387, 1e-05
    %v7452 = vadd.f32 %v7388, 1e-05
    %v7453 = vadd.f32 %v7389, 1e-05
    %v7454 = vadd.f32 %v7390, 1e-05
    %v7455 = vadd.f32 %v7391, 1e-05
    %v7456 = vadd.f32 %v7392, 1e-05
    %v7457 = vadd.f32 %v7393, 1e-05
    %v7458 = vadd.f32 %v7394, 1e-05
    %v7459 = vadd.f32 %v7395, 1e-05
    %v7460 = vadd.f32 %v7396, 1e-05
    %v7461 = vadd.f32 %v7397, 1e-05
    %v7462 = vadd.f32 %v7398, 1e-05
    %v7463 = vadd.f32 %v7399, 1e-05
    %v7464 = vadd.f32 %v7400, 1e-05
    %v7465 = vadd.f32 %v7401, 1e-05
    %v7466 = vadd.f32 %v7402, 1e-05
    %v7467 = vadd.f32 %v7403, 1e-05
    %v7468 = vadd.f32 %v7404, 1e-05
    %v7469 = vadd.f32 %v7405, 1e-05
    %v7470 = vadd.f32 %v7406, 1e-05
    %v7471 = vadd.f32 %v7407, 1e-05
    %v7472 = vadd.f32 %v7408, 1e-05
    %v7473 = vadd.f32 %v7409, 1e-05
    %v7474 = vadd.f32 %v7410, 1e-05
    %v7475 = vadd.f32 %v7411, 1e-05
    %v7476 = vadd.f32 %v7412, 1e-05
    %v7477 = vadd.f32 %v7413, 1e-05
    %v7478 = vadd.f32 %v7414, 1e-05
    %v7479 = vadd.f32 %v7415, 1e-05
    %v7480 = vadd.f32 %v7416, 1e-05
    %v7481 = vadd.f32 %v7417, 1e-05
    %v7482 = vadd.f32 %v7418, 1e-05
    %v7483 = vadd.f32 %v7419, 1e-05
    %v7484 = vadd.f32 %v7420, 1e-05
    %v7485 = vadd.f32 %v7421, 1e-05
    %v7486 = vadd.f32 %v7422, 1e-05
    %v7487 = vadd.f32 %v7423, 1e-05
    %v7488 = vadd.f32 %v7424, 1e-05
    %v7489 = vadd.f32 %v7425, 1e-05
    %v7490 = vadd.f32 %v7426, 1e-05
    %v7491 = vadd.f32 %v7427, 1e-05
    %v7492 = vadd.f32 %v7428, 1e-05
    %v7493 = vadd.f32 %v7429, 1e-05
    %v7494 = vadd.f32 %v7430, 1e-05
    %v7495 = vadd.f32 %v7431, 1e-05
    %v7496 = vadd.f32 %v7432, 1e-05
    %v7497 = vadd.f32 %v7433, 1e-05
    %v7498 = vadd.f32 %v7434, 1e-05
    %v7499 = vadd.f32 %v7435, 1e-05
    %v7500 = vadd.f32 %v7436, 1e-05
    %v7501 = vadd.f32 %v7437, 1e-05
    %v7502 = vadd.f32 %v7438, 1e-05
    %v7503 = vadd.f32 %v7439, 1e-05
    %v7504 = vadd.f32 %v7440, 1e-05
    %v7505 = vadd.f32 %v7441, 1e-05
    %v7506 = vadd.f32 %v7442, 1e-05
    %v7507 = vadd.f32 %v7443, 1e-05
    %v7508 = vrsqrt.pop %v7444
    %v7509 = vmul.f32 %v7508, %v7444
    %v7510 = vmul.f32 %v7509, %v7508
    %v7511 = vmul.f32 0.5, %v7510
    %v7512 = vsub.f32 1.5, %v7511
    %v7513 = vmul.f32 %v7508, %v7512
    %vm7514 = vweird.f32 %v7444
    %vm7515 = vweird.f32 %v7508
    %vm7516 = vmor %vm7514, %vm7515
    %v7517 = vsel %vm7516, %v7508, %v7513
    %v7518 = vrsqrt.pop %v7445
    %v7519 = vmul.f32 %v7518, %v7445
    %v7520 = vmul.f32 %v7519, %v7518
    %v7521 = vmul.f32 0.5, %v7520
    %v7522 = vsub.f32 1.5, %v7521
    %v7523 = vmul.f32 %v7518, %v7522
    %vm7524 = vweird.f32 %v7445
    %vm7525 = vweird.f32 %v7518
    %vm7526 = vmor %vm7524, %vm7525
    %v7527 = vsel %vm7526, %v7518, %v7523
    %v7528 = vrsqrt.pop %v7446
    %v7529 = vmul.f32 %v7528, %v7446
    %v7530 = vmul.f32 %v7529, %v7528
    %v7531 = vmul.f32 0.5, %v7530
    %v7532 = vsub.f32 1.5, %v7531
    %v7533 = vmul.f32 %v7528, %v7532
    %vm7534 = vweird.f32 %v7446
    %vm7535 = vweird.f32 %v7528
    %vm7536 = vmor %vm7534, %vm7535
    %v7537 = vsel %vm7536, %v7528, %v7533
    %v7538 = vrsqrt.pop %v7447
    %v7539 = vmul.f32 %v7538, %v7447
    %v7540 = vmul.f32 %v7539, %v7538
    %v7541 = vmul.f32 0.5, %v7540
    %v7542 = vsub.f32 1.5, %v7541
    %v7543 = vmul.f32 %v7538, %v7542
    %vm7544 = vweird.f32 %v7447
    %vm7545 = vweird.f32 %v7538
    %vm7546 = vmor %vm7544, %vm7545
    %v7547 = vsel %vm7546, %v7538, %v7543
    %v7548 = vrsqrt.pop %v7448
    %v7549 = vmul.f32 %v7548, %v7448
    %v7550 = vmul.f32 %v7549, %v7548
    %v7551 = vmul.f32 0.5, %v7550
    %v7552 = vsub.f32 1.5, %v7551
    %v7553 = vmul.f32 %v7548, %v7552
    %vm7554 = vweird.f32 %v7448
    %vm7555 = vweird.f32 %v7548
    %vm7556 = vmor %vm7554, %vm7555
    %v7557 = vsel %vm7556, %v7548, %v7553
    %v7558 = vrsqrt.pop %v7449
    %v7559 = vmul.f32 %v7558, %v7449
    %v7560 = vmul.f32 %v7559, %v7558
    %v7561 = vmul.f32 0.5, %v7560
    %v7562 = vsub.f32 1.5, %v7561
    %v7563 = vmul.f32 %v7558, %v7562
    %vm7564 = vweird.f32 %v7449
    %vm7565 = vweird.f32 %v7558
    %vm7566 = vmor %vm7564, %vm7565
    %v7567 = vsel %vm7566, %v7558, %v7563
    %v7568 = vrsqrt.pop %v7450
    %v7569 = vmul.f32 %v7568, %v7450
    %v7570 = vmul.f32 %v7569, %v7568
    %v7571 = vmul.f32 0.5, %v7570
    %v7572 = vsub.f32 1.5, %v7571
    %v7573 = vmul.f32 %v7568, %v7572
    %vm7574 = vweird.f32 %v7450
    %vm7575 = vweird.f32 %v7568
    %vm7576 = vmor %vm7574, %vm7575
    %v7577 = vsel %vm7576, %v7568, %v7573
    %v7578 = vrsqrt.pop %v7451
    %v7579 = vmul.f32 %v7578, %v7451
    %v7580 = vmul.f32 %v7579, %v7578
    %v7581 = vmul.f32 0.5, %v7580
    %v7582 = vsub.f32 1.5, %v7581
    %v7583 = vmul.f32 %v7578, %v7582
    %vm7584 = vweird.f32 %v7451
    %vm7585 = vweird.f32 %v7578
    %vm7586 = vmor %vm7584, %vm7585
    %v7587 = vsel %vm7586, %v7578, %v7583
    %v7588 = vrsqrt.pop %v7452
    %v7589 = vmul.f32 %v7588, %v7452
    %v7590 = vmul.f32 %v7589, %v7588
    %v7591 = vmul.f32 0.5, %v7590
    %v7592 = vsub.f32 1.5, %v7591
    %v7593 = vmul.f32 %v7588, %v7592
    %vm7594 = vweird.f32 %v7452
    %vm7595 = vweird.f32 %v7588
    %vm7596 = vmor %vm7594, %vm7595
    %v7597 = vsel %vm7596, %v7588, %v7593
    %v7598 = vrsqrt.pop %v7453
    %v7599 = vmul.f32 %v7598, %v7453
    %v7600 = vmul.f32 %v7599, %v7598
    %v7601 = vmul.f32 0.5, %v7600
    %v7602 = vsub.f32 1.5, %v7601
    %v7603 = vmul.f32 %v7598, %v7602
    %vm7604 = vweird.f32 %v7453
    %vm7605 = vweird.f32 %v7598
    %vm7606 = vmor %vm7604, %vm7605
    %v7607 = vsel %vm7606, %v7598, %v7603
    %v7608 = vrsqrt.pop %v7454
    %v7609 = vmul.f32 %v7608, %v7454
    %v7610 = vmul.f32 %v7609, %v7608
    %v7611 = vmul.f32 0.5, %v7610
    %v7612 = vsub.f32 1.5, %v7611
    %v7613 = vmul.f32 %v7608, %v7612
    %vm7614 = vweird.f32 %v7454
    %vm7615 = vweird.f32 %v7608
    %vm7616 = vmor %vm7614, %vm7615
    %v7617 = vsel %vm7616, %v7608, %v7613
    %v7618 = vrsqrt.pop %v7455
    %v7619 = vmul.f32 %v7618, %v7455
    %v7620 = vmul.f32 %v7619, %v7618
    %v7621 = vmul.f32 0.5, %v7620
    %v7622 = vsub.f32 1.5, %v7621
    %v7623 = vmul.f32 %v7618, %v7622
    %vm7624 = vweird.f32 %v7455
    %vm7625 = vweird.f32 %v7618
    %vm7626 = vmor %vm7624, %vm7625
    %v7627 = vsel %vm7626, %v7618, %v7623
    %v7628 = vrsqrt.pop %v7456
    %v7629 = vmul.f32 %v7628, %v7456
    %v7630 = vmul.f32 %v7629, %v7628
    %v7631 = vmul.f32 0.5, %v7630
    %v7632 = vsub.f32 1.5, %v7631
    %v7633 = vmul.f32 %v7628, %v7632
    %vm7634 = vweird.f32 %v7456
    %vm7635 = vweird.f32 %v7628
    %vm7636 = vmor %vm7634, %vm7635
    %v7637 = vsel %vm7636, %v7628, %v7633
    %v7638 = vrsqrt.pop %v7457
    %v7639 = vmul.f32 %v7638, %v7457
    %v7640 = vmul.f32 %v7639, %v7638
    %v7641 = vmul.f32 0.5, %v7640
    %v7642 = vsub.f32 1.5, %v7641
    %v7643 = vmul.f32 %v7638, %v7642
    %vm7644 = vweird.f32 %v7457
    %vm7645 = vweird.f32 %v7638
    %vm7646 = vmor %vm7644, %vm7645
    %v7647 = vsel %vm7646, %v7638, %v7643
    %v7648 = vrsqrt.pop %v7458
    %v7649 = vmul.f32 %v7648, %v7458
    %v7650 = vmul.f32 %v7649, %v7648
    %v7651 = vmul.f32 0.5, %v7650
    %v7652 = vsub.f32 1.5, %v7651
    %v7653 = vmul.f32 %v7648, %v7652
    %vm7654 = vweird.f32 %v7458
    %vm7655 = vweird.f32 %v7648
    %vm7656 = vmor %vm7654, %vm7655
    %v7657 = vsel %vm7656, %v7648, %v7653
    %v7658 = vrsqrt.pop %v7459
    %v7659 = vmul.f32 %v7658, %v7459
    %v7660 = vmul.f32 %v7659, %v7658
    %v7661 = vmul.f32 0.5, %v7660
    %v7662 = vsub.f32 1.5, %v7661
    %v7663 = vmul.f32 %v7658, %v7662
    %vm7664 = vweird.f32 %v7459
    %vm7665 = vweird.f32 %v7658
    %vm7666 = vmor %vm7664, %vm7665
    %v7667 = vsel %vm7666, %v7658, %v7663
    %v7668 = vrsqrt.pop %v7460
    %v7669 = vmul.f32 %v7668, %v7460
    %v7670 = vmul.f32 %v7669, %v7668
    %v7671 = vmul.f32 0.5, %v7670
    %v7672 = vsub.f32 1.5, %v7671
    %v7673 = vmul.f32 %v7668, %v7672
    %vm7674 = vweird.f32 %v7460
    %vm7675 = vweird.f32 %v7668
    %vm7676 = vmor %vm7674, %vm7675
    %v7677 = vsel %vm7676, %v7668, %v7673
    %v7678 = vrsqrt.pop %v7461
    %v7679 = vmul.f32 %v7678, %v7461
    %v7680 = vmul.f32 %v7679, %v7678
    %v7681 = vmul.f32 0.5, %v7680
    %v7682 = vsub.f32 1.5, %v7681
    %v7683 = vmul.f32 %v7678, %v7682
    %vm7684 = vweird.f32 %v7461
    %vm7685 = vweird.f32 %v7678
    %vm7686 = vmor %vm7684, %vm7685
    %v7687 = vsel %vm7686, %v7678, %v7683
    %v7688 = vrsqrt.pop %v7462
    %v7689 = vmul.f32 %v7688, %v7462
    %v7690 = vmul.f32 %v7689, %v7688
    %v7691 = vmul.f32 0.5, %v7690
    %v7692 = vsub.f32 1.5, %v7691
    %v7693 = vmul.f32 %v7688, %v7692
    %vm7694 = vweird.f32 %v7462
    %vm7695 = vweird.f32 %v7688
    %vm7696 = vmor %vm7694, %vm7695
    %v7697 = vsel %vm7696, %v7688, %v7693
    %v7698 = vrsqrt.pop %v7463
    %v7699 = vmul.f32 %v7698, %v7463
    %v7700 = vmul.f32 %v7699, %v7698
    %v7701 = vmul.f32 0.5, %v7700
    %v7702 = vsub.f32 1.5, %v7701
    %v7703 = vmul.f32 %v7698, %v7702
    %vm7704 = vweird.f32 %v7463
    %vm7705 = vweird.f32 %v7698
    %vm7706 = vmor %vm7704, %vm7705
    %v7707 = vsel %vm7706, %v7698, %v7703
    %v7708 = vrsqrt.pop %v7464
    %v7709 = vmul.f32 %v7708, %v7464
    %v7710 = vmul.f32 %v7709, %v7708
    %v7711 = vmul.f32 0.5, %v7710
    %v7712 = vsub.f32 1.5, %v7711
    %v7713 = vmul.f32 %v7708, %v7712
    %vm7714 = vweird.f32 %v7464
    %vm7715 = vweird.f32 %v7708
    %vm7716 = vmor %vm7714, %vm7715
    %v7717 = vsel %vm7716, %v7708, %v7713
    %v7718 = vrsqrt.pop %v7465
    %v7719 = vmul.f32 %v7718, %v7465
    %v7720 = vmul.f32 %v7719, %v7718
    %v7721 = vmul.f32 0.5, %v7720
    %v7722 = vsub.f32 1.5, %v7721
    %v7723 = vmul.f32 %v7718, %v7722
    %vm7724 = vweird.f32 %v7465
    %vm7725 = vweird.f32 %v7718
    %vm7726 = vmor %vm7724, %vm7725
    %v7727 = vsel %vm7726, %v7718, %v7723
    %v7728 = vrsqrt.pop %v7466
    %v7729 = vmul.f32 %v7728, %v7466
    %v7730 = vmul.f32 %v7729, %v7728
    %v7731 = vmul.f32 0.5, %v7730
    %v7732 = vsub.f32 1.5, %v7731
    %v7733 = vmul.f32 %v7728, %v7732
    %vm7734 = vweird.f32 %v7466
    %vm7735 = vweird.f32 %v7728
    %vm7736 = vmor %vm7734, %vm7735
    %v7737 = vsel %vm7736, %v7728, %v7733
    %v7738 = vrsqrt.pop %v7467
    %v7739 = vmul.f32 %v7738, %v7467
    %v7740 = vmul.f32 %v7739, %v7738
    %v7741 = vmul.f32 0.5, %v7740
    %v7742 = vsub.f32 1.5, %v7741
    %v7743 = vmul.f32 %v7738, %v7742
    %vm7744 = vweird.f32 %v7467
    %vm7745 = vweird.f32 %v7738
    %vm7746 = vmor %vm7744, %vm7745
    %v7747 = vsel %vm7746, %v7738, %v7743
    %v7748 = vrsqrt.pop %v7468
    %v7749 = vmul.f32 %v7748, %v7468
    %v7750 = vmul.f32 %v7749, %v7748
    %v7751 = vmul.f32 0.5, %v7750
    %v7752 = vsub.f32 1.5, %v7751
    %v7753 = vmul.f32 %v7748, %v7752
    %vm7754 = vweird.f32 %v7468
    %vm7755 = vweird.f32 %v7748
    %vm7756 = vmor %vm7754, %vm7755
    %v7757 = vsel %vm7756, %v7748, %v7753
    %v7758 = vrsqrt.pop %v7469
    %v7759 = vmul.f32 %v7758, %v7469
    %v7760 = vmul.f32 %v7759, %v7758
    %v7761 = vmul.f32 0.5, %v7760
    %v7762 = vsub.f32 1.5, %v7761
    %v7763 = vmul.f32 %v7758, %v7762
    %vm7764 = vweird.f32 %v7469
    %vm7765 = vweird.f32 %v7758
    %vm7766 = vmor %vm7764, %vm7765
    %v7767 = vsel %vm7766, %v7758, %v7763
    %v7768 = vrsqrt.pop %v7470
    %v7769 = vmul.f32 %v7768, %v7470
    %v7770 = vmul.f32 %v7769, %v7768
    %v7771 = vmul.f32 0.5, %v7770
    %v7772 = vsub.f32 1.5, %v7771
    %v7773 = vmul.f32 %v7768, %v7772
    %vm7774 = vweird.f32 %v7470
    %vm7775 = vweird.f32 %v7768
    %vm7776 = vmor %vm7774, %vm7775
    %v7777 = vsel %vm7776, %v7768, %v7773
    %v7778 = vrsqrt.pop %v7471
    %v7779 = vmul.f32 %v7778, %v7471
    %v7780 = vmul.f32 %v7779, %v7778
    %v7781 = vmul.f32 0.5, %v7780
    %v7782 = vsub.f32 1.5, %v7781
    %v7783 = vmul.f32 %v7778, %v7782
    %vm7784 = vweird.f32 %v7471
    %vm7785 = vweird.f32 %v7778
    %vm7786 = vmor %vm7784, %vm7785
    %v7787 = vsel %vm7786, %v7778, %v7783
    %v7788 = vrsqrt.pop %v7472
    %v7789 = vmul.f32 %v7788, %v7472
    %v7790 = vmul.f32 %v7789, %v7788
    %v7791 = vmul.f32 0.5, %v7790
    %v7792 = vsub.f32 1.5, %v7791
    %v7793 = vmul.f32 %v7788, %v7792
    %vm7794 = vweird.f32 %v7472
    %vm7795 = vweird.f32 %v7788
    %vm7796 = vmor %vm7794, %vm7795
    %v7797 = vsel %vm7796, %v7788, %v7793
    %v7798 = vrsqrt.pop %v7473
    %v7799 = vmul.f32 %v7798, %v7473
    %v7800 = vmul.f32 %v7799, %v7798
    %v7801 = vmul.f32 0.5, %v7800
    %v7802 = vsub.f32 1.5, %v7801
    %v7803 = vmul.f32 %v7798, %v7802
    %vm7804 = vweird.f32 %v7473
    %vm7805 = vweird.f32 %v7798
    %vm7806 = vmor %vm7804, %vm7805
    %v7807 = vsel %vm7806, %v7798, %v7803
    %v7808 = vrsqrt.pop %v7474
    %v7809 = vmul.f32 %v7808, %v7474
    %v7810 = vmul.f32 %v7809, %v7808
    %v7811 = vmul.f32 0.5, %v7810
    %v7812 = vsub.f32 1.5, %v7811
    %v7813 = vmul.f32 %v7808, %v7812
    %vm7814 = vweird.f32 %v7474
    %vm7815 = vweird.f32 %v7808
    %vm7816 = vmor %vm7814, %vm7815
    %v7817 = vsel %vm7816, %v7808, %v7813
    %v7818 = vrsqrt.pop %v7475
    %v7819 = vmul.f32 %v7818, %v7475
    %v7820 = vmul.f32 %v7819, %v7818
    %v7821 = vmul.f32 0.5, %v7820
    %v7822 = vsub.f32 1.5, %v7821
    %v7823 = vmul.f32 %v7818, %v7822
    %vm7824 = vweird.f32 %v7475
    %vm7825 = vweird.f32 %v7818
    %vm7826 = vmor %vm7824, %vm7825
    %v7827 = vsel %vm7826, %v7818, %v7823
    %v7828 = vrsqrt.pop %v7476
    %v7829 = vmul.f32 %v7828, %v7476
    %v7830 = vmul.f32 %v7829, %v7828
    %v7831 = vmul.f32 0.5, %v7830
    %v7832 = vsub.f32 1.5, %v7831
    %v7833 = vmul.f32 %v7828, %v7832
    %vm7834 = vweird.f32 %v7476
    %vm7835 = vweird.f32 %v7828
    %vm7836 = vmor %vm7834, %vm7835
    %v7837 = vsel %vm7836, %v7828, %v7833
    %v7838 = vrsqrt.pop %v7477
    %v7839 = vmul.f32 %v7838, %v7477
    %v7840 = vmul.f32 %v7839, %v7838
    %v7841 = vmul.f32 0.5, %v7840
    %v7842 = vsub.f32 1.5, %v7841
    %v7843 = vmul.f32 %v7838, %v7842
    %vm7844 = vweird.f32 %v7477
    %vm7845 = vweird.f32 %v7838
    %vm7846 = vmor %vm7844, %vm7845
    %v7847 = vsel %vm7846, %v7838, %v7843
    %v7848 = vrsqrt.pop %v7478
    %v7849 = vmul.f32 %v7848, %v7478
    %v7850 = vmul.f32 %v7849, %v7848
    %v7851 = vmul.f32 0.5, %v7850
    %v7852 = vsub.f32 1.5, %v7851
    %v7853 = vmul.f32 %v7848, %v7852
    %vm7854 = vweird.f32 %v7478
    %vm7855 = vweird.f32 %v7848
    %vm7856 = vmor %vm7854, %vm7855
    %v7857 = vsel %vm7856, %v7848, %v7853
    %v7858 = vrsqrt.pop %v7479
    %v7859 = vmul.f32 %v7858, %v7479
    %v7860 = vmul.f32 %v7859, %v7858
    %v7861 = vmul.f32 0.5, %v7860
    %v7862 = vsub.f32 1.5, %v7861
    %v7863 = vmul.f32 %v7858, %v7862
    %vm7864 = vweird.f32 %v7479
    %vm7865 = vweird.f32 %v7858
    %vm7866 = vmor %vm7864, %vm7865
    %v7867 = vsel %vm7866, %v7858, %v7863
    %v7868 = vrsqrt.pop %v7480
    %v7869 = vmul.f32 %v7868, %v7480
    %v7870 = vmul.f32 %v7869, %v7868
    %v7871 = vmul.f32 0.5, %v7870
    %v7872 = vsub.f32 1.5, %v7871
    %v7873 = vmul.f32 %v7868, %v7872
    %vm7874 = vweird.f32 %v7480
    %vm7875 = vweird.f32 %v7868
    %vm7876 = vmor %vm7874, %vm7875
    %v7877 = vsel %vm7876, %v7868, %v7873
    %v7878 = vrsqrt.pop %v7481
    %v7879 = vmul.f32 %v7878, %v7481
    %v7880 = vmul.f32 %v7879, %v7878
    %v7881 = vmul.f32 0.5, %v7880
    %v7882 = vsub.f32 1.5, %v7881
    %v7883 = vmul.f32 %v7878, %v7882
    %vm7884 = vweird.f32 %v7481
    %vm7885 = vweird.f32 %v7878
    %vm7886 = vmor %vm7884, %vm7885
    %v7887 = vsel %vm7886, %v7878, %v7883
    %v7888 = vrsqrt.pop %v7482
    %v7889 = vmul.f32 %v7888, %v7482
    %v7890 = vmul.f32 %v7889, %v7888
    %v7891 = vmul.f32 0.5, %v7890
    %v7892 = vsub.f32 1.5, %v7891
    %v7893 = vmul.f32 %v7888, %v7892
    %vm7894 = vweird.f32 %v7482
    %vm7895 = vweird.f32 %v7888
    %vm7896 = vmor %vm7894, %vm7895
    %v7897 = vsel %vm7896, %v7888, %v7893
    %v7898 = vrsqrt.pop %v7483
    %v7899 = vmul.f32 %v7898, %v7483
    %v7900 = vmul.f32 %v7899, %v7898
    %v7901 = vmul.f32 0.5, %v7900
    %v7902 = vsub.f32 1.5, %v7901
    %v7903 = vmul.f32 %v7898, %v7902
    %vm7904 = vweird.f32 %v7483
    %vm7905 = vweird.f32 %v7898
    %vm7906 = vmor %vm7904, %vm7905
    %v7907 = vsel %vm7906, %v7898, %v7903
    %v7908 = vrsqrt.pop %v7484
    %v7909 = vmul.f32 %v7908, %v7484
    %v7910 = vmul.f32 %v7909, %v7908
    %v7911 = vmul.f32 0.5, %v7910
    %v7912 = vsub.f32 1.5, %v7911
    %v7913 = vmul.f32 %v7908, %v7912
    %vm7914 = vweird.f32 %v7484
    %vm7915 = vweird.f32 %v7908
    %vm7916 = vmor %vm7914, %vm7915
    %v7917 = vsel %vm7916, %v7908, %v7913
    %v7918 = vrsqrt.pop %v7485
    %v7919 = vmul.f32 %v7918, %v7485
    %v7920 = vmul.f32 %v7919, %v7918
    %v7921 = vmul.f32 0.5, %v7920
    %v7922 = vsub.f32 1.5, %v7921
    %v7923 = vmul.f32 %v7918, %v7922
    %vm7924 = vweird.f32 %v7485
    %vm7925 = vweird.f32 %v7918
    %vm7926 = vmor %vm7924, %vm7925
    %v7927 = vsel %vm7926, %v7918, %v7923
    %v7928 = vrsqrt.pop %v7486
    %v7929 = vmul.f32 %v7928, %v7486
    %v7930 = vmul.f32 %v7929, %v7928
    %v7931 = vmul.f32 0.5, %v7930
    %v7932 = vsub.f32 1.5, %v7931
    %v7933 = vmul.f32 %v7928, %v7932
    %vm7934 = vweird.f32 %v7486
    %vm7935 = vweird.f32 %v7928
    %vm7936 = vmor %vm7934, %vm7935
    %v7937 = vsel %vm7936, %v7928, %v7933
    %v7938 = vrsqrt.pop %v7487
    %v7939 = vmul.f32 %v7938, %v7487
    %v7940 = vmul.f32 %v7939, %v7938
    %v7941 = vmul.f32 0.5, %v7940
    %v7942 = vsub.f32 1.5, %v7941
    %v7943 = vmul.f32 %v7938, %v7942
    %vm7944 = vweird.f32 %v7487
    %vm7945 = vweird.f32 %v7938
    %vm7946 = vmor %vm7944, %vm7945
    %v7947 = vsel %vm7946, %v7938, %v7943
    %v7948 = vrsqrt.pop %v7488
    %v7949 = vmul.f32 %v7948, %v7488
    %v7950 = vmul.f32 %v7949, %v7948
    %v7951 = vmul.f32 0.5, %v7950
    %v7952 = vsub.f32 1.5, %v7951
    %v7953 = vmul.f32 %v7948, %v7952
    %vm7954 = vweird.f32 %v7488
    %vm7955 = vweird.f32 %v7948
    %vm7956 = vmor %vm7954, %vm7955
    %v7957 = vsel %vm7956, %v7948, %v7953
    %v7958 = vrsqrt.pop %v7489
    %v7959 = vmul.f32 %v7958, %v7489
    %v7960 = vmul.f32 %v7959, %v7958
    %v7961 = vmul.f32 0.5, %v7960
    %v7962 = vsub.f32 1.5, %v7961
    %v7963 = vmul.f32 %v7958, %v7962
    %vm7964 = vweird.f32 %v7489
    %vm7965 = vweird.f32 %v7958
    %vm7966 = vmor %vm7964, %vm7965
    %v7967 = vsel %vm7966, %v7958, %v7963
    %v7968 = vrsqrt.pop %v7490
    %v7969 = vmul.f32 %v7968, %v7490
    %v7970 = vmul.f32 %v7969, %v7968
    %v7971 = vmul.f32 0.5, %v7970
    %v7972 = vsub.f32 1.5, %v7971
    %v7973 = vmul.f32 %v7968, %v7972
    %vm7974 = vweird.f32 %v7490
    %vm7975 = vweird.f32 %v7968
    %vm7976 = vmor %vm7974, %vm7975
    %v7977 = vsel %vm7976, %v7968, %v7973
    %v7978 = vrsqrt.pop %v7491
    %v7979 = vmul.f32 %v7978, %v7491
    %v7980 = vmul.f32 %v7979, %v7978
    %v7981 = vmul.f32 0.5, %v7980
    %v7982 = vsub.f32 1.5, %v7981
    %v7983 = vmul.f32 %v7978, %v7982
    %vm7984 = vweird.f32 %v7491
    %vm7985 = vweird.f32 %v7978
    %vm7986 = vmor %vm7984, %vm7985
    %v7987 = vsel %vm7986, %v7978, %v7983
    %v7988 = vrsqrt.pop %v7492
    %v7989 = vmul.f32 %v7988, %v7492
    %v7990 = vmul.f32 %v7989, %v7988
    %v7991 = vmul.f32 0.5, %v7990
    %v7992 = vsub.f32 1.5, %v7991
    %v7993 = vmul.f32 %v7988, %v7992
    %vm7994 = vweird.f32 %v7492
    %vm7995 = vweird.f32 %v7988
    %vm7996 = vmor %vm7994, %vm7995
    %v7997 = vsel %vm7996, %v7988, %v7993
    %v7998 = vrsqrt.pop %v7493
    %v7999 = vmul.f32 %v7998, %v7493
    %v8000 = vmul.f32 %v7999, %v7998
    %v8001 = vmul.f32 0.5, %v8000
    %v8002 = vsub.f32 1.5, %v8001
    %v8003 = vmul.f32 %v7998, %v8002
    %vm8004 = vweird.f32 %v7493
    %vm8005 = vweird.f32 %v7998
    %vm8006 = vmor %vm8004, %vm8005
    %v8007 = vsel %vm8006, %v7998, %v8003
    %v8008 = vrsqrt.pop %v7494
    %v8009 = vmul.f32 %v8008, %v7494
    %v8010 = vmul.f32 %v8009, %v8008
    %v8011 = vmul.f32 0.5, %v8010
    %v8012 = vsub.f32 1.5, %v8011
    %v8013 = vmul.f32 %v8008, %v8012
    %vm8014 = vweird.f32 %v7494
    %vm8015 = vweird.f32 %v8008
    %vm8016 = vmor %vm8014, %vm8015
    %v8017 = vsel %vm8016, %v8008, %v8013
    %v8018 = vrsqrt.pop %v7495
    %v8019 = vmul.f32 %v8018, %v7495
    %v8020 = vmul.f32 %v8019, %v8018
    %v8021 = vmul.f32 0.5, %v8020
    %v8022 = vsub.f32 1.5, %v8021
    %v8023 = vmul.f32 %v8018, %v8022
    %vm8024 = vweird.f32 %v7495
    %vm8025 = vweird.f32 %v8018
    %vm8026 = vmor %vm8024, %vm8025
    %v8027 = vsel %vm8026, %v8018, %v8023
    %v8028 = vrsqrt.pop %v7496
    %v8029 = vmul.f32 %v8028, %v7496
    %v8030 = vmul.f32 %v8029, %v8028
    %v8031 = vmul.f32 0.5, %v8030
    %v8032 = vsub.f32 1.5, %v8031
    %v8033 = vmul.f32 %v8028, %v8032
    %vm8034 = vweird.f32 %v7496
    %vm8035 = vweird.f32 %v8028
    %vm8036 = vmor %vm8034, %vm8035
    %v8037 = vsel %vm8036, %v8028, %v8033
    %v8038 = vrsqrt.pop %v7497
    %v8039 = vmul.f32 %v8038, %v7497
    %v8040 = vmul.f32 %v8039, %v8038
    %v8041 = vmul.f32 0.5, %v8040
    %v8042 = vsub.f32 1.5, %v8041
    %v8043 = vmul.f32 %v8038, %v8042
    %vm8044 = vweird.f32 %v7497
    %vm8045 = vweird.f32 %v8038
    %vm8046 = vmor %vm8044, %vm8045
    %v8047 = vsel %vm8046, %v8038, %v8043
    %v8048 = vrsqrt.pop %v7498
    %v8049 = vmul.f32 %v8048, %v7498
    %v8050 = vmul.f32 %v8049, %v8048
    %v8051 = vmul.f32 0.5, %v8050
    %v8052 = vsub.f32 1.5, %v8051
    %v8053 = vmul.f32 %v8048, %v8052
    %vm8054 = vweird.f32 %v7498
    %vm8055 = vweird.f32 %v8048
    %vm8056 = vmor %vm8054, %vm8055
    %v8057 = vsel %vm8056, %v8048, %v8053
    %v8058 = vrsqrt.pop %v7499
    %v8059 = vmul.f32 %v8058, %v7499
    %v8060 = vmul.f32 %v8059, %v8058
    %v8061 = vmul.f32 0.5, %v8060
    %v8062 = vsub.f32 1.5, %v8061
    %v8063 = vmul.f32 %v8058, %v8062
    %vm8064 = vweird.f32 %v7499
    %vm8065 = vweird.f32 %v8058
    %vm8066 = vmor %vm8064, %vm8065
    %v8067 = vsel %vm8066, %v8058, %v8063
    %v8068 = vrsqrt.pop %v7500
    %v8069 = vmul.f32 %v8068, %v7500
    %v8070 = vmul.f32 %v8069, %v8068
    %v8071 = vmul.f32 0.5, %v8070
    %v8072 = vsub.f32 1.5, %v8071
    %v8073 = vmul.f32 %v8068, %v8072
    %vm8074 = vweird.f32 %v7500
    %vm8075 = vweird.f32 %v8068
    %vm8076 = vmor %vm8074, %vm8075
    %v8077 = vsel %vm8076, %v8068, %v8073
    %v8078 = vrsqrt.pop %v7501
    %v8079 = vmul.f32 %v8078, %v7501
    %v8080 = vmul.f32 %v8079, %v8078
    %v8081 = vmul.f32 0.5, %v8080
    %v8082 = vsub.f32 1.5, %v8081
    %v8083 = vmul.f32 %v8078, %v8082
    %vm8084 = vweird.f32 %v7501
    %vm8085 = vweird.f32 %v8078
    %vm8086 = vmor %vm8084, %vm8085
    %v8087 = vsel %vm8086, %v8078, %v8083
    %v8088 = vrsqrt.pop %v7502
    %v8089 = vmul.f32 %v8088, %v7502
    %v8090 = vmul.f32 %v8089, %v8088
    %v8091 = vmul.f32 0.5, %v8090
    %v8092 = vsub.f32 1.5, %v8091
    %v8093 = vmul.f32 %v8088, %v8092
    %vm8094 = vweird.f32 %v7502
    %vm8095 = vweird.f32 %v8088
    %vm8096 = vmor %vm8094, %vm8095
    %v8097 = vsel %vm8096, %v8088, %v8093
    %v8098 = vrsqrt.pop %v7503
    %v8099 = vmul.f32 %v8098, %v7503
    %v8100 = vmul.f32 %v8099, %v8098
    %v8101 = vmul.f32 0.5, %v8100
    %v8102 = vsub.f32 1.5, %v8101
    %v8103 = vmul.f32 %v8098, %v8102
    %vm8104 = vweird.f32 %v7503
    %vm8105 = vweird.f32 %v8098
    %vm8106 = vmor %vm8104, %vm8105
    %v8107 = vsel %vm8106, %v8098, %v8103
    %v8108 = vrsqrt.pop %v7504
    %v8109 = vmul.f32 %v8108, %v7504
    %v8110 = vmul.f32 %v8109, %v8108
    %v8111 = vmul.f32 0.5, %v8110
    %v8112 = vsub.f32 1.5, %v8111
    %v8113 = vmul.f32 %v8108, %v8112
    %vm8114 = vweird.f32 %v7504
    %vm8115 = vweird.f32 %v8108
    %vm8116 = vmor %vm8114, %vm8115
    %v8117 = vsel %vm8116, %v8108, %v8113
    %v8118 = vrsqrt.pop %v7505
    %v8119 = vmul.f32 %v8118, %v7505
    %v8120 = vmul.f32 %v8119, %v8118
    %v8121 = vmul.f32 0.5, %v8120
    %v8122 = vsub.f32 1.5, %v8121
    %v8123 = vmul.f32 %v8118, %v8122
    %vm8124 = vweird.f32 %v7505
    %vm8125 = vweird.f32 %v8118
    %vm8126 = vmor %vm8124, %vm8125
    %v8127 = vsel %vm8126, %v8118, %v8123
    %v8128 = vrsqrt.pop %v7506
    %v8129 = vmul.f32 %v8128, %v7506
    %v8130 = vmul.f32 %v8129, %v8128
    %v8131 = vmul.f32 0.5, %v8130
    %v8132 = vsub.f32 1.5, %v8131
    %v8133 = vmul.f32 %v8128, %v8132
    %vm8134 = vweird.f32 %v7506
    %vm8135 = vweird.f32 %v8128
    %vm8136 = vmor %vm8134, %vm8135
    %v8137 = vsel %vm8136, %v8128, %v8133
    %v8138 = vrsqrt.pop %v7507
    %v8139 = vmul.f32 %v8138, %v7507
    %v8140 = vmul.f32 %v8139, %v8138
    %v8141 = vmul.f32 0.5, %v8140
    %v8142 = vsub.f32 1.5, %v8141
    %v8143 = vmul.f32 %v8138, %v8142
    %vm8144 = vweird.f32 %v7507
    %vm8145 = vweird.f32 %v8138
    %vm8146 = vmor %vm8144, %vm8145
    %v8147 = vsel %vm8146, %v8138, %v8143
    %v8148 = vsub.f32 %v6731, %v6932
    %v8149 = vsub.f32 %v6732, %v6933
    %v8150 = vsub.f32 %v6733, %v6934
    %v8151 = vsub.f32 %v6734, %v6935
    %v8152 = vsub.f32 %v6735, %v6936
    %v8153 = vsub.f32 %v6736, %v6937
    %v8154 = vsub.f32 %v6737, %v6938
    %v8155 = vsub.f32 %v6738, %v6939
    %v8156 = vsub.f32 %v6739, %v6940
    %v8157 = vsub.f32 %v6740, %v6941
    %v8158 = vsub.f32 %v6741, %v6942
    %v8159 = vsub.f32 %v6742, %v6943
    %v8160 = vsub.f32 %v6743, %v6944
    %v8161 = vsub.f32 %v6744, %v6945
    %v8162 = vsub.f32 %v6745, %v6946
    %v8163 = vsub.f32 %v6746, %v6947
    %v8164 = vsub.f32 %v6747, %v6948
    %v8165 = vsub.f32 %v6748, %v6949
    %v8166 = vsub.f32 %v6749, %v6950
    %v8167 = vsub.f32 %v6750, %v6951
    %v8168 = vsub.f32 %v6751, %v6952
    %v8169 = vsub.f32 %v6752, %v6953
    %v8170 = vsub.f32 %v6753, %v6954
    %v8171 = vsub.f32 %v6754, %v6955
    %v8172 = vsub.f32 %v6755, %v6956
    %v8173 = vsub.f32 %v6756, %v6957
    %v8174 = vsub.f32 %v6757, %v6958
    %v8175 = vsub.f32 %v6758, %v6959
    %v8176 = vsub.f32 %v6759, %v6960
    %v8177 = vsub.f32 %v6760, %v6961
    %v8178 = vsub.f32 %v6761, %v6962
    %v8179 = vsub.f32 %v6762, %v6963
    %v8180 = vsub.f32 %v6763, %v6964
    %v8181 = vsub.f32 %v6764, %v6965
    %v8182 = vsub.f32 %v6765, %v6966
    %v8183 = vsub.f32 %v6766, %v6967
    %v8184 = vsub.f32 %v6767, %v6968
    %v8185 = vsub.f32 %v6768, %v6969
    %v8186 = vsub.f32 %v6769, %v6970
    %v8187 = vsub.f32 %v6770, %v6971
    %v8188 = vsub.f32 %v6771, %v6972
    %v8189 = vsub.f32 %v6772, %v6973
    %v8190 = vsub.f32 %v6773, %v6974
    %v8191 = vsub.f32 %v6774, %v6975
    %v8192 = vsub.f32 %v6775, %v6976
    %v8193 = vsub.f32 %v6776, %v6977
    %v8194 = vsub.f32 %v6777, %v6978
    %v8195 = vsub.f32 %v6778, %v6979
    %v8196 = vsub.f32 %v6779, %v6980
    %v8197 = vsub.f32 %v6780, %v6981
    %v8198 = vsub.f32 %v6781, %v6982
    %v8199 = vsub.f32 %v6782, %v6983
    %v8200 = vsub.f32 %v6783, %v6984
    %v8201 = vsub.f32 %v6784, %v6985
    %v8202 = vsub.f32 %v6785, %v6986
    %v8203 = vsub.f32 %v6786, %v6987
    %v8204 = vsub.f32 %v6787, %v6988
    %v8205 = vsub.f32 %v6788, %v6989
    %v8206 = vsub.f32 %v6789, %v6990
    %v8207 = vsub.f32 %v6790, %v6991
    %v8208 = vsub.f32 %v6791, %v6992
    %v8209 = vsub.f32 %v6792, %v6993
    %v8210 = vsub.f32 %v6793, %v6994
    %v8211 = vsub.f32 %v6794, %v6995
    %v8212 = vmul.f32 %v8148, %v7517
    %v8213 = vmul.f32 %v8149, %v7527
    %v8214 = vmul.f32 %v8150, %v7537
    %v8215 = vmul.f32 %v8151, %v7547
    %v8216 = vmul.f32 %v8152, %v7557
    %v8217 = vmul.f32 %v8153, %v7567
    %v8218 = vmul.f32 %v8154, %v7577
    %v8219 = vmul.f32 %v8155, %v7587
    %v8220 = vmul.f32 %v8156, %v7597
    %v8221 = vmul.f32 %v8157, %v7607
    %v8222 = vmul.f32 %v8158, %v7617
    %v8223 = vmul.f32 %v8159, %v7627
    %v8224 = vmul.f32 %v8160, %v7637
    %v8225 = vmul.f32 %v8161, %v7647
    %v8226 = vmul.f32 %v8162, %v7657
    %v8227 = vmul.f32 %v8163, %v7667
    %v8228 = vmul.f32 %v8164, %v7677
    %v8229 = vmul.f32 %v8165, %v7687
    %v8230 = vmul.f32 %v8166, %v7697
    %v8231 = vmul.f32 %v8167, %v7707
    %v8232 = vmul.f32 %v8168, %v7717
    %v8233 = vmul.f32 %v8169, %v7727
    %v8234 = vmul.f32 %v8170, %v7737
    %v8235 = vmul.f32 %v8171, %v7747
    %v8236 = vmul.f32 %v8172, %v7757
    %v8237 = vmul.f32 %v8173, %v7767
    %v8238 = vmul.f32 %v8174, %v7777
    %v8239 = vmul.f32 %v8175, %v7787
    %v8240 = vmul.f32 %v8176, %v7797
    %v8241 = vmul.f32 %v8177, %v7807
    %v8242 = vmul.f32 %v8178, %v7817
    %v8243 = vmul.f32 %v8179, %v7827
    %v8244 = vmul.f32 %v8180, %v7837
    %v8245 = vmul.f32 %v8181, %v7847
    %v8246 = vmul.f32 %v8182, %v7857
    %v8247 = vmul.f32 %v8183, %v7867
    %v8248 = vmul.f32 %v8184, %v7877
    %v8249 = vmul.f32 %v8185, %v7887
    %v8250 = vmul.f32 %v8186, %v7897
    %v8251 = vmul.f32 %v8187, %v7907
    %v8252 = vmul.f32 %v8188, %v7917
    %v8253 = vmul.f32 %v8189, %v7927
    %v8254 = vmul.f32 %v8190, %v7937
    %v8255 = vmul.f32 %v8191, %v7947
    %v8256 = vmul.f32 %v8192, %v7957
    %v8257 = vmul.f32 %v8193, %v7967
    %v8258 = vmul.f32 %v8194, %v7977
    %v8259 = vmul.f32 %v8195, %v7987
    %v8260 = vmul.f32 %v8196, %v7997
    %v8261 = vmul.f32 %v8197, %v8007
    %v8262 = vmul.f32 %v8198, %v8017
    %v8263 = vmul.f32 %v8199, %v8027
    %v8264 = vmul.f32 %v8200, %v8037
    %v8265 = vmul.f32 %v8201, %v8047
    %v8266 = vmul.f32 %v8202, %v8057
    %v8267 = vmul.f32 %v8203, %v8067
    %v8268 = vmul.f32 %v8204, %v8077
    %v8269 = vmul.f32 %v8205, %v8087
    %v8270 = vmul.f32 %v8206, %v8097
    %v8271 = vmul.f32 %v8207, %v8107
    %v8272 = vmul.f32 %v8208, %v8117
    %v8273 = vmul.f32 %v8209, %v8127
    %v8274 = vmul.f32 %v8210, %v8137
    %v8275 = vmul.f32 %v8211, %v8147
    %v8277 = vperm.slane %v6795, 0
    %v8279 = vmul.f32 %v8212, %v8277
    %v8280 = vmul.f32 %v8213, %v8277
    %v8281 = vmul.f32 %v8214, %v8277
    %v8282 = vmul.f32 %v8215, %v8277
    %v8283 = vmul.f32 %v8216, %v8277
    %v8284 = vmul.f32 %v8217, %v8277
    %v8285 = vmul.f32 %v8218, %v8277
    %v8286 = vmul.f32 %v8219, %v8277
    %v8287 = vmul.f32 %v8220, %v8277
    %v8288 = vmul.f32 %v8221, %v8277
    %v8289 = vmul.f32 %v8222, %v8277
    %v8290 = vmul.f32 %v8223, %v8277
    %v8291 = vmul.f32 %v8224, %v8277
    %v8292 = vmul.f32 %v8225, %v8277
    %v8293 = vmul.f32 %v8226, %v8277
    %v8294 = vmul.f32 %v8227, %v8277
    %v8295 = vmul.f32 %v8228, %v8277
    %v8296 = vmul.f32 %v8229, %v8277
    %v8297 = vmul.f32 %v8230, %v8277
    %v8298 = vmul.f32 %v8231, %v8277
    %v8299 = vmul.f32 %v8232, %v8277
    %v8300 = vmul.f32 %v8233, %v8277
    %v8301 = vmul.f32 %v8234, %v8277
    %v8302 = vmul.f32 %v8235, %v8277
    %v8303 = vmul.f32 %v8236, %v8277
    %v8304 = vmul.f32 %v8237, %v8277
    %v8305 = vmul.f32 %v8238, %v8277
    %v8306 = vmul.f32 %v8239, %v8277
    %v8307 = vmul.f32 %v8240, %v8277
    %v8308 = vmul.f32 %v8241, %v8277
    %v8309 = vmul.f32 %v8242, %v8277
    %v8310 = vmul.f32 %v8243, %v8277
    %v8311 = vmul.f32 %v8244, %v8277
    %v8312 = vmul.f32 %v8245, %v8277
    %v8313 = vmul.f32 %v8246, %v8277
    %v8314 = vmul.f32 %v8247, %v8277
    %v8315 = vmul.f32 %v8248, %v8277
    %v8316 = vmul.f32 %v8249, %v8277
    %v8317 = vmul.f32 %v8250, %v8277
    %v8318 = vmul.f32 %v8251, %v8277
    %v8319 = vmul.f32 %v8252, %v8277
    %v8320 = vmul.f32 %v8253, %v8277
    %v8321 = vmul.f32 %v8254, %v8277
    %v8322 = vmul.f32 %v8255, %v8277
    %v8323 = vmul.f32 %v8256, %v8277
    %v8324 = vmul.f32 %v8257, %v8277
    %v8325 = vmul.f32 %v8258, %v8277
    %v8326 = vmul.f32 %v8259, %v8277
    %v8327 = vmul.f32 %v8260, %v8277
    %v8328 = vmul.f32 %v8261, %v8277
    %v8329 = vmul.f32 %v8262, %v8277
    %v8330 = vmul.f32 %v8263, %v8277
    %v8331 = vmul.f32 %v8264, %v8277
    %v8332 = vmul.f32 %v8265, %v8277
    %v8333 = vmul.f32 %v8266, %v8277
    %v8334 = vmul.f32 %v8267, %v8277
    %v8335 = vmul.f32 %v8268, %v8277
    %v8336 = vmul.f32 %v8269, %v8277
    %v8337 = vmul.f32 %v8270, %v8277
    %v8338 = vmul.f32 %v8271, %v8277
    %v8339 = vmul.f32 %v8272, %v8277
    %v8340 = vmul.f32 %v8273, %v8277
    %v8341 = vmul.f32 %v8274, %v8277
    %v8342 = vmul.f32 %v8275, %v8277
    %v8344 = vperm.slane %v6796, 0
    %v8346 = vadd.f32 %v8279, %v8344
    %v8347 = vadd.f32 %v8280, %v8344
    %v8348 = vadd.f32 %v8281, %v8344
    %v8349 = vadd.f32 %v8282, %v8344
    %v8350 = vadd.f32 %v8283, %v8344
    %v8351 = vadd.f32 %v8284, %v8344
    %v8352 = vadd.f32 %v8285, %v8344
    %v8353 = vadd.f32 %v8286, %v8344
    %v8354 = vadd.f32 %v8287, %v8344
    %v8355 = vadd.f32 %v8288, %v8344
    %v8356 = vadd.f32 %v8289, %v8344
    %v8357 = vadd.f32 %v8290, %v8344
    %v8358 = vadd.f32 %v8291, %v8344
    %v8359 = vadd.f32 %v8292, %v8344
    %v8360 = vadd.f32 %v8293, %v8344
    %v8361 = vadd.f32 %v8294, %v8344
    %v8362 = vadd.f32 %v8295, %v8344
    %v8363 = vadd.f32 %v8296, %v8344
    %v8364 = vadd.f32 %v8297, %v8344
    %v8365 = vadd.f32 %v8298, %v8344
    %v8366 = vadd.f32 %v8299, %v8344
    %v8367 = vadd.f32 %v8300, %v8344
    %v8368 = vadd.f32 %v8301, %v8344
    %v8369 = vadd.f32 %v8302, %v8344
    %v8370 = vadd.f32 %v8303, %v8344
    %v8371 = vadd.f32 %v8304, %v8344
    %v8372 = vadd.f32 %v8305, %v8344
    %v8373 = vadd.f32 %v8306, %v8344
    %v8374 = vadd.f32 %v8307, %v8344
    %v8375 = vadd.f32 %v8308, %v8344
    %v8376 = vadd.f32 %v8309, %v8344
    %v8377 = vadd.f32 %v8310, %v8344
    %v8378 = vadd.f32 %v8311, %v8344
    %v8379 = vadd.f32 %v8312, %v8344
    %v8380 = vadd.f32 %v8313, %v8344
    %v8381 = vadd.f32 %v8314, %v8344
    %v8382 = vadd.f32 %v8315, %v8344
    %v8383 = vadd.f32 %v8316, %v8344
    %v8384 = vadd.f32 %v8317, %v8344
    %v8385 = vadd.f32 %v8318, %v8344
    %v8386 = vadd.f32 %v8319, %v8344
    %v8387 = vadd.f32 %v8320, %v8344
    %v8388 = vadd.f32 %v8321, %v8344
    %v8389 = vadd.f32 %v8322, %v8344
    %v8390 = vadd.f32 %v8323, %v8344
    %v8391 = vadd.f32 %v8324, %v8344
    %v8392 = vadd.f32 %v8325, %v8344
    %v8393 = vadd.f32 %v8326, %v8344
    %v8394 = vadd.f32 %v8327, %v8344
    %v8395 = vadd.f32 %v8328, %v8344
    %v8396 = vadd.f32 %v8329, %v8344
    %v8397 = vadd.f32 %v8330, %v8344
    %v8398 = vadd.f32 %v8331, %v8344
    %v8399 = vadd.f32 %v8332, %v8344
    %v8400 = vadd.f32 %v8333, %v8344
    %v8401 = vadd.f32 %v8334, %v8344
    %v8402 = vadd.f32 %v8335, %v8344
    %v8403 = vadd.f32 %v8336, %v8344
    %v8404 = vadd.f32 %v8337, %v8344
    %v8405 = vadd.f32 %v8338, %v8344
    %v8406 = vadd.f32 %v8339, %v8344
    %v8407 = vadd.f32 %v8340, %v8344
    %v8408 = vadd.f32 %v8341, %v8344
    %v8409 = vadd.f32 %v8342, %v8344
    %v8410 = vadd.f32 %v8346, %v180
    %v8411 = vadd.f32 %v8347, %v181
    %v8412 = vadd.f32 %v8348, %v182
    %v8413 = vadd.f32 %v8349, %v183
    %v8414 = vadd.f32 %v8350, %v184
    %v8415 = vadd.f32 %v8351, %v185
    %v8416 = vadd.f32 %v8352, %v186
    %v8417 = vadd.f32 %v8353, %v187
    %v8418 = vadd.f32 %v8354, %v188
    %v8419 = vadd.f32 %v8355, %v189
    %v8420 = vadd.f32 %v8356, %v190
    %v8421 = vadd.f32 %v8357, %v191
    %v8422 = vadd.f32 %v8358, %v192
    %v8423 = vadd.f32 %v8359, %v193
    %v8424 = vadd.f32 %v8360, %v194
    %v8425 = vadd.f32 %v8361, %v195
    %v8426 = vadd.f32 %v8362, %v196
    %v8427 = vadd.f32 %v8363, %v197
    %v8428 = vadd.f32 %v8364, %v198
    %v8429 = vadd.f32 %v8365, %v199
    %v8430 = vadd.f32 %v8366, %v200
    %v8431 = vadd.f32 %v8367, %v201
    %v8432 = vadd.f32 %v8368, %v202
    %v8433 = vadd.f32 %v8369, %v203
    %v8434 = vadd.f32 %v8370, %v204
    %v8435 = vadd.f32 %v8371, %v205
    %v8436 = vadd.f32 %v8372, %v206
    %v8437 = vadd.f32 %v8373, %v207
    %v8438 = vadd.f32 %v8374, %v208
    %v8439 = vadd.f32 %v8375, %v209
    %v8440 = vadd.f32 %v8376, %v210
    %v8441 = vadd.f32 %v8377, %v211
    %v8442 = vadd.f32 %v8378, %v212
    %v8443 = vadd.f32 %v8379, %v213
    %v8444 = vadd.f32 %v8380, %v214
    %v8445 = vadd.f32 %v8381, %v215
    %v8446 = vadd.f32 %v8382, %v216
    %v8447 = vadd.f32 %v8383, %v217
    %v8448 = vadd.f32 %v8384, %v218
    %v8449 = vadd.f32 %v8385, %v219
    %v8450 = vadd.f32 %v8386, %v220
    %v8451 = vadd.f32 %v8387, %v221
    %v8452 = vadd.f32 %v8388, %v222
    %v8453 = vadd.f32 %v8389, %v223
    %v8454 = vadd.f32 %v8390, %v224
    %v8455 = vadd.f32 %v8391, %v225
    %v8456 = vadd.f32 %v8392, %v226
    %v8457 = vadd.f32 %v8393, %v227
    %v8458 = vadd.f32 %v8394, %v228
    %v8459 = vadd.f32 %v8395, %v229
    %v8460 = vadd.f32 %v8396, %v230
    %v8461 = vadd.f32 %v8397, %v231
    %v8462 = vadd.f32 %v8398, %v232
    %v8463 = vadd.f32 %v8399, %v233
    %v8464 = vadd.f32 %v8400, %v234
    %v8465 = vadd.f32 %v8401, %v235
    %v8466 = vadd.f32 %v8402, %v236
    %v8467 = vadd.f32 %v8403, %v237
    %v8468 = vadd.f32 %v8404, %v238
    %v8469 = vadd.f32 %v8405, %v239
    %v8470 = vadd.f32 %v8406, %v240
    %v8471 = vadd.f32 %v8407, %v241
    %v8472 = vadd.f32 %v8408, %v242
    %v8473 = vadd.f32 %v8409, %v243
    %v8474 = vpack.c.bf16 %v8411, %v8410
    %v8475 = vpack.c.bf16 %v8413, %v8412
    %v8476 = vpack.c.bf16 %v8415, %v8414
    %v8477 = vpack.c.bf16 %v8417, %v8416
    %v8478 = vpack.c.bf16 %v8419, %v8418
    %v8479 = vpack.c.bf16 %v8421, %v8420
    %v8480 = vpack.c.bf16 %v8423, %v8422
    %v8481 = vpack.c.bf16 %v8425, %v8424
    %v8482 = vpack.c.bf16 %v8427, %v8426
    %v8483 = vpack.c.bf16 %v8429, %v8428
    %v8484 = vpack.c.bf16 %v8431, %v8430
    %v8485 = vpack.c.bf16 %v8433, %v8432
    %v8486 = vpack.c.bf16 %v8435, %v8434
    %v8487 = vpack.c.bf16 %v8437, %v8436
    %v8488 = vpack.c.bf16 %v8439, %v8438
    %v8489 = vpack.c.bf16 %v8441, %v8440
    %v8490 = vpack.c.bf16 %v8443, %v8442
    %v8491 = vpack.c.bf16 %v8445, %v8444
    %v8492 = vpack.c.bf16 %v8447, %v8446
    %v8493 = vpack.c.bf16 %v8449, %v8448
    %v8494 = vpack.c.bf16 %v8451, %v8450
    %v8495 = vpack.c.bf16 %v8453, %v8452
    %v8496 = vpack.c.bf16 %v8455, %v8454
    %v8497 = vpack.c.bf16 %v8457, %v8456
    %v8498 = vpack.c.bf16 %v8459, %v8458
    %v8499 = vpack.c.bf16 %v8461, %v8460
    %v8500 = vpack.c.bf16 %v8463, %v8462
    %v8501 = vpack.c.bf16 %v8465, %v8464
    %v8502 = vpack.c.bf16 %v8467, %v8466
    %v8503 = vpack.c.bf16 %v8469, %v8468
    %v8504 = vpack.c.bf16 %v8471, %v8470
    %v8505 = vpack.c.bf16 %v8473, %v8472
    %v8506 = vld [vmem:[#allocation10] sm:$0xf]
    %v8507 = vld [vmem:[#allocation10 + $0x4] sm:$0xf]
    %v8508 = vld [vmem:[#allocation10 + $0x8] sm:$0xf]
    %v8509 = vld [vmem:[#allocation10 + $0xc] sm:$0xf]
    %v8510 = vld [vmem:[#allocation10 + $0x10] sm:$0xf]
    %v8511 = vld [vmem:[#allocation10 + $0x14] sm:$0xf]
    %v8512 = vld [vmem:[#allocation10 + $0x18] sm:$0xf]
    %v8513 = vld [vmem:[#allocation10 + $0x1c] sm:$0xf]
    %v8514 = vld [vmem:[#allocation10 + $0x20] sm:$0xf]
    %v8515 = vld [vmem:[#allocation10 + $0x24] sm:$0xf]
    %v8516 = vld [vmem:[#allocation10 + $0x28] sm:$0xf]
    %v8517 = vld [vmem:[#allocation10 + $0x2c] sm:$0xf]
    %v8518 = vld [vmem:[#allocation10 + $0x30] sm:$0xf]
    %v8519 = vld [vmem:[#allocation10 + $0x34] sm:$0xf]
    %v8520 = vld [vmem:[#allocation10 + $0x38] sm:$0xf]
    %v8521 = vld [vmem:[#allocation10 + $0x3c] sm:$0xf]
    %v8522 = vld [vmem:[#allocation11 + $0xf] sm:$0x1]
    %v8524 = vperm.slane %v8522, 0
    %v8542 = vunpack.c.l.b16 %v8506
    %v8543 = vunpack.c.l.b16 %v8507
    %v8544 = vunpack.c.l.b16 %v8508
    %v8545 = vunpack.c.l.b16 %v8509
    %v8546 = vunpack.c.l.b16 %v8510
    %v8547 = vunpack.c.l.b16 %v8511
    %v8548 = vunpack.c.l.b16 %v8512
    %v8549 = vunpack.c.l.b16 %v8513
    %v8550 = vunpack.c.l.b16 %v8514
    %v8551 = vunpack.c.l.b16 %v8515
    %v8552 = vunpack.c.l.b16 %v8516
    %v8553 = vunpack.c.l.b16 %v8517
    %v8554 = vunpack.c.l.b16 %v8518
    %v8555 = vunpack.c.l.b16 %v8519
    %v8556 = vunpack.c.l.b16 %v8520
    %v8557 = vunpack.c.l.b16 %v8521
    %v8558 = vpack.c.b16 %v8543, %v8542
    %v8559 = vpack.c.b16 %v8545, %v8544
    %v8560 = vpack.c.b16 %v8547, %v8546
    %v8561 = vpack.c.b16 %v8549, %v8548
    %v8562 = vpack.c.b16 %v8551, %v8550
    %v8563 = vpack.c.b16 %v8553, %v8552
    %v8564 = vpack.c.b16 %v8555, %v8554
    %v8565 = vpack.c.b16 %v8557, %v8556
    %8574 = vmatpush.bf16.msra.mxu0 %v8565
    %8575 = vmatpush.bf16.msra.mxu0 %v8564
    %8576 = vmatpush.bf16.msra.mxu0 %v8563
    %8577 = vmatpush.bf16.msra.mxu0 %v8562
    %8578 = vmatpush.bf16.msra.mxu0 %v8561
    %8579 = vmatpush.bf16.msra.mxu0 %v8560
    %8580 = vmatpush.bf16.msra.mxu0 %v8559
    %8581 = vmatpush.bf16.msra.mxu0 %v8558
    %8582 = vmatmul.bf16.gmra.mxu0 %v8474
    %v8583 = vpop.f32.mrf.mxu0
    %v8584 = vadd.f32 %v8524, %v8583
    %v8585 = vpop.f32.mrf.mxu0
    %v8586 = vadd.f32 %v8524, %v8585
    %8587 = vmatmul.bf16.gmra.mxu0 %v8475
    %v8588 = vpop.f32.mrf.mxu0
    %v8589 = vadd.f32 %v8524, %v8588
    %v8590 = vpop.f32.mrf.mxu0
    %v8591 = vadd.f32 %v8524, %v8590
    %8592 = vmatmul.bf16.gmra.mxu0 %v8476
    %v8593 = vpop.f32.mrf.mxu0
    %v8594 = vadd.f32 %v8524, %v8593
    %v8595 = vpop.f32.mrf.mxu0
    %v8596 = vadd.f32 %v8524, %v8595
    %8597 = vmatmul.bf16.gmra.mxu0 %v8477
    %v8598 = vpop.f32.mrf.mxu0
    %v8599 = vadd.f32 %v8524, %v8598
    %v8600 = vpop.f32.mrf.mxu0
    %v8601 = vadd.f32 %v8524, %v8600
    %8602 = vmatmul.bf16.gmra.mxu0 %v8478
    %v8603 = vpop.f32.mrf.mxu0
    %v8604 = vadd.f32 %v8524, %v8603
    %v8605 = vpop.f32.mrf.mxu0
    %v8606 = vadd.f32 %v8524, %v8605
    %8607 = vmatmul.bf16.gmra.mxu0 %v8479
    %v8608 = vpop.f32.mrf.mxu0
    %v8609 = vadd.f32 %v8524, %v8608
    %v8610 = vpop.f32.mrf.mxu0
    %v8611 = vadd.f32 %v8524, %v8610
    %8612 = vmatmul.bf16.gmra.mxu0 %v8480
    %v8613 = vpop.f32.mrf.mxu0
    %v8614 = vadd.f32 %v8524, %v8613
    %v8615 = vpop.f32.mrf.mxu0
    %v8616 = vadd.f32 %v8524, %v8615
    %8617 = vmatmul.bf16.gmra.mxu0 %v8481
    %v8618 = vpop.f32.mrf.mxu0
    %v8619 = vadd.f32 %v8524, %v8618
    %v8620 = vpop.f32.mrf.mxu0
    %v8621 = vadd.f32 %v8524, %v8620
    %8622 = vmatmul.bf16.gmra.mxu0 %v8482
    %v8623 = vpop.f32.mrf.mxu0
    %v8624 = vadd.f32 %v8524, %v8623
    %v8625 = vpop.f32.mrf.mxu0
    %v8626 = vadd.f32 %v8524, %v8625
    %8627 = vmatmul.bf16.gmra.mxu0 %v8483
    %v8628 = vpop.f32.mrf.mxu0
    %v8629 = vadd.f32 %v8524, %v8628
    %v8630 = vpop.f32.mrf.mxu0
    %v8631 = vadd.f32 %v8524, %v8630
    %8632 = vmatmul.bf16.gmra.mxu0 %v8484
    %v8633 = vpop.f32.mrf.mxu0
    %v8634 = vadd.f32 %v8524, %v8633
    %v8635 = vpop.f32.mrf.mxu0
    %v8636 = vadd.f32 %v8524, %v8635
    %8637 = vmatmul.bf16.gmra.mxu0 %v8485
    %v8638 = vpop.f32.mrf.mxu0
    %v8639 = vadd.f32 %v8524, %v8638
    %v8640 = vpop.f32.mrf.mxu0
    %v8641 = vadd.f32 %v8524, %v8640
    %8642 = vmatmul.bf16.gmra.mxu0 %v8486
    %v8643 = vpop.f32.mrf.mxu0
    %v8644 = vadd.f32 %v8524, %v8643
    %v8645 = vpop.f32.mrf.mxu0
    %v8646 = vadd.f32 %v8524, %v8645
    %8647 = vmatmul.bf16.gmra.mxu0 %v8487
    %v8648 = vpop.f32.mrf.mxu0
    %v8649 = vadd.f32 %v8524, %v8648
    %v8650 = vpop.f32.mrf.mxu0
    %v8651 = vadd.f32 %v8524, %v8650
    %8652 = vmatmul.bf16.gmra.mxu0 %v8488
    %v8653 = vpop.f32.mrf.mxu0
    %v8654 = vadd.f32 %v8524, %v8653
    %v8655 = vpop.f32.mrf.mxu0
    %v8656 = vadd.f32 %v8524, %v8655
    %8657 = vmatmul.bf16.gmra.mxu0 %v8489
    %v8658 = vpop.f32.mrf.mxu0
    %v8659 = vadd.f32 %v8524, %v8658
    %v8660 = vpop.f32.mrf.mxu0
    %v8661 = vadd.f32 %v8524, %v8660
    %8662 = vmatmul.bf16.gmra.mxu0 %v8490
    %v8663 = vpop.f32.mrf.mxu0
    %v8664 = vadd.f32 %v8524, %v8663
    %v8665 = vpop.f32.mrf.mxu0
    %v8666 = vadd.f32 %v8524, %v8665
    %8667 = vmatmul.bf16.gmra.mxu0 %v8491
    %v8668 = vpop.f32.mrf.mxu0
    %v8669 = vadd.f32 %v8524, %v8668
    %v8670 = vpop.f32.mrf.mxu0
    %v8671 = vadd.f32 %v8524, %v8670
    %8672 = vmatmul.bf16.gmra.mxu0 %v8492
    %v8673 = vpop.f32.mrf.mxu0
    %v8674 = vadd.f32 %v8524, %v8673
    %v8675 = vpop.f32.mrf.mxu0
    %v8676 = vadd.f32 %v8524, %v8675
    %8677 = vmatmul.bf16.gmra.mxu0 %v8493
    %v8678 = vpop.f32.mrf.mxu0
    %v8679 = vadd.f32 %v8524, %v8678
    %v8680 = vpop.f32.mrf.mxu0
    %v8681 = vadd.f32 %v8524, %v8680
    %8682 = vmatmul.bf16.gmra.mxu0 %v8494
    %v8683 = vpop.f32.mrf.mxu0
    %v8684 = vadd.f32 %v8524, %v8683
    %v8685 = vpop.f32.mrf.mxu0
    %v8686 = vadd.f32 %v8524, %v8685
    %8687 = vmatmul.bf16.gmra.mxu0 %v8495
    %v8688 = vpop.f32.mrf.mxu0
    %v8689 = vadd.f32 %v8524, %v8688
    %v8690 = vpop.f32.mrf.mxu0
    %v8691 = vadd.f32 %v8524, %v8690
    %8692 = vmatmul.bf16.gmra.mxu0 %v8496
    %v8693 = vpop.f32.mrf.mxu0
    %v8694 = vadd.f32 %v8524, %v8693
    %v8695 = vpop.f32.mrf.mxu0
    %v8696 = vadd.f32 %v8524, %v8695
    %8697 = vmatmul.bf16.gmra.mxu0 %v8497
    %v8698 = vpop.f32.mrf.mxu0
    %v8699 = vadd.f32 %v8524, %v8698
    %v8700 = vpop.f32.mrf.mxu0
    %v8701 = vadd.f32 %v8524, %v8700
    %8702 = vmatmul.bf16.gmra.mxu0 %v8498
    %v8703 = vpop.f32.mrf.mxu0
    %v8704 = vadd.f32 %v8524, %v8703
    %v8705 = vpop.f32.mrf.mxu0
    %v8706 = vadd.f32 %v8524, %v8705
    %8707 = vmatmul.bf16.gmra.mxu0 %v8499
    %v8708 = vpop.f32.mrf.mxu0
    %v8709 = vadd.f32 %v8524, %v8708
    %v8710 = vpop.f32.mrf.mxu0
    %v8711 = vadd.f32 %v8524, %v8710
    %8712 = vmatmul.bf16.gmra.mxu0 %v8500
    %v8713 = vpop.f32.mrf.mxu0
    %v8714 = vadd.f32 %v8524, %v8713
    %v8715 = vpop.f32.mrf.mxu0
    %v8716 = vadd.f32 %v8524, %v8715
    %8717 = vmatmul.bf16.gmra.mxu0 %v8501
    %v8718 = vpop.f32.mrf.mxu0
    %v8719 = vadd.f32 %v8524, %v8718
    %v8720 = vpop.f32.mrf.mxu0
    %v8721 = vadd.f32 %v8524, %v8720
    %8722 = vmatmul.bf16.gmra.mxu0 %v8502
    %v8723 = vpop.f32.mrf.mxu0
    %v8724 = vadd.f32 %v8524, %v8723
    %v8725 = vpop.f32.mrf.mxu0
    %v8726 = vadd.f32 %v8524, %v8725
    %8727 = vmatmul.bf16.gmra.mxu0 %v8503
    %v8728 = vpop.f32.mrf.mxu0
    %v8729 = vadd.f32 %v8524, %v8728
    %v8730 = vpop.f32.mrf.mxu0
    %v8731 = vadd.f32 %v8524, %v8730
    %8732 = vmatmul.bf16.gmra.mxu0 %v8504
    %v8733 = vpop.f32.mrf.mxu0
    %v8734 = vadd.f32 %v8524, %v8733
    %v8735 = vpop.f32.mrf.mxu0
    %v8736 = vadd.f32 %v8524, %v8735
    %8737 = vmatmul.bf16.gmra.mxu0 %v8505
    %v8738 = vpop.f32.mrf.mxu0
    %v8739 = vadd.f32 %v8524, %v8738
    %v8740 = vpop.f32.mrf.mxu0
    %v8741 = vadd.f32 %v8524, %v8740
    %8742 = vdwg.mxu0
    %8743 = vst [vmem:[#allocation13] sm:$0xff] %v8584
    %8744 = vst [vmem:[#allocation13 + $0x8] sm:$0xff] %v8586
    %8745 = vst [vmem:[#allocation13 + $0x10] sm:$0xff] %v8589
    %8746 = vst [vmem:[#allocation13 + $0x18] sm:$0xff] %v8591
    %8747 = vst [vmem:[#allocation13 + $0x20] sm:$0xff] %v8594
    %8748 = vst [vmem:[#allocation13 + $0x28] sm:$0xff] %v8596
    %8749 = vst [vmem:[#allocation13 + $0x30] sm:$0xff] %v8599
    %8750 = vst [vmem:[#allocation13 + $0x38] sm:$0xff] %v8601
    %8751 = vst [vmem:[#allocation13 + $0x40] sm:$0xff] %v8604
    %8752 = vst [vmem:[#allocation13 + $0x48] sm:$0xff] %v8606
    %8753 = vst [vmem:[#allocation13 + $0x50] sm:$0xff] %v8609
    %8754 = vst [vmem:[#allocation13 + $0x58] sm:$0xff] %v8611
    %8755 = vst [vmem:[#allocation13 + $0x60] sm:$0xff] %v8614
    %8756 = vst [vmem:[#allocation13 + $0x68] sm:$0xff] %v8616
    %8757 = vst [vmem:[#allocation13 + $0x70] sm:$0xff] %v8619
    %8758 = vst [vmem:[#allocation13 + $0x78] sm:$0xff] %v8621
    %8759 = vst [vmem:[#allocation13 + $0x80] sm:$0xff] %v8624
    %8760 = vst [vmem:[#allocation13 + $0x88] sm:$0xff] %v8626
    %8761 = vst [vmem:[#allocation13 + $0x90] sm:$0xff] %v8629
    %8762 = vst [vmem:[#allocation13 + $0x98] sm:$0xff] %v8631
    %8763 = vst [vmem:[#allocation13 + $0xa0] sm:$0xff] %v8634
    %8764 = vst [vmem:[#allocation13 + $0xa8] sm:$0xff] %v8636
    %8765 = vst [vmem:[#allocation13 + $0xb0] sm:$0xff] %v8639
    %8766 = vst [vmem:[#allocation13 + $0xb8] sm:$0xff] %v8641
    %8767 = vst [vmem:[#allocation13 + $0xc0] sm:$0xff] %v8644
    %8768 = vst [vmem:[#allocation13 + $0xc8] sm:$0xff] %v8646
    %8769 = vst [vmem:[#allocation13 + $0xd0] sm:$0xff] %v8649
    %8770 = vst [vmem:[#allocation13 + $0xd8] sm:$0xff] %v8651
    %8771 = vst [vmem:[#allocation13 + $0xe0] sm:$0xff] %v8654
    %8772 = vst [vmem:[#allocation13 + $0xe8] sm:$0xff] %v8656
    %8773 = vst [vmem:[#allocation13 + $0xf0] sm:$0xff] %v8659
    %8774 = vst [vmem:[#allocation13 + $0xf8] sm:$0xff] %v8661
    %8775 = vst [vmem:[#allocation13 + $0x100] sm:$0xff] %v8664
    %8776 = vst [vmem:[#allocation13 + $0x108] sm:$0xff] %v8666
    %8777 = vst [vmem:[#allocation13 + $0x110] sm:$0xff] %v8669
    %8778 = vst [vmem:[#allocation13 + $0x118] sm:$0xff] %v8671
    %8779 = vst [vmem:[#allocation13 + $0x120] sm:$0xff] %v8674
    %8780 = vst [vmem:[#allocation13 + $0x128] sm:$0xff] %v8676
    %8781 = vst [vmem:[#allocation13 + $0x130] sm:$0xff] %v8679
    %8782 = vst [vmem:[#allocation13 + $0x138] sm:$0xff] %v8681
    %8783 = vst [vmem:[#allocation13 + $0x140] sm:$0xff] %v8684
    %8784 = vst [vmem:[#allocation13 + $0x148] sm:$0xff] %v8686
    %8785 = vst [vmem:[#allocation13 + $0x150] sm:$0xff] %v8689
    %8786 = vst [vmem:[#allocation13 + $0x158] sm:$0xff] %v8691
    %8787 = vst [vmem:[#allocation13 + $0x160] sm:$0xff] %v8694
    %8788 = vst [vmem:[#allocation13 + $0x168] sm:$0xff] %v8696
    %8789 = vst [vmem:[#allocation13 + $0x170] sm:$0xff] %v8699
    %8790 = vst [vmem:[#allocation13 + $0x178] sm:$0xff] %v8701
    %8791 = vst [vmem:[#allocation13 + $0x180] sm:$0xff] %v8704
    %8792 = vst [vmem:[#allocation13 + $0x188] sm:$0xff] %v8706
    %8793 = vst [vmem:[#allocation13 + $0x190] sm:$0xff] %v8709
    %8794 = vst [vmem:[#allocation13 + $0x198] sm:$0xff] %v8711
    %8795 = vst [vmem:[#allocation13 + $0x1a0] sm:$0xff] %v8714
    %8796 = vst [vmem:[#allocation13 + $0x1a8] sm:$0xff] %v8716
    %8797 = vst [vmem:[#allocation13 + $0x1b0] sm:$0xff] %v8719
    %8798 = vst [vmem:[#allocation13 + $0x1b8] sm:$0xff] %v8721
    %8799 = vst [vmem:[#allocation13 + $0x1c0] sm:$0xff] %v8724
    %8800 = vst [vmem:[#allocation13 + $0x1c8] sm:$0xff] %v8726
    %8801 = vst [vmem:[#allocation13 + $0x1d0] sm:$0xff] %v8729
    %8802 = vst [vmem:[#allocation13 + $0x1d8] sm:$0xff] %v8731
    %8803 = vst [vmem:[#allocation13 + $0x1e0] sm:$0xff] %v8734
    %8804 = vst [vmem:[#allocation13 + $0x1e8] sm:$0xff] %v8736
    %8805 = vst [vmem:[#allocation13 + $0x1f0] sm:$0xff] %v8739
    %8806 = vst [vmem:[#allocation13 + $0x1f8] sm:$0xff] %v8741
    // Predicated region
    $region50: #{tpu_custom_call.1} parent=1 // pred_check
      _
    $region51: #{tpu_custom_call.1} parent=1 // pred_check_branch
      %8808 = sbr.rel (0) target = $region53
    $region52: #{tpu_custom_call.1} parent=1 // pred_region
      %8810 = vsyncadd [#allocation4], 0
      %s8811 = sshll.u32 [#allocation13], 4
      %s8812 = int_to_ptr.vmem [resolvable:$true] %s8811
      %s8813 = sshll.u32 %s6, 4
      %s8814 = int_to_ptr.hbm [resolvable:$true] %s8813
      %8819 = dma.vmem_to_hbm [thread:$0]  %s8812, 8192, %s8814, [#allocation4], 128, 128, 8
    $region53: #{tpu_custom_call.1} parent=1 // pred_fallthru
      _
    // Predicated region
    $region54: #{tpu_custom_call.1} parent=1 // pred_check
      _
    $region55: #{tpu_custom_call.1} parent=1 // pred_check_branch
      %8821 = sbr.rel (0) target = $region57
    $region56: #{tpu_custom_call.1} parent=1 // pred_region
      %8823 = dma.done [#allocation4], 8192
    $region57: #{tpu_custom_call.1} parent=1 // pred_fallthru
      _
    %8824 = vsyncpa [#allocation3], 1
    %8825 = vsyncpa [#allocation6], 1
    %8826 = vsyncpa [#allocation9], 1
    %8827 = vsyncpa [#allocation12], 1
    %8828 = vsyncpa [#allocation4], 1

</llo_original>
